<compile_context>
chip_gen: v7x
topology: tpu7x:2x2x1
jax: 0.10.0
libtpu: 0.0.40
codegen_flags: <defaults>
</compile_context>

<pallas_src>
import jax
import jax.numpy as jnp
from jax import lax
from jax.experimental import pallas as pl
from jax.experimental.pallas import tpu as pltpu


# ----------------------------------------------------------------------------
# In-kernel helpers
# ----------------------------------------------------------------------------
def _silu(y):
    # sigmoid via EUP exp + approx reciprocal (both off the VPU critical path).
    return y * pl.reciprocal(1.0 + jnp.exp(-y), approx=True)


def _accumulate_taps(x_ref, w_taps, *, k, s, cin, ho, wo_len):
    """Direct KxK conv for one output row: acc = sum_t W[t] @ X_window[t].

    x_ref block layout is (1, s*s*Cin, Hq, Wq): phase-split padded input, so
    every tap window is a static, unit-stride slice.  Result is (Cout, Wo) f32.
    """
    acc = None
    for i in range(k):
        for j in range(k):
            t = i * k + j
            ph = (i % s) * s + (j % s)      # which phase grid holds this tap
            row = ho + i // s               # row offset inside the phase grid
            col = j // s                    # first column inside the phase grid
            xs = x_ref[0, ph * cin:(ph + 1) * cin, row, col:col + wo_len]
            part = jnp.dot(w_taps[t], xs, preferred_element_type=jnp.float32)
            acc = part if acc is None else acc + part
    return acc


def _make_stem_kernel(*, k, s, cin, ho_len, wo_len):
    """conv_stem + bn1 + act1 fused: one pass, three NCHW feature outputs."""
    def kernel(x_ref, w_ref, scale_ref, bias_ref, conv_ref, bn_ref, act_ref):
        w = [w_ref[t] for t in range(k * k)]        # (Cout, Cin) per tap
        scale = scale_ref[...]                      # (Cout, 1)
        bias = bias_ref[...]                        # (Cout, 1)
        for ho in range(ho_len):
            acc = _accumulate_taps(x_ref, w, k=k, s=s, cin=cin,
                                   ho=ho, wo_len=wo_len)
            conv_ref[0, :, ho, :] = acc             # conv_stem feature (raw)
            y = acc * scale + bias
            bn_ref[0, :, ho, :] = y                 # bn1 feature
            act_ref[0, :, ho, :] = _silu(y)         # act1 feature
    return kernel


def _make_block_kernel(*, k, s, cin, ho_len, wo_len):
    """Block conv + folded-BN + SiLU (BN scale pre-folded into the weights)."""
    def kernel(x_ref, w_ref, bias_ref, o_ref):
        w = [w_ref[t] for t in range(k * k)]
        bias = bias_ref[...]
        for ho in range(ho_len):
            acc = _accumulate_taps(x_ref, w, k=k, s=s, cin=cin,
                                   ho=ho, wo_len=wo_len)
            o_ref[0, :, ho, :] = _silu(acc + bias)
    return kernel


# ----------------------------------------------------------------------------
# Wrapper glue
# ----------------------------------------------------------------------------
def _phase_decompose_nchw(x_nchw, *, k, s, pad):
    """Pad + phase-split an NCHW activation for a stride-s KxK conv.

    Single XLA pass over the input bytes (vs. the k*k-fold im2col expansion).
    Returns (N, s*s*C, Hq, Wq) such that conv tap (i, j) reads the unit-stride
    window  [:, ((i%s)*s + j%s)*C : +C, i//s : i//s+Ho, j//s : j//s+Wo].
    """
    n, c, h, w = x_nchw.shape
    ho = (h + 2 * pad - k) // s + 1
    wo = (w + 2 * pad - k) // s + 1
    d = (k - 1) // s
    hq, wq = ho + d, wo + d
    hp, wp = s * hq, s * wq
    x_p = jnp.pad(x_nchw, ((0, 0), (0, 0),
                           (pad, max(0, hp - h - pad)),
                           (pad, max(0, wp - w - pad))))[:, :, :hp, :wp]
    xph = x_p.reshape(n, c, hq, s, wq, s)
    xph = jnp.transpose(xph, (0, 3, 5, 1, 2, 4))    # (N, s, s, C, Hq, Wq)
    return xph.reshape(n, s * s * c, hq, wq), (ho, wo)


def _conv_layer(x_nchw, layer, *, stem):
    k, s, pad = layer["k"], layer["s"], layer["pad"]
    w = layer["w"]                                  # (k*k, Cout, Cin)
    kk, cout, cin = w.shape

    xph, (ho, wo) = _phase_decompose_nchw(x_nchw, k=k, s=s, pad=pad)
    n, pc, hq, wq = xph.shape

    in_specs = [
        # Per-batch phase-split input: DMA'd to VMEM once per grid step.
        pl.BlockSpec((1, pc, hq, wq), lambda b: (b, 0, 0, 0)),
        # Grid-invariant operands (weights / per-channel affine).
        # TODO(synk): pipeline_mode=pl.Buffered(1) here once weights are
        # multi-MiB (v7x 64 MiB VMEM budget).
        pl.BlockSpec((kk, cout, cin), lambda b: (0, 0, 0)),
    ]
    out_spec = pl.BlockSpec((1, cout, ho, wo), lambda b: (b, 0, 0, 0))
    cparams = pltpu.CompilerParams(
        dimension_semantics=("parallel",),          # batch axis -> megacore
        vmem_limit_bytes=32 * 1024 * 1024)

    if stem:
        in_specs += [pl.BlockSpec((cout, 1), lambda b: (0, 0)),
                     pl.BlockSpec((cout, 1), lambda b: (0, 0))]
        kern = _make_stem_kernel(k=k, s=s, cin=cin, ho_len=ho, wo_len=wo)
        conv_f, bn_f, act_f = pl.pallas_call(
            kern,
            grid=(n,),
            out_shape=tuple(jax.ShapeDtypeStruct((n, cout, ho, wo), jnp.float32)
                            for _ in range(3)),
            in_specs=in_specs,
            out_specs=(out_spec, out_spec, out_spec),
            compiler_params=cparams,
        )(xph, w, layer["scale"], layer["bias"])
        return conv_f, bn_f, act_f

    in_specs += [pl.BlockSpec((cout, 1), lambda b: (0, 0))]
    kern = _make_block_kernel(k=k, s=s, cin=cin, ho_len=ho, wo_len=wo)
    return pl.pallas_call(
        kern,
        grid=(n,),
        out_shape=jax.ShapeDtypeStruct((n, cout, ho, wo), jnp.float32),
        in_specs=in_specs,
        out_specs=out_spec,
        compiler_params=cparams,
    )(xph, w, layer["bias"])


def fold_bn(gamma, beta, mean, var, eps=1e-5):
    s = gamma / jnp.sqrt(var + eps)
    b = beta - mean * s
    return s, b


# ----------------------------------------------------------------------------
# Synthetic backend + one-time parameter preparation + Encoder.forward
# ----------------------------------------------------------------------------
def make_backend_params():
    key = jax.random.PRNGKey(0)
    ks = jax.random.split(key, 8)

    def conv_w(k, cout, cin, kh, kw):
        return 0.1 * jax.random.normal(k, (cout, cin, kh, kw), jnp.float32)

    def bn_p(k, c):
        k1, k2, k3, k4 = jax.random.split(k, 4)
        gamma = 1.0 + 0.1 * jax.random.normal(k1, (c,), jnp.float32)
        beta = 0.1 * jax.random.normal(k2, (c,), jnp.float32)
        mean = 0.1 * jax.random.normal(k3, (c,), jnp.float32)
        var = 1.0 + 0.1 * jax.random.uniform(k4, (c,), jnp.float32)
        return gamma, beta, mean, var

    return {
        "conv_stem_w": conv_w(ks[0], 8, 4, 3, 3),   # Conv2d(4, 8, 3, s=2, p=1)
        "bn1": bn_p(ks[1], 8),                      # BatchNorm2d(8), eval mode
        "block0_w": conv_w(ks[2], 16, 8, 3, 3),     # conv(8->16,s=2)+BN+SiLU
        "block0_bn": bn_p(ks[3], 16),
        "block1_w": conv_w(ks[4], 16, 16, 3, 3),    # conv(16->16,s=1)+BN+SiLU
        "block1_bn": bn_p(ks[5], 16),
    }


def prepare_encoder_params(params):
    """One-time weight prep, hoisted out of the per-forward path."""
    def taps(w_oihw):
        cout, cin, kh, kw = w_oihw.shape
        # (kh*kw, Cout, Cin): tap-major, matmul-ready, channels-as-rows.
        return jnp.transpose(w_oihw, (2, 3, 0, 1)).reshape(kh * kw, cout, cin)

    s1, b1 = fold_bn(*params["bn1"])
    prep = {
        "stem": {
            "w": taps(params["conv_stem_w"]).astype(jnp.float32),
            "scale": s1.reshape(-1, 1).astype(jnp.float32),
            "bias": b1.reshape(-1, 1).astype(jnp.float32),
            "k": 3, "s": 2, "pad": 1,
        },
        "blocks": [],
    }
    for wname, bnname, stride in (("block0_w", "block0_bn", 2),
                                  ("block1_w", "block1_bn", 1)):
        sc, bi = fold_bn(*params[bnname])
        # Fold the BN scale into the weight taps -> kernel epilogue is add+SiLU.
        wt = taps(params[wname]) * sc[None, :, None]
        prep["blocks"].append({
            "w": wt.astype(jnp.float32),
            "bias": bi.reshape(-1, 1).astype(jnp.float32),
            "k": 3, "s": stride, "pad": 1,
        })
    return prep


def encoder_forward(x_nchw, prep):
    """Mirror of Encoder.forward: iterate backend sub-modules, collect features."""
    feats = [x_nchw]

    # conv_stem + bn1 + act1: ONE fused pallas_call, three feature outputs.
    conv_f, bn_f, act_f = _conv_layer(x_nchw, prep["stem"], stem=True)
    feats += [conv_f, bn_f, act_f]

    # blocks: each conv + folded-BN + SiLU is a single fused pallas_call.
    cur = act_f
    for blk in prep["blocks"]:
        cur = _conv_layer(cur, blk, stem=False)
        feats.append(cur)
    return feats


# ----------------------------------------------------------------------------
# Pure-JAX reference (numerical verification of the Pallas path)
# ----------------------------------------------------------------------------
def ref_conv(x, w, stride, pad):
    return lax.conv_general_dilated(
        x, w, (stride, stride), [(pad, pad), (pad, pad)],
        dimension_numbers=("NCHW", "OIHW", "NCHW"))


def ref_affine(x, s, b):
    return x * s[None, :, None, None] + b[None, :, None, None]


def ref_silu(x):
    return x * (1.0 / (1.0 + jnp.exp(-x)))


def encoder_forward_ref(x, params):
    bn1_s, bn1_b = fold_bn(*params["bn1"])
    b0_s, b0_b = fold_bn(*params["block0_bn"])
    b1_s, b1_b = fold_bn(*params["block1_bn"])
    feats = [x]
    feats.append(ref_conv(feats[-1], params["conv_stem_w"], 2, 1))
    feats.append(ref_affine(feats[-1], bn1_s, bn1_b))
    feats.append(ref_silu(feats[-1]))
    feats.append(ref_silu(ref_affine(
        ref_conv(feats[-1], params["block0_w"], 2, 1), b0_s, b0_b)))
    feats.append(ref_silu(ref_affine(
        ref_conv(feats[-1], params["block1_w"], 1, 1), b1_s, b1_b)))
    return feats


# ----------------------------------------------------------------------------
if __name__ == "__main__":
    params = make_backend_params()
    prep = prepare_encoder_params(params)       # one-time weight prep (hoisted)

    x = jax.random.normal(jax.random.PRNGKey(0), (2, 4, 16, 16), jnp.float32)

    features = jax.block_until_ready(encoder_forward(x, prep))

    ref_features = encoder_forward_ref(x, params)
    expected_shapes = [(2, 4, 16, 16), (2, 8, 8, 8), (2, 8, 8, 8),
                       (2, 8, 8, 8), (2, 16, 4, 4), (2, 16, 4, 4)]
    assert len(features) == len(expected_shapes)
    for f, r, es in zip(features, ref_features, expected_shapes):
        assert f.shape == es, (f.shape, es)
        assert f.dtype == jnp.float32
        # Matmuls/accumulation are exact f32; the only approximation left is
        # the EUP approx reciprocal inside SiLU.
        assert jnp.allclose(f, r, rtol=1e-2, atol=1e-2), "mismatch vs reference"

    print("KERNEL_OK")
</pallas_src>

<mosaic_0001>
module attributes {stable_mosaic.version = 11 : i64} {
  func.func @kernel(%arg0: i32, %arg1: memref<1x16x9x9xf32, #tpu.memory_space<vmem>>, %arg2: memref<9x8x4xf32, #tpu.memory_space<vmem>>, %arg3: memref<8x1xf32, #tpu.memory_space<vmem>>, %arg4: memref<8x1xf32, #tpu.memory_space<vmem>>, %arg5: memref<1x8x8x8xf32, #tpu.memory_space<vmem>>, %arg6: memref<1x8x8x8xf32, #tpu.memory_space<vmem>>, %arg7: memref<1x8x8x8xf32, #tpu.memory_space<vmem>>) attributes {dimension_semantics = [#tpu.dimension_semantics<parallel>], iteration_bounds = array<i64: 2>, scalar_prefetch = 0 : i64, scratch_operands = 0 : i64, tpu.core_type = #tpu.core_type<tc>, window_params = [{transform_indices = @transform_0, window_bounds = array<i64: 1, 16, 9, 9>}, {pipeline_mode = #tpu.pipeline_mode<synchronous>, transform_indices = @transform_1, window_bounds = array<i64: 9, 8, 4>}, {pipeline_mode = #tpu.pipeline_mode<synchronous>, transform_indices = @transform_2, window_bounds = array<i64: 8, 1>}, {pipeline_mode = #tpu.pipeline_mode<synchronous>, transform_indices = @transform_3, window_bounds = array<i64: 8, 1>}, {transform_indices = @transform_4, window_bounds = array<i64: 1, 8, 8, 8>}, {transform_indices = @transform_5, window_bounds = array<i64: 1, 8, 8, 8>}, {transform_indices = @transform_6, window_bounds = array<i64: 1, 8, 8, 8>}]} {
    %c0 = arith.constant 0 : index
    %c0_0 = arith.constant 0 : index
    %c0_1 = arith.constant 0 : index
    %0 = vector.load %arg2[%c0, %c0_0, %c0_1] : memref<9x8x4xf32, #tpu.memory_space<vmem>>, vector<1x8x4xf32>
    %1 = vector.shape_cast %0 : vector<1x8x4xf32> to vector<8x4xf32>
    %c1 = arith.constant 1 : index
    %c0_2 = arith.constant 0 : index
    %c0_3 = arith.constant 0 : index
    %2 = vector.load %arg2[%c1, %c0_2, %c0_3] : memref<9x8x4xf32, #tpu.memory_space<vmem>>, vector<1x8x4xf32>
    %3 = vector.shape_cast %2 : vector<1x8x4xf32> to vector<8x4xf32>
    %c2 = arith.constant 2 : index
    %c0_4 = arith.constant 0 : index
    %c0_5 = arith.constant 0 : index
    %4 = vector.load %arg2[%c2, %c0_4, %c0_5] : memref<9x8x4xf32, #tpu.memory_space<vmem>>, vector<1x8x4xf32>
    %5 = vector.shape_cast %4 : vector<1x8x4xf32> to vector<8x4xf32>
    %c3 = arith.constant 3 : index
    %c0_6 = arith.constant 0 : index
    %c0_7 = arith.constant 0 : index
    %6 = vector.load %arg2[%c3, %c0_6, %c0_7] : memref<9x8x4xf32, #tpu.memory_space<vmem>>, vector<1x8x4xf32>
    %7 = vector.shape_cast %6 : vector<1x8x4xf32> to vector<8x4xf32>
    %c4 = arith.constant 4 : index
    %c0_8 = arith.constant 0 : index
    %c0_9 = arith.constant 0 : index
    %8 = vector.load %arg2[%c4, %c0_8, %c0_9] : memref<9x8x4xf32, #tpu.memory_space<vmem>>, vector<1x8x4xf32>
    %9 = vector.shape_cast %8 : vector<1x8x4xf32> to vector<8x4xf32>
    %c5 = arith.constant 5 : index
    %c0_10 = arith.constant 0 : index
    %c0_11 = arith.constant 0 : index
    %10 = vector.load %arg2[%c5, %c0_10, %c0_11] : memref<9x8x4xf32, #tpu.memory_space<vmem>>, vector<1x8x4xf32>
    %11 = vector.shape_cast %10 : vector<1x8x4xf32> to vector<8x4xf32>
    %c6 = arith.constant 6 : index
    %c0_12 = arith.constant 0 : index
    %c0_13 = arith.constant 0 : index
    %12 = vector.load %arg2[%c6, %c0_12, %c0_13] : memref<9x8x4xf32, #tpu.memory_space<vmem>>, vector<1x8x4xf32>
    %13 = vector.shape_cast %12 : vector<1x8x4xf32> to vector<8x4xf32>
    %c7 = arith.constant 7 : index
    %c0_14 = arith.constant 0 : index
    %c0_15 = arith.constant 0 : index
    %14 = vector.load %arg2[%c7, %c0_14, %c0_15] : memref<9x8x4xf32, #tpu.memory_space<vmem>>, vector<1x8x4xf32>
    %15 = vector.shape_cast %14 : vector<1x8x4xf32> to vector<8x4xf32>
    %c8 = arith.constant 8 : index
    %c0_16 = arith.constant 0 : index
    %c0_17 = arith.constant 0 : index
    %16 = vector.load %arg2[%c8, %c0_16, %c0_17] : memref<9x8x4xf32, #tpu.memory_space<vmem>>, vector<1x8x4xf32>
    %17 = vector.shape_cast %16 : vector<1x8x4xf32> to vector<8x4xf32>
    %c0_18 = arith.constant 0 : index
    %c0_19 = arith.constant 0 : index
    %18 = vector.load %arg3[%c0_18, %c0_19] : memref<8x1xf32, #tpu.memory_space<vmem>>, vector<8x1xf32>
    %c0_20 = arith.constant 0 : index
    %c0_21 = arith.constant 0 : index
    %19 = vector.load %arg4[%c0_20, %c0_21] : memref<8x1xf32, #tpu.memory_space<vmem>>, vector<8x1xf32>
    %c0_22 = arith.constant 0 : index
    %c0_23 = arith.constant 0 : index
    %c0_24 = arith.constant 0 : index
    %c0_25 = arith.constant 0 : index
    %20 = vector.load %arg1[%c0_22, %c0_23, %c0_24, %c0_25] : memref<1x16x9x9xf32, #tpu.memory_space<vmem>>, vector<1x4x1x8xf32>
    %21 = vector.shape_cast %20 : vector<1x4x1x8xf32> to vector<4x8xf32>
    %cst = arith.constant dense<0.000000e+00> : vector<8x8xf32>
    %22 = tpu.matmul %1, %21, %cst {dimension_numbers = #tpu.dot_dimension_numbers<[1], [0], [0], [1], [0, 0, 1, 1], [], []>} : vector<8x4xf32>, vector<4x8xf32>, vector<8x8xf32> -> vector<8x8xf32>
    %c0_26 = arith.constant 0 : index
    %c4_27 = arith.constant 4 : index
    %c0_28 = arith.constant 0 : index
    %c0_29 = arith.constant 0 : index
    %23 = vector.load %arg1[%c0_26, %c4_27, %c0_28, %c0_29] : memref<1x16x9x9xf32, #tpu.memory_space<vmem>>, vector<1x4x1x8xf32>
    %24 = vector.shape_cast %23 : vector<1x4x1x8xf32> to vector<4x8xf32>
    %cst_30 = arith.constant dense<0.000000e+00> : vector<8x8xf32>
    %25 = tpu.matmul %3, %24, %cst_30 {dimension_numbers = #tpu.dot_dimension_numbers<[1], [0], [0], [1], [0, 0, 1, 1], [], []>} : vector<8x4xf32>, vector<4x8xf32>, vector<8x8xf32> -> vector<8x8xf32>
    %26 = arith.addf %22, %25 : vector<8x8xf32>
    %c0_31 = arith.constant 0 : index
    %c0_32 = arith.constant 0 : index
    %c0_33 = arith.constant 0 : index
    %c1_34 = arith.constant 1 : index
    %27 = vector.load %arg1[%c0_31, %c0_32, %c0_33, %c1_34] : memref<1x16x9x9xf32, #tpu.memory_space<vmem>>, vector<1x4x1x8xf32>
    %28 = vector.shape_cast %27 : vector<1x4x1x8xf32> to vector<4x8xf32>
    %cst_35 = arith.constant dense<0.000000e+00> : vector<8x8xf32>
    %29 = tpu.matmul %5, %28, %cst_35 {dimension_numbers = #tpu.dot_dimension_numbers<[1], [0], [0], [1], [0, 0, 1, 1], [], []>} : vector<8x4xf32>, vector<4x8xf32>, vector<8x8xf32> -> vector<8x8xf32>
    %30 = arith.addf %26, %29 : vector<8x8xf32>
    %c0_36 = arith.constant 0 : index
    %c8_37 = arith.constant 8 : index
    %c0_38 = arith.constant 0 : index
    %c0_39 = arith.constant 0 : index
    %31 = vector.load %arg1[%c0_36, %c8_37, %c0_38, %c0_39] : memref<1x16x9x9xf32, #tpu.memory_space<vmem>>, vector<1x4x1x8xf32>
    %32 = vector.shape_cast %31 : vector<1x4x1x8xf32> to vector<4x8xf32>
    %cst_40 = arith.constant dense<0.000000e+00> : vector<8x8xf32>
    %33 = tpu.matmul %7, %32, %cst_40 {dimension_numbers = #tpu.dot_dimension_numbers<[1], [0], [0], [1], [0, 0, 1, 1], [], []>} : vector<8x4xf32>, vector<4x8xf32>, vector<8x8xf32> -> vector<8x8xf32>
    %34 = arith.addf %30, %33 : vector<8x8xf32>
    %c0_41 = arith.constant 0 : index
    %c12 = arith.constant 12 : index
    %c0_42 = arith.constant 0 : index
    %c0_43 = arith.constant 0 : index
    %35 = vector.load %arg1[%c0_41, %c12, %c0_42, %c0_43] : memref<1x16x9x9xf32, #tpu.memory_space<vmem>>, vector<1x4x1x8xf32>
    %36 = vector.shape_cast %35 : vector<1x4x1x8xf32> to vector<4x8xf32>
    %cst_44 = arith.constant dense<0.000000e+00> : vector<8x8xf32>
    %37 = tpu.matmul %9, %36, %cst_44 {dimension_numbers = #tpu.dot_dimension_numbers<[1], [0], [0], [1], [0, 0, 1, 1], [], []>} : vector<8x4xf32>, vector<4x8xf32>, vector<8x8xf32> -> vector<8x8xf32>
    %38 = arith.addf %34, %37 : vector<8x8xf32>
    %c0_45 = arith.constant 0 : index
    %c8_46 = arith.constant 8 : index
    %c0_47 = arith.constant 0 : index
    %c1_48 = arith.constant 1 : index
    %39 = vector.load %arg1[%c0_45, %c8_46, %c0_47, %c1_48] : memref<1x16x9x9xf32, #tpu.memory_space<vmem>>, vector<1x4x1x8xf32>
    %40 = vector.shape_cast %39 : vector<1x4x1x8xf32> to vector<4x8xf32>
    %cst_49 = arith.constant dense<0.000000e+00> : vector<8x8xf32>
    %41 = tpu.matmul %11, %40, %cst_49 {dimension_numbers = #tpu.dot_dimension_numbers<[1], [0], [0], [1], [0, 0, 1, 1], [], []>} : vector<8x4xf32>, vector<4x8xf32>, vector<8x8xf32> -> vector<8x8xf32>
    %42 = arith.addf %38, %41 : vector<8x8xf32>
    %c0_50 = arith.constant 0 : index
    %c0_51 = arith.constant 0 : index
    %c1_52 = arith.constant 1 : index
    %c0_53 = arith.constant 0 : index
    %43 = vector.load %arg1[%c0_50, %c0_51, %c1_52, %c0_53] : memref<1x16x9x9xf32, #tpu.memory_space<vmem>>, vector<1x4x1x8xf32>
    %44 = vector.shape_cast %43 : vector<1x4x1x8xf32> to vector<4x8xf32>
    %cst_54 = arith.constant dense<0.000000e+00> : vector<8x8xf32>
    %45 = tpu.matmul %13, %44, %cst_54 {dimension_numbers = #tpu.dot_dimension_numbers<[1], [0], [0], [1], [0, 0, 1, 1], [], []>} : vector<8x4xf32>, vector<4x8xf32>, vector<8x8xf32> -> vector<8x8xf32>
    %46 = arith.addf %42, %45 : vector<8x8xf32>
    %c0_55 = arith.constant 0 : index
    %c4_56 = arith.constant 4 : index
    %c1_57 = arith.constant 1 : index
    %c0_58 = arith.constant 0 : index
    %47 = vector.load %arg1[%c0_55, %c4_56, %c1_57, %c0_58] : memref<1x16x9x9xf32, #tpu.memory_space<vmem>>, vector<1x4x1x8xf32>
    %48 = vector.shape_cast %47 : vector<1x4x1x8xf32> to vector<4x8xf32>
    %cst_59 = arith.constant dense<0.000000e+00> : vector<8x8xf32>
    %49 = tpu.matmul %15, %48, %cst_59 {dimension_numbers = #tpu.dot_dimension_numbers<[1], [0], [0], [1], [0, 0, 1, 1], [], []>} : vector<8x4xf32>, vector<4x8xf32>, vector<8x8xf32> -> vector<8x8xf32>
    %50 = arith.addf %46, %49 : vector<8x8xf32>
    %c0_60 = arith.constant 0 : index
    %c0_61 = arith.constant 0 : index
    %c1_62 = arith.constant 1 : index
    %c1_63 = arith.constant 1 : index
    %51 = vector.load %arg1[%c0_60, %c0_61, %c1_62, %c1_63] : memref<1x16x9x9xf32, #tpu.memory_space<vmem>>, vector<1x4x1x8xf32>
    %52 = vector.shape_cast %51 : vector<1x4x1x8xf32> to vector<4x8xf32>
    %cst_64 = arith.constant dense<0.000000e+00> : vector<8x8xf32>
    %53 = tpu.matmul %17, %52, %cst_64 {dimension_numbers = #tpu.dot_dimension_numbers<[1], [0], [0], [1], [0, 0, 1, 1], [], []>} : vector<8x4xf32>, vector<4x8xf32>, vector<8x8xf32> -> vector<8x8xf32>
    %54 = arith.addf %50, %53 : vector<8x8xf32>
    %c0_65 = arith.constant 0 : index
    %c0_66 = arith.constant 0 : index
    %c0_67 = arith.constant 0 : index
    %c0_68 = arith.constant 0 : index
    %55 = vector.load %arg5[%c0_65, %c0_66, %c0_67, %c0_68] : memref<1x8x8x8xf32, #tpu.memory_space<vmem>>, vector<1x8x1x8xf32>
    %56 = vector.shape_cast %55 : vector<1x8x1x8xf32> to vector<8x8xf32>
    %57 = vector.shape_cast %54 : vector<8x8xf32> to vector<1x8x1x8xf32>
    tpu.vector_store %arg5[%c0_65, %c0_66, %c0_67, %c0_68], %57 {strides = array<i32>} : memref<1x8x8x8xf32, #tpu.memory_space<vmem>>, vector<1x8x1x8xf32>,
    %58 = vector.broadcast %18 : vector<8x1xf32> to vector<8x8xf32>
    %59 = arith.mulf %54, %58 : vector<8x8xf32>
    %60 = vector.broadcast %19 : vector<8x1xf32> to vector<8x8xf32>
    %61 = arith.addf %59, %60 : vector<8x8xf32>
    %c0_69 = arith.constant 0 : index
    %c0_70 = arith.constant 0 : index
    %c0_71 = arith.constant 0 : index
    %c0_72 = arith.constant 0 : index
    %62 = vector.load %arg6[%c0_69, %c0_70, %c0_71, %c0_72] : memref<1x8x8x8xf32, #tpu.memory_space<vmem>>, vector<1x8x1x8xf32>
    %63 = vector.shape_cast %62 : vector<1x8x1x8xf32> to vector<8x8xf32>
    %64 = vector.shape_cast %61 : vector<8x8xf32> to vector<1x8x1x8xf32>
    tpu.vector_store %arg6[%c0_69, %c0_70, %c0_71, %c0_72], %64 {strides = array<i32>} : memref<1x8x8x8xf32, #tpu.memory_space<vmem>>, vector<1x8x1x8xf32>,
    %cst_73 = arith.constant 0.000000e+00 : f32
    %65 = vector.broadcast %cst_73 : f32 to vector<8x8xf32>
    %66 = arith.subf %65, %61 : vector<8x8xf32>
    %67 = math.exp %66 : vector<8x8xf32>
    %cst_74 = arith.constant 1.000000e+00 : f32
    %68 = vector.broadcast %cst_74 : f32 to vector<8x8xf32>
    %69 = arith.addf %68, %67 : vector<8x8xf32>
    %70 = tpu.reciprocal %69 {approx = true} : vector<8x8xf32> -> vector<8x8xf32>
    %71 = arith.mulf %61, %70 : vector<8x8xf32>
    %c0_75 = arith.constant 0 : index
    %c0_76 = arith.constant 0 : index
    %c0_77 = arith.constant 0 : index
    %c0_78 = arith.constant 0 : index
    %72 = vector.load %arg7[%c0_75, %c0_76, %c0_77, %c0_78] : memref<1x8x8x8xf32, #tpu.memory_space<vmem>>, vector<1x8x1x8xf32>
    %73 = vector.shape_cast %72 : vector<1x8x1x8xf32> to vector<8x8xf32>
    %74 = vector.shape_cast %71 : vector<8x8xf32> to vector<1x8x1x8xf32>
    tpu.vector_store %arg7[%c0_75, %c0_76, %c0_77, %c0_78], %74 {strides = array<i32>} : memref<1x8x8x8xf32, #tpu.memory_space<vmem>>, vector<1x8x1x8xf32>,
    %c0_79 = arith.constant 0 : index
    %c0_80 = arith.constant 0 : index
    %c1_81 = arith.constant 1 : index
    %c0_82 = arith.constant 0 : index
    %75 = vector.load %arg1[%c0_79, %c0_80, %c1_81, %c0_82] : memref<1x16x9x9xf32, #tpu.memory_space<vmem>>, vector<1x4x1x8xf32>
    %76 = vector.shape_cast %75 : vector<1x4x1x8xf32> to vector<4x8xf32>
    %cst_83 = arith.constant dense<0.000000e+00> : vector<8x8xf32>
    %77 = tpu.matmul %1, %76, %cst_83 {dimension_numbers = #tpu.dot_dimension_numbers<[1], [0], [0], [1], [0, 0, 1, 1], [], []>} : vector<8x4xf32>, vector<4x8xf32>, vector<8x8xf32> -> vector<8x8xf32>
    %c0_84 = arith.constant 0 : index
    %c4_85 = arith.constant 4 : index
    %c1_86 = arith.constant 1 : index
    %c0_87 = arith.constant 0 : index
    %78 = vector.load %arg1[%c0_84, %c4_85, %c1_86, %c0_87] : memref<1x16x9x9xf32, #tpu.memory_space<vmem>>, vector<1x4x1x8xf32>
    %79 = vector.shape_cast %78 : vector<1x4x1x8xf32> to vector<4x8xf32>
    %cst_88 = arith.constant dense<0.000000e+00> : vector<8x8xf32>
    %80 = tpu.matmul %3, %79, %cst_88 {dimension_numbers = #tpu.dot_dimension_numbers<[1], [0], [0], [1], [0, 0, 1, 1], [], []>} : vector<8x4xf32>, vector<4x8xf32>, vector<8x8xf32> -> vector<8x8xf32>
    %81 = arith.addf %77, %80 : vector<8x8xf32>
    %c0_89 = arith.constant 0 : index
    %c0_90 = arith.constant 0 : index
    %c1_91 = arith.constant 1 : index
    %c1_92 = arith.constant 1 : index
    %82 = vector.load %arg1[%c0_89, %c0_90, %c1_91, %c1_92] : memref<1x16x9x9xf32, #tpu.memory_space<vmem>>, vector<1x4x1x8xf32>
    %83 = vector.shape_cast %82 : vector<1x4x1x8xf32> to vector<4x8xf32>
    %cst_93 = arith.constant dense<0.000000e+00> : vector<8x8xf32>
    %84 = tpu.matmul %5, %83, %cst_93 {dimension_numbers = #tpu.dot_dimension_numbers<[1], [0], [0], [1], [0, 0, 1, 1], [], []>} : vector<8x4xf32>, vector<4x8xf32>, vector<8x8xf32> -> vector<8x8xf32>
    %85 = arith.addf %81, %84 : vector<8x8xf32>
    %c0_94 = arith.constant 0 : index
    %c8_95 = arith.constant 8 : index
    %c1_96 = arith.constant 1 : index
    %c0_97 = arith.constant 0 : index
    %86 = vector.load %arg1[%c0_94, %c8_95, %c1_96, %c0_97] : memref<1x16x9x9xf32, #tpu.memory_space<vmem>>, vector<1x4x1x8xf32>
    %87 = vector.shape_cast %86 : vector<1x4x1x8xf32> to vector<4x8xf32>
    %cst_98 = arith.constant dense<0.000000e+00> : vector<8x8xf32>
    %88 = tpu.matmul %7, %87, %cst_98 {dimension_numbers = #tpu.dot_dimension_numbers<[1], [0], [0], [1], [0, 0, 1, 1], [], []>} : vector<8x4xf32>, vector<4x8xf32>, vector<8x8xf32> -> vector<8x8xf32>
    %89 = arith.addf %85, %88 : vector<8x8xf32>
    %c0_99 = arith.constant 0 : index
    %c12_100 = arith.constant 12 : index
    %c1_101 = arith.constant 1 : index
    %c0_102 = arith.constant 0 : index
    %90 = vector.load %arg1[%c0_99, %c12_100, %c1_101, %c0_102] : memref<1x16x9x9xf32, #tpu.memory_space<vmem>>, vector<1x4x1x8xf32>
    %91 = vector.shape_cast %90 : vector<1x4x1x8xf32> to vector<4x8xf32>
    %cst_103 = arith.constant dense<0.000000e+00> : vector<8x8xf32>
    %92 = tpu.matmul %9, %91, %cst_103 {dimension_numbers = #tpu.dot_dimension_numbers<[1], [0], [0], [1], [0, 0, 1, 1], [], []>} : vector<8x4xf32>, vector<4x8xf32>, vector<8x8xf32> -> vector<8x8xf32>
    %93 = arith.addf %89, %92 : vector<8x8xf32>
    %c0_104 = arith.constant 0 : index
    %c8_105 = arith.constant 8 : index
    %c1_106 = arith.constant 1 : index
    %c1_107 = arith.constant 1 : index
    %94 = vector.load %arg1[%c0_104, %c8_105, %c1_106, %c1_107] : memref<1x16x9x9xf32, #tpu.memory_space<vmem>>, vector<1x4x1x8xf32>
    %95 = vector.shape_cast %94 : vector<1x4x1x8xf32> to vector<4x8xf32>
    %cst_108 = arith.constant dense<0.000000e+00> : vector<8x8xf32>
    %96 = tpu.matmul %11, %95, %cst_108 {dimension_numbers = #tpu.dot_dimension_numbers<[1], [0], [0], [1], [0, 0, 1, 1], [], []>} : vector<8x4xf32>, vector<4x8xf32>, vector<8x8xf32> -> vector<8x8xf32>
    %97 = arith.addf %93, %96 : vector<8x8xf32>
    %c0_109 = arith.constant 0 : index
    %c0_110 = arith.constant 0 : index
    %c2_111 = arith.constant 2 : index
    %c0_112 = arith.constant 0 : index
    %98 = vector.load %arg1[%c0_109, %c0_110, %c2_111, %c0_112] : memref<1x16x9x9xf32, #tpu.memory_space<vmem>>, vector<1x4x1x8xf32>
    %99 = vector.shape_cast %98 : vector<1x4x1x8xf32> to vector<4x8xf32>
    %cst_113 = arith.constant dense<0.000000e+00> : vector<8x8xf32>
    %100 = tpu.matmul %13, %99, %cst_113 {dimension_numbers = #tpu.dot_dimension_numbers<[1], [0], [0], [1], [0, 0, 1, 1], [], []>} : vector<8x4xf32>, vector<4x8xf32>, vector<8x8xf32> -> vector<8x8xf32>
    %101 = arith.addf %97, %100 : vector<8x8xf32>
    %c0_114 = arith.constant 0 : index
    %c4_115 = arith.constant 4 : index
    %c2_116 = arith.constant 2 : index
    %c0_117 = arith.constant 0 : index
    %102 = vector.load %arg1[%c0_114, %c4_115, %c2_116, %c0_117] : memref<1x16x9x9xf32, #tpu.memory_space<vmem>>, vector<1x4x1x8xf32>
    %103 = vector.shape_cast %102 : vector<1x4x1x8xf32> to vector<4x8xf32>
    %cst_118 = arith.constant dense<0.000000e+00> : vector<8x8xf32>
    %104 = tpu.matmul %15, %103, %cst_118 {dimension_numbers = #tpu.dot_dimension_numbers<[1], [0], [0], [1], [0, 0, 1, 1], [], []>} : vector<8x4xf32>, vector<4x8xf32>, vector<8x8xf32> -> vector<8x8xf32>
    %105 = arith.addf %101, %104 : vector<8x8xf32>
    %c0_119 = arith.constant 0 : index
    %c0_120 = arith.constant 0 : index
    %c2_121 = arith.constant 2 : index
    %c1_122 = arith.constant 1 : index
    %106 = vector.load %arg1[%c0_119, %c0_120, %c2_121, %c1_122] : memref<1x16x9x9xf32, #tpu.memory_space<vmem>>, vector<1x4x1x8xf32>
    %107 = vector.shape_cast %106 : vector<1x4x1x8xf32> to vector<4x8xf32>
    %cst_123 = arith.constant dense<0.000000e+00> : vector<8x8xf32>
    %108 = tpu.matmul %17, %107, %cst_123 {dimension_numbers = #tpu.dot_dimension_numbers<[1], [0], [0], [1], [0, 0, 1, 1], [], []>} : vector<8x4xf32>, vector<4x8xf32>, vector<8x8xf32> -> vector<8x8xf32>
    %109 = arith.addf %105, %108 : vector<8x8xf32>
    %c0_124 = arith.constant 0 : index
    %c0_125 = arith.constant 0 : index
    %c1_126 = arith.constant 1 : index
    %c0_127 = arith.constant 0 : index
    %110 = vector.load %arg5[%c0_124, %c0_125, %c1_126, %c0_127] : memref<1x8x8x8xf32, #tpu.memory_space<vmem>>, vector<1x8x1x8xf32>
    %111 = vector.shape_cast %110 : vector<1x8x1x8xf32> to vector<8x8xf32>
    %112 = vector.shape_cast %109 : vector<8x8xf32> to vector<1x8x1x8xf32>
    tpu.vector_store %arg5[%c0_124, %c0_125, %c1_126, %c0_127], %112 {strides = array<i32>} : memref<1x8x8x8xf32, #tpu.memory_space<vmem>>, vector<1x8x1x8xf32>,
    %113 = vector.broadcast %18 : vector<8x1xf32> to vector<8x8xf32>
    %114 = arith.mulf %109, %113 : vector<8x8xf32>
    %115 = vector.broadcast %19 : vector<8x1xf32> to vector<8x8xf32>
    %116 = arith.addf %114, %115 : vector<8x8xf32>
    %c0_128 = arith.constant 0 : index
    %c0_129 = arith.constant 0 : index
    %c1_130 = arith.constant 1 : index
    %c0_131 = arith.constant 0 : index
    %117 = vector.load %arg6[%c0_128, %c0_129, %c1_130, %c0_131] : memref<1x8x8x8xf32, #tpu.memory_space<vmem>>, vector<1x8x1x8xf32>
    %118 = vector.shape_cast %117 : vector<1x8x1x8xf32> to vector<8x8xf32>
    %119 = vector.shape_cast %116 : vector<8x8xf32> to vector<1x8x1x8xf32>
    tpu.vector_store %arg6[%c0_128, %c0_129, %c1_130, %c0_131], %119 {strides = array<i32>} : memref<1x8x8x8xf32, #tpu.memory_space<vmem>>, vector<1x8x1x8xf32>,
    %cst_132 = arith.constant 0.000000e+00 : f32
    %120 = vector.broadcast %cst_132 : f32 to vector<8x8xf32>
    %121 = arith.subf %120, %116 : vector<8x8xf32>
    %122 = math.exp %121 : vector<8x8xf32>
    %cst_133 = arith.constant 1.000000e+00 : f32
    %123 = vector.broadcast %cst_133 : f32 to vector<8x8xf32>
    %124 = arith.addf %123, %122 : vector<8x8xf32>
    %125 = tpu.reciprocal %124 {approx = true} : vector<8x8xf32> -> vector<8x8xf32>
    %126 = arith.mulf %116, %125 : vector<8x8xf32>
    %c0_134 = arith.constant 0 : index
    %c0_135 = arith.constant 0 : index
    %c1_136 = arith.constant 1 : index
    %c0_137 = arith.constant 0 : index
    %127 = vector.load %arg7[%c0_134, %c0_135, %c1_136, %c0_137] : memref<1x8x8x8xf32, #tpu.memory_space<vmem>>, vector<1x8x1x8xf32>
    %128 = vector.shape_cast %127 : vector<1x8x1x8xf32> to vector<8x8xf32>
    %129 = vector.shape_cast %126 : vector<8x8xf32> to vector<1x8x1x8xf32>
    tpu.vector_store %arg7[%c0_134, %c0_135, %c1_136, %c0_137], %129 {strides = array<i32>} : memref<1x8x8x8xf32, #tpu.memory_space<vmem>>, vector<1x8x1x8xf32>,
    %c0_138 = arith.constant 0 : index
    %c0_139 = arith.constant 0 : index
    %c2_140 = arith.constant 2 : index
    %c0_141 = arith.constant 0 : index
    %130 = vector.load %arg1[%c0_138, %c0_139, %c2_140, %c0_141] : memref<1x16x9x9xf32, #tpu.memory_space<vmem>>, vector<1x4x1x8xf32>
    %131 = vector.shape_cast %130 : vector<1x4x1x8xf32> to vector<4x8xf32>
    %cst_142 = arith.constant dense<0.000000e+00> : vector<8x8xf32>
    %132 = tpu.matmul %1, %131, %cst_142 {dimension_numbers = #tpu.dot_dimension_numbers<[1], [0], [0], [1], [0, 0, 1, 1], [], []>} : vector<8x4xf32>, vector<4x8xf32>, vector<8x8xf32> -> vector<8x8xf32>
    %c0_143 = arith.constant 0 : index
    %c4_144 = arith.constant 4 : index
    %c2_145 = arith.constant 2 : index
    %c0_146 = arith.constant 0 : index
    %133 = vector.load %arg1[%c0_143, %c4_144, %c2_145, %c0_146] : memref<1x16x9x9xf32, #tpu.memory_space<vmem>>, vector<1x4x1x8xf32>
    %134 = vector.shape_cast %133 : vector<1x4x1x8xf32> to vector<4x8xf32>
    %cst_147 = arith.constant dense<0.000000e+00> : vector<8x8xf32>
    %135 = tpu.matmul %3, %134, %cst_147 {dimension_numbers = #tpu.dot_dimension_numbers<[1], [0], [0], [1], [0, 0, 1, 1], [], []>} : vector<8x4xf32>, vector<4x8xf32>, vector<8x8xf32> -> vector<8x8xf32>
    %136 = arith.addf %132, %135 : vector<8x8xf32>
    %c0_148 = arith.constant 0 : index
    %c0_149 = arith.constant 0 : index
    %c2_150 = arith.constant 2 : index
    %c1_151 = arith.constant 1 : index
    %137 = vector.load %arg1[%c0_148, %c0_149, %c2_150, %c1_151] : memref<1x16x9x9xf32, #tpu.memory_space<vmem>>, vector<1x4x1x8xf32>
    %138 = vector.shape_cast %137 : vector<1x4x1x8xf32> to vector<4x8xf32>
    %cst_152 = arith.constant dense<0.000000e+00> : vector<8x8xf32>
    %139 = tpu.matmul %5, %138, %cst_152 {dimension_numbers = #tpu.dot_dimension_numbers<[1], [0], [0], [1], [0, 0, 1, 1], [], []>} : vector<8x4xf32>, vector<4x8xf32>, vector<8x8xf32> -> vector<8x8xf32>
    %140 = arith.addf %136, %139 : vector<8x8xf32>
    %c0_153 = arith.constant 0 : index
    %c8_154 = arith.constant 8 : index
    %c2_155 = arith.constant 2 : index
    %c0_156 = arith.constant 0 : index
    %141 = vector.load %arg1[%c0_153, %c8_154, %c2_155, %c0_156] : memref<1x16x9x9xf32, #tpu.memory_space<vmem>>, vector<1x4x1x8xf32>
    %142 = vector.shape_cast %141 : vector<1x4x1x8xf32> to vector<4x8xf32>
    %cst_157 = arith.constant dense<0.000000e+00> : vector<8x8xf32>
    %143 = tpu.matmul %7, %142, %cst_157 {dimension_numbers = #tpu.dot_dimension_numbers<[1], [0], [0], [1], [0, 0, 1, 1], [], []>} : vector<8x4xf32>, vector<4x8xf32>, vector<8x8xf32> -> vector<8x8xf32>
    %144 = arith.addf %140, %143 : vector<8x8xf32>
    %c0_158 = arith.constant 0 : index
    %c12_159 = arith.constant 12 : index
    %c2_160 = arith.constant 2 : index
    %c0_161 = arith.constant 0 : index
    %145 = vector.load %arg1[%c0_158, %c12_159, %c2_160, %c0_161] : memref<1x16x9x9xf32, #tpu.memory_space<vmem>>, vector<1x4x1x8xf32>
    %146 = vector.shape_cast %145 : vector<1x4x1x8xf32> to vector<4x8xf32>
    %cst_162 = arith.constant dense<0.000000e+00> : vector<8x8xf32>
    %147 = tpu.matmul %9, %146, %cst_162 {dimension_numbers = #tpu.dot_dimension_numbers<[1], [0], [0], [1], [0, 0, 1, 1], [], []>} : vector<8x4xf32>, vector<4x8xf32>, vector<8x8xf32> -> vector<8x8xf32>
    %148 = arith.addf %144, %147 : vector<8x8xf32>
    %c0_163 = arith.constant 0 : index
    %c8_164 = arith.constant 8 : index
    %c2_165 = arith.constant 2 : index
    %c1_166 = arith.constant 1 : index
    %149 = vector.load %arg1[%c0_163, %c8_164, %c2_165, %c1_166] : memref<1x16x9x9xf32, #tpu.memory_space<vmem>>, vector<1x4x1x8xf32>
    %150 = vector.shape_cast %149 : vector<1x4x1x8xf32> to vector<4x8xf32>
    %cst_167 = arith.constant dense<0.000000e+00> : vector<8x8xf32>
    %151 = tpu.matmul %11, %150, %cst_167 {dimension_numbers = #tpu.dot_dimension_numbers<[1], [0], [0], [1], [0, 0, 1, 1], [], []>} : vector<8x4xf32>, vector<4x8xf32>, vector<8x8xf32> -> vector<8x8xf32>
    %152 = arith.addf %148, %151 : vector<8x8xf32>
    %c0_168 = arith.constant 0 : index
    %c0_169 = arith.constant 0 : index
    %c3_170 = arith.constant 3 : index
    %c0_171 = arith.constant 0 : index
    %153 = vector.load %arg1[%c0_168, %c0_169, %c3_170, %c0_171] : memref<1x16x9x9xf32, #tpu.memory_space<vmem>>, vector<1x4x1x8xf32>
    %154 = vector.shape_cast %153 : vector<1x4x1x8xf32> to vector<4x8xf32>
    %cst_172 = arith.constant dense<0.000000e+00> : vector<8x8xf32>
    %155 = tpu.matmul %13, %154, %cst_172 {dimension_numbers = #tpu.dot_dimension_numbers<[1], [0], [0], [1], [0, 0, 1, 1], [], []>} : vector<8x4xf32>, vector<4x8xf32>, vector<8x8xf32> -> vector<8x8xf32>
    %156 = arith.addf %152, %155 : vector<8x8xf32>
    %c0_173 = arith.constant 0 : index
    %c4_174 = arith.constant 4 : index
    %c3_175 = arith.constant 3 : index
    %c0_176 = arith.constant 0 : index
    %157 = vector.load %arg1[%c0_173, %c4_174, %c3_175, %c0_176] : memref<1x16x9x9xf32, #tpu.memory_space<vmem>>, vector<1x4x1x8xf32>
    %158 = vector.shape_cast %157 : vector<1x4x1x8xf32> to vector<4x8xf32>
    %cst_177 = arith.constant dense<0.000000e+00> : vector<8x8xf32>
    %159 = tpu.matmul %15, %158, %cst_177 {dimension_numbers = #tpu.dot_dimension_numbers<[1], [0], [0], [1], [0, 0, 1, 1], [], []>} : vector<8x4xf32>, vector<4x8xf32>, vector<8x8xf32> -> vector<8x8xf32>
    %160 = arith.addf %156, %159 : vector<8x8xf32>
    %c0_178 = arith.constant 0 : index
    %c0_179 = arith.constant 0 : index
    %c3_180 = arith.constant 3 : index
    %c1_181 = arith.constant 1 : index
    %161 = vector.load %arg1[%c0_178, %c0_179, %c3_180, %c1_181] : memref<1x16x9x9xf32, #tpu.memory_space<vmem>>, vector<1x4x1x8xf32>
    %162 = vector.shape_cast %161 : vector<1x4x1x8xf32> to vector<4x8xf32>
    %cst_182 = arith.constant dense<0.000000e+00> : vector<8x8xf32>
    %163 = tpu.matmul %17, %162, %cst_182 {dimension_numbers = #tpu.dot_dimension_numbers<[1], [0], [0], [1], [0, 0, 1, 1], [], []>} : vector<8x4xf32>, vector<4x8xf32>, vector<8x8xf32> -> vector<8x8xf32>
    %164 = arith.addf %160, %163 : vector<8x8xf32>
    %c0_183 = arith.constant 0 : index
    %c0_184 = arith.constant 0 : index
    %c2_185 = arith.constant 2 : index
    %c0_186 = arith.constant 0 : index
    %165 = vector.load %arg5[%c0_183, %c0_184, %c2_185, %c0_186] : memref<1x8x8x8xf32, #tpu.memory_space<vmem>>, vector<1x8x1x8xf32>
    %166 = vector.shape_cast %165 : vector<1x8x1x8xf32> to vector<8x8xf32>
    %167 = vector.shape_cast %164 : vector<8x8xf32> to vector<1x8x1x8xf32>
    tpu.vector_store %arg5[%c0_183, %c0_184, %c2_185, %c0_186], %167 {strides = array<i32>} : memref<1x8x8x8xf32, #tpu.memory_space<vmem>>, vector<1x8x1x8xf32>,
    %168 = vector.broadcast %18 : vector<8x1xf32> to vector<8x8xf32>
    %169 = arith.mulf %164, %168 : vector<8x8xf32>
    %170 = vector.broadcast %19 : vector<8x1xf32> to vector<8x8xf32>
    %171 = arith.addf %169, %170 : vector<8x8xf32>
    %c0_187 = arith.constant 0 : index
    %c0_188 = arith.constant 0 : index
    %c2_189 = arith.constant 2 : index
    %c0_190 = arith.constant 0 : index
    %172 = vector.load %arg6[%c0_187, %c0_188, %c2_189, %c0_190] : memref<1x8x8x8xf32, #tpu.memory_space<vmem>>, vector<1x8x1x8xf32>
    %173 = vector.shape_cast %172 : vector<1x8x1x8xf32> to vector<8x8xf32>
    %174 = vector.shape_cast %171 : vector<8x8xf32> to vector<1x8x1x8xf32>
    tpu.vector_store %arg6[%c0_187, %c0_188, %c2_189, %c0_190], %174 {strides = array<i32>} : memref<1x8x8x8xf32, #tpu.memory_space<vmem>>, vector<1x8x1x8xf32>,
    %cst_191 = arith.constant 0.000000e+00 : f32
    %175 = vector.broadcast %cst_191 : f32 to vector<8x8xf32>
    %176 = arith.subf %175, %171 : vector<8x8xf32>
    %177 = math.exp %176 : vector<8x8xf32>
    %cst_192 = arith.constant 1.000000e+00 : f32
    %178 = vector.broadcast %cst_192 : f32 to vector<8x8xf32>
    %179 = arith.addf %178, %177 : vector<8x8xf32>
    %180 = tpu.reciprocal %179 {approx = true} : vector<8x8xf32> -> vector<8x8xf32>
    %181 = arith.mulf %171, %180 : vector<8x8xf32>
    %c0_193 = arith.constant 0 : index
    %c0_194 = arith.constant 0 : index
    %c2_195 = arith.constant 2 : index
    %c0_196 = arith.constant 0 : index
    %182 = vector.load %arg7[%c0_193, %c0_194, %c2_195, %c0_196] : memref<1x8x8x8xf32, #tpu.memory_space<vmem>>, vector<1x8x1x8xf32>
    %183 = vector.shape_cast %182 : vector<1x8x1x8xf32> to vector<8x8xf32>
    %184 = vector.shape_cast %181 : vector<8x8xf32> to vector<1x8x1x8xf32>
    tpu.vector_store %arg7[%c0_193, %c0_194, %c2_195, %c0_196], %184 {strides = array<i32>} : memref<1x8x8x8xf32, #tpu.memory_space<vmem>>, vector<1x8x1x8xf32>,
    %c0_197 = arith.constant 0 : index
    %c0_198 = arith.constant 0 : index
    %c3_199 = arith.constant 3 : index
    %c0_200 = arith.constant 0 : index
    %185 = vector.load %arg1[%c0_197, %c0_198, %c3_199, %c0_200] : memref<1x16x9x9xf32, #tpu.memory_space<vmem>>, vector<1x4x1x8xf32>
    %186 = vector.shape_cast %185 : vector<1x4x1x8xf32> to vector<4x8xf32>
    %cst_201 = arith.constant dense<0.000000e+00> : vector<8x8xf32>
    %187 = tpu.matmul %1, %186, %cst_201 {dimension_numbers = #tpu.dot_dimension_numbers<[1], [0], [0], [1], [0, 0, 1, 1], [], []>} : vector<8x4xf32>, vector<4x8xf32>, vector<8x8xf32> -> vector<8x8xf32>
    %c0_202 = arith.constant 0 : index
    %c4_203 = arith.constant 4 : index
    %c3_204 = arith.constant 3 : index
    %c0_205 = arith.constant 0 : index
    %188 = vector.load %arg1[%c0_202, %c4_203, %c3_204, %c0_205] : memref<1x16x9x9xf32, #tpu.memory_space<vmem>>, vector<1x4x1x8xf32>
    %189 = vector.shape_cast %188 : vector<1x4x1x8xf32> to vector<4x8xf32>
    %cst_206 = arith.constant dense<0.000000e+00> : vector<8x8xf32>
    %190 = tpu.matmul %3, %189, %cst_206 {dimension_numbers = #tpu.dot_dimension_numbers<[1], [0], [0], [1], [0, 0, 1, 1], [], []>} : vector<8x4xf32>, vector<4x8xf32>, vector<8x8xf32> -> vector<8x8xf32>
    %191 = arith.addf %187, %190 : vector<8x8xf32>
    %c0_207 = arith.constant 0 : index
    %c0_208 = arith.constant 0 : index
    %c3_209 = arith.constant 3 : index
    %c1_210 = arith.constant 1 : index
    %192 = vector.load %arg1[%c0_207, %c0_208, %c3_209, %c1_210] : memref<1x16x9x9xf32, #tpu.memory_space<vmem>>, vector<1x4x1x8xf32>
    %193 = vector.shape_cast %192 : vector<1x4x1x8xf32> to vector<4x8xf32>
    %cst_211 = arith.constant dense<0.000000e+00> : vector<8x8xf32>
    %194 = tpu.matmul %5, %193, %cst_211 {dimension_numbers = #tpu.dot_dimension_numbers<[1], [0], [0], [1], [0, 0, 1, 1], [], []>} : vector<8x4xf32>, vector<4x8xf32>, vector<8x8xf32> -> vector<8x8xf32>
    %195 = arith.addf %191, %194 : vector<8x8xf32>
    %c0_212 = arith.constant 0 : index
    %c8_213 = arith.constant 8 : index
    %c3_214 = arith.constant 3 : index
    %c0_215 = arith.constant 0 : index
    %196 = vector.load %arg1[%c0_212, %c8_213, %c3_214, %c0_215] : memref<1x16x9x9xf32, #tpu.memory_space<vmem>>, vector<1x4x1x8xf32>
    %197 = vector.shape_cast %196 : vector<1x4x1x8xf32> to vector<4x8xf32>
    %cst_216 = arith.constant dense<0.000000e+00> : vector<8x8xf32>
    %198 = tpu.matmul %7, %197, %cst_216 {dimension_numbers = #tpu.dot_dimension_numbers<[1], [0], [0], [1], [0, 0, 1, 1], [], []>} : vector<8x4xf32>, vector<4x8xf32>, vector<8x8xf32> -> vector<8x8xf32>
    %199 = arith.addf %195, %198 : vector<8x8xf32>
    %c0_217 = arith.constant 0 : index
    %c12_218 = arith.constant 12 : index
    %c3_219 = arith.constant 3 : index
    %c0_220 = arith.constant 0 : index
    %200 = vector.load %arg1[%c0_217, %c12_218, %c3_219, %c0_220] : memref<1x16x9x9xf32, #tpu.memory_space<vmem>>, vector<1x4x1x8xf32>
    %201 = vector.shape_cast %200 : vector<1x4x1x8xf32> to vector<4x8xf32>
    %cst_221 = arith.constant dense<0.000000e+00> : vector<8x8xf32>
    %202 = tpu.matmul %9, %201, %cst_221 {dimension_numbers = #tpu.dot_dimension_numbers<[1], [0], [0], [1], [0, 0, 1, 1], [], []>} : vector<8x4xf32>, vector<4x8xf32>, vector<8x8xf32> -> vector<8x8xf32>
    %203 = arith.addf %199, %202 : vector<8x8xf32>
    %c0_222 = arith.constant 0 : index
    %c8_223 = arith.constant 8 : index
    %c3_224 = arith.constant 3 : index
    %c1_225 = arith.constant 1 : index
    %204 = vector.load %arg1[%c0_222, %c8_223, %c3_224, %c1_225] : memref<1x16x9x9xf32, #tpu.memory_space<vmem>>, vector<1x4x1x8xf32>
    %205 = vector.shape_cast %204 : vector<1x4x1x8xf32> to vector<4x8xf32>
    %cst_226 = arith.constant dense<0.000000e+00> : vector<8x8xf32>
    %206 = tpu.matmul %11, %205, %cst_226 {dimension_numbers = #tpu.dot_dimension_numbers<[1], [0], [0], [1], [0, 0, 1, 1], [], []>} : vector<8x4xf32>, vector<4x8xf32>, vector<8x8xf32> -> vector<8x8xf32>
    %207 = arith.addf %203, %206 : vector<8x8xf32>
    %c0_227 = arith.constant 0 : index
    %c0_228 = arith.constant 0 : index
    %c4_229 = arith.constant 4 : index
    %c0_230 = arith.constant 0 : index
    %208 = vector.load %arg1[%c0_227, %c0_228, %c4_229, %c0_230] : memref<1x16x9x9xf32, #tpu.memory_space<vmem>>, vector<1x4x1x8xf32>
    %209 = vector.shape_cast %208 : vector<1x4x1x8xf32> to vector<4x8xf32>
    %cst_231 = arith.constant dense<0.000000e+00> : vector<8x8xf32>
    %210 = tpu.matmul %13, %209, %cst_231 {dimension_numbers = #tpu.dot_dimension_numbers<[1], [0], [0], [1], [0, 0, 1, 1], [], []>} : vector<8x4xf32>, vector<4x8xf32>, vector<8x8xf32> -> vector<8x8xf32>
    %211 = arith.addf %207, %210 : vector<8x8xf32>
    %c0_232 = arith.constant 0 : index
    %c4_233 = arith.constant 4 : index
    %c4_234 = arith.constant 4 : index
    %c0_235 = arith.constant 0 : index
    %212 = vector.load %arg1[%c0_232, %c4_233, %c4_234, %c0_235] : memref<1x16x9x9xf32, #tpu.memory_space<vmem>>, vector<1x4x1x8xf32>
    %213 = vector.shape_cast %212 : vector<1x4x1x8xf32> to vector<4x8xf32>
    %cst_236 = arith.constant dense<0.000000e+00> : vector<8x8xf32>
    %214 = tpu.matmul %15, %213, %cst_236 {dimension_numbers = #tpu.dot_dimension_numbers<[1], [0], [0], [1], [0, 0, 1, 1], [], []>} : vector<8x4xf32>, vector<4x8xf32>, vector<8x8xf32> -> vector<8x8xf32>
    %215 = arith.addf %211, %214 : vector<8x8xf32>
    %c0_237 = arith.constant 0 : index
    %c0_238 = arith.constant 0 : index
    %c4_239 = arith.constant 4 : index
    %c1_240 = arith.constant 1 : index
    %216 = vector.load %arg1[%c0_237, %c0_238, %c4_239, %c1_240] : memref<1x16x9x9xf32, #tpu.memory_space<vmem>>, vector<1x4x1x8xf32>
    %217 = vector.shape_cast %216 : vector<1x4x1x8xf32> to vector<4x8xf32>
    %cst_241 = arith.constant dense<0.000000e+00> : vector<8x8xf32>
    %218 = tpu.matmul %17, %217, %cst_241 {dimension_numbers = #tpu.dot_dimension_numbers<[1], [0], [0], [1], [0, 0, 1, 1], [], []>} : vector<8x4xf32>, vector<4x8xf32>, vector<8x8xf32> -> vector<8x8xf32>
    %219 = arith.addf %215, %218 : vector<8x8xf32>
    %c0_242 = arith.constant 0 : index
    %c0_243 = arith.constant 0 : index
    %c3_244 = arith.constant 3 : index
    %c0_245 = arith.constant 0 : index
    %220 = vector.load %arg5[%c0_242, %c0_243, %c3_244, %c0_245] : memref<1x8x8x8xf32, #tpu.memory_space<vmem>>, vector<1x8x1x8xf32>
    %221 = vector.shape_cast %220 : vector<1x8x1x8xf32> to vector<8x8xf32>
    %222 = vector.shape_cast %219 : vector<8x8xf32> to vector<1x8x1x8xf32>
    tpu.vector_store %arg5[%c0_242, %c0_243, %c3_244, %c0_245], %222 {strides = array<i32>} : memref<1x8x8x8xf32, #tpu.memory_space<vmem>>, vector<1x8x1x8xf32>,
    %223 = vector.broadcast %18 : vector<8x1xf32> to vector<8x8xf32>
    %224 = arith.mulf %219, %223 : vector<8x8xf32>
    %225 = vector.broadcast %19 : vector<8x1xf32> to vector<8x8xf32>
    %226 = arith.addf %224, %225 : vector<8x8xf32>
    %c0_246 = arith.constant 0 : index
    %c0_247 = arith.constant 0 : index
    %c3_248 = arith.constant 3 : index
    %c0_249 = arith.constant 0 : index
    %227 = vector.load %arg6[%c0_246, %c0_247, %c3_248, %c0_249] : memref<1x8x8x8xf32, #tpu.memory_space<vmem>>, vector<1x8x1x8xf32>
    %228 = vector.shape_cast %227 : vector<1x8x1x8xf32> to vector<8x8xf32>
    %229 = vector.shape_cast %226 : vector<8x8xf32> to vector<1x8x1x8xf32>
    tpu.vector_store %arg6[%c0_246, %c0_247, %c3_248, %c0_249], %229 {strides = array<i32>} : memref<1x8x8x8xf32, #tpu.memory_space<vmem>>, vector<1x8x1x8xf32>,
    %cst_250 = arith.constant 0.000000e+00 : f32
    %230 = vector.broadcast %cst_250 : f32 to vector<8x8xf32>
    %231 = arith.subf %230, %226 : vector<8x8xf32>
    %232 = math.exp %231 : vector<8x8xf32>
    %cst_251 = arith.constant 1.000000e+00 : f32
    %233 = vector.broadcast %cst_251 : f32 to vector<8x8xf32>
    %234 = arith.addf %233, %232 : vector<8x8xf32>
    %235 = tpu.reciprocal %234 {approx = true} : vector<8x8xf32> -> vector<8x8xf32>
    %236 = arith.mulf %226, %235 : vector<8x8xf32>
    %c0_252 = arith.constant 0 : index
    %c0_253 = arith.constant 0 : index
    %c3_254 = arith.constant 3 : index
    %c0_255 = arith.constant 0 : index
    %237 = vector.load %arg7[%c0_252, %c0_253, %c3_254, %c0_255] : memref<1x8x8x8xf32, #tpu.memory_space<vmem>>, vector<1x8x1x8xf32>
    %238 = vector.shape_cast %237 : vector<1x8x1x8xf32> to vector<8x8xf32>
    %239 = vector.shape_cast %236 : vector<8x8xf32> to vector<1x8x1x8xf32>
    tpu.vector_store %arg7[%c0_252, %c0_253, %c3_254, %c0_255], %239 {strides = array<i32>} : memref<1x8x8x8xf32, #tpu.memory_space<vmem>>, vector<1x8x1x8xf32>,
    %c0_256 = arith.constant 0 : index
    %c0_257 = arith.constant 0 : index
    %c4_258 = arith.constant 4 : index
    %c0_259 = arith.constant 0 : index
    %240 = vector.load %arg1[%c0_256, %c0_257, %c4_258, %c0_259] : memref<1x16x9x9xf32, #tpu.memory_space<vmem>>, vector<1x4x1x8xf32>
    %241 = vector.shape_cast %240 : vector<1x4x1x8xf32> to vector<4x8xf32>
    %cst_260 = arith.constant dense<0.000000e+00> : vector<8x8xf32>
    %242 = tpu.matmul %1, %241, %cst_260 {dimension_numbers = #tpu.dot_dimension_numbers<[1], [0], [0], [1], [0, 0, 1, 1], [], []>} : vector<8x4xf32>, vector<4x8xf32>, vector<8x8xf32> -> vector<8x8xf32>
    %c0_261 = arith.constant 0 : index
    %c4_262 = arith.constant 4 : index
    %c4_263 = arith.constant 4 : index
    %c0_264 = arith.constant 0 : index
    %243 = vector.load %arg1[%c0_261, %c4_262, %c4_263, %c0_264] : memref<1x16x9x9xf32, #tpu.memory_space<vmem>>, vector<1x4x1x8xf32>
    %244 = vector.shape_cast %243 : vector<1x4x1x8xf32> to vector<4x8xf32>
    %cst_265 = arith.constant dense<0.000000e+00> : vector<8x8xf32>
    %245 = tpu.matmul %3, %244, %cst_265 {dimension_numbers = #tpu.dot_dimension_numbers<[1], [0], [0], [1], [0, 0, 1, 1], [], []>} : vector<8x4xf32>, vector<4x8xf32>, vector<8x8xf32> -> vector<8x8xf32>
    %246 = arith.addf %242, %245 : vector<8x8xf32>
    %c0_266 = arith.constant 0 : index
    %c0_267 = arith.constant 0 : index
    %c4_268 = arith.constant 4 : index
    %c1_269 = arith.constant 1 : index
    %247 = vector.load %arg1[%c0_266, %c0_267, %c4_268, %c1_269] : memref<1x16x9x9xf32, #tpu.memory_space<vmem>>, vector<1x4x1x8xf32>
    %248 = vector.shape_cast %247 : vector<1x4x1x8xf32> to vector<4x8xf32>
    %cst_270 = arith.constant dense<0.000000e+00> : vector<8x8xf32>
    %249 = tpu.matmul %5, %248, %cst_270 {dimension_numbers = #tpu.dot_dimension_numbers<[1], [0], [0], [1], [0, 0, 1, 1], [], []>} : vector<8x4xf32>, vector<4x8xf32>, vector<8x8xf32> -> vector<8x8xf32>
    %250 = arith.addf %246, %249 : vector<8x8xf32>
    %c0_271 = arith.constant 0 : index
    %c8_272 = arith.constant 8 : index
    %c4_273 = arith.constant 4 : index
    %c0_274 = arith.constant 0 : index
    %251 = vector.load %arg1[%c0_271, %c8_272, %c4_273, %c0_274] : memref<1x16x9x9xf32, #tpu.memory_space<vmem>>, vector<1x4x1x8xf32>
    %252 = vector.shape_cast %251 : vector<1x4x1x8xf32> to vector<4x8xf32>
    %cst_275 = arith.constant dense<0.000000e+00> : vector<8x8xf32>
    %253 = tpu.matmul %7, %252, %cst_275 {dimension_numbers = #tpu.dot_dimension_numbers<[1], [0], [0], [1], [0, 0, 1, 1], [], []>} : vector<8x4xf32>, vector<4x8xf32>, vector<8x8xf32> -> vector<8x8xf32>
    %254 = arith.addf %250, %253 : vector<8x8xf32>
    %c0_276 = arith.constant 0 : index
    %c12_277 = arith.constant 12 : index
    %c4_278 = arith.constant 4 : index
    %c0_279 = arith.constant 0 : index
    %255 = vector.load %arg1[%c0_276, %c12_277, %c4_278, %c0_279] : memref<1x16x9x9xf32, #tpu.memory_space<vmem>>, vector<1x4x1x8xf32>
    %256 = vector.shape_cast %255 : vector<1x4x1x8xf32> to vector<4x8xf32>
    %cst_280 = arith.constant dense<0.000000e+00> : vector<8x8xf32>
    %257 = tpu.matmul %9, %256, %cst_280 {dimension_numbers = #tpu.dot_dimension_numbers<[1], [0], [0], [1], [0, 0, 1, 1], [], []>} : vector<8x4xf32>, vector<4x8xf32>, vector<8x8xf32> -> vector<8x8xf32>
    %258 = arith.addf %254, %257 : vector<8x8xf32>
    %c0_281 = arith.constant 0 : index
    %c8_282 = arith.constant 8 : index
    %c4_283 = arith.constant 4 : index
    %c1_284 = arith.constant 1 : index
    %259 = vector.load %arg1[%c0_281, %c8_282, %c4_283, %c1_284] : memref<1x16x9x9xf32, #tpu.memory_space<vmem>>, vector<1x4x1x8xf32>
    %260 = vector.shape_cast %259 : vector<1x4x1x8xf32> to vector<4x8xf32>
    %cst_285 = arith.constant dense<0.000000e+00> : vector<8x8xf32>
    %261 = tpu.matmul %11, %260, %cst_285 {dimension_numbers = #tpu.dot_dimension_numbers<[1], [0], [0], [1], [0, 0, 1, 1], [], []>} : vector<8x4xf32>, vector<4x8xf32>, vector<8x8xf32> -> vector<8x8xf32>
    %262 = arith.addf %258, %261 : vector<8x8xf32>
    %c0_286 = arith.constant 0 : index
    %c0_287 = arith.constant 0 : index
    %c5_288 = arith.constant 5 : index
    %c0_289 = arith.constant 0 : index
    %263 = vector.load %arg1[%c0_286, %c0_287, %c5_288, %c0_289] : memref<1x16x9x9xf32, #tpu.memory_space<vmem>>, vector<1x4x1x8xf32>
    %264 = vector.shape_cast %263 : vector<1x4x1x8xf32> to vector<4x8xf32>
    %cst_290 = arith.constant dense<0.000000e+00> : vector<8x8xf32>
    %265 = tpu.matmul %13, %264, %cst_290 {dimension_numbers = #tpu.dot_dimension_numbers<[1], [0], [0], [1], [0, 0, 1, 1], [], []>} : vector<8x4xf32>, vector<4x8xf32>, vector<8x8xf32> -> vector<8x8xf32>
    %266 = arith.addf %262, %265 : vector<8x8xf32>
    %c0_291 = arith.constant 0 : index
    %c4_292 = arith.constant 4 : index
    %c5_293 = arith.constant 5 : index
    %c0_294 = arith.constant 0 : index
    %267 = vector.load %arg1[%c0_291, %c4_292, %c5_293, %c0_294] : memref<1x16x9x9xf32, #tpu.memory_space<vmem>>, vector<1x4x1x8xf32>
    %268 = vector.shape_cast %267 : vector<1x4x1x8xf32> to vector<4x8xf32>
    %cst_295 = arith.constant dense<0.000000e+00> : vector<8x8xf32>
    %269 = tpu.matmul %15, %268, %cst_295 {dimension_numbers = #tpu.dot_dimension_numbers<[1], [0], [0], [1], [0, 0, 1, 1], [], []>} : vector<8x4xf32>, vector<4x8xf32>, vector<8x8xf32> -> vector<8x8xf32>
    %270 = arith.addf %266, %269 : vector<8x8xf32>
    %c0_296 = arith.constant 0 : index
    %c0_297 = arith.constant 0 : index
    %c5_298 = arith.constant 5 : index
    %c1_299 = arith.constant 1 : index
    %271 = vector.load %arg1[%c0_296, %c0_297, %c5_298, %c1_299] : memref<1x16x9x9xf32, #tpu.memory_space<vmem>>, vector<1x4x1x8xf32>
    %272 = vector.shape_cast %271 : vector<1x4x1x8xf32> to vector<4x8xf32>
    %cst_300 = arith.constant dense<0.000000e+00> : vector<8x8xf32>
    %273 = tpu.matmul %17, %272, %cst_300 {dimension_numbers = #tpu.dot_dimension_numbers<[1], [0], [0], [1], [0, 0, 1, 1], [], []>} : vector<8x4xf32>, vector<4x8xf32>, vector<8x8xf32> -> vector<8x8xf32>
    %274 = arith.addf %270, %273 : vector<8x8xf32>
    %c0_301 = arith.constant 0 : index
    %c0_302 = arith.constant 0 : index
    %c4_303 = arith.constant 4 : index
    %c0_304 = arith.constant 0 : index
    %275 = vector.load %arg5[%c0_301, %c0_302, %c4_303, %c0_304] : memref<1x8x8x8xf32, #tpu.memory_space<vmem>>, vector<1x8x1x8xf32>
    %276 = vector.shape_cast %275 : vector<1x8x1x8xf32> to vector<8x8xf32>
    %277 = vector.shape_cast %274 : vector<8x8xf32> to vector<1x8x1x8xf32>
    tpu.vector_store %arg5[%c0_301, %c0_302, %c4_303, %c0_304], %277 {strides = array<i32>} : memref<1x8x8x8xf32, #tpu.memory_space<vmem>>, vector<1x8x1x8xf32>,
    %278 = vector.broadcast %18 : vector<8x1xf32> to vector<8x8xf32>
    %279 = arith.mulf %274, %278 : vector<8x8xf32>
    %280 = vector.broadcast %19 : vector<8x1xf32> to vector<8x8xf32>
    %281 = arith.addf %279, %280 : vector<8x8xf32>
    %c0_305 = arith.constant 0 : index
    %c0_306 = arith.constant 0 : index
    %c4_307 = arith.constant 4 : index
    %c0_308 = arith.constant 0 : index
    %282 = vector.load %arg6[%c0_305, %c0_306, %c4_307, %c0_308] : memref<1x8x8x8xf32, #tpu.memory_space<vmem>>, vector<1x8x1x8xf32>
    %283 = vector.shape_cast %282 : vector<1x8x1x8xf32> to vector<8x8xf32>
    %284 = vector.shape_cast %281 : vector<8x8xf32> to vector<1x8x1x8xf32>
    tpu.vector_store %arg6[%c0_305, %c0_306, %c4_307, %c0_308], %284 {strides = array<i32>} : memref<1x8x8x8xf32, #tpu.memory_space<vmem>>, vector<1x8x1x8xf32>,
    %cst_309 = arith.constant 0.000000e+00 : f32
    %285 = vector.broadcast %cst_309 : f32 to vector<8x8xf32>
    %286 = arith.subf %285, %281 : vector<8x8xf32>
    %287 = math.exp %286 : vector<8x8xf32>
    %cst_310 = arith.constant 1.000000e+00 : f32
    %288 = vector.broadcast %cst_310 : f32 to vector<8x8xf32>
    %289 = arith.addf %288, %287 : vector<8x8xf32>
    %290 = tpu.reciprocal %289 {approx = true} : vector<8x8xf32> -> vector<8x8xf32>
    %291 = arith.mulf %281, %290 : vector<8x8xf32>
    %c0_311 = arith.constant 0 : index
    %c0_312 = arith.constant 0 : index
    %c4_313 = arith.constant 4 : index
    %c0_314 = arith.constant 0 : index
    %292 = vector.load %arg7[%c0_311, %c0_312, %c4_313, %c0_314] : memref<1x8x8x8xf32, #tpu.memory_space<vmem>>, vector<1x8x1x8xf32>
    %293 = vector.shape_cast %292 : vector<1x8x1x8xf32> to vector<8x8xf32>
    %294 = vector.shape_cast %291 : vector<8x8xf32> to vector<1x8x1x8xf32>
    tpu.vector_store %arg7[%c0_311, %c0_312, %c4_313, %c0_314], %294 {strides = array<i32>} : memref<1x8x8x8xf32, #tpu.memory_space<vmem>>, vector<1x8x1x8xf32>,
    %c0_315 = arith.constant 0 : index
    %c0_316 = arith.constant 0 : index
    %c5_317 = arith.constant 5 : index
    %c0_318 = arith.constant 0 : index
    %295 = vector.load %arg1[%c0_315, %c0_316, %c5_317, %c0_318] : memref<1x16x9x9xf32, #tpu.memory_space<vmem>>, vector<1x4x1x8xf32>
    %296 = vector.shape_cast %295 : vector<1x4x1x8xf32> to vector<4x8xf32>
    %cst_319 = arith.constant dense<0.000000e+00> : vector<8x8xf32>
    %297 = tpu.matmul %1, %296, %cst_319 {dimension_numbers = #tpu.dot_dimension_numbers<[1], [0], [0], [1], [0, 0, 1, 1], [], []>} : vector<8x4xf32>, vector<4x8xf32>, vector<8x8xf32> -> vector<8x8xf32>
    %c0_320 = arith.constant 0 : index
    %c4_321 = arith.constant 4 : index
    %c5_322 = arith.constant 5 : index
    %c0_323 = arith.constant 0 : index
    %298 = vector.load %arg1[%c0_320, %c4_321, %c5_322, %c0_323] : memref<1x16x9x9xf32, #tpu.memory_space<vmem>>, vector<1x4x1x8xf32>
    %299 = vector.shape_cast %298 : vector<1x4x1x8xf32> to vector<4x8xf32>
    %cst_324 = arith.constant dense<0.000000e+00> : vector<8x8xf32>
    %300 = tpu.matmul %3, %299, %cst_324 {dimension_numbers = #tpu.dot_dimension_numbers<[1], [0], [0], [1], [0, 0, 1, 1], [], []>} : vector<8x4xf32>, vector<4x8xf32>, vector<8x8xf32> -> vector<8x8xf32>
    %301 = arith.addf %297, %300 : vector<8x8xf32>
    %c0_325 = arith.constant 0 : index
    %c0_326 = arith.constant 0 : index
    %c5_327 = arith.constant 5 : index
    %c1_328 = arith.constant 1 : index
    %302 = vector.load %arg1[%c0_325, %c0_326, %c5_327, %c1_328] : memref<1x16x9x9xf32, #tpu.memory_space<vmem>>, vector<1x4x1x8xf32>
    %303 = vector.shape_cast %302 : vector<1x4x1x8xf32> to vector<4x8xf32>
    %cst_329 = arith.constant dense<0.000000e+00> : vector<8x8xf32>
    %304 = tpu.matmul %5, %303, %cst_329 {dimension_numbers = #tpu.dot_dimension_numbers<[1], [0], [0], [1], [0, 0, 1, 1], [], []>} : vector<8x4xf32>, vector<4x8xf32>, vector<8x8xf32> -> vector<8x8xf32>
    %305 = arith.addf %301, %304 : vector<8x8xf32>
    %c0_330 = arith.constant 0 : index
    %c8_331 = arith.constant 8 : index
    %c5_332 = arith.constant 5 : index
    %c0_333 = arith.constant 0 : index
    %306 = vector.load %arg1[%c0_330, %c8_331, %c5_332, %c0_333] : memref<1x16x9x9xf32, #tpu.memory_space<vmem>>, vector<1x4x1x8xf32>
    %307 = vector.shape_cast %306 : vector<1x4x1x8xf32> to vector<4x8xf32>
    %cst_334 = arith.constant dense<0.000000e+00> : vector<8x8xf32>
    %308 = tpu.matmul %7, %307, %cst_334 {dimension_numbers = #tpu.dot_dimension_numbers<[1], [0], [0], [1], [0, 0, 1, 1], [], []>} : vector<8x4xf32>, vector<4x8xf32>, vector<8x8xf32> -> vector<8x8xf32>
    %309 = arith.addf %305, %308 : vector<8x8xf32>
    %c0_335 = arith.constant 0 : index
    %c12_336 = arith.constant 12 : index
    %c5_337 = arith.constant 5 : index
    %c0_338 = arith.constant 0 : index
    %310 = vector.load %arg1[%c0_335, %c12_336, %c5_337, %c0_338] : memref<1x16x9x9xf32, #tpu.memory_space<vmem>>, vector<1x4x1x8xf32>
    %311 = vector.shape_cast %310 : vector<1x4x1x8xf32> to vector<4x8xf32>
    %cst_339 = arith.constant dense<0.000000e+00> : vector<8x8xf32>
    %312 = tpu.matmul %9, %311, %cst_339 {dimension_numbers = #tpu.dot_dimension_numbers<[1], [0], [0], [1], [0, 0, 1, 1], [], []>} : vector<8x4xf32>, vector<4x8xf32>, vector<8x8xf32> -> vector<8x8xf32>
    %313 = arith.addf %309, %312 : vector<8x8xf32>
    %c0_340 = arith.constant 0 : index
    %c8_341 = arith.constant 8 : index
    %c5_342 = arith.constant 5 : index
    %c1_343 = arith.constant 1 : index
    %314 = vector.load %arg1[%c0_340, %c8_341, %c5_342, %c1_343] : memref<1x16x9x9xf32, #tpu.memory_space<vmem>>, vector<1x4x1x8xf32>
    %315 = vector.shape_cast %314 : vector<1x4x1x8xf32> to vector<4x8xf32>
    %cst_344 = arith.constant dense<0.000000e+00> : vector<8x8xf32>
    %316 = tpu.matmul %11, %315, %cst_344 {dimension_numbers = #tpu.dot_dimension_numbers<[1], [0], [0], [1], [0, 0, 1, 1], [], []>} : vector<8x4xf32>, vector<4x8xf32>, vector<8x8xf32> -> vector<8x8xf32>
    %317 = arith.addf %313, %316 : vector<8x8xf32>
    %c0_345 = arith.constant 0 : index
    %c0_346 = arith.constant 0 : index
    %c6_347 = arith.constant 6 : index
    %c0_348 = arith.constant 0 : index
    %318 = vector.load %arg1[%c0_345, %c0_346, %c6_347, %c0_348] : memref<1x16x9x9xf32, #tpu.memory_space<vmem>>, vector<1x4x1x8xf32>
    %319 = vector.shape_cast %318 : vector<1x4x1x8xf32> to vector<4x8xf32>
    %cst_349 = arith.constant dense<0.000000e+00> : vector<8x8xf32>
    %320 = tpu.matmul %13, %319, %cst_349 {dimension_numbers = #tpu.dot_dimension_numbers<[1], [0], [0], [1], [0, 0, 1, 1], [], []>} : vector<8x4xf32>, vector<4x8xf32>, vector<8x8xf32> -> vector<8x8xf32>
    %321 = arith.addf %317, %320 : vector<8x8xf32>
    %c0_350 = arith.constant 0 : index
    %c4_351 = arith.constant 4 : index
    %c6_352 = arith.constant 6 : index
    %c0_353 = arith.constant 0 : index
    %322 = vector.load %arg1[%c0_350, %c4_351, %c6_352, %c0_353] : memref<1x16x9x9xf32, #tpu.memory_space<vmem>>, vector<1x4x1x8xf32>
    %323 = vector.shape_cast %322 : vector<1x4x1x8xf32> to vector<4x8xf32>
    %cst_354 = arith.constant dense<0.000000e+00> : vector<8x8xf32>
    %324 = tpu.matmul %15, %323, %cst_354 {dimension_numbers = #tpu.dot_dimension_numbers<[1], [0], [0], [1], [0, 0, 1, 1], [], []>} : vector<8x4xf32>, vector<4x8xf32>, vector<8x8xf32> -> vector<8x8xf32>
    %325 = arith.addf %321, %324 : vector<8x8xf32>
    %c0_355 = arith.constant 0 : index
    %c0_356 = arith.constant 0 : index
    %c6_357 = arith.constant 6 : index
    %c1_358 = arith.constant 1 : index
    %326 = vector.load %arg1[%c0_355, %c0_356, %c6_357, %c1_358] : memref<1x16x9x9xf32, #tpu.memory_space<vmem>>, vector<1x4x1x8xf32>
    %327 = vector.shape_cast %326 : vector<1x4x1x8xf32> to vector<4x8xf32>
    %cst_359 = arith.constant dense<0.000000e+00> : vector<8x8xf32>
    %328 = tpu.matmul %17, %327, %cst_359 {dimension_numbers = #tpu.dot_dimension_numbers<[1], [0], [0], [1], [0, 0, 1, 1], [], []>} : vector<8x4xf32>, vector<4x8xf32>, vector<8x8xf32> -> vector<8x8xf32>
    %329 = arith.addf %325, %328 : vector<8x8xf32>
    %c0_360 = arith.constant 0 : index
    %c0_361 = arith.constant 0 : index
    %c5_362 = arith.constant 5 : index
    %c0_363 = arith.constant 0 : index
    %330 = vector.load %arg5[%c0_360, %c0_361, %c5_362, %c0_363] : memref<1x8x8x8xf32, #tpu.memory_space<vmem>>, vector<1x8x1x8xf32>
    %331 = vector.shape_cast %330 : vector<1x8x1x8xf32> to vector<8x8xf32>
    %332 = vector.shape_cast %329 : vector<8x8xf32> to vector<1x8x1x8xf32>
    tpu.vector_store %arg5[%c0_360, %c0_361, %c5_362, %c0_363], %332 {strides = array<i32>} : memref<1x8x8x8xf32, #tpu.memory_space<vmem>>, vector<1x8x1x8xf32>,
    %333 = vector.broadcast %18 : vector<8x1xf32> to vector<8x8xf32>
    %334 = arith.mulf %329, %333 : vector<8x8xf32>
    %335 = vector.broadcast %19 : vector<8x1xf32> to vector<8x8xf32>
    %336 = arith.addf %334, %335 : vector<8x8xf32>
    %c0_364 = arith.constant 0 : index
    %c0_365 = arith.constant 0 : index
    %c5_366 = arith.constant 5 : index
    %c0_367 = arith.constant 0 : index
    %337 = vector.load %arg6[%c0_364, %c0_365, %c5_366, %c0_367] : memref<1x8x8x8xf32, #tpu.memory_space<vmem>>, vector<1x8x1x8xf32>
    %338 = vector.shape_cast %337 : vector<1x8x1x8xf32> to vector<8x8xf32>
    %339 = vector.shape_cast %336 : vector<8x8xf32> to vector<1x8x1x8xf32>
    tpu.vector_store %arg6[%c0_364, %c0_365, %c5_366, %c0_367], %339 {strides = array<i32>} : memref<1x8x8x8xf32, #tpu.memory_space<vmem>>, vector<1x8x1x8xf32>,
    %cst_368 = arith.constant 0.000000e+00 : f32
    %340 = vector.broadcast %cst_368 : f32 to vector<8x8xf32>
    %341 = arith.subf %340, %336 : vector<8x8xf32>
    %342 = math.exp %341 : vector<8x8xf32>
    %cst_369 = arith.constant 1.000000e+00 : f32
    %343 = vector.broadcast %cst_369 : f32 to vector<8x8xf32>
    %344 = arith.addf %343, %342 : vector<8x8xf32>
    %345 = tpu.reciprocal %344 {approx = true} : vector<8x8xf32> -> vector<8x8xf32>
    %346 = arith.mulf %336, %345 : vector<8x8xf32>
    %c0_370 = arith.constant 0 : index
    %c0_371 = arith.constant 0 : index
    %c5_372 = arith.constant 5 : index
    %c0_373 = arith.constant 0 : index
    %347 = vector.load %arg7[%c0_370, %c0_371, %c5_372, %c0_373] : memref<1x8x8x8xf32, #tpu.memory_space<vmem>>, vector<1x8x1x8xf32>
    %348 = vector.shape_cast %347 : vector<1x8x1x8xf32> to vector<8x8xf32>
    %349 = vector.shape_cast %346 : vector<8x8xf32> to vector<1x8x1x8xf32>
    tpu.vector_store %arg7[%c0_370, %c0_371, %c5_372, %c0_373], %349 {strides = array<i32>} : memref<1x8x8x8xf32, #tpu.memory_space<vmem>>, vector<1x8x1x8xf32>,
    %c0_374 = arith.constant 0 : index
    %c0_375 = arith.constant 0 : index
    %c6_376 = arith.constant 6 : index
    %c0_377 = arith.constant 0 : index
    %350 = vector.load %arg1[%c0_374, %c0_375, %c6_376, %c0_377] : memref<1x16x9x9xf32, #tpu.memory_space<vmem>>, vector<1x4x1x8xf32>
    %351 = vector.shape_cast %350 : vector<1x4x1x8xf32> to vector<4x8xf32>
    %cst_378 = arith.constant dense<0.000000e+00> : vector<8x8xf32>
    %352 = tpu.matmul %1, %351, %cst_378 {dimension_numbers = #tpu.dot_dimension_numbers<[1], [0], [0], [1], [0, 0, 1, 1], [], []>} : vector<8x4xf32>, vector<4x8xf32>, vector<8x8xf32> -> vector<8x8xf32>
    %c0_379 = arith.constant 0 : index
    %c4_380 = arith.constant 4 : index
    %c6_381 = arith.constant 6 : index
    %c0_382 = arith.constant 0 : index
    %353 = vector.load %arg1[%c0_379, %c4_380, %c6_381, %c0_382] : memref<1x16x9x9xf32, #tpu.memory_space<vmem>>, vector<1x4x1x8xf32>
    %354 = vector.shape_cast %353 : vector<1x4x1x8xf32> to vector<4x8xf32>
    %cst_383 = arith.constant dense<0.000000e+00> : vector<8x8xf32>
    %355 = tpu.matmul %3, %354, %cst_383 {dimension_numbers = #tpu.dot_dimension_numbers<[1], [0], [0], [1], [0, 0, 1, 1], [], []>} : vector<8x4xf32>, vector<4x8xf32>, vector<8x8xf32> -> vector<8x8xf32>
    %356 = arith.addf %352, %355 : vector<8x8xf32>
    %c0_384 = arith.constant 0 : index
    %c0_385 = arith.constant 0 : index
    %c6_386 = arith.constant 6 : index
    %c1_387 = arith.constant 1 : index
    %357 = vector.load %arg1[%c0_384, %c0_385, %c6_386, %c1_387] : memref<1x16x9x9xf32, #tpu.memory_space<vmem>>, vector<1x4x1x8xf32>
    %358 = vector.shape_cast %357 : vector<1x4x1x8xf32> to vector<4x8xf32>
    %cst_388 = arith.constant dense<0.000000e+00> : vector<8x8xf32>
    %359 = tpu.matmul %5, %358, %cst_388 {dimension_numbers = #tpu.dot_dimension_numbers<[1], [0], [0], [1], [0, 0, 1, 1], [], []>} : vector<8x4xf32>, vector<4x8xf32>, vector<8x8xf32> -> vector<8x8xf32>
    %360 = arith.addf %356, %359 : vector<8x8xf32>
    %c0_389 = arith.constant 0 : index
    %c8_390 = arith.constant 8 : index
    %c6_391 = arith.constant 6 : index
    %c0_392 = arith.constant 0 : index
    %361 = vector.load %arg1[%c0_389, %c8_390, %c6_391, %c0_392] : memref<1x16x9x9xf32, #tpu.memory_space<vmem>>, vector<1x4x1x8xf32>
    %362 = vector.shape_cast %361 : vector<1x4x1x8xf32> to vector<4x8xf32>
    %cst_393 = arith.constant dense<0.000000e+00> : vector<8x8xf32>
    %363 = tpu.matmul %7, %362, %cst_393 {dimension_numbers = #tpu.dot_dimension_numbers<[1], [0], [0], [1], [0, 0, 1, 1], [], []>} : vector<8x4xf32>, vector<4x8xf32>, vector<8x8xf32> -> vector<8x8xf32>
    %364 = arith.addf %360, %363 : vector<8x8xf32>
    %c0_394 = arith.constant 0 : index
    %c12_395 = arith.constant 12 : index
    %c6_396 = arith.constant 6 : index
    %c0_397 = arith.constant 0 : index
    %365 = vector.load %arg1[%c0_394, %c12_395, %c6_396, %c0_397] : memref<1x16x9x9xf32, #tpu.memory_space<vmem>>, vector<1x4x1x8xf32>
    %366 = vector.shape_cast %365 : vector<1x4x1x8xf32> to vector<4x8xf32>
    %cst_398 = arith.constant dense<0.000000e+00> : vector<8x8xf32>
    %367 = tpu.matmul %9, %366, %cst_398 {dimension_numbers = #tpu.dot_dimension_numbers<[1], [0], [0], [1], [0, 0, 1, 1], [], []>} : vector<8x4xf32>, vector<4x8xf32>, vector<8x8xf32> -> vector<8x8xf32>
    %368 = arith.addf %364, %367 : vector<8x8xf32>
    %c0_399 = arith.constant 0 : index
    %c8_400 = arith.constant 8 : index
    %c6_401 = arith.constant 6 : index
    %c1_402 = arith.constant 1 : index
    %369 = vector.load %arg1[%c0_399, %c8_400, %c6_401, %c1_402] : memref<1x16x9x9xf32, #tpu.memory_space<vmem>>, vector<1x4x1x8xf32>
    %370 = vector.shape_cast %369 : vector<1x4x1x8xf32> to vector<4x8xf32>
    %cst_403 = arith.constant dense<0.000000e+00> : vector<8x8xf32>
    %371 = tpu.matmul %11, %370, %cst_403 {dimension_numbers = #tpu.dot_dimension_numbers<[1], [0], [0], [1], [0, 0, 1, 1], [], []>} : vector<8x4xf32>, vector<4x8xf32>, vector<8x8xf32> -> vector<8x8xf32>
    %372 = arith.addf %368, %371 : vector<8x8xf32>
    %c0_404 = arith.constant 0 : index
    %c0_405 = arith.constant 0 : index
    %c7_406 = arith.constant 7 : index
    %c0_407 = arith.constant 0 : index
    %373 = vector.load %arg1[%c0_404, %c0_405, %c7_406, %c0_407] : memref<1x16x9x9xf32, #tpu.memory_space<vmem>>, vector<1x4x1x8xf32>
    %374 = vector.shape_cast %373 : vector<1x4x1x8xf32> to vector<4x8xf32>
    %cst_408 = arith.constant dense<0.000000e+00> : vector<8x8xf32>
    %375 = tpu.matmul %13, %374, %cst_408 {dimension_numbers = #tpu.dot_dimension_numbers<[1], [0], [0], [1], [0, 0, 1, 1], [], []>} : vector<8x4xf32>, vector<4x8xf32>, vector<8x8xf32> -> vector<8x8xf32>
    %376 = arith.addf %372, %375 : vector<8x8xf32>
    %c0_409 = arith.constant 0 : index
    %c4_410 = arith.constant 4 : index
    %c7_411 = arith.constant 7 : index
    %c0_412 = arith.constant 0 : index
    %377 = vector.load %arg1[%c0_409, %c4_410, %c7_411, %c0_412] : memref<1x16x9x9xf32, #tpu.memory_space<vmem>>, vector<1x4x1x8xf32>
    %378 = vector.shape_cast %377 : vector<1x4x1x8xf32> to vector<4x8xf32>
    %cst_413 = arith.constant dense<0.000000e+00> : vector<8x8xf32>
    %379 = tpu.matmul %15, %378, %cst_413 {dimension_numbers = #tpu.dot_dimension_numbers<[1], [0], [0], [1], [0, 0, 1, 1], [], []>} : vector<8x4xf32>, vector<4x8xf32>, vector<8x8xf32> -> vector<8x8xf32>
    %380 = arith.addf %376, %379 : vector<8x8xf32>
    %c0_414 = arith.constant 0 : index
    %c0_415 = arith.constant 0 : index
    %c7_416 = arith.constant 7 : index
    %c1_417 = arith.constant 1 : index
    %381 = vector.load %arg1[%c0_414, %c0_415, %c7_416, %c1_417] : memref<1x16x9x9xf32, #tpu.memory_space<vmem>>, vector<1x4x1x8xf32>
    %382 = vector.shape_cast %381 : vector<1x4x1x8xf32> to vector<4x8xf32>
    %cst_418 = arith.constant dense<0.000000e+00> : vector<8x8xf32>
    %383 = tpu.matmul %17, %382, %cst_418 {dimension_numbers = #tpu.dot_dimension_numbers<[1], [0], [0], [1], [0, 0, 1, 1], [], []>} : vector<8x4xf32>, vector<4x8xf32>, vector<8x8xf32> -> vector<8x8xf32>
    %384 = arith.addf %380, %383 : vector<8x8xf32>
    %c0_419 = arith.constant 0 : index
    %c0_420 = arith.constant 0 : index
    %c6_421 = arith.constant 6 : index
    %c0_422 = arith.constant 0 : index
    %385 = vector.load %arg5[%c0_419, %c0_420, %c6_421, %c0_422] : memref<1x8x8x8xf32, #tpu.memory_space<vmem>>, vector<1x8x1x8xf32>
    %386 = vector.shape_cast %385 : vector<1x8x1x8xf32> to vector<8x8xf32>
    %387 = vector.shape_cast %384 : vector<8x8xf32> to vector<1x8x1x8xf32>
    tpu.vector_store %arg5[%c0_419, %c0_420, %c6_421, %c0_422], %387 {strides = array<i32>} : memref<1x8x8x8xf32, #tpu.memory_space<vmem>>, vector<1x8x1x8xf32>,
    %388 = vector.broadcast %18 : vector<8x1xf32> to vector<8x8xf32>
    %389 = arith.mulf %384, %388 : vector<8x8xf32>
    %390 = vector.broadcast %19 : vector<8x1xf32> to vector<8x8xf32>
    %391 = arith.addf %389, %390 : vector<8x8xf32>
    %c0_423 = arith.constant 0 : index
    %c0_424 = arith.constant 0 : index
    %c6_425 = arith.constant 6 : index
    %c0_426 = arith.constant 0 : index
    %392 = vector.load %arg6[%c0_423, %c0_424, %c6_425, %c0_426] : memref<1x8x8x8xf32, #tpu.memory_space<vmem>>, vector<1x8x1x8xf32>
    %393 = vector.shape_cast %392 : vector<1x8x1x8xf32> to vector<8x8xf32>
    %394 = vector.shape_cast %391 : vector<8x8xf32> to vector<1x8x1x8xf32>
    tpu.vector_store %arg6[%c0_423, %c0_424, %c6_425, %c0_426], %394 {strides = array<i32>} : memref<1x8x8x8xf32, #tpu.memory_space<vmem>>, vector<1x8x1x8xf32>,
    %cst_427 = arith.constant 0.000000e+00 : f32
    %395 = vector.broadcast %cst_427 : f32 to vector<8x8xf32>
    %396 = arith.subf %395, %391 : vector<8x8xf32>
    %397 = math.exp %396 : vector<8x8xf32>
    %cst_428 = arith.constant 1.000000e+00 : f32
    %398 = vector.broadcast %cst_428 : f32 to vector<8x8xf32>
    %399 = arith.addf %398, %397 : vector<8x8xf32>
    %400 = tpu.reciprocal %399 {approx = true} : vector<8x8xf32> -> vector<8x8xf32>
    %401 = arith.mulf %391, %400 : vector<8x8xf32>
    %c0_429 = arith.constant 0 : index
    %c0_430 = arith.constant 0 : index
    %c6_431 = arith.constant 6 : index
    %c0_432 = arith.constant 0 : index
    %402 = vector.load %arg7[%c0_429, %c0_430, %c6_431, %c0_432] : memref<1x8x8x8xf32, #tpu.memory_space<vmem>>, vector<1x8x1x8xf32>
    %403 = vector.shape_cast %402 : vector<1x8x1x8xf32> to vector<8x8xf32>
    %404 = vector.shape_cast %401 : vector<8x8xf32> to vector<1x8x1x8xf32>
    tpu.vector_store %arg7[%c0_429, %c0_430, %c6_431, %c0_432], %404 {strides = array<i32>} : memref<1x8x8x8xf32, #tpu.memory_space<vmem>>, vector<1x8x1x8xf32>,
    %c0_433 = arith.constant 0 : index
    %c0_434 = arith.constant 0 : index
    %c7_435 = arith.constant 7 : index
    %c0_436 = arith.constant 0 : index
    %405 = vector.load %arg1[%c0_433, %c0_434, %c7_435, %c0_436] : memref<1x16x9x9xf32, #tpu.memory_space<vmem>>, vector<1x4x1x8xf32>
    %406 = vector.shape_cast %405 : vector<1x4x1x8xf32> to vector<4x8xf32>
    %cst_437 = arith.constant dense<0.000000e+00> : vector<8x8xf32>
    %407 = tpu.matmul %1, %406, %cst_437 {dimension_numbers = #tpu.dot_dimension_numbers<[1], [0], [0], [1], [0, 0, 1, 1], [], []>} : vector<8x4xf32>, vector<4x8xf32>, vector<8x8xf32> -> vector<8x8xf32>
    %c0_438 = arith.constant 0 : index
    %c4_439 = arith.constant 4 : index
    %c7_440 = arith.constant 7 : index
    %c0_441 = arith.constant 0 : index
    %408 = vector.load %arg1[%c0_438, %c4_439, %c7_440, %c0_441] : memref<1x16x9x9xf32, #tpu.memory_space<vmem>>, vector<1x4x1x8xf32>
    %409 = vector.shape_cast %408 : vector<1x4x1x8xf32> to vector<4x8xf32>
    %cst_442 = arith.constant dense<0.000000e+00> : vector<8x8xf32>
    %410 = tpu.matmul %3, %409, %cst_442 {dimension_numbers = #tpu.dot_dimension_numbers<[1], [0], [0], [1], [0, 0, 1, 1], [], []>} : vector<8x4xf32>, vector<4x8xf32>, vector<8x8xf32> -> vector<8x8xf32>
    %411 = arith.addf %407, %410 : vector<8x8xf32>
    %c0_443 = arith.constant 0 : index
    %c0_444 = arith.constant 0 : index
    %c7_445 = arith.constant 7 : index
    %c1_446 = arith.constant 1 : index
    %412 = vector.load %arg1[%c0_443, %c0_444, %c7_445, %c1_446] : memref<1x16x9x9xf32, #tpu.memory_space<vmem>>, vector<1x4x1x8xf32>
    %413 = vector.shape_cast %412 : vector<1x4x1x8xf32> to vector<4x8xf32>
    %cst_447 = arith.constant dense<0.000000e+00> : vector<8x8xf32>
    %414 = tpu.matmul %5, %413, %cst_447 {dimension_numbers = #tpu.dot_dimension_numbers<[1], [0], [0], [1], [0, 0, 1, 1], [], []>} : vector<8x4xf32>, vector<4x8xf32>, vector<8x8xf32> -> vector<8x8xf32>
    %415 = arith.addf %411, %414 : vector<8x8xf32>
    %c0_448 = arith.constant 0 : index
    %c8_449 = arith.constant 8 : index
    %c7_450 = arith.constant 7 : index
    %c0_451 = arith.constant 0 : index
    %416 = vector.load %arg1[%c0_448, %c8_449, %c7_450, %c0_451] : memref<1x16x9x9xf32, #tpu.memory_space<vmem>>, vector<1x4x1x8xf32>
    %417 = vector.shape_cast %416 : vector<1x4x1x8xf32> to vector<4x8xf32>
    %cst_452 = arith.constant dense<0.000000e+00> : vector<8x8xf32>
    %418 = tpu.matmul %7, %417, %cst_452 {dimension_numbers = #tpu.dot_dimension_numbers<[1], [0], [0], [1], [0, 0, 1, 1], [], []>} : vector<8x4xf32>, vector<4x8xf32>, vector<8x8xf32> -> vector<8x8xf32>
    %419 = arith.addf %415, %418 : vector<8x8xf32>
    %c0_453 = arith.constant 0 : index
    %c12_454 = arith.constant 12 : index
    %c7_455 = arith.constant 7 : index
    %c0_456 = arith.constant 0 : index
    %420 = vector.load %arg1[%c0_453, %c12_454, %c7_455, %c0_456] : memref<1x16x9x9xf32, #tpu.memory_space<vmem>>, vector<1x4x1x8xf32>
    %421 = vector.shape_cast %420 : vector<1x4x1x8xf32> to vector<4x8xf32>
    %cst_457 = arith.constant dense<0.000000e+00> : vector<8x8xf32>
    %422 = tpu.matmul %9, %421, %cst_457 {dimension_numbers = #tpu.dot_dimension_numbers<[1], [0], [0], [1], [0, 0, 1, 1], [], []>} : vector<8x4xf32>, vector<4x8xf32>, vector<8x8xf32> -> vector<8x8xf32>
    %423 = arith.addf %419, %422 : vector<8x8xf32>
    %c0_458 = arith.constant 0 : index
    %c8_459 = arith.constant 8 : index
    %c7_460 = arith.constant 7 : index
    %c1_461 = arith.constant 1 : index
    %424 = vector.load %arg1[%c0_458, %c8_459, %c7_460, %c1_461] : memref<1x16x9x9xf32, #tpu.memory_space<vmem>>, vector<1x4x1x8xf32>
    %425 = vector.shape_cast %424 : vector<1x4x1x8xf32> to vector<4x8xf32>
    %cst_462 = arith.constant dense<0.000000e+00> : vector<8x8xf32>
    %426 = tpu.matmul %11, %425, %cst_462 {dimension_numbers = #tpu.dot_dimension_numbers<[1], [0], [0], [1], [0, 0, 1, 1], [], []>} : vector<8x4xf32>, vector<4x8xf32>, vector<8x8xf32> -> vector<8x8xf32>
    %427 = arith.addf %423, %426 : vector<8x8xf32>
    %c0_463 = arith.constant 0 : index
    %c0_464 = arith.constant 0 : index
    %c8_465 = arith.constant 8 : index
    %c0_466 = arith.constant 0 : index
    %428 = vector.load %arg1[%c0_463, %c0_464, %c8_465, %c0_466] : memref<1x16x9x9xf32, #tpu.memory_space<vmem>>, vector<1x4x1x8xf32>
    %429 = vector.shape_cast %428 : vector<1x4x1x8xf32> to vector<4x8xf32>
    %cst_467 = arith.constant dense<0.000000e+00> : vector<8x8xf32>
    %430 = tpu.matmul %13, %429, %cst_467 {dimension_numbers = #tpu.dot_dimension_numbers<[1], [0], [0], [1], [0, 0, 1, 1], [], []>} : vector<8x4xf32>, vector<4x8xf32>, vector<8x8xf32> -> vector<8x8xf32>
    %431 = arith.addf %427, %430 : vector<8x8xf32>
    %c0_468 = arith.constant 0 : index
    %c4_469 = arith.constant 4 : index
    %c8_470 = arith.constant 8 : index
    %c0_471 = arith.constant 0 : index
    %432 = vector.load %arg1[%c0_468, %c4_469, %c8_470, %c0_471] : memref<1x16x9x9xf32, #tpu.memory_space<vmem>>, vector<1x4x1x8xf32>
    %433 = vector.shape_cast %432 : vector<1x4x1x8xf32> to vector<4x8xf32>
    %cst_472 = arith.constant dense<0.000000e+00> : vector<8x8xf32>
    %434 = tpu.matmul %15, %433, %cst_472 {dimension_numbers = #tpu.dot_dimension_numbers<[1], [0], [0], [1], [0, 0, 1, 1], [], []>} : vector<8x4xf32>, vector<4x8xf32>, vector<8x8xf32> -> vector<8x8xf32>
    %435 = arith.addf %431, %434 : vector<8x8xf32>
    %c0_473 = arith.constant 0 : index
    %c0_474 = arith.constant 0 : index
    %c8_475 = arith.constant 8 : index
    %c1_476 = arith.constant 1 : index
    %436 = vector.load %arg1[%c0_473, %c0_474, %c8_475, %c1_476] : memref<1x16x9x9xf32, #tpu.memory_space<vmem>>, vector<1x4x1x8xf32>
    %437 = vector.shape_cast %436 : vector<1x4x1x8xf32> to vector<4x8xf32>
    %cst_477 = arith.constant dense<0.000000e+00> : vector<8x8xf32>
    %438 = tpu.matmul %17, %437, %cst_477 {dimension_numbers = #tpu.dot_dimension_numbers<[1], [0], [0], [1], [0, 0, 1, 1], [], []>} : vector<8x4xf32>, vector<4x8xf32>, vector<8x8xf32> -> vector<8x8xf32>
    %439 = arith.addf %435, %438 : vector<8x8xf32>
    %c0_478 = arith.constant 0 : index
    %c0_479 = arith.constant 0 : index
    %c7_480 = arith.constant 7 : index
    %c0_481 = arith.constant 0 : index
    %440 = vector.load %arg5[%c0_478, %c0_479, %c7_480, %c0_481] : memref<1x8x8x8xf32, #tpu.memory_space<vmem>>, vector<1x8x1x8xf32>
    %441 = vector.shape_cast %440 : vector<1x8x1x8xf32> to vector<8x8xf32>
    %442 = vector.shape_cast %439 : vector<8x8xf32> to vector<1x8x1x8xf32>
    tpu.vector_store %arg5[%c0_478, %c0_479, %c7_480, %c0_481], %442 {strides = array<i32>} : memref<1x8x8x8xf32, #tpu.memory_space<vmem>>, vector<1x8x1x8xf32>,
    %443 = vector.broadcast %18 : vector<8x1xf32> to vector<8x8xf32>
    %444 = arith.mulf %439, %443 : vector<8x8xf32>
    %445 = vector.broadcast %19 : vector<8x1xf32> to vector<8x8xf32>
    %446 = arith.addf %444, %445 : vector<8x8xf32>
    %c0_482 = arith.constant 0 : index
    %c0_483 = arith.constant 0 : index
    %c7_484 = arith.constant 7 : index
    %c0_485 = arith.constant 0 : index
    %447 = vector.load %arg6[%c0_482, %c0_483, %c7_484, %c0_485] : memref<1x8x8x8xf32, #tpu.memory_space<vmem>>, vector<1x8x1x8xf32>
    %448 = vector.shape_cast %447 : vector<1x8x1x8xf32> to vector<8x8xf32>
    %449 = vector.shape_cast %446 : vector<8x8xf32> to vector<1x8x1x8xf32>
    tpu.vector_store %arg6[%c0_482, %c0_483, %c7_484, %c0_485], %449 {strides = array<i32>} : memref<1x8x8x8xf32, #tpu.memory_space<vmem>>, vector<1x8x1x8xf32>,
    %cst_486 = arith.constant 0.000000e+00 : f32
    %450 = vector.broadcast %cst_486 : f32 to vector<8x8xf32>
    %451 = arith.subf %450, %446 : vector<8x8xf32>
    %452 = math.exp %451 : vector<8x8xf32>
    %cst_487 = arith.constant 1.000000e+00 : f32
    %453 = vector.broadcast %cst_487 : f32 to vector<8x8xf32>
    %454 = arith.addf %453, %452 : vector<8x8xf32>
    %455 = tpu.reciprocal %454 {approx = true} : vector<8x8xf32> -> vector<8x8xf32>
    %456 = arith.mulf %446, %455 : vector<8x8xf32>
    %c0_488 = arith.constant 0 : index
    %c0_489 = arith.constant 0 : index
    %c7_490 = arith.constant 7 : index
    %c0_491 = arith.constant 0 : index
    %457 = vector.load %arg7[%c0_488, %c0_489, %c7_490, %c0_491] : memref<1x8x8x8xf32, #tpu.memory_space<vmem>>, vector<1x8x1x8xf32>
    %458 = vector.shape_cast %457 : vector<1x8x1x8xf32> to vector<8x8xf32>
    %459 = vector.shape_cast %456 : vector<8x8xf32> to vector<1x8x1x8xf32>
    tpu.vector_store %arg7[%c0_488, %c0_489, %c7_490, %c0_491], %459 {strides = array<i32>} : memref<1x8x8x8xf32, #tpu.memory_space<vmem>>, vector<1x8x1x8xf32>,
    return
  }
  func.func @transform_0(%arg0: i32) -> (i32, i32, i32, i32) {
    %c0_i32 = arith.constant 0 : i32
    %c0_i32_0 = arith.constant 0 : i32
    %c0_i32_1 = arith.constant 0 : i32
    %c0_i32_2 = arith.constant 0 : i32
    return %arg0, %c0_i32, %c0_i32_0, %c0_i32_1 : i32, i32, i32, i32
  }
  func.func @transform_1(%arg0: i32) -> (i32, i32, i32) {
    %c0_i32 = arith.constant 0 : i32
    %c0_i32_0 = arith.constant 0 : i32
    %c0_i32_1 = arith.constant 0 : i32
    %c0_i32_2 = arith.constant 0 : i32
    return %c0_i32, %c0_i32_0, %c0_i32_1 : i32, i32, i32
  }
  func.func @transform_2(%arg0: i32) -> (i32, i32) {
    %c0_i32 = arith.constant 0 : i32
    %c0_i32_0 = arith.constant 0 : i32
    %c0_i32_1 = arith.constant 0 : i32
    return %c0_i32, %c0_i32_0 : i32, i32
  }
  func.func @transform_3(%arg0: i32) -> (i32, i32) {
    %c0_i32 = arith.constant 0 : i32
    %c0_i32_0 = arith.constant 0 : i32
    %c0_i32_1 = arith.constant 0 : i32
    return %c0_i32, %c0_i32_0 : i32, i32
  }
  func.func @transform_4(%arg0: i32) -> (i32, i32, i32, i32) {
    %c0_i32 = arith.constant 0 : i32
    %c0_i32_0 = arith.constant 0 : i32
    %c0_i32_1 = arith.constant 0 : i32
    %c0_i32_2 = arith.constant 0 : i32
    return %arg0, %c0_i32, %c0_i32_0, %c0_i32_1 : i32, i32, i32, i32
  }
  func.func @transform_5(%arg0: i32) -> (i32, i32, i32, i32) {
    %c0_i32 = arith.constant 0 : i32
    %c0_i32_0 = arith.constant 0 : i32
    %c0_i32_1 = arith.constant 0 : i32
    %c0_i32_2 = arith.constant 0 : i32
    return %arg0, %c0_i32, %c0_i32_0, %c0_i32_1 : i32, i32, i32, i32
  }
  func.func @transform_6(%arg0: i32) -> (i32, i32, i32, i32) {
    %c0_i32 = arith.constant 0 : i32
    %c0_i32_0 = arith.constant 0 : i32
    %c0_i32_1 = arith.constant 0 : i32
    %c0_i32_2 = arith.constant 0 : i32
    return %arg0, %c0_i32, %c0_i32_0, %c0_i32_1 : i32, i32, i32, i32
  }
}

</mosaic_0001>

<llo_original>
// kernel: tpu_custom_call.1
$region0: #{tpu_custom_call.1}
  #allocation0 [shape = 'u32[]', space=smem, size = 0x4, offset = 0x4, fixed_abs, tag = 'smem constant byte address 0x4 - core index']
  #allocation1 [shape = 'u32[144,128]{1,0:T(1,128)}', space=vmem, size = 0x12000, scoped, tag = 'internal scratch']
  %s0 = inlined_call_operand.vmem [shape: f32[2,16,9,9], index: 0, kind: input, shape index: {}]
  %s1 = inlined_call_operand.vmem [shape: f32[9,8,4], index: 1, kind: input, shape index: {}]
  %s2 = inlined_call_operand.vmem [shape: f32[8,1], index: 2, kind: input, shape index: {}]
  %s3 = inlined_call_operand.vmem [shape: f32[8,1], index: 3, kind: input, shape index: {}]
  %s4 = inlined_call_operand.hbm [shape: f32[2,8,8,8], index: 4, kind: output, shape index: {0}]
  %s5 = inlined_call_operand.hbm [shape: f32[2,8,8,8], index: 5, kind: output, shape index: {1}]
  %s6 = inlined_call_operand.hbm [shape: f32[2,8,8,8], index: 6, kind: output, shape index: {2}]
  %7 = xla_tuple %s4, %s5, %s6
  %s8 = sld [smem:[#allocation0]]
  $region65: #{tpu_custom_call.1} parent=0
    _
  %s10 = ssub.s32 1, %s8
  %s11 = scalar_select 0, %s10, %s8
  $region1: #{tpu_custom_call.1} parent=0
    #allocation2 [shape = 'u8[65536]{0}', space=vmem, size = 0x10000, scoped, tag = 'output window, operand 0']
    #allocation3 [shape = 's32[2]{0}', space=sflag, size = 0x8, scoped, tag = 'scoped memory for tpu_custom_call.1']
    #allocation4 [shape = 'u8[65536]{0}', space=vmem, size = 0x10000, scoped, tag = 'output window, operand 1']
    #allocation5 [shape = 's32[2]{0}', space=sflag, size = 0x8, scoped, tag = 'scoped memory for tpu_custom_call.1']
    #allocation6 [shape = 'u8[65536]{0}', space=vmem, size = 0x10000, scoped, tag = 'output window, operand 2']
    %12 = vsyncpa [#allocation3], 0
    %s13 = scalar_lea.sflag [#allocation3], 1
    %14 = vsyncpa %s13, 0
    %15 = vsyncpa [#allocation5], 0
    %s16 = scalar_lea.sflag [#allocation5], 1
    %17 = vsyncpa %s16, 0
    loop: start=0, step=1, limit=4
    $region2: #{tpu_custom_call.1} parent=1 // loop_pre_header
      _
    $region3: #{tpu_custom_call.1} parent=1 // loop_header
      %s19 = sphi 0, %s23
      %p20 = scmp.ge.s32.totalorder %s19, 4
      %s29 = sphi 0, %s31
      %s32 = sphi 0, %s29
      %s33 = sphi 0, %s32
      %s49 = sphi 0, %s33
      %s53 = sphi 0, %s53
      %s55 = sphi 0, %s53
      %s56 = sphi 0, %s55
      %s70 = sphi 0, %s56
      %s74 = sphi 0, %s74
      %s76 = sphi 0, %s74
      %s77 = sphi 0, %s76
      %s91 = sphi 0, %s77
      %s95 = sphi 0, %s95
      %s97 = sphi 0, %s95
      %s98 = sphi 0, %s97
      %s112 = sphi 0, %s98
      %s118 = sphi 0, %s120
      %s121 = sphi 0, %s118
      %s122 = sphi 0, %s121
      %s138 = sphi 0, %s122
      %s144 = sphi 0, %s146
      %s147 = sphi 0, %s144
      %s148 = sphi 0, %s147
      %s164 = sphi 0, %s148
      %s170 = sphi 0, %s172
      %s173 = sphi 0, %s170
      %s174 = sphi 0, %s173
      %s190 = sphi 0, %s174
    $region4: #{tpu_custom_call.1} parent=1 // loop_header_branch
      %22 = sbr.rel (%p20) target = $region8
    $region5: #{tpu_custom_call.1} parent=1 // loop_body
      %s24 = ssub.s32 %s19, 1
      %s25 = ssub.s32 %s19, 2
      %s26 = sadd.s32 %s19, 1
      %s27 = ssub.s32 %s19, %s26
      %p28 = scmp.eq.s32.totalorder %s27, 0
      %s30 = sadd.s32 %s29, 1
      %s31 = scalar_select %p28, %s29, %s30
      %p34 = pneg %p28
      %p35 = scmp.eq.s32.totalorder %s19, 1
      %p36 = por %p34, %p35
      %p37 = scmp.ne.s32.totalorder %s29, %s32
      %p38 = scmp.eq.s32.totalorder %s19, 0
      %p39 = por %p37, %p38
      %p40 = scmp.ne.s32.totalorder %s29, %s32
      %p41 = scmp.eq.s32.totalorder %s24, 1
      %p42 = por %p40, %p41
      %p43 = scmp.ne.s32.totalorder %s32, %s33
      %p44 = scmp.eq.s32.totalorder %s24, 0
      %p45 = por %p43, %p44
      %p46 = scmp.ne.s32.totalorder %s32, %s33
      %p47 = scmp.eq.s32.totalorder %s25, 1
      %p48 = por %p46, %p47
      %p50 = scmp.ne.s32.totalorder %s33, %s49
      %p51 = scmp.eq.s32.totalorder %s25, 0
      %p52 = por %p50, %p51
      %s54 = sadd.s32 %s53, 1
      %p57 = scmp.eq.s32.totalorder %s19, 1
      %p58 = scmp.ne.s32.totalorder %s53, %s55
      %p59 = scmp.eq.s32.totalorder %s19, 0
      %p60 = por %p58, %p59
      %p61 = scmp.ne.s32.totalorder %s53, %s55
      %p62 = scmp.eq.s32.totalorder %s24, 1
      %p63 = por %p61, %p62
      %p64 = scmp.ne.s32.totalorder %s55, %s56
      %p65 = scmp.eq.s32.totalorder %s24, 0
      %p66 = por %p64, %p65
      %p67 = scmp.ne.s32.totalorder %s55, %s56
      %p68 = scmp.eq.s32.totalorder %s25, 1
      %p69 = por %p67, %p68
      %p71 = scmp.ne.s32.totalorder %s56, %s70
      %p72 = scmp.eq.s32.totalorder %s25, 0
      %p73 = por %p71, %p72
      %s75 = sadd.s32 %s74, 1
      %p78 = scmp.eq.s32.totalorder %s19, 1
      %p79 = scmp.ne.s32.totalorder %s74, %s76
      %p80 = scmp.eq.s32.totalorder %s19, 0
      %p81 = por %p79, %p80
      %p82 = scmp.ne.s32.totalorder %s74, %s76
      %p83 = scmp.eq.s32.totalorder %s24, 1
      %p84 = por %p82, %p83
      %p85 = scmp.ne.s32.totalorder %s76, %s77
      %p86 = scmp.eq.s32.totalorder %s24, 0
      %p87 = por %p85, %p86
      %p88 = scmp.ne.s32.totalorder %s76, %s77
      %p89 = scmp.eq.s32.totalorder %s25, 1
      %p90 = por %p88, %p89
      %p92 = scmp.ne.s32.totalorder %s77, %s91
      %p93 = scmp.eq.s32.totalorder %s25, 0
      %p94 = por %p92, %p93
      %s96 = sadd.s32 %s95, 1
      %p99 = scmp.eq.s32.totalorder %s19, 1
      %p100 = scmp.ne.s32.totalorder %s95, %s97
      %p101 = scmp.eq.s32.totalorder %s19, 0
      %p102 = por %p100, %p101
      %p103 = scmp.ne.s32.totalorder %s95, %s97
      %p104 = scmp.eq.s32.totalorder %s24, 1
      %p105 = por %p103, %p104
      %p106 = scmp.ne.s32.totalorder %s97, %s98
      %p107 = scmp.eq.s32.totalorder %s24, 0
      %p108 = por %p106, %p107
      %p109 = scmp.ne.s32.totalorder %s97, %s98
      %p110 = scmp.eq.s32.totalorder %s25, 1
      %p111 = por %p109, %p110
      %p113 = scmp.ne.s32.totalorder %s98, %s112
      %p114 = scmp.eq.s32.totalorder %s25, 0
      %p115 = por %p113, %p114
      %s116 = ssub.s32 %s19, %s26
      %p117 = scmp.eq.s32.totalorder %s116, 0
      %s119 = sadd.s32 %s118, 1
      %s120 = scalar_select %p117, %s118, %s119
      %p123 = pneg %p117
      %p124 = scmp.eq.s32.totalorder %s19, 1
      %p125 = por %p123, %p124
      %p126 = scmp.ne.s32.totalorder %s118, %s121
      %p127 = scmp.eq.s32.totalorder %s19, 0
      %p128 = por %p126, %p127
      %p129 = scmp.ne.s32.totalorder %s118, %s121
      %p130 = scmp.eq.s32.totalorder %s24, 1
      %p131 = por %p129, %p130
      %p132 = scmp.ne.s32.totalorder %s121, %s122
      %p133 = scmp.eq.s32.totalorder %s24, 0
      %p134 = por %p132, %p133
      %p135 = scmp.ne.s32.totalorder %s121, %s122
      %p136 = scmp.eq.s32.totalorder %s25, 1
      %p137 = por %p135, %p136
      %p139 = scmp.ne.s32.totalorder %s122, %s138
      %p140 = scmp.eq.s32.totalorder %s25, 0
      %p141 = por %p139, %p140
      %s142 = ssub.s32 %s19, %s26
      %p143 = scmp.eq.s32.totalorder %s142, 0
      %s145 = sadd.s32 %s144, 1
      %s146 = scalar_select %p143, %s144, %s145
      %p149 = pneg %p143
      %p150 = scmp.eq.s32.totalorder %s19, 1
      %p151 = por %p149, %p150
      %p152 = scmp.ne.s32.totalorder %s144, %s147
      %p153 = scmp.eq.s32.totalorder %s19, 0
      %p154 = por %p152, %p153
      %p155 = scmp.ne.s32.totalorder %s144, %s147
      %p156 = scmp.eq.s32.totalorder %s24, 1
      %p157 = por %p155, %p156
      %p158 = scmp.ne.s32.totalorder %s147, %s148
      %p159 = scmp.eq.s32.totalorder %s24, 0
      %p160 = por %p158, %p159
      %p161 = scmp.ne.s32.totalorder %s147, %s148
      %p162 = scmp.eq.s32.totalorder %s25, 1
      %p163 = por %p161, %p162
      %p165 = scmp.ne.s32.totalorder %s148, %s164
      %p166 = scmp.eq.s32.totalorder %s25, 0
      %p167 = por %p165, %p166
      %s168 = ssub.s32 %s19, %s26
      %p169 = scmp.eq.s32.totalorder %s168, 0
      %s171 = sadd.s32 %s170, 1
      %s172 = scalar_select %p169, %s170, %s171
      %p175 = pneg %p169
      %p176 = scmp.eq.s32.totalorder %s19, 1
      %p177 = por %p175, %p176
      %p178 = scmp.ne.s32.totalorder %s170, %s173
      %p179 = scmp.eq.s32.totalorder %s19, 0
      %p180 = por %p178, %p179
      %p181 = scmp.ne.s32.totalorder %s170, %s173
      %p182 = scmp.eq.s32.totalorder %s24, 1
      %p183 = por %p181, %p182
      %p184 = scmp.ne.s32.totalorder %s173, %s174
      %p185 = scmp.eq.s32.totalorder %s24, 0
      %p186 = por %p184, %p185
      %p187 = scmp.ne.s32.totalorder %s173, %s174
      %p188 = scmp.eq.s32.totalorder %s25, 1
      %p189 = por %p187, %p188
      %p191 = scmp.ne.s32.totalorder %s174, %s190
      %p192 = scmp.eq.s32.totalorder %s25, 0
      %p193 = por %p191, %p192
      %p194 = scmp.le.s32.totalorder 1, %s19
      %p195 = scmp.lt.s32.totalorder %s19, 3
      %p196 = pnand %p194, %p195
      %p197 = pneg %p196
      // Predicated region
      $region9: #{tpu_custom_call.1} parent=5 // pred_check
        _
      $region10: #{tpu_custom_call.1} parent=5 // pred_check_branch
        %199 = sbr.rel (%p196) target = $region12
      $region11: #{tpu_custom_call.1} parent=5 // pred_region
        %s200 = ssub.s32 %s19, 1
        // Predicated region
        $region13: #{tpu_custom_call.1} parent=11 // pred_check
          %p201 = pneg %p66
        $region14: #{tpu_custom_call.1} parent=11 // pred_check_branch
          %203 = sbr.rel (%p201) target = $region16
        $region15: #{tpu_custom_call.1} parent=11 // pred_region
          _
        $region16: #{tpu_custom_call.1} parent=11 // pred_fallthru
          _
        // Predicated region
        $region17: #{tpu_custom_call.1} parent=11 // pred_check
          %p204 = pneg %p87
        $region18: #{tpu_custom_call.1} parent=11 // pred_check_branch
          %206 = sbr.rel (%p204) target = $region20
        $region19: #{tpu_custom_call.1} parent=11 // pred_region
          _
        $region20: #{tpu_custom_call.1} parent=11 // pred_fallthru
          _
        // Predicated region
        $region21: #{tpu_custom_call.1} parent=11 // pred_check
          %p207 = pneg %p108
        $region22: #{tpu_custom_call.1} parent=11 // pred_check_branch
          %209 = sbr.rel (%p207) target = $region24
        $region23: #{tpu_custom_call.1} parent=11 // pred_region
          _
        $region24: #{tpu_custom_call.1} parent=11 // pred_fallthru
          _
      $region12: #{tpu_custom_call.1} parent=5 // pred_fallthru
        _
      %p210 = scmp.lt.s32.totalorder %s19, 2
      // Predicated region
      $region25: #{tpu_custom_call.1} parent=5 // pred_check
        %p211 = pneg %p210
      $region26: #{tpu_custom_call.1} parent=5 // pred_check_branch
        %213 = sbr.rel (%p211) target = $region28
      $region27: #{tpu_custom_call.1} parent=5 // pred_region
        // Predicated region
        $region29: #{tpu_custom_call.1} parent=27 // pred_check
          %p214 = pneg %p39
        $region30: #{tpu_custom_call.1} parent=27 // pred_check_branch
          %216 = sbr.rel (%p214) target = $region32
        $region31: #{tpu_custom_call.1} parent=27 // pred_region
          %p217 = scmp.lt.s32.totalorder %s19, 1
          %s218 = scalar_select %p217, %s19, 1
          %s219 = smul.addr %s218, 32
          %s220 = smul.addr %s219, 8
          %s221 = scalar_lea.vmem %s0, %s220
        $region32: #{tpu_custom_call.1} parent=27 // pred_fallthru
          _
      $region28: #{tpu_custom_call.1} parent=5 // pred_fallthru
        _
      %p222 = scmp.le.s32.totalorder 1, %s19
      %p223 = scmp.lt.s32.totalorder %s19, 3
      %p224 = pnand %p222, %p223
      %p225 = pneg %p224
      // Predicated region
      $region33: #{tpu_custom_call.1} parent=5 // pred_check
        _
      $region34: #{tpu_custom_call.1} parent=5 // pred_check_branch
        %227 = sbr.rel (%p224) target = $region36
      $region35: #{tpu_custom_call.1} parent=5 // pred_region
        %s228 = ssub.s32 %s19, 1
        %p229 = scmp.lt.s32.totalorder %s24, 1
        %s230 = scalar_select %p229, %s24, 1
        %s231 = smul.addr %s230, 32
        %s232 = smul.addr %s231, 8
        %s233 = scalar_lea.vmem %s0, %s232
        %p234 = pneg %p45
        %p235 = pneg %p42
        %p236 = pneg %p66
        %p237 = pneg %p63
        %p238 = pneg %p87
        %p239 = pneg %p84
        %p240 = pneg %p108
        %p241 = pneg %p105
        %p242 = pneg %p134
        %p243 = pneg %p131
        %s244 = sand.u32 %s121, 1
        %s245 = scalar_lea.sflag [#allocation3], %s244
        %s246 = sand.u32 %s121, 1
        %s247 = smul.addr %s246, 64
        %s248 = scalar_lea.vmem [#allocation2], %s247
        %p249 = pneg %p160
        %p250 = pneg %p157
        %s251 = sand.u32 %s24, 1
        %s252 = scalar_lea.sflag [#allocation5], %s251
        %s253 = sand.u32 %s147, 1
        %s254 = smul.addr %s253, 64
        %s255 = scalar_lea.vmem [#allocation4], %s254
        %p256 = pneg %p186
        %p257 = pneg %p183
        %s258 = sand.u32 %s24, 1
        %s259 = scalar_lea.sflag [#allocation5], %s258
        %s260 = sand.u32 %s173, 1
        %s261 = smul.addr %s260, 64
        %s262 = scalar_lea.vmem [#allocation6], %s261
        %p263 = scmp.lt.s32.totalorder %s24, 1
        %s264 = scalar_select %p263, %s24, 1
        %s265 = smul.addr %s264, 32
        %s266 = smul.addr %s265, 8
        %s267 = scalar_lea.vmem %s0, %s266
        %v268 = vld [vmem:[%s1] sm:$0xff]
        %s269 = scalar_lea.vmem %s1, 8
        %v270 = vld [vmem:[%s269] sm:$0xff]
        %s271 = scalar_lea.vmem %s1, 16
        %v272 = vld [vmem:[%s271] sm:$0xff]
        %s273 = scalar_lea.vmem %s1, 24
        %v274 = vld [vmem:[%s273] sm:$0xff]
        %s275 = scalar_lea.vmem %s1, 32
        %v276 = vld [vmem:[%s275] sm:$0xff]
        %s277 = scalar_lea.vmem %s1, 40
        %v278 = vld [vmem:[%s277] sm:$0xff]
        %s279 = scalar_lea.vmem %s1, 48
        %v280 = vld [vmem:[%s279] sm:$0xff]
        %s281 = scalar_lea.vmem %s1, 56
        %v282 = vld [vmem:[%s281] sm:$0xff]
        %s283 = scalar_lea.vmem %s1, 64
        %v284 = vld [vmem:[%s283] sm:$0xff]
        %v285 = vld [vmem:[%s2] sm:$0xff]
        %v286 = vld [vmem:[%s3] sm:$0xff]
        %v287 = vld [vmem:[%s267] sm:$0x1]
        %v288 = vld [vmem:[%s267 + $0x10] sm:$0x1]
        %v289 = vld [vmem:[%s267 + $0x20] sm:$0x1]
        %v290 = vld [vmem:[%s267 + $0x30] sm:$0x1]
        %s291 = scalar_lea.vmem %s267, 64
        %v292 = vld [vmem:[%s291] sm:$0x1]
        %v293 = vld [vmem:[%s291 + $0x10] sm:$0x1]
        %v294 = vld [vmem:[%s291 + $0x20] sm:$0x1]
        %v295 = vld [vmem:[%s291 + $0x30] sm:$0x1]
        %v300 = vrot.slane %v293, 7
        %vm301 = vcmask 1041409
        %v302 = vsel %vm301, %v300, %v292
        %v303 = vrot.slane %v294, 6
        %vm304 = vcmask 1042434
        %v305 = vsel %vm304, %v303, %v302
        %v306 = vrot.slane %v295, 5
        %vm307 = vcmask 1043459
        %v308 = vsel %vm307, %v306, %v305
        %vm309 = vcmask 31744
        %v311 = vsel %vm309, %v270, 0
        %vm313 = vcmask 1043456
        %v314 = vsel %vm313, %v308, 0
        %316 = vmatprep.subr.mxu0 0.0
        %317 = vmatpush1.msra.mxu0 %v314
        %318 = vmatprep.subr.mxu0 0.0
        %319 = vmatpush1.msra.mxu0 0.0
        %320 = vmatprep.subr.mxu0 0.0
        %321 = vmatpush1.msra.mxu0 0.0
        %322 = vmatprep.subr.mxu0 0.0
        %323 = vmatpush1.msra.mxu0 0.0
        %324 = vmatprep.subr.mxu0 0.0
        %325 = vmatpush1.msra.mxu0 0.0
        %326 = vmatprep.subr.mxu0 0.0
        %327 = vmatpush1.msra.mxu0 0.0
        %328 = vmatprep.subr.mxu0 0.0
        %329 = vmatpush1.msra.mxu0 0.0
        %330 = vmatprep.subr.mxu0 0.0
        %331 = vmatpush1.msra.mxu0 0.0
        %332 = vmatprep.subr.mxu0 0.0
        %333 = vmatpush1.msra.mxu0 0.0
        %334 = vmatprep.subr.mxu0 0.0
        %335 = vmatpush1.msra.mxu0 0.0
        %336 = vmatprep.subr.mxu0 0.0
        %337 = vmatpush1.msra.mxu0 0.0
        %338 = vmatprep.subr.mxu0 0.0
        %339 = vmatpush1.msra.mxu0 0.0
        %340 = vmatprep.subr.mxu0 0.0
        %341 = vmatpush1.msra.mxu0 0.0
        %342 = vmatprep.subr.mxu0 0.0
        %343 = vmatpush1.msra.mxu0 0.0
        %344 = vmatprep.subr.mxu0 0.0
        %345 = vmatpush1.msra.mxu0 0.0
        %346 = vmatprep.subr.mxu0 0.0
        %347 = vmatpush1.msra.mxu0 0.0
        %348 = vmatprep.subr.mxu0 0.0
        %349 = vmatpush1.msra.mxu0 0.0
        %350 = vmatprep.subr.mxu0 0.0
        %351 = vmatpush1.msra.mxu0 0.0
        %352 = vmatprep.subr.mxu0 0.0
        %353 = vmatpush1.msra.mxu0 0.0
        %354 = vmatprep.subr.mxu0 0.0
        %355 = vmatpush1.msra.mxu0 0.0
        %356 = vmatprep.subr.mxu0 0.0
        %357 = vmatpush1.msra.mxu0 0.0
        %358 = vmatprep.subr.mxu0 0.0
        %359 = vmatpush1.msra.mxu0 0.0
        %360 = vmatprep.subr.mxu0 0.0
        %361 = vmatpush1.msra.mxu0 0.0
        %362 = vmatprep.subr.mxu0 0.0
        %363 = vmatpush1.msra.mxu0 0.0
        %364 = vmatprep.subr.mxu0 0.0
        %365 = vmatpush1.msra.mxu0 0.0
        %366 = vmatprep.subr.mxu0 0.0
        %367 = vmatpush1.msra.mxu0 0.0
        %368 = vmatprep.subr.mxu0 0.0
        %369 = vmatpush1.msra.mxu0 0.0
        %370 = vmatprep.subr.mxu0 0.0
        %371 = vmatpush1.msra.mxu0 0.0
        %372 = vmatprep.subr.mxu0 0.0
        %373 = vmatpush1.msra.mxu0 0.0
        %374 = vmatprep.subr.mxu0 0.0
        %375 = vmatpush1.msra.mxu0 0.0
        %376 = vmatprep.subr.mxu0 0.0
        %377 = vmatpush1.msra.mxu0 0.0
        %378 = vmatprep.subr.mxu0 0.0
        %379 = vmatpush1.msra.mxu0 0.0
        %380 = vmatprep.mubr.f32.mxu0 0.0
        %381 = vmatmul.mubr.f32.gmra.mrb[0].mxu0 %v311
        %v382 = vpop.f32.mrb[0].mxu0
        %v383 = vadd.f32 0.0, %v382
        %v384 = vpop.f32.mrb[0].mxu0
        %385 = vdwg.mxu0
        %v390 = vrot.slane %v288, 7
        %v391 = vsel %vm301, %v390, %v287
        %v392 = vrot.slane %v289, 6
        %v393 = vsel %vm304, %v392, %v391
        %v394 = vrot.slane %v290, 5
        %v395 = vsel %vm307, %v394, %v393
        %v397 = vsel %vm309, %v268, 0
        %v399 = vsel %vm313, %v395, 0
        %401 = vmatprep.subr.mxu0 0.0
        %402 = vmatpush1.msra.mxu0 %v399
        %403 = vmatprep.subr.mxu0 0.0
        %404 = vmatpush1.msra.mxu0 0.0
        %405 = vmatprep.subr.mxu0 0.0
        %406 = vmatpush1.msra.mxu0 0.0
        %407 = vmatprep.subr.mxu0 0.0
        %408 = vmatpush1.msra.mxu0 0.0
        %409 = vmatprep.subr.mxu0 0.0
        %410 = vmatpush1.msra.mxu0 0.0
        %411 = vmatprep.subr.mxu0 0.0
        %412 = vmatpush1.msra.mxu0 0.0
        %413 = vmatprep.subr.mxu0 0.0
        %414 = vmatpush1.msra.mxu0 0.0
        %415 = vmatprep.subr.mxu0 0.0
        %416 = vmatpush1.msra.mxu0 0.0
        %417 = vmatprep.subr.mxu0 0.0
        %418 = vmatpush1.msra.mxu0 0.0
        %419 = vmatprep.subr.mxu0 0.0
        %420 = vmatpush1.msra.mxu0 0.0
        %421 = vmatprep.subr.mxu0 0.0
        %422 = vmatpush1.msra.mxu0 0.0
        %423 = vmatprep.subr.mxu0 0.0
        %424 = vmatpush1.msra.mxu0 0.0
        %425 = vmatprep.subr.mxu0 0.0
        %426 = vmatpush1.msra.mxu0 0.0
        %427 = vmatprep.subr.mxu0 0.0
        %428 = vmatpush1.msra.mxu0 0.0
        %429 = vmatprep.subr.mxu0 0.0
        %430 = vmatpush1.msra.mxu0 0.0
        %431 = vmatprep.subr.mxu0 0.0
        %432 = vmatpush1.msra.mxu0 0.0
        %433 = vmatprep.subr.mxu0 0.0
        %434 = vmatpush1.msra.mxu0 0.0
        %435 = vmatprep.subr.mxu0 0.0
        %436 = vmatpush1.msra.mxu0 0.0
        %437 = vmatprep.subr.mxu0 0.0
        %438 = vmatpush1.msra.mxu0 0.0
        %439 = vmatprep.subr.mxu0 0.0
        %440 = vmatpush1.msra.mxu0 0.0
        %441 = vmatprep.subr.mxu0 0.0
        %442 = vmatpush1.msra.mxu0 0.0
        %443 = vmatprep.subr.mxu0 0.0
        %444 = vmatpush1.msra.mxu0 0.0
        %445 = vmatprep.subr.mxu0 0.0
        %446 = vmatpush1.msra.mxu0 0.0
        %447 = vmatprep.subr.mxu0 0.0
        %448 = vmatpush1.msra.mxu0 0.0
        %449 = vmatprep.subr.mxu0 0.0
        %450 = vmatpush1.msra.mxu0 0.0
        %451 = vmatprep.subr.mxu0 0.0
        %452 = vmatpush1.msra.mxu0 0.0
        %453 = vmatprep.subr.mxu0 0.0
        %454 = vmatpush1.msra.mxu0 0.0
        %455 = vmatprep.subr.mxu0 0.0
        %456 = vmatpush1.msra.mxu0 0.0
        %457 = vmatprep.subr.mxu0 0.0
        %458 = vmatpush1.msra.mxu0 0.0
        %459 = vmatprep.subr.mxu0 0.0
        %460 = vmatpush1.msra.mxu0 0.0
        %461 = vmatprep.subr.mxu0 0.0
        %462 = vmatpush1.msra.mxu0 0.0
        %463 = vmatprep.subr.mxu0 0.0
        %464 = vmatpush1.msra.mxu0 0.0
        %465 = vmatprep.mubr.f32.mxu0 0.0
        %466 = vmatmul.mubr.f32.gmra.mrb[0].mxu0 %v397
        %v467 = vpop.f32.mrb[0].mxu0
        %v468 = vadd.f32 %v383, %v467
        %v469 = vpop.f32.mrb[0].mxu0
        %470 = vdwg.mxu0
        %471 = vrot.lane.b32.xlu0 %v395, 127
        %v472 = vpop.permute.xlu0 %471
        %v474 = vsel %vm309, %v272, 0
        %v476 = vsel %vm313, %v472, 0
        %478 = vmatprep.subr.mxu0 0.0
        %479 = vmatpush1.msra.mxu0 %v476
        %480 = vmatprep.subr.mxu0 0.0
        %481 = vmatpush1.msra.mxu0 0.0
        %482 = vmatprep.subr.mxu0 0.0
        %483 = vmatpush1.msra.mxu0 0.0
        %484 = vmatprep.subr.mxu0 0.0
        %485 = vmatpush1.msra.mxu0 0.0
        %486 = vmatprep.subr.mxu0 0.0
        %487 = vmatpush1.msra.mxu0 0.0
        %488 = vmatprep.subr.mxu0 0.0
        %489 = vmatpush1.msra.mxu0 0.0
        %490 = vmatprep.subr.mxu0 0.0
        %491 = vmatpush1.msra.mxu0 0.0
        %492 = vmatprep.subr.mxu0 0.0
        %493 = vmatpush1.msra.mxu0 0.0
        %494 = vmatprep.subr.mxu0 0.0
        %495 = vmatpush1.msra.mxu0 0.0
        %496 = vmatprep.subr.mxu0 0.0
        %497 = vmatpush1.msra.mxu0 0.0
        %498 = vmatprep.subr.mxu0 0.0
        %499 = vmatpush1.msra.mxu0 0.0
        %500 = vmatprep.subr.mxu0 0.0
        %501 = vmatpush1.msra.mxu0 0.0
        %502 = vmatprep.subr.mxu0 0.0
        %503 = vmatpush1.msra.mxu0 0.0
        %504 = vmatprep.subr.mxu0 0.0
        %505 = vmatpush1.msra.mxu0 0.0
        %506 = vmatprep.subr.mxu0 0.0
        %507 = vmatpush1.msra.mxu0 0.0
        %508 = vmatprep.subr.mxu0 0.0
        %509 = vmatpush1.msra.mxu0 0.0
        %510 = vmatprep.subr.mxu0 0.0
        %511 = vmatpush1.msra.mxu0 0.0
        %512 = vmatprep.subr.mxu0 0.0
        %513 = vmatpush1.msra.mxu0 0.0
        %514 = vmatprep.subr.mxu0 0.0
        %515 = vmatpush1.msra.mxu0 0.0
        %516 = vmatprep.subr.mxu0 0.0
        %517 = vmatpush1.msra.mxu0 0.0
        %518 = vmatprep.subr.mxu0 0.0
        %519 = vmatpush1.msra.mxu0 0.0
        %520 = vmatprep.subr.mxu0 0.0
        %521 = vmatpush1.msra.mxu0 0.0
        %522 = vmatprep.subr.mxu0 0.0
        %523 = vmatpush1.msra.mxu0 0.0
        %524 = vmatprep.subr.mxu0 0.0
        %525 = vmatpush1.msra.mxu0 0.0
        %526 = vmatprep.subr.mxu0 0.0
        %527 = vmatpush1.msra.mxu0 0.0
        %528 = vmatprep.subr.mxu0 0.0
        %529 = vmatpush1.msra.mxu0 0.0
        %530 = vmatprep.subr.mxu0 0.0
        %531 = vmatpush1.msra.mxu0 0.0
        %532 = vmatprep.subr.mxu0 0.0
        %533 = vmatpush1.msra.mxu0 0.0
        %534 = vmatprep.subr.mxu0 0.0
        %535 = vmatpush1.msra.mxu0 0.0
        %536 = vmatprep.subr.mxu0 0.0
        %537 = vmatpush1.msra.mxu0 0.0
        %538 = vmatprep.subr.mxu0 0.0
        %539 = vmatpush1.msra.mxu0 0.0
        %540 = vmatprep.subr.mxu0 0.0
        %541 = vmatpush1.msra.mxu0 0.0
        %542 = vmatprep.mubr.f32.mxu0 0.0
        %543 = vmatmul.mubr.f32.gmra.mrb[0].mxu0 %v474
        %v544 = vpop.f32.mrb[0].mxu0
        %v545 = vadd.f32 0.0, %v544
        %v546 = vpop.f32.mrb[0].mxu0
        %547 = vdwg.mxu0
        %v548 = vadd.f32 %v468, %v545
        %s549 = scalar_lea.vmem %s267, 128
        %v550 = vld [vmem:[%s549] sm:$0x1]
        %v551 = vld [vmem:[%s549 + $0x10] sm:$0x1]
        %v552 = vld [vmem:[%s549 + $0x20] sm:$0x1]
        %v553 = vld [vmem:[%s549 + $0x30] sm:$0x1]
        %v558 = vrot.slane %v551, 7
        %v559 = vsel %vm301, %v558, %v550
        %v560 = vrot.slane %v552, 6
        %v561 = vsel %vm304, %v560, %v559
        %v562 = vrot.slane %v553, 5
        %v563 = vsel %vm307, %v562, %v561
        %v565 = vsel %vm309, %v274, 0
        %v567 = vsel %vm313, %v563, 0
        %569 = vmatprep.subr.mxu0 0.0
        %570 = vmatpush1.msra.mxu0 %v567
        %571 = vmatprep.subr.mxu0 0.0
        %572 = vmatpush1.msra.mxu0 0.0
        %573 = vmatprep.subr.mxu0 0.0
        %574 = vmatpush1.msra.mxu0 0.0
        %575 = vmatprep.subr.mxu0 0.0
        %576 = vmatpush1.msra.mxu0 0.0
        %577 = vmatprep.subr.mxu0 0.0
        %578 = vmatpush1.msra.mxu0 0.0
        %579 = vmatprep.subr.mxu0 0.0
        %580 = vmatpush1.msra.mxu0 0.0
        %581 = vmatprep.subr.mxu0 0.0
        %582 = vmatpush1.msra.mxu0 0.0
        %583 = vmatprep.subr.mxu0 0.0
        %584 = vmatpush1.msra.mxu0 0.0
        %585 = vmatprep.subr.mxu0 0.0
        %586 = vmatpush1.msra.mxu0 0.0
        %587 = vmatprep.subr.mxu0 0.0
        %588 = vmatpush1.msra.mxu0 0.0
        %589 = vmatprep.subr.mxu0 0.0
        %590 = vmatpush1.msra.mxu0 0.0
        %591 = vmatprep.subr.mxu0 0.0
        %592 = vmatpush1.msra.mxu0 0.0
        %593 = vmatprep.subr.mxu0 0.0
        %594 = vmatpush1.msra.mxu0 0.0
        %595 = vmatprep.subr.mxu0 0.0
        %596 = vmatpush1.msra.mxu0 0.0
        %597 = vmatprep.subr.mxu0 0.0
        %598 = vmatpush1.msra.mxu0 0.0
        %599 = vmatprep.subr.mxu0 0.0
        %600 = vmatpush1.msra.mxu0 0.0
        %601 = vmatprep.subr.mxu0 0.0
        %602 = vmatpush1.msra.mxu0 0.0
        %603 = vmatprep.subr.mxu0 0.0
        %604 = vmatpush1.msra.mxu0 0.0
        %605 = vmatprep.subr.mxu0 0.0
        %606 = vmatpush1.msra.mxu0 0.0
        %607 = vmatprep.subr.mxu0 0.0
        %608 = vmatpush1.msra.mxu0 0.0
        %609 = vmatprep.subr.mxu0 0.0
        %610 = vmatpush1.msra.mxu0 0.0
        %611 = vmatprep.subr.mxu0 0.0
        %612 = vmatpush1.msra.mxu0 0.0
        %613 = vmatprep.subr.mxu0 0.0
        %614 = vmatpush1.msra.mxu0 0.0
        %615 = vmatprep.subr.mxu0 0.0
        %616 = vmatpush1.msra.mxu0 0.0
        %617 = vmatprep.subr.mxu0 0.0
        %618 = vmatpush1.msra.mxu0 0.0
        %619 = vmatprep.subr.mxu0 0.0
        %620 = vmatpush1.msra.mxu0 0.0
        %621 = vmatprep.subr.mxu0 0.0
        %622 = vmatpush1.msra.mxu0 0.0
        %623 = vmatprep.subr.mxu0 0.0
        %624 = vmatpush1.msra.mxu0 0.0
        %625 = vmatprep.subr.mxu0 0.0
        %626 = vmatpush1.msra.mxu0 0.0
        %627 = vmatprep.subr.mxu0 0.0
        %628 = vmatpush1.msra.mxu0 0.0
        %629 = vmatprep.subr.mxu0 0.0
        %630 = vmatpush1.msra.mxu0 0.0
        %631 = vmatprep.subr.mxu0 0.0
        %632 = vmatpush1.msra.mxu0 0.0
        %633 = vmatprep.mubr.f32.mxu0 0.0
        %634 = vmatmul.mubr.f32.gmra.mrb[0].mxu0 %v565
        %v635 = vpop.f32.mrb[0].mxu0
        %v636 = vadd.f32 0.0, %v635
        %v637 = vpop.f32.mrb[0].mxu0
        %638 = vdwg.mxu0
        %v639 = vadd.f32 %v548, %v636
        %s640 = scalar_lea.vmem %s267, 192
        %v641 = vld [vmem:[%s640] sm:$0x1]
        %v642 = vld [vmem:[%s640 + $0x10] sm:$0x1]
        %v643 = vld [vmem:[%s640 + $0x20] sm:$0x1]
        %v644 = vld [vmem:[%s640 + $0x30] sm:$0x1]
        %v649 = vrot.slane %v642, 7
        %v650 = vsel %vm301, %v649, %v641
        %v651 = vrot.slane %v643, 6
        %v652 = vsel %vm304, %v651, %v650
        %v653 = vrot.slane %v644, 5
        %v654 = vsel %vm307, %v653, %v652
        %v656 = vsel %vm309, %v276, 0
        %v658 = vsel %vm313, %v654, 0
        %660 = vmatprep.subr.mxu0 0.0
        %661 = vmatpush1.msra.mxu0 %v658
        %662 = vmatprep.subr.mxu0 0.0
        %663 = vmatpush1.msra.mxu0 0.0
        %664 = vmatprep.subr.mxu0 0.0
        %665 = vmatpush1.msra.mxu0 0.0
        %666 = vmatprep.subr.mxu0 0.0
        %667 = vmatpush1.msra.mxu0 0.0
        %668 = vmatprep.subr.mxu0 0.0
        %669 = vmatpush1.msra.mxu0 0.0
        %670 = vmatprep.subr.mxu0 0.0
        %671 = vmatpush1.msra.mxu0 0.0
        %672 = vmatprep.subr.mxu0 0.0
        %673 = vmatpush1.msra.mxu0 0.0
        %674 = vmatprep.subr.mxu0 0.0
        %675 = vmatpush1.msra.mxu0 0.0
        %676 = vmatprep.subr.mxu0 0.0
        %677 = vmatpush1.msra.mxu0 0.0
        %678 = vmatprep.subr.mxu0 0.0
        %679 = vmatpush1.msra.mxu0 0.0
        %680 = vmatprep.subr.mxu0 0.0
        %681 = vmatpush1.msra.mxu0 0.0
        %682 = vmatprep.subr.mxu0 0.0
        %683 = vmatpush1.msra.mxu0 0.0
        %684 = vmatprep.subr.mxu0 0.0
        %685 = vmatpush1.msra.mxu0 0.0
        %686 = vmatprep.subr.mxu0 0.0
        %687 = vmatpush1.msra.mxu0 0.0
        %688 = vmatprep.subr.mxu0 0.0
        %689 = vmatpush1.msra.mxu0 0.0
        %690 = vmatprep.subr.mxu0 0.0
        %691 = vmatpush1.msra.mxu0 0.0
        %692 = vmatprep.subr.mxu0 0.0
        %693 = vmatpush1.msra.mxu0 0.0
        %694 = vmatprep.subr.mxu0 0.0
        %695 = vmatpush1.msra.mxu0 0.0
        %696 = vmatprep.subr.mxu0 0.0
        %697 = vmatpush1.msra.mxu0 0.0
        %698 = vmatprep.subr.mxu0 0.0
        %699 = vmatpush1.msra.mxu0 0.0
        %700 = vmatprep.subr.mxu0 0.0
        %701 = vmatpush1.msra.mxu0 0.0
        %702 = vmatprep.subr.mxu0 0.0
        %703 = vmatpush1.msra.mxu0 0.0
        %704 = vmatprep.subr.mxu0 0.0
        %705 = vmatpush1.msra.mxu0 0.0
        %706 = vmatprep.subr.mxu0 0.0
        %707 = vmatpush1.msra.mxu0 0.0
        %708 = vmatprep.subr.mxu0 0.0
        %709 = vmatpush1.msra.mxu0 0.0
        %710 = vmatprep.subr.mxu0 0.0
        %711 = vmatpush1.msra.mxu0 0.0
        %712 = vmatprep.subr.mxu0 0.0
        %713 = vmatpush1.msra.mxu0 0.0
        %714 = vmatprep.subr.mxu0 0.0
        %715 = vmatpush1.msra.mxu0 0.0
        %716 = vmatprep.subr.mxu0 0.0
        %717 = vmatpush1.msra.mxu0 0.0
        %718 = vmatprep.subr.mxu0 0.0
        %719 = vmatpush1.msra.mxu0 0.0
        %720 = vmatprep.subr.mxu0 0.0
        %721 = vmatpush1.msra.mxu0 0.0
        %722 = vmatprep.subr.mxu0 0.0
        %723 = vmatpush1.msra.mxu0 0.0
        %724 = vmatprep.mubr.f32.mxu0 0.0
        %725 = vmatmul.mubr.f32.gmra.mrb[0].mxu0 %v656
        %v726 = vpop.f32.mrb[0].mxu0
        %v727 = vadd.f32 0.0, %v726
        %v728 = vpop.f32.mrb[0].mxu0
        %729 = vdwg.mxu0
        %v730 = vadd.f32 %v639, %v727
        %731 = vrot.lane.b32.xlu0 %v563, 127
        %v732 = vpop.permute.xlu0 %731
        %v734 = vsel %vm309, %v278, 0
        %v736 = vsel %vm313, %v732, 0
        %738 = vmatprep.subr.mxu0 0.0
        %739 = vmatpush1.msra.mxu0 %v736
        %740 = vmatprep.subr.mxu0 0.0
        %741 = vmatpush1.msra.mxu0 0.0
        %742 = vmatprep.subr.mxu0 0.0
        %743 = vmatpush1.msra.mxu0 0.0
        %744 = vmatprep.subr.mxu0 0.0
        %745 = vmatpush1.msra.mxu0 0.0
        %746 = vmatprep.subr.mxu0 0.0
        %747 = vmatpush1.msra.mxu0 0.0
        %748 = vmatprep.subr.mxu0 0.0
        %749 = vmatpush1.msra.mxu0 0.0
        %750 = vmatprep.subr.mxu0 0.0
        %751 = vmatpush1.msra.mxu0 0.0
        %752 = vmatprep.subr.mxu0 0.0
        %753 = vmatpush1.msra.mxu0 0.0
        %754 = vmatprep.subr.mxu0 0.0
        %755 = vmatpush1.msra.mxu0 0.0
        %756 = vmatprep.subr.mxu0 0.0
        %757 = vmatpush1.msra.mxu0 0.0
        %758 = vmatprep.subr.mxu0 0.0
        %759 = vmatpush1.msra.mxu0 0.0
        %760 = vmatprep.subr.mxu0 0.0
        %761 = vmatpush1.msra.mxu0 0.0
        %762 = vmatprep.subr.mxu0 0.0
        %763 = vmatpush1.msra.mxu0 0.0
        %764 = vmatprep.subr.mxu0 0.0
        %765 = vmatpush1.msra.mxu0 0.0
        %766 = vmatprep.subr.mxu0 0.0
        %767 = vmatpush1.msra.mxu0 0.0
        %768 = vmatprep.subr.mxu0 0.0
        %769 = vmatpush1.msra.mxu0 0.0
        %770 = vmatprep.subr.mxu0 0.0
        %771 = vmatpush1.msra.mxu0 0.0
        %772 = vmatprep.subr.mxu0 0.0
        %773 = vmatpush1.msra.mxu0 0.0
        %774 = vmatprep.subr.mxu0 0.0
        %775 = vmatpush1.msra.mxu0 0.0
        %776 = vmatprep.subr.mxu0 0.0
        %777 = vmatpush1.msra.mxu0 0.0
        %778 = vmatprep.subr.mxu0 0.0
        %779 = vmatpush1.msra.mxu0 0.0
        %780 = vmatprep.subr.mxu0 0.0
        %781 = vmatpush1.msra.mxu0 0.0
        %782 = vmatprep.subr.mxu0 0.0
        %783 = vmatpush1.msra.mxu0 0.0
        %784 = vmatprep.subr.mxu0 0.0
        %785 = vmatpush1.msra.mxu0 0.0
        %786 = vmatprep.subr.mxu0 0.0
        %787 = vmatpush1.msra.mxu0 0.0
        %788 = vmatprep.subr.mxu0 0.0
        %789 = vmatpush1.msra.mxu0 0.0
        %790 = vmatprep.subr.mxu0 0.0
        %791 = vmatpush1.msra.mxu0 0.0
        %792 = vmatprep.subr.mxu0 0.0
        %793 = vmatpush1.msra.mxu0 0.0
        %794 = vmatprep.subr.mxu0 0.0
        %795 = vmatpush1.msra.mxu0 0.0
        %796 = vmatprep.subr.mxu0 0.0
        %797 = vmatpush1.msra.mxu0 0.0
        %798 = vmatprep.subr.mxu0 0.0
        %799 = vmatpush1.msra.mxu0 0.0
        %800 = vmatprep.subr.mxu0 0.0
        %801 = vmatpush1.msra.mxu0 0.0
        %802 = vmatprep.mubr.f32.mxu0 0.0
        %803 = vmatmul.mubr.f32.gmra.mrb[0].mxu0 %v734
        %v804 = vpop.f32.mrb[0].mxu0
        %v805 = vadd.f32 0.0, %v804
        %v806 = vpop.f32.mrb[0].mxu0
        %807 = vdwg.mxu0
        %v808 = vadd.f32 %v730, %v805
        %v809 = vld [vmem:[%s267 + $0x1] sm:$0x1]
        %v810 = vld [vmem:[%s267 + $0x11] sm:$0x1]
        %v811 = vld [vmem:[%s267 + $0x21] sm:$0x1]
        %v812 = vld [vmem:[%s267 + $0x31] sm:$0x1]
        %v817 = vrot.slane %v810, 7
        %v818 = vsel %vm301, %v817, %v809
        %v819 = vrot.slane %v811, 6
        %v820 = vsel %vm304, %v819, %v818
        %v821 = vrot.slane %v812, 5
        %v822 = vsel %vm307, %v821, %v820
        %v824 = vsel %vm309, %v280, 0
        %v826 = vsel %vm313, %v822, 0
        %828 = vmatprep.subr.mxu0 0.0
        %829 = vmatpush1.msra.mxu0 %v826
        %830 = vmatprep.subr.mxu0 0.0
        %831 = vmatpush1.msra.mxu0 0.0
        %832 = vmatprep.subr.mxu0 0.0
        %833 = vmatpush1.msra.mxu0 0.0
        %834 = vmatprep.subr.mxu0 0.0
        %835 = vmatpush1.msra.mxu0 0.0
        %836 = vmatprep.subr.mxu0 0.0
        %837 = vmatpush1.msra.mxu0 0.0
        %838 = vmatprep.subr.mxu0 0.0
        %839 = vmatpush1.msra.mxu0 0.0
        %840 = vmatprep.subr.mxu0 0.0
        %841 = vmatpush1.msra.mxu0 0.0
        %842 = vmatprep.subr.mxu0 0.0
        %843 = vmatpush1.msra.mxu0 0.0
        %844 = vmatprep.subr.mxu0 0.0
        %845 = vmatpush1.msra.mxu0 0.0
        %846 = vmatprep.subr.mxu0 0.0
        %847 = vmatpush1.msra.mxu0 0.0
        %848 = vmatprep.subr.mxu0 0.0
        %849 = vmatpush1.msra.mxu0 0.0
        %850 = vmatprep.subr.mxu0 0.0
        %851 = vmatpush1.msra.mxu0 0.0
        %852 = vmatprep.subr.mxu0 0.0
        %853 = vmatpush1.msra.mxu0 0.0
        %854 = vmatprep.subr.mxu0 0.0
        %855 = vmatpush1.msra.mxu0 0.0
        %856 = vmatprep.subr.mxu0 0.0
        %857 = vmatpush1.msra.mxu0 0.0
        %858 = vmatprep.subr.mxu0 0.0
        %859 = vmatpush1.msra.mxu0 0.0
        %860 = vmatprep.subr.mxu0 0.0
        %861 = vmatpush1.msra.mxu0 0.0
        %862 = vmatprep.subr.mxu0 0.0
        %863 = vmatpush1.msra.mxu0 0.0
        %864 = vmatprep.subr.mxu0 0.0
        %865 = vmatpush1.msra.mxu0 0.0
        %866 = vmatprep.subr.mxu0 0.0
        %867 = vmatpush1.msra.mxu0 0.0
        %868 = vmatprep.subr.mxu0 0.0
        %869 = vmatpush1.msra.mxu0 0.0
        %870 = vmatprep.subr.mxu0 0.0
        %871 = vmatpush1.msra.mxu0 0.0
        %872 = vmatprep.subr.mxu0 0.0
        %873 = vmatpush1.msra.mxu0 0.0
        %874 = vmatprep.subr.mxu0 0.0
        %875 = vmatpush1.msra.mxu0 0.0
        %876 = vmatprep.subr.mxu0 0.0
        %877 = vmatpush1.msra.mxu0 0.0
        %878 = vmatprep.subr.mxu0 0.0
        %879 = vmatpush1.msra.mxu0 0.0
        %880 = vmatprep.subr.mxu0 0.0
        %881 = vmatpush1.msra.mxu0 0.0
        %882 = vmatprep.subr.mxu0 0.0
        %883 = vmatpush1.msra.mxu0 0.0
        %884 = vmatprep.subr.mxu0 0.0
        %885 = vmatpush1.msra.mxu0 0.0
        %886 = vmatprep.subr.mxu0 0.0
        %887 = vmatpush1.msra.mxu0 0.0
        %888 = vmatprep.subr.mxu0 0.0
        %889 = vmatpush1.msra.mxu0 0.0
        %890 = vmatprep.subr.mxu0 0.0
        %891 = vmatpush1.msra.mxu0 0.0
        %892 = vmatprep.mubr.f32.mxu0 0.0
        %893 = vmatmul.mubr.f32.gmra.mrb[0].mxu0 %v824
        %v894 = vpop.f32.mrb[0].mxu0
        %v895 = vadd.f32 0.0, %v894
        %v896 = vpop.f32.mrb[0].mxu0
        %897 = vdwg.mxu0
        %v898 = vadd.f32 %v808, %v895
        %v899 = vld [vmem:[%s291 + $0x1] sm:$0x1]
        %v900 = vld [vmem:[%s291 + $0x11] sm:$0x1]
        %v901 = vld [vmem:[%s291 + $0x21] sm:$0x1]
        %v902 = vld [vmem:[%s291 + $0x31] sm:$0x1]
        %v907 = vrot.slane %v900, 7
        %v908 = vsel %vm301, %v907, %v899
        %v909 = vrot.slane %v901, 6
        %v910 = vsel %vm304, %v909, %v908
        %v911 = vrot.slane %v902, 5
        %v912 = vsel %vm307, %v911, %v910
        %v914 = vsel %vm309, %v282, 0
        %v916 = vsel %vm313, %v912, 0
        %918 = vmatprep.subr.mxu0 0.0
        %919 = vmatpush1.msra.mxu0 %v916
        %920 = vmatprep.subr.mxu0 0.0
        %921 = vmatpush1.msra.mxu0 0.0
        %922 = vmatprep.subr.mxu0 0.0
        %923 = vmatpush1.msra.mxu0 0.0
        %924 = vmatprep.subr.mxu0 0.0
        %925 = vmatpush1.msra.mxu0 0.0
        %926 = vmatprep.subr.mxu0 0.0
        %927 = vmatpush1.msra.mxu0 0.0
        %928 = vmatprep.subr.mxu0 0.0
        %929 = vmatpush1.msra.mxu0 0.0
        %930 = vmatprep.subr.mxu0 0.0
        %931 = vmatpush1.msra.mxu0 0.0
        %932 = vmatprep.subr.mxu0 0.0
        %933 = vmatpush1.msra.mxu0 0.0
        %934 = vmatprep.subr.mxu0 0.0
        %935 = vmatpush1.msra.mxu0 0.0
        %936 = vmatprep.subr.mxu0 0.0
        %937 = vmatpush1.msra.mxu0 0.0
        %938 = vmatprep.subr.mxu0 0.0
        %939 = vmatpush1.msra.mxu0 0.0
        %940 = vmatprep.subr.mxu0 0.0
        %941 = vmatpush1.msra.mxu0 0.0
        %942 = vmatprep.subr.mxu0 0.0
        %943 = vmatpush1.msra.mxu0 0.0
        %944 = vmatprep.subr.mxu0 0.0
        %945 = vmatpush1.msra.mxu0 0.0
        %946 = vmatprep.subr.mxu0 0.0
        %947 = vmatpush1.msra.mxu0 0.0
        %948 = vmatprep.subr.mxu0 0.0
        %949 = vmatpush1.msra.mxu0 0.0
        %950 = vmatprep.subr.mxu0 0.0
        %951 = vmatpush1.msra.mxu0 0.0
        %952 = vmatprep.subr.mxu0 0.0
        %953 = vmatpush1.msra.mxu0 0.0
        %954 = vmatprep.subr.mxu0 0.0
        %955 = vmatpush1.msra.mxu0 0.0
        %956 = vmatprep.subr.mxu0 0.0
        %957 = vmatpush1.msra.mxu0 0.0
        %958 = vmatprep.subr.mxu0 0.0
        %959 = vmatpush1.msra.mxu0 0.0
        %960 = vmatprep.subr.mxu0 0.0
        %961 = vmatpush1.msra.mxu0 0.0
        %962 = vmatprep.subr.mxu0 0.0
        %963 = vmatpush1.msra.mxu0 0.0
        %964 = vmatprep.subr.mxu0 0.0
        %965 = vmatpush1.msra.mxu0 0.0
        %966 = vmatprep.subr.mxu0 0.0
        %967 = vmatpush1.msra.mxu0 0.0
        %968 = vmatprep.subr.mxu0 0.0
        %969 = vmatpush1.msra.mxu0 0.0
        %970 = vmatprep.subr.mxu0 0.0
        %971 = vmatpush1.msra.mxu0 0.0
        %972 = vmatprep.subr.mxu0 0.0
        %973 = vmatpush1.msra.mxu0 0.0
        %974 = vmatprep.subr.mxu0 0.0
        %975 = vmatpush1.msra.mxu0 0.0
        %976 = vmatprep.subr.mxu0 0.0
        %977 = vmatpush1.msra.mxu0 0.0
        %978 = vmatprep.subr.mxu0 0.0
        %979 = vmatpush1.msra.mxu0 0.0
        %980 = vmatprep.subr.mxu0 0.0
        %981 = vmatpush1.msra.mxu0 0.0
        %982 = vmatprep.mubr.f32.mxu0 0.0
        %983 = vmatmul.mubr.f32.gmra.mrb[0].mxu0 %v914
        %v984 = vpop.f32.mrb[0].mxu0
        %v985 = vadd.f32 0.0, %v984
        %v986 = vpop.f32.mrb[0].mxu0
        %987 = vdwg.mxu0
        %v988 = vadd.f32 %v898, %v985
        %989 = vrot.lane.b32.xlu0 %v822, 127
        %v990 = vpop.permute.xlu0 %989
        %v992 = vsel %vm309, %v284, 0
        %v994 = vsel %vm313, %v990, 0
        %996 = vmatprep.subr.mxu0 0.0
        %997 = vmatpush1.msra.mxu0 %v994
        %998 = vmatprep.subr.mxu0 0.0
        %999 = vmatpush1.msra.mxu0 0.0
        %1000 = vmatprep.subr.mxu0 0.0
        %1001 = vmatpush1.msra.mxu0 0.0
        %1002 = vmatprep.subr.mxu0 0.0
        %1003 = vmatpush1.msra.mxu0 0.0
        %1004 = vmatprep.subr.mxu0 0.0
        %1005 = vmatpush1.msra.mxu0 0.0
        %1006 = vmatprep.subr.mxu0 0.0
        %1007 = vmatpush1.msra.mxu0 0.0
        %1008 = vmatprep.subr.mxu0 0.0
        %1009 = vmatpush1.msra.mxu0 0.0
        %1010 = vmatprep.subr.mxu0 0.0
        %1011 = vmatpush1.msra.mxu0 0.0
        %1012 = vmatprep.subr.mxu0 0.0
        %1013 = vmatpush1.msra.mxu0 0.0
        %1014 = vmatprep.subr.mxu0 0.0
        %1015 = vmatpush1.msra.mxu0 0.0
        %1016 = vmatprep.subr.mxu0 0.0
        %1017 = vmatpush1.msra.mxu0 0.0
        %1018 = vmatprep.subr.mxu0 0.0
        %1019 = vmatpush1.msra.mxu0 0.0
        %1020 = vmatprep.subr.mxu0 0.0
        %1021 = vmatpush1.msra.mxu0 0.0
        %1022 = vmatprep.subr.mxu0 0.0
        %1023 = vmatpush1.msra.mxu0 0.0
        %1024 = vmatprep.subr.mxu0 0.0
        %1025 = vmatpush1.msra.mxu0 0.0
        %1026 = vmatprep.subr.mxu0 0.0
        %1027 = vmatpush1.msra.mxu0 0.0
        %1028 = vmatprep.subr.mxu0 0.0
        %1029 = vmatpush1.msra.mxu0 0.0
        %1030 = vmatprep.subr.mxu0 0.0
        %1031 = vmatpush1.msra.mxu0 0.0
        %1032 = vmatprep.subr.mxu0 0.0
        %1033 = vmatpush1.msra.mxu0 0.0
        %1034 = vmatprep.subr.mxu0 0.0
        %1035 = vmatpush1.msra.mxu0 0.0
        %1036 = vmatprep.subr.mxu0 0.0
        %1037 = vmatpush1.msra.mxu0 0.0
        %1038 = vmatprep.subr.mxu0 0.0
        %1039 = vmatpush1.msra.mxu0 0.0
        %1040 = vmatprep.subr.mxu0 0.0
        %1041 = vmatpush1.msra.mxu0 0.0
        %1042 = vmatprep.subr.mxu0 0.0
        %1043 = vmatpush1.msra.mxu0 0.0
        %1044 = vmatprep.subr.mxu0 0.0
        %1045 = vmatpush1.msra.mxu0 0.0
        %1046 = vmatprep.subr.mxu0 0.0
        %1047 = vmatpush1.msra.mxu0 0.0
        %1048 = vmatprep.subr.mxu0 0.0
        %1049 = vmatpush1.msra.mxu0 0.0
        %1050 = vmatprep.subr.mxu0 0.0
        %1051 = vmatpush1.msra.mxu0 0.0
        %1052 = vmatprep.subr.mxu0 0.0
        %1053 = vmatpush1.msra.mxu0 0.0
        %1054 = vmatprep.subr.mxu0 0.0
        %1055 = vmatpush1.msra.mxu0 0.0
        %1056 = vmatprep.subr.mxu0 0.0
        %1057 = vmatpush1.msra.mxu0 0.0
        %1058 = vmatprep.subr.mxu0 0.0
        %1059 = vmatpush1.msra.mxu0 0.0
        %1060 = vmatprep.mubr.f32.mxu0 0.0
        %1061 = vmatmul.mubr.f32.gmra.mrb[0].mxu0 %v992
        %v1062 = vpop.f32.mrb[0].mxu0
        %v1063 = vadd.f32 0.0, %v1062
        %v1064 = vpop.f32.mrb[0].mxu0
        %1065 = vdwg.mxu0
        %v1066 = vadd.f32 %v988, %v1063
        %v1068 = vcombine.high %v1066, %v1066
        %v1070 = vunpack.c.l.s4 1966171168
        %v1071 = vunpack.c.0.s8 %v1070
        %v1072 = vlaneseq
        %v1073 = vshrl.u32 %v1072, 7
        %v1074 = vsub.s32 %v1071, %v1073
        %v1075 = vrot.slane %v1066, %v1074
        %v1077 = vunpack.c.l.s4 1966171168
        %v1078 = vunpack.c.0.s8 %v1077
        %v1079 = vlaneseq
        %v1080 = vshrl.u32 %v1079, 7
        %v1081 = vsub.s32 %v1078, %v1080
        %v1082 = vrot.slane %v1068, %v1081
        %v1083 = vcombine.high %v1075, %v1075
        %v1084 = vcombine.high %v1082, %v1082
        %v1086 = vunpack.c.l.s4 1966171168
        %v1087 = vunpack.c.0.s8 %v1086
        %v1088 = vlaneseq
        %v1089 = vshrl.u32 %v1088, 7
        %v1090 = vsub.s32 %v1087, %v1089
        %v1091 = vrot.slane %v1075, %v1090
        %v1093 = vunpack.c.l.s4 1966171168
        %v1094 = vunpack.c.0.s8 %v1093
        %v1095 = vlaneseq
        %v1096 = vshrl.u32 %v1095, 7
        %v1097 = vsub.s32 %v1094, %v1096
        %v1098 = vrot.slane %v1082, %v1097
        %v1100 = vunpack.c.l.s4 1966171168
        %v1101 = vunpack.c.0.s8 %v1100
        %v1102 = vlaneseq
        %v1103 = vshrl.u32 %v1102, 7
        %v1104 = vsub.s32 %v1101, %v1103
        %v1105 = vrot.slane %v1083, %v1104
        %v1107 = vunpack.c.l.s4 1966171168
        %v1108 = vunpack.c.0.s8 %v1107
        %v1109 = vlaneseq
        %v1110 = vshrl.u32 %v1109, 7
        %v1111 = vsub.s32 %v1108, %v1110
        %v1112 = vrot.slane %v1084, %v1111
        %v1113 = vcombine.high %v1091, %v1091
        %v1114 = vcombine.high %v1098, %v1098
        %v1115 = vcombine.high %v1105, %v1105
        %v1116 = vcombine.high %v1112, %v1112
        %vm1125 = vcmask 57344
        %1126 = vst.msk [vmem:[%s248] sm:$0x1] %vm1125, %v1091
        %1127 = vst.msk [vmem:[%s248 + $0x8] sm:$0x1] %vm1125, %v1105
        %1128 = vst.msk [vmem:[%s248 + $0x10] sm:$0x1] %vm1125, %v1113
        %1129 = vst.msk [vmem:[%s248 + $0x18] sm:$0x1] %vm1125, %v1115
        %1130 = vst.msk [vmem:[%s248 + $0x20] sm:$0x1] %vm1125, %v1098
        %1131 = vst.msk [vmem:[%s248 + $0x28] sm:$0x1] %vm1125, %v1112
        %1132 = vst.msk [vmem:[%s248 + $0x30] sm:$0x1] %vm1125, %v1114
        %1133 = vst.msk [vmem:[%s248 + $0x38] sm:$0x1] %vm1125, %v1116
        %1135 = vset.pattern.permute.xlu0 0
        %1136 = vperm.xlu0 %1135, %v285
        %v1137 = vpop.permute.xlu0 %1136
        %v1139 = vmul.f32 %v1066, %v1137
        %1141 = vset.pattern.permute.xlu0 0
        %1142 = vperm.xlu0 %1141, %v286
        %v1143 = vpop.permute.xlu0 %1142
        %v1145 = vadd.f32 %v1139, %v1143
        %v1147 = vcombine.high %v1145, %v1145
        %v1149 = vunpack.c.l.s4 1966171168
        %v1150 = vunpack.c.0.s8 %v1149
        %v1151 = vlaneseq
        %v1152 = vshrl.u32 %v1151, 7
        %v1153 = vsub.s32 %v1150, %v1152
        %v1154 = vrot.slane %v1145, %v1153
        %v1156 = vunpack.c.l.s4 1966171168
        %v1157 = vunpack.c.0.s8 %v1156
        %v1158 = vlaneseq
        %v1159 = vshrl.u32 %v1158, 7
        %v1160 = vsub.s32 %v1157, %v1159
        %v1161 = vrot.slane %v1147, %v1160
        %v1162 = vcombine.high %v1154, %v1154
        %v1163 = vcombine.high %v1161, %v1161
        %v1165 = vunpack.c.l.s4 1966171168
        %v1166 = vunpack.c.0.s8 %v1165
        %v1167 = vlaneseq
        %v1168 = vshrl.u32 %v1167, 7
        %v1169 = vsub.s32 %v1166, %v1168
        %v1170 = vrot.slane %v1154, %v1169
        %v1172 = vunpack.c.l.s4 1966171168
        %v1173 = vunpack.c.0.s8 %v1172
        %v1174 = vlaneseq
        %v1175 = vshrl.u32 %v1174, 7
        %v1176 = vsub.s32 %v1173, %v1175
        %v1177 = vrot.slane %v1161, %v1176
        %v1179 = vunpack.c.l.s4 1966171168
        %v1180 = vunpack.c.0.s8 %v1179
        %v1181 = vlaneseq
        %v1182 = vshrl.u32 %v1181, 7
        %v1183 = vsub.s32 %v1180, %v1182
        %v1184 = vrot.slane %v1162, %v1183
        %v1186 = vunpack.c.l.s4 1966171168
        %v1187 = vunpack.c.0.s8 %v1186
        %v1188 = vlaneseq
        %v1189 = vshrl.u32 %v1188, 7
        %v1190 = vsub.s32 %v1187, %v1189
        %v1191 = vrot.slane %v1163, %v1190
        %v1192 = vcombine.high %v1170, %v1170
        %v1193 = vcombine.high %v1177, %v1177
        %v1194 = vcombine.high %v1184, %v1184
        %v1195 = vcombine.high %v1191, %v1191
        %1204 = vst.msk [vmem:[%s255] sm:$0x1] %vm1125, %v1170
        %1205 = vst.msk [vmem:[%s255 + $0x8] sm:$0x1] %vm1125, %v1184
        %1206 = vst.msk [vmem:[%s255 + $0x10] sm:$0x1] %vm1125, %v1192
        %1207 = vst.msk [vmem:[%s255 + $0x18] sm:$0x1] %vm1125, %v1194
        %1208 = vst.msk [vmem:[%s255 + $0x20] sm:$0x1] %vm1125, %v1177
        %1209 = vst.msk [vmem:[%s255 + $0x28] sm:$0x1] %vm1125, %v1191
        %1210 = vst.msk [vmem:[%s255 + $0x30] sm:$0x1] %vm1125, %v1193
        %1211 = vst.msk [vmem:[%s255 + $0x38] sm:$0x1] %vm1125, %v1195
        %v1212 = vsub.f32 0.0, %v1145
        %v1213 = vmul.f32 %v1212, 1.442695
        %v1214 = vpow.pop %v1213
        %v1215 = vadd.f32 %v1214, 1.0
        %v1216 = vrcp.pop %v1215
        %v1217 = vmul.f32 %v1145, %v1216
        %v1219 = vcombine.high %v1217, %v1217
        %v1221 = vunpack.c.l.s4 1966171168
        %v1222 = vunpack.c.0.s8 %v1221
        %v1223 = vlaneseq
        %v1224 = vshrl.u32 %v1223, 7
        %v1225 = vsub.s32 %v1222, %v1224
        %v1226 = vrot.slane %v1217, %v1225
        %v1228 = vunpack.c.l.s4 1966171168
        %v1229 = vunpack.c.0.s8 %v1228
        %v1230 = vlaneseq
        %v1231 = vshrl.u32 %v1230, 7
        %v1232 = vsub.s32 %v1229, %v1231
        %v1233 = vrot.slane %v1219, %v1232
        %v1234 = vcombine.high %v1226, %v1226
        %v1235 = vcombine.high %v1233, %v1233
        %v1237 = vunpack.c.l.s4 1966171168
        %v1238 = vunpack.c.0.s8 %v1237
        %v1239 = vlaneseq
        %v1240 = vshrl.u32 %v1239, 7
        %v1241 = vsub.s32 %v1238, %v1240
        %v1242 = vrot.slane %v1226, %v1241
        %v1244 = vunpack.c.l.s4 1966171168
        %v1245 = vunpack.c.0.s8 %v1244
        %v1246 = vlaneseq
        %v1247 = vshrl.u32 %v1246, 7
        %v1248 = vsub.s32 %v1245, %v1247
        %v1249 = vrot.slane %v1233, %v1248
        %v1251 = vunpack.c.l.s4 1966171168
        %v1252 = vunpack.c.0.s8 %v1251
        %v1253 = vlaneseq
        %v1254 = vshrl.u32 %v1253, 7
        %v1255 = vsub.s32 %v1252, %v1254
        %v1256 = vrot.slane %v1234, %v1255
        %v1258 = vunpack.c.l.s4 1966171168
        %v1259 = vunpack.c.0.s8 %v1258
        %v1260 = vlaneseq
        %v1261 = vshrl.u32 %v1260, 7
        %v1262 = vsub.s32 %v1259, %v1261
        %v1263 = vrot.slane %v1235, %v1262
        %v1264 = vcombine.high %v1242, %v1242
        %v1265 = vcombine.high %v1249, %v1249
        %v1266 = vcombine.high %v1256, %v1256
        %v1267 = vcombine.high %v1263, %v1263
        %1276 = vst.msk [vmem:[%s262] sm:$0x1] %vm1125, %v1242
        %1277 = vst.msk [vmem:[%s262 + $0x8] sm:$0x1] %vm1125, %v1256
        %1278 = vst.msk [vmem:[%s262 + $0x10] sm:$0x1] %vm1125, %v1264
        %1279 = vst.msk [vmem:[%s262 + $0x18] sm:$0x1] %vm1125, %v1266
        %1280 = vst.msk [vmem:[%s262 + $0x20] sm:$0x1] %vm1125, %v1249
        %1281 = vst.msk [vmem:[%s262 + $0x28] sm:$0x1] %vm1125, %v1263
        %1282 = vst.msk [vmem:[%s262 + $0x30] sm:$0x1] %vm1125, %v1265
        %1283 = vst.msk [vmem:[%s262 + $0x38] sm:$0x1] %vm1125, %v1267
        %v1284 = vld [vmem:[%s267 + $0x1] sm:$0x1]
        %v1285 = vld [vmem:[%s267 + $0x11] sm:$0x1]
        %v1286 = vld [vmem:[%s267 + $0x21] sm:$0x1]
        %v1287 = vld [vmem:[%s267 + $0x31] sm:$0x1]
        %v1288 = vld [vmem:[%s291 + $0x1] sm:$0x1]
        %v1289 = vld [vmem:[%s291 + $0x11] sm:$0x1]
        %v1290 = vld [vmem:[%s291 + $0x21] sm:$0x1]
        %v1291 = vld [vmem:[%s291 + $0x31] sm:$0x1]
        %v1296 = vrot.slane %v1289, 7
        %v1297 = vsel %vm301, %v1296, %v1288
        %v1298 = vrot.slane %v1290, 6
        %v1299 = vsel %vm304, %v1298, %v1297
        %v1300 = vrot.slane %v1291, 5
        %v1301 = vsel %vm307, %v1300, %v1299
        %v1302 = vsel %vm313, %v1301, 0
        %1304 = vmatprep.subr.mxu0 0.0
        %1305 = vmatpush1.msra.mxu0 %v1302
        %1306 = vmatprep.subr.mxu0 0.0
        %1307 = vmatpush1.msra.mxu0 0.0
        %1308 = vmatprep.subr.mxu0 0.0
        %1309 = vmatpush1.msra.mxu0 0.0
        %1310 = vmatprep.subr.mxu0 0.0
        %1311 = vmatpush1.msra.mxu0 0.0
        %1312 = vmatprep.subr.mxu0 0.0
        %1313 = vmatpush1.msra.mxu0 0.0
        %1314 = vmatprep.subr.mxu0 0.0
        %1315 = vmatpush1.msra.mxu0 0.0
        %1316 = vmatprep.subr.mxu0 0.0
        %1317 = vmatpush1.msra.mxu0 0.0
        %1318 = vmatprep.subr.mxu0 0.0
        %1319 = vmatpush1.msra.mxu0 0.0
        %1320 = vmatprep.subr.mxu0 0.0
        %1321 = vmatpush1.msra.mxu0 0.0
        %1322 = vmatprep.subr.mxu0 0.0
        %1323 = vmatpush1.msra.mxu0 0.0
        %1324 = vmatprep.subr.mxu0 0.0
        %1325 = vmatpush1.msra.mxu0 0.0
        %1326 = vmatprep.subr.mxu0 0.0
        %1327 = vmatpush1.msra.mxu0 0.0
        %1328 = vmatprep.subr.mxu0 0.0
        %1329 = vmatpush1.msra.mxu0 0.0
        %1330 = vmatprep.subr.mxu0 0.0
        %1331 = vmatpush1.msra.mxu0 0.0
        %1332 = vmatprep.subr.mxu0 0.0
        %1333 = vmatpush1.msra.mxu0 0.0
        %1334 = vmatprep.subr.mxu0 0.0
        %1335 = vmatpush1.msra.mxu0 0.0
        %1336 = vmatprep.subr.mxu0 0.0
        %1337 = vmatpush1.msra.mxu0 0.0
        %1338 = vmatprep.subr.mxu0 0.0
        %1339 = vmatpush1.msra.mxu0 0.0
        %1340 = vmatprep.subr.mxu0 0.0
        %1341 = vmatpush1.msra.mxu0 0.0
        %1342 = vmatprep.subr.mxu0 0.0
        %1343 = vmatpush1.msra.mxu0 0.0
        %1344 = vmatprep.subr.mxu0 0.0
        %1345 = vmatpush1.msra.mxu0 0.0
        %1346 = vmatprep.subr.mxu0 0.0
        %1347 = vmatpush1.msra.mxu0 0.0
        %1348 = vmatprep.subr.mxu0 0.0
        %1349 = vmatpush1.msra.mxu0 0.0
        %1350 = vmatprep.subr.mxu0 0.0
        %1351 = vmatpush1.msra.mxu0 0.0
        %1352 = vmatprep.subr.mxu0 0.0
        %1353 = vmatpush1.msra.mxu0 0.0
        %1354 = vmatprep.subr.mxu0 0.0
        %1355 = vmatpush1.msra.mxu0 0.0
        %1356 = vmatprep.subr.mxu0 0.0
        %1357 = vmatpush1.msra.mxu0 0.0
        %1358 = vmatprep.subr.mxu0 0.0
        %1359 = vmatpush1.msra.mxu0 0.0
        %1360 = vmatprep.subr.mxu0 0.0
        %1361 = vmatpush1.msra.mxu0 0.0
        %1362 = vmatprep.subr.mxu0 0.0
        %1363 = vmatpush1.msra.mxu0 0.0
        %1364 = vmatprep.subr.mxu0 0.0
        %1365 = vmatpush1.msra.mxu0 0.0
        %1366 = vmatprep.subr.mxu0 0.0
        %1367 = vmatpush1.msra.mxu0 0.0
        %1368 = vmatprep.mubr.f32.mxu0 0.0
        %1369 = vmatmul.mubr.f32.gmra.mrb[0].mxu0 %v311
        %v1370 = vpop.f32.mrb[0].mxu0
        %v1371 = vadd.f32 0.0, %v1370
        %v1372 = vpop.f32.mrb[0].mxu0
        %1373 = vdwg.mxu0
        %v1378 = vrot.slane %v1285, 7
        %v1379 = vsel %vm301, %v1378, %v1284
        %v1380 = vrot.slane %v1286, 6
        %v1381 = vsel %vm304, %v1380, %v1379
        %v1382 = vrot.slane %v1287, 5
        %v1383 = vsel %vm307, %v1382, %v1381
        %v1384 = vsel %vm313, %v1383, 0
        %1386 = vmatprep.subr.mxu0 0.0
        %1387 = vmatpush1.msra.mxu0 %v1384
        %1388 = vmatprep.subr.mxu0 0.0
        %1389 = vmatpush1.msra.mxu0 0.0
        %1390 = vmatprep.subr.mxu0 0.0
        %1391 = vmatpush1.msra.mxu0 0.0
        %1392 = vmatprep.subr.mxu0 0.0
        %1393 = vmatpush1.msra.mxu0 0.0
        %1394 = vmatprep.subr.mxu0 0.0
        %1395 = vmatpush1.msra.mxu0 0.0
        %1396 = vmatprep.subr.mxu0 0.0
        %1397 = vmatpush1.msra.mxu0 0.0
        %1398 = vmatprep.subr.mxu0 0.0
        %1399 = vmatpush1.msra.mxu0 0.0
        %1400 = vmatprep.subr.mxu0 0.0
        %1401 = vmatpush1.msra.mxu0 0.0
        %1402 = vmatprep.subr.mxu0 0.0
        %1403 = vmatpush1.msra.mxu0 0.0
        %1404 = vmatprep.subr.mxu0 0.0
        %1405 = vmatpush1.msra.mxu0 0.0
        %1406 = vmatprep.subr.mxu0 0.0
        %1407 = vmatpush1.msra.mxu0 0.0
        %1408 = vmatprep.subr.mxu0 0.0
        %1409 = vmatpush1.msra.mxu0 0.0
        %1410 = vmatprep.subr.mxu0 0.0
        %1411 = vmatpush1.msra.mxu0 0.0
        %1412 = vmatprep.subr.mxu0 0.0
        %1413 = vmatpush1.msra.mxu0 0.0
        %1414 = vmatprep.subr.mxu0 0.0
        %1415 = vmatpush1.msra.mxu0 0.0
        %1416 = vmatprep.subr.mxu0 0.0
        %1417 = vmatpush1.msra.mxu0 0.0
        %1418 = vmatprep.subr.mxu0 0.0
        %1419 = vmatpush1.msra.mxu0 0.0
        %1420 = vmatprep.subr.mxu0 0.0
        %1421 = vmatpush1.msra.mxu0 0.0
        %1422 = vmatprep.subr.mxu0 0.0
        %1423 = vmatpush1.msra.mxu0 0.0
        %1424 = vmatprep.subr.mxu0 0.0
        %1425 = vmatpush1.msra.mxu0 0.0
        %1426 = vmatprep.subr.mxu0 0.0
        %1427 = vmatpush1.msra.mxu0 0.0
        %1428 = vmatprep.subr.mxu0 0.0
        %1429 = vmatpush1.msra.mxu0 0.0
        %1430 = vmatprep.subr.mxu0 0.0
        %1431 = vmatpush1.msra.mxu0 0.0
        %1432 = vmatprep.subr.mxu0 0.0
        %1433 = vmatpush1.msra.mxu0 0.0
        %1434 = vmatprep.subr.mxu0 0.0
        %1435 = vmatpush1.msra.mxu0 0.0
        %1436 = vmatprep.subr.mxu0 0.0
        %1437 = vmatpush1.msra.mxu0 0.0
        %1438 = vmatprep.subr.mxu0 0.0
        %1439 = vmatpush1.msra.mxu0 0.0
        %1440 = vmatprep.subr.mxu0 0.0
        %1441 = vmatpush1.msra.mxu0 0.0
        %1442 = vmatprep.subr.mxu0 0.0
        %1443 = vmatpush1.msra.mxu0 0.0
        %1444 = vmatprep.subr.mxu0 0.0
        %1445 = vmatpush1.msra.mxu0 0.0
        %1446 = vmatprep.subr.mxu0 0.0
        %1447 = vmatpush1.msra.mxu0 0.0
        %1448 = vmatprep.subr.mxu0 0.0
        %1449 = vmatpush1.msra.mxu0 0.0
        %1450 = vmatprep.mubr.f32.mxu0 0.0
        %1451 = vmatmul.mubr.f32.gmra.mrb[0].mxu0 %v397
        %v1452 = vpop.f32.mrb[0].mxu0
        %v1453 = vadd.f32 %v1371, %v1452
        %v1454 = vpop.f32.mrb[0].mxu0
        %1455 = vdwg.mxu0
        %1456 = vrot.lane.b32.xlu0 %v1383, 127
        %v1457 = vpop.permute.xlu0 %1456
        %v1458 = vsel %vm313, %v1457, 0
        %1460 = vmatprep.subr.mxu0 0.0
        %1461 = vmatpush1.msra.mxu0 %v1458
        %1462 = vmatprep.subr.mxu0 0.0
        %1463 = vmatpush1.msra.mxu0 0.0
        %1464 = vmatprep.subr.mxu0 0.0
        %1465 = vmatpush1.msra.mxu0 0.0
        %1466 = vmatprep.subr.mxu0 0.0
        %1467 = vmatpush1.msra.mxu0 0.0
        %1468 = vmatprep.subr.mxu0 0.0
        %1469 = vmatpush1.msra.mxu0 0.0
        %1470 = vmatprep.subr.mxu0 0.0
        %1471 = vmatpush1.msra.mxu0 0.0
        %1472 = vmatprep.subr.mxu0 0.0
        %1473 = vmatpush1.msra.mxu0 0.0
        %1474 = vmatprep.subr.mxu0 0.0
        %1475 = vmatpush1.msra.mxu0 0.0
        %1476 = vmatprep.subr.mxu0 0.0
        %1477 = vmatpush1.msra.mxu0 0.0
        %1478 = vmatprep.subr.mxu0 0.0
        %1479 = vmatpush1.msra.mxu0 0.0
        %1480 = vmatprep.subr.mxu0 0.0
        %1481 = vmatpush1.msra.mxu0 0.0
        %1482 = vmatprep.subr.mxu0 0.0
        %1483 = vmatpush1.msra.mxu0 0.0
        %1484 = vmatprep.subr.mxu0 0.0
        %1485 = vmatpush1.msra.mxu0 0.0
        %1486 = vmatprep.subr.mxu0 0.0
        %1487 = vmatpush1.msra.mxu0 0.0
        %1488 = vmatprep.subr.mxu0 0.0
        %1489 = vmatpush1.msra.mxu0 0.0
        %1490 = vmatprep.subr.mxu0 0.0
        %1491 = vmatpush1.msra.mxu0 0.0
        %1492 = vmatprep.subr.mxu0 0.0
        %1493 = vmatpush1.msra.mxu0 0.0
        %1494 = vmatprep.subr.mxu0 0.0
        %1495 = vmatpush1.msra.mxu0 0.0
        %1496 = vmatprep.subr.mxu0 0.0
        %1497 = vmatpush1.msra.mxu0 0.0
        %1498 = vmatprep.subr.mxu0 0.0
        %1499 = vmatpush1.msra.mxu0 0.0
        %1500 = vmatprep.subr.mxu0 0.0
        %1501 = vmatpush1.msra.mxu0 0.0
        %1502 = vmatprep.subr.mxu0 0.0
        %1503 = vmatpush1.msra.mxu0 0.0
        %1504 = vmatprep.subr.mxu0 0.0
        %1505 = vmatpush1.msra.mxu0 0.0
        %1506 = vmatprep.subr.mxu0 0.0
        %1507 = vmatpush1.msra.mxu0 0.0
        %1508 = vmatprep.subr.mxu0 0.0
        %1509 = vmatpush1.msra.mxu0 0.0
        %1510 = vmatprep.subr.mxu0 0.0
        %1511 = vmatpush1.msra.mxu0 0.0
        %1512 = vmatprep.subr.mxu0 0.0
        %1513 = vmatpush1.msra.mxu0 0.0
        %1514 = vmatprep.subr.mxu0 0.0
        %1515 = vmatpush1.msra.mxu0 0.0
        %1516 = vmatprep.subr.mxu0 0.0
        %1517 = vmatpush1.msra.mxu0 0.0
        %1518 = vmatprep.subr.mxu0 0.0
        %1519 = vmatpush1.msra.mxu0 0.0
        %1520 = vmatprep.subr.mxu0 0.0
        %1521 = vmatpush1.msra.mxu0 0.0
        %1522 = vmatprep.subr.mxu0 0.0
        %1523 = vmatpush1.msra.mxu0 0.0
        %1524 = vmatprep.mubr.f32.mxu0 0.0
        %1525 = vmatmul.mubr.f32.gmra.mrb[0].mxu0 %v474
        %v1526 = vpop.f32.mrb[0].mxu0
        %v1527 = vadd.f32 0.0, %v1526
        %v1528 = vpop.f32.mrb[0].mxu0
        %1529 = vdwg.mxu0
        %v1530 = vadd.f32 %v1453, %v1527
        %v1531 = vld [vmem:[%s549 + $0x1] sm:$0x1]
        %v1532 = vld [vmem:[%s549 + $0x11] sm:$0x1]
        %v1533 = vld [vmem:[%s549 + $0x21] sm:$0x1]
        %v1534 = vld [vmem:[%s549 + $0x31] sm:$0x1]
        %v1539 = vrot.slane %v1532, 7
        %v1540 = vsel %vm301, %v1539, %v1531
        %v1541 = vrot.slane %v1533, 6
        %v1542 = vsel %vm304, %v1541, %v1540
        %v1543 = vrot.slane %v1534, 5
        %v1544 = vsel %vm307, %v1543, %v1542
        %v1545 = vsel %vm313, %v1544, 0
        %1547 = vmatprep.subr.mxu0 0.0
        %1548 = vmatpush1.msra.mxu0 %v1545
        %1549 = vmatprep.subr.mxu0 0.0
        %1550 = vmatpush1.msra.mxu0 0.0
        %1551 = vmatprep.subr.mxu0 0.0
        %1552 = vmatpush1.msra.mxu0 0.0
        %1553 = vmatprep.subr.mxu0 0.0
        %1554 = vmatpush1.msra.mxu0 0.0
        %1555 = vmatprep.subr.mxu0 0.0
        %1556 = vmatpush1.msra.mxu0 0.0
        %1557 = vmatprep.subr.mxu0 0.0
        %1558 = vmatpush1.msra.mxu0 0.0
        %1559 = vmatprep.subr.mxu0 0.0
        %1560 = vmatpush1.msra.mxu0 0.0
        %1561 = vmatprep.subr.mxu0 0.0
        %1562 = vmatpush1.msra.mxu0 0.0
        %1563 = vmatprep.subr.mxu0 0.0
        %1564 = vmatpush1.msra.mxu0 0.0
        %1565 = vmatprep.subr.mxu0 0.0
        %1566 = vmatpush1.msra.mxu0 0.0
        %1567 = vmatprep.subr.mxu0 0.0
        %1568 = vmatpush1.msra.mxu0 0.0
        %1569 = vmatprep.subr.mxu0 0.0
        %1570 = vmatpush1.msra.mxu0 0.0
        %1571 = vmatprep.subr.mxu0 0.0
        %1572 = vmatpush1.msra.mxu0 0.0
        %1573 = vmatprep.subr.mxu0 0.0
        %1574 = vmatpush1.msra.mxu0 0.0
        %1575 = vmatprep.subr.mxu0 0.0
        %1576 = vmatpush1.msra.mxu0 0.0
        %1577 = vmatprep.subr.mxu0 0.0
        %1578 = vmatpush1.msra.mxu0 0.0
        %1579 = vmatprep.subr.mxu0 0.0
        %1580 = vmatpush1.msra.mxu0 0.0
        %1581 = vmatprep.subr.mxu0 0.0
        %1582 = vmatpush1.msra.mxu0 0.0
        %1583 = vmatprep.subr.mxu0 0.0
        %1584 = vmatpush1.msra.mxu0 0.0
        %1585 = vmatprep.subr.mxu0 0.0
        %1586 = vmatpush1.msra.mxu0 0.0
        %1587 = vmatprep.subr.mxu0 0.0
        %1588 = vmatpush1.msra.mxu0 0.0
        %1589 = vmatprep.subr.mxu0 0.0
        %1590 = vmatpush1.msra.mxu0 0.0
        %1591 = vmatprep.subr.mxu0 0.0
        %1592 = vmatpush1.msra.mxu0 0.0
        %1593 = vmatprep.subr.mxu0 0.0
        %1594 = vmatpush1.msra.mxu0 0.0
        %1595 = vmatprep.subr.mxu0 0.0
        %1596 = vmatpush1.msra.mxu0 0.0
        %1597 = vmatprep.subr.mxu0 0.0
        %1598 = vmatpush1.msra.mxu0 0.0
        %1599 = vmatprep.subr.mxu0 0.0
        %1600 = vmatpush1.msra.mxu0 0.0
        %1601 = vmatprep.subr.mxu0 0.0
        %1602 = vmatpush1.msra.mxu0 0.0
        %1603 = vmatprep.subr.mxu0 0.0
        %1604 = vmatpush1.msra.mxu0 0.0
        %1605 = vmatprep.subr.mxu0 0.0
        %1606 = vmatpush1.msra.mxu0 0.0
        %1607 = vmatprep.subr.mxu0 0.0
        %1608 = vmatpush1.msra.mxu0 0.0
        %1609 = vmatprep.subr.mxu0 0.0
        %1610 = vmatpush1.msra.mxu0 0.0
        %1611 = vmatprep.mubr.f32.mxu0 0.0
        %1612 = vmatmul.mubr.f32.gmra.mrb[0].mxu0 %v565
        %v1613 = vpop.f32.mrb[0].mxu0
        %v1614 = vadd.f32 0.0, %v1613
        %v1615 = vpop.f32.mrb[0].mxu0
        %1616 = vdwg.mxu0
        %v1617 = vadd.f32 %v1530, %v1614
        %v1618 = vld [vmem:[%s640 + $0x1] sm:$0x1]
        %v1619 = vld [vmem:[%s640 + $0x11] sm:$0x1]
        %v1620 = vld [vmem:[%s640 + $0x21] sm:$0x1]
        %v1621 = vld [vmem:[%s640 + $0x31] sm:$0x1]
        %v1626 = vrot.slane %v1619, 7
        %v1627 = vsel %vm301, %v1626, %v1618
        %v1628 = vrot.slane %v1620, 6
        %v1629 = vsel %vm304, %v1628, %v1627
        %v1630 = vrot.slane %v1621, 5
        %v1631 = vsel %vm307, %v1630, %v1629
        %v1632 = vsel %vm313, %v1631, 0
        %1634 = vmatprep.subr.mxu0 0.0
        %1635 = vmatpush1.msra.mxu0 %v1632
        %1636 = vmatprep.subr.mxu0 0.0
        %1637 = vmatpush1.msra.mxu0 0.0
        %1638 = vmatprep.subr.mxu0 0.0
        %1639 = vmatpush1.msra.mxu0 0.0
        %1640 = vmatprep.subr.mxu0 0.0
        %1641 = vmatpush1.msra.mxu0 0.0
        %1642 = vmatprep.subr.mxu0 0.0
        %1643 = vmatpush1.msra.mxu0 0.0
        %1644 = vmatprep.subr.mxu0 0.0
        %1645 = vmatpush1.msra.mxu0 0.0
        %1646 = vmatprep.subr.mxu0 0.0
        %1647 = vmatpush1.msra.mxu0 0.0
        %1648 = vmatprep.subr.mxu0 0.0
        %1649 = vmatpush1.msra.mxu0 0.0
        %1650 = vmatprep.subr.mxu0 0.0
        %1651 = vmatpush1.msra.mxu0 0.0
        %1652 = vmatprep.subr.mxu0 0.0
        %1653 = vmatpush1.msra.mxu0 0.0
        %1654 = vmatprep.subr.mxu0 0.0
        %1655 = vmatpush1.msra.mxu0 0.0
        %1656 = vmatprep.subr.mxu0 0.0
        %1657 = vmatpush1.msra.mxu0 0.0
        %1658 = vmatprep.subr.mxu0 0.0
        %1659 = vmatpush1.msra.mxu0 0.0
        %1660 = vmatprep.subr.mxu0 0.0
        %1661 = vmatpush1.msra.mxu0 0.0
        %1662 = vmatprep.subr.mxu0 0.0
        %1663 = vmatpush1.msra.mxu0 0.0
        %1664 = vmatprep.subr.mxu0 0.0
        %1665 = vmatpush1.msra.mxu0 0.0
        %1666 = vmatprep.subr.mxu0 0.0
        %1667 = vmatpush1.msra.mxu0 0.0
        %1668 = vmatprep.subr.mxu0 0.0
        %1669 = vmatpush1.msra.mxu0 0.0
        %1670 = vmatprep.subr.mxu0 0.0
        %1671 = vmatpush1.msra.mxu0 0.0
        %1672 = vmatprep.subr.mxu0 0.0
        %1673 = vmatpush1.msra.mxu0 0.0
        %1674 = vmatprep.subr.mxu0 0.0
        %1675 = vmatpush1.msra.mxu0 0.0
        %1676 = vmatprep.subr.mxu0 0.0
        %1677 = vmatpush1.msra.mxu0 0.0
        %1678 = vmatprep.subr.mxu0 0.0
        %1679 = vmatpush1.msra.mxu0 0.0
        %1680 = vmatprep.subr.mxu0 0.0
        %1681 = vmatpush1.msra.mxu0 0.0
        %1682 = vmatprep.subr.mxu0 0.0
        %1683 = vmatpush1.msra.mxu0 0.0
        %1684 = vmatprep.subr.mxu0 0.0
        %1685 = vmatpush1.msra.mxu0 0.0
        %1686 = vmatprep.subr.mxu0 0.0
        %1687 = vmatpush1.msra.mxu0 0.0
        %1688 = vmatprep.subr.mxu0 0.0
        %1689 = vmatpush1.msra.mxu0 0.0
        %1690 = vmatprep.subr.mxu0 0.0
        %1691 = vmatpush1.msra.mxu0 0.0
        %1692 = vmatprep.subr.mxu0 0.0
        %1693 = vmatpush1.msra.mxu0 0.0
        %1694 = vmatprep.subr.mxu0 0.0
        %1695 = vmatpush1.msra.mxu0 0.0
        %1696 = vmatprep.subr.mxu0 0.0
        %1697 = vmatpush1.msra.mxu0 0.0
        %1698 = vmatprep.mubr.f32.mxu0 0.0
        %1699 = vmatmul.mubr.f32.gmra.mrb[0].mxu0 %v656
        %v1700 = vpop.f32.mrb[0].mxu0
        %v1701 = vadd.f32 0.0, %v1700
        %v1702 = vpop.f32.mrb[0].mxu0
        %1703 = vdwg.mxu0
        %v1704 = vadd.f32 %v1617, %v1701
        %1705 = vrot.lane.b32.xlu0 %v1544, 127
        %v1706 = vpop.permute.xlu0 %1705
        %v1707 = vsel %vm313, %v1706, 0
        %1709 = vmatprep.subr.mxu0 0.0
        %1710 = vmatpush1.msra.mxu0 %v1707
        %1711 = vmatprep.subr.mxu0 0.0
        %1712 = vmatpush1.msra.mxu0 0.0
        %1713 = vmatprep.subr.mxu0 0.0
        %1714 = vmatpush1.msra.mxu0 0.0
        %1715 = vmatprep.subr.mxu0 0.0
        %1716 = vmatpush1.msra.mxu0 0.0
        %1717 = vmatprep.subr.mxu0 0.0
        %1718 = vmatpush1.msra.mxu0 0.0
        %1719 = vmatprep.subr.mxu0 0.0
        %1720 = vmatpush1.msra.mxu0 0.0
        %1721 = vmatprep.subr.mxu0 0.0
        %1722 = vmatpush1.msra.mxu0 0.0
        %1723 = vmatprep.subr.mxu0 0.0
        %1724 = vmatpush1.msra.mxu0 0.0
        %1725 = vmatprep.subr.mxu0 0.0
        %1726 = vmatpush1.msra.mxu0 0.0
        %1727 = vmatprep.subr.mxu0 0.0
        %1728 = vmatpush1.msra.mxu0 0.0
        %1729 = vmatprep.subr.mxu0 0.0
        %1730 = vmatpush1.msra.mxu0 0.0
        %1731 = vmatprep.subr.mxu0 0.0
        %1732 = vmatpush1.msra.mxu0 0.0
        %1733 = vmatprep.subr.mxu0 0.0
        %1734 = vmatpush1.msra.mxu0 0.0
        %1735 = vmatprep.subr.mxu0 0.0
        %1736 = vmatpush1.msra.mxu0 0.0
        %1737 = vmatprep.subr.mxu0 0.0
        %1738 = vmatpush1.msra.mxu0 0.0
        %1739 = vmatprep.subr.mxu0 0.0
        %1740 = vmatpush1.msra.mxu0 0.0
        %1741 = vmatprep.subr.mxu0 0.0
        %1742 = vmatpush1.msra.mxu0 0.0
        %1743 = vmatprep.subr.mxu0 0.0
        %1744 = vmatpush1.msra.mxu0 0.0
        %1745 = vmatprep.subr.mxu0 0.0
        %1746 = vmatpush1.msra.mxu0 0.0
        %1747 = vmatprep.subr.mxu0 0.0
        %1748 = vmatpush1.msra.mxu0 0.0
        %1749 = vmatprep.subr.mxu0 0.0
        %1750 = vmatpush1.msra.mxu0 0.0
        %1751 = vmatprep.subr.mxu0 0.0
        %1752 = vmatpush1.msra.mxu0 0.0
        %1753 = vmatprep.subr.mxu0 0.0
        %1754 = vmatpush1.msra.mxu0 0.0
        %1755 = vmatprep.subr.mxu0 0.0
        %1756 = vmatpush1.msra.mxu0 0.0
        %1757 = vmatprep.subr.mxu0 0.0
        %1758 = vmatpush1.msra.mxu0 0.0
        %1759 = vmatprep.subr.mxu0 0.0
        %1760 = vmatpush1.msra.mxu0 0.0
        %1761 = vmatprep.subr.mxu0 0.0
        %1762 = vmatpush1.msra.mxu0 0.0
        %1763 = vmatprep.subr.mxu0 0.0
        %1764 = vmatpush1.msra.mxu0 0.0
        %1765 = vmatprep.subr.mxu0 0.0
        %1766 = vmatpush1.msra.mxu0 0.0
        %1767 = vmatprep.subr.mxu0 0.0
        %1768 = vmatpush1.msra.mxu0 0.0
        %1769 = vmatprep.subr.mxu0 0.0
        %1770 = vmatpush1.msra.mxu0 0.0
        %1771 = vmatprep.subr.mxu0 0.0
        %1772 = vmatpush1.msra.mxu0 0.0
        %1773 = vmatprep.mubr.f32.mxu0 0.0
        %1774 = vmatmul.mubr.f32.gmra.mrb[0].mxu0 %v734
        %v1775 = vpop.f32.mrb[0].mxu0
        %v1776 = vadd.f32 0.0, %v1775
        %v1777 = vpop.f32.mrb[0].mxu0
        %1778 = vdwg.mxu0
        %v1779 = vadd.f32 %v1704, %v1776
        %v1780 = vld [vmem:[%s267 + $0x2] sm:$0x1]
        %v1781 = vld [vmem:[%s267 + $0x12] sm:$0x1]
        %v1782 = vld [vmem:[%s267 + $0x22] sm:$0x1]
        %v1783 = vld [vmem:[%s267 + $0x32] sm:$0x1]
        %v1788 = vrot.slane %v1781, 7
        %v1789 = vsel %vm301, %v1788, %v1780
        %v1790 = vrot.slane %v1782, 6
        %v1791 = vsel %vm304, %v1790, %v1789
        %v1792 = vrot.slane %v1783, 5
        %v1793 = vsel %vm307, %v1792, %v1791
        %v1794 = vsel %vm313, %v1793, 0
        %1796 = vmatprep.subr.mxu0 0.0
        %1797 = vmatpush1.msra.mxu0 %v1794
        %1798 = vmatprep.subr.mxu0 0.0
        %1799 = vmatpush1.msra.mxu0 0.0
        %1800 = vmatprep.subr.mxu0 0.0
        %1801 = vmatpush1.msra.mxu0 0.0
        %1802 = vmatprep.subr.mxu0 0.0
        %1803 = vmatpush1.msra.mxu0 0.0
        %1804 = vmatprep.subr.mxu0 0.0
        %1805 = vmatpush1.msra.mxu0 0.0
        %1806 = vmatprep.subr.mxu0 0.0
        %1807 = vmatpush1.msra.mxu0 0.0
        %1808 = vmatprep.subr.mxu0 0.0
        %1809 = vmatpush1.msra.mxu0 0.0
        %1810 = vmatprep.subr.mxu0 0.0
        %1811 = vmatpush1.msra.mxu0 0.0
        %1812 = vmatprep.subr.mxu0 0.0
        %1813 = vmatpush1.msra.mxu0 0.0
        %1814 = vmatprep.subr.mxu0 0.0
        %1815 = vmatpush1.msra.mxu0 0.0
        %1816 = vmatprep.subr.mxu0 0.0
        %1817 = vmatpush1.msra.mxu0 0.0
        %1818 = vmatprep.subr.mxu0 0.0
        %1819 = vmatpush1.msra.mxu0 0.0
        %1820 = vmatprep.subr.mxu0 0.0
        %1821 = vmatpush1.msra.mxu0 0.0
        %1822 = vmatprep.subr.mxu0 0.0
        %1823 = vmatpush1.msra.mxu0 0.0
        %1824 = vmatprep.subr.mxu0 0.0
        %1825 = vmatpush1.msra.mxu0 0.0
        %1826 = vmatprep.subr.mxu0 0.0
        %1827 = vmatpush1.msra.mxu0 0.0
        %1828 = vmatprep.subr.mxu0 0.0
        %1829 = vmatpush1.msra.mxu0 0.0
        %1830 = vmatprep.subr.mxu0 0.0
        %1831 = vmatpush1.msra.mxu0 0.0
        %1832 = vmatprep.subr.mxu0 0.0
        %1833 = vmatpush1.msra.mxu0 0.0
        %1834 = vmatprep.subr.mxu0 0.0
        %1835 = vmatpush1.msra.mxu0 0.0
        %1836 = vmatprep.subr.mxu0 0.0
        %1837 = vmatpush1.msra.mxu0 0.0
        %1838 = vmatprep.subr.mxu0 0.0
        %1839 = vmatpush1.msra.mxu0 0.0
        %1840 = vmatprep.subr.mxu0 0.0
        %1841 = vmatpush1.msra.mxu0 0.0
        %1842 = vmatprep.subr.mxu0 0.0
        %1843 = vmatpush1.msra.mxu0 0.0
        %1844 = vmatprep.subr.mxu0 0.0
        %1845 = vmatpush1.msra.mxu0 0.0
        %1846 = vmatprep.subr.mxu0 0.0
        %1847 = vmatpush1.msra.mxu0 0.0
        %1848 = vmatprep.subr.mxu0 0.0
        %1849 = vmatpush1.msra.mxu0 0.0
        %1850 = vmatprep.subr.mxu0 0.0
        %1851 = vmatpush1.msra.mxu0 0.0
        %1852 = vmatprep.subr.mxu0 0.0
        %1853 = vmatpush1.msra.mxu0 0.0
        %1854 = vmatprep.subr.mxu0 0.0
        %1855 = vmatpush1.msra.mxu0 0.0
        %1856 = vmatprep.subr.mxu0 0.0
        %1857 = vmatpush1.msra.mxu0 0.0
        %1858 = vmatprep.subr.mxu0 0.0
        %1859 = vmatpush1.msra.mxu0 0.0
        %1860 = vmatprep.mubr.f32.mxu0 0.0
        %1861 = vmatmul.mubr.f32.gmra.mrb[0].mxu0 %v824
        %v1862 = vpop.f32.mrb[0].mxu0
        %v1863 = vadd.f32 0.0, %v1862
        %v1864 = vpop.f32.mrb[0].mxu0
        %1865 = vdwg.mxu0
        %v1866 = vadd.f32 %v1779, %v1863
        %v1867 = vld [vmem:[%s291 + $0x2] sm:$0x1]
        %v1868 = vld [vmem:[%s291 + $0x12] sm:$0x1]
        %v1869 = vld [vmem:[%s291 + $0x22] sm:$0x1]
        %v1870 = vld [vmem:[%s291 + $0x32] sm:$0x1]
        %v1875 = vrot.slane %v1868, 7
        %v1876 = vsel %vm301, %v1875, %v1867
        %v1877 = vrot.slane %v1869, 6
        %v1878 = vsel %vm304, %v1877, %v1876
        %v1879 = vrot.slane %v1870, 5
        %v1880 = vsel %vm307, %v1879, %v1878
        %v1881 = vsel %vm313, %v1880, 0
        %1883 = vmatprep.subr.mxu0 0.0
        %1884 = vmatpush1.msra.mxu0 %v1881
        %1885 = vmatprep.subr.mxu0 0.0
        %1886 = vmatpush1.msra.mxu0 0.0
        %1887 = vmatprep.subr.mxu0 0.0
        %1888 = vmatpush1.msra.mxu0 0.0
        %1889 = vmatprep.subr.mxu0 0.0
        %1890 = vmatpush1.msra.mxu0 0.0
        %1891 = vmatprep.subr.mxu0 0.0
        %1892 = vmatpush1.msra.mxu0 0.0
        %1893 = vmatprep.subr.mxu0 0.0
        %1894 = vmatpush1.msra.mxu0 0.0
        %1895 = vmatprep.subr.mxu0 0.0
        %1896 = vmatpush1.msra.mxu0 0.0
        %1897 = vmatprep.subr.mxu0 0.0
        %1898 = vmatpush1.msra.mxu0 0.0
        %1899 = vmatprep.subr.mxu0 0.0
        %1900 = vmatpush1.msra.mxu0 0.0
        %1901 = vmatprep.subr.mxu0 0.0
        %1902 = vmatpush1.msra.mxu0 0.0
        %1903 = vmatprep.subr.mxu0 0.0
        %1904 = vmatpush1.msra.mxu0 0.0
        %1905 = vmatprep.subr.mxu0 0.0
        %1906 = vmatpush1.msra.mxu0 0.0
        %1907 = vmatprep.subr.mxu0 0.0
        %1908 = vmatpush1.msra.mxu0 0.0
        %1909 = vmatprep.subr.mxu0 0.0
        %1910 = vmatpush1.msra.mxu0 0.0
        %1911 = vmatprep.subr.mxu0 0.0
        %1912 = vmatpush1.msra.mxu0 0.0
        %1913 = vmatprep.subr.mxu0 0.0
        %1914 = vmatpush1.msra.mxu0 0.0
        %1915 = vmatprep.subr.mxu0 0.0
        %1916 = vmatpush1.msra.mxu0 0.0
        %1917 = vmatprep.subr.mxu0 0.0
        %1918 = vmatpush1.msra.mxu0 0.0
        %1919 = vmatprep.subr.mxu0 0.0
        %1920 = vmatpush1.msra.mxu0 0.0
        %1921 = vmatprep.subr.mxu0 0.0
        %1922 = vmatpush1.msra.mxu0 0.0
        %1923 = vmatprep.subr.mxu0 0.0
        %1924 = vmatpush1.msra.mxu0 0.0
        %1925 = vmatprep.subr.mxu0 0.0
        %1926 = vmatpush1.msra.mxu0 0.0
        %1927 = vmatprep.subr.mxu0 0.0
        %1928 = vmatpush1.msra.mxu0 0.0
        %1929 = vmatprep.subr.mxu0 0.0
        %1930 = vmatpush1.msra.mxu0 0.0
        %1931 = vmatprep.subr.mxu0 0.0
        %1932 = vmatpush1.msra.mxu0 0.0
        %1933 = vmatprep.subr.mxu0 0.0
        %1934 = vmatpush1.msra.mxu0 0.0
        %1935 = vmatprep.subr.mxu0 0.0
        %1936 = vmatpush1.msra.mxu0 0.0
        %1937 = vmatprep.subr.mxu0 0.0
        %1938 = vmatpush1.msra.mxu0 0.0
        %1939 = vmatprep.subr.mxu0 0.0
        %1940 = vmatpush1.msra.mxu0 0.0
        %1941 = vmatprep.subr.mxu0 0.0
        %1942 = vmatpush1.msra.mxu0 0.0
        %1943 = vmatprep.subr.mxu0 0.0
        %1944 = vmatpush1.msra.mxu0 0.0
        %1945 = vmatprep.subr.mxu0 0.0
        %1946 = vmatpush1.msra.mxu0 0.0
        %1947 = vmatprep.mubr.f32.mxu0 0.0
        %1948 = vmatmul.mubr.f32.gmra.mrb[0].mxu0 %v914
        %v1949 = vpop.f32.mrb[0].mxu0
        %v1950 = vadd.f32 0.0, %v1949
        %v1951 = vpop.f32.mrb[0].mxu0
        %1952 = vdwg.mxu0
        %v1953 = vadd.f32 %v1866, %v1950
        %1954 = vrot.lane.b32.xlu0 %v1793, 127
        %v1955 = vpop.permute.xlu0 %1954
        %v1956 = vsel %vm313, %v1955, 0
        %1958 = vmatprep.subr.mxu0 0.0
        %1959 = vmatpush1.msra.mxu0 %v1956
        %1960 = vmatprep.subr.mxu0 0.0
        %1961 = vmatpush1.msra.mxu0 0.0
        %1962 = vmatprep.subr.mxu0 0.0
        %1963 = vmatpush1.msra.mxu0 0.0
        %1964 = vmatprep.subr.mxu0 0.0
        %1965 = vmatpush1.msra.mxu0 0.0
        %1966 = vmatprep.subr.mxu0 0.0
        %1967 = vmatpush1.msra.mxu0 0.0
        %1968 = vmatprep.subr.mxu0 0.0
        %1969 = vmatpush1.msra.mxu0 0.0
        %1970 = vmatprep.subr.mxu0 0.0
        %1971 = vmatpush1.msra.mxu0 0.0
        %1972 = vmatprep.subr.mxu0 0.0
        %1973 = vmatpush1.msra.mxu0 0.0
        %1974 = vmatprep.subr.mxu0 0.0
        %1975 = vmatpush1.msra.mxu0 0.0
        %1976 = vmatprep.subr.mxu0 0.0
        %1977 = vmatpush1.msra.mxu0 0.0
        %1978 = vmatprep.subr.mxu0 0.0
        %1979 = vmatpush1.msra.mxu0 0.0
        %1980 = vmatprep.subr.mxu0 0.0
        %1981 = vmatpush1.msra.mxu0 0.0
        %1982 = vmatprep.subr.mxu0 0.0
        %1983 = vmatpush1.msra.mxu0 0.0
        %1984 = vmatprep.subr.mxu0 0.0
        %1985 = vmatpush1.msra.mxu0 0.0
        %1986 = vmatprep.subr.mxu0 0.0
        %1987 = vmatpush1.msra.mxu0 0.0
        %1988 = vmatprep.subr.mxu0 0.0
        %1989 = vmatpush1.msra.mxu0 0.0
        %1990 = vmatprep.subr.mxu0 0.0
        %1991 = vmatpush1.msra.mxu0 0.0
        %1992 = vmatprep.subr.mxu0 0.0
        %1993 = vmatpush1.msra.mxu0 0.0
        %1994 = vmatprep.subr.mxu0 0.0
        %1995 = vmatpush1.msra.mxu0 0.0
        %1996 = vmatprep.subr.mxu0 0.0
        %1997 = vmatpush1.msra.mxu0 0.0
        %1998 = vmatprep.subr.mxu0 0.0
        %1999 = vmatpush1.msra.mxu0 0.0
        %2000 = vmatprep.subr.mxu0 0.0
        %2001 = vmatpush1.msra.mxu0 0.0
        %2002 = vmatprep.subr.mxu0 0.0
        %2003 = vmatpush1.msra.mxu0 0.0
        %2004 = vmatprep.subr.mxu0 0.0
        %2005 = vmatpush1.msra.mxu0 0.0
        %2006 = vmatprep.subr.mxu0 0.0
        %2007 = vmatpush1.msra.mxu0 0.0
        %2008 = vmatprep.subr.mxu0 0.0
        %2009 = vmatpush1.msra.mxu0 0.0
        %2010 = vmatprep.subr.mxu0 0.0
        %2011 = vmatpush1.msra.mxu0 0.0
        %2012 = vmatprep.subr.mxu0 0.0
        %2013 = vmatpush1.msra.mxu0 0.0
        %2014 = vmatprep.subr.mxu0 0.0
        %2015 = vmatpush1.msra.mxu0 0.0
        %2016 = vmatprep.subr.mxu0 0.0
        %2017 = vmatpush1.msra.mxu0 0.0
        %2018 = vmatprep.subr.mxu0 0.0
        %2019 = vmatpush1.msra.mxu0 0.0
        %2020 = vmatprep.subr.mxu0 0.0
        %2021 = vmatpush1.msra.mxu0 0.0
        %2022 = vmatprep.mubr.f32.mxu0 0.0
        %2023 = vmatmul.mubr.f32.gmra.mrb[0].mxu0 %v992
        %v2024 = vpop.f32.mrb[0].mxu0
        %v2025 = vadd.f32 0.0, %v2024
        %v2026 = vpop.f32.mrb[0].mxu0
        %2027 = vdwg.mxu0
        %v2028 = vadd.f32 %v1953, %v2025
        %v2030 = vcombine.high %v2028, %v2028
        %v2032 = vunpack.c.l.s4 1966171168
        %v2033 = vunpack.c.0.s8 %v2032
        %v2034 = vlaneseq
        %v2035 = vshrl.u32 %v2034, 7
        %v2036 = vsub.s32 %v2033, %v2035
        %v2037 = vrot.slane %v2028, %v2036
        %v2039 = vunpack.c.l.s4 1966171168
        %v2040 = vunpack.c.0.s8 %v2039
        %v2041 = vlaneseq
        %v2042 = vshrl.u32 %v2041, 7
        %v2043 = vsub.s32 %v2040, %v2042
        %v2044 = vrot.slane %v2030, %v2043
        %v2045 = vcombine.high %v2037, %v2037
        %v2046 = vcombine.high %v2044, %v2044
        %v2048 = vunpack.c.l.s4 1966171168
        %v2049 = vunpack.c.0.s8 %v2048
        %v2050 = vlaneseq
        %v2051 = vshrl.u32 %v2050, 7
        %v2052 = vsub.s32 %v2049, %v2051
        %v2053 = vrot.slane %v2037, %v2052
        %v2055 = vunpack.c.l.s4 1966171168
        %v2056 = vunpack.c.0.s8 %v2055
        %v2057 = vlaneseq
        %v2058 = vshrl.u32 %v2057, 7
        %v2059 = vsub.s32 %v2056, %v2058
        %v2060 = vrot.slane %v2044, %v2059
        %v2062 = vunpack.c.l.s4 1966171168
        %v2063 = vunpack.c.0.s8 %v2062
        %v2064 = vlaneseq
        %v2065 = vshrl.u32 %v2064, 7
        %v2066 = vsub.s32 %v2063, %v2065
        %v2067 = vrot.slane %v2045, %v2066
        %v2069 = vunpack.c.l.s4 1966171168
        %v2070 = vunpack.c.0.s8 %v2069
        %v2071 = vlaneseq
        %v2072 = vshrl.u32 %v2071, 7
        %v2073 = vsub.s32 %v2070, %v2072
        %v2074 = vrot.slane %v2046, %v2073
        %v2075 = vcombine.high %v2053, %v2053
        %v2076 = vcombine.high %v2060, %v2060
        %v2077 = vcombine.high %v2067, %v2067
        %v2078 = vcombine.high %v2074, %v2074
        %2087 = vst.msk [vmem:[%s248 + $0x1] sm:$0x1] %vm1125, %v2053
        %2088 = vst.msk [vmem:[%s248 + $0x9] sm:$0x1] %vm1125, %v2067
        %2089 = vst.msk [vmem:[%s248 + $0x11] sm:$0x1] %vm1125, %v2075
        %2090 = vst.msk [vmem:[%s248 + $0x19] sm:$0x1] %vm1125, %v2077
        %2091 = vst.msk [vmem:[%s248 + $0x21] sm:$0x1] %vm1125, %v2060
        %2092 = vst.msk [vmem:[%s248 + $0x29] sm:$0x1] %vm1125, %v2074
        %2093 = vst.msk [vmem:[%s248 + $0x31] sm:$0x1] %vm1125, %v2076
        %2094 = vst.msk [vmem:[%s248 + $0x39] sm:$0x1] %vm1125, %v2078
        %v2095 = vmul.f32 %v2028, %v1137
        %v2096 = vadd.f32 %v2095, %v1143
        %v2098 = vcombine.high %v2096, %v2096
        %v2100 = vunpack.c.l.s4 1966171168
        %v2101 = vunpack.c.0.s8 %v2100
        %v2102 = vlaneseq
        %v2103 = vshrl.u32 %v2102, 7
        %v2104 = vsub.s32 %v2101, %v2103
        %v2105 = vrot.slane %v2096, %v2104
        %v2107 = vunpack.c.l.s4 1966171168
        %v2108 = vunpack.c.0.s8 %v2107
        %v2109 = vlaneseq
        %v2110 = vshrl.u32 %v2109, 7
        %v2111 = vsub.s32 %v2108, %v2110
        %v2112 = vrot.slane %v2098, %v2111
        %v2113 = vcombine.high %v2105, %v2105
        %v2114 = vcombine.high %v2112, %v2112
        %v2116 = vunpack.c.l.s4 1966171168
        %v2117 = vunpack.c.0.s8 %v2116
        %v2118 = vlaneseq
        %v2119 = vshrl.u32 %v2118, 7
        %v2120 = vsub.s32 %v2117, %v2119
        %v2121 = vrot.slane %v2105, %v2120
        %v2123 = vunpack.c.l.s4 1966171168
        %v2124 = vunpack.c.0.s8 %v2123
        %v2125 = vlaneseq
        %v2126 = vshrl.u32 %v2125, 7
        %v2127 = vsub.s32 %v2124, %v2126
        %v2128 = vrot.slane %v2112, %v2127
        %v2130 = vunpack.c.l.s4 1966171168
        %v2131 = vunpack.c.0.s8 %v2130
        %v2132 = vlaneseq
        %v2133 = vshrl.u32 %v2132, 7
        %v2134 = vsub.s32 %v2131, %v2133
        %v2135 = vrot.slane %v2113, %v2134
        %v2137 = vunpack.c.l.s4 1966171168
        %v2138 = vunpack.c.0.s8 %v2137
        %v2139 = vlaneseq
        %v2140 = vshrl.u32 %v2139, 7
        %v2141 = vsub.s32 %v2138, %v2140
        %v2142 = vrot.slane %v2114, %v2141
        %v2143 = vcombine.high %v2121, %v2121
        %v2144 = vcombine.high %v2128, %v2128
        %v2145 = vcombine.high %v2135, %v2135
        %v2146 = vcombine.high %v2142, %v2142
        %2155 = vst.msk [vmem:[%s255 + $0x1] sm:$0x1] %vm1125, %v2121
        %2156 = vst.msk [vmem:[%s255 + $0x9] sm:$0x1] %vm1125, %v2135
        %2157 = vst.msk [vmem:[%s255 + $0x11] sm:$0x1] %vm1125, %v2143
        %2158 = vst.msk [vmem:[%s255 + $0x19] sm:$0x1] %vm1125, %v2145
        %2159 = vst.msk [vmem:[%s255 + $0x21] sm:$0x1] %vm1125, %v2128
        %2160 = vst.msk [vmem:[%s255 + $0x29] sm:$0x1] %vm1125, %v2142
        %2161 = vst.msk [vmem:[%s255 + $0x31] sm:$0x1] %vm1125, %v2144
        %2162 = vst.msk [vmem:[%s255 + $0x39] sm:$0x1] %vm1125, %v2146
        %v2163 = vsub.f32 0.0, %v2096
        %v2164 = vmul.f32 %v2163, 1.442695
        %v2165 = vpow.pop %v2164
        %v2166 = vadd.f32 %v2165, 1.0
        %v2167 = vrcp.pop %v2166
        %v2168 = vmul.f32 %v2096, %v2167
        %v2170 = vcombine.high %v2168, %v2168
        %v2172 = vunpack.c.l.s4 1966171168
        %v2173 = vunpack.c.0.s8 %v2172
        %v2174 = vlaneseq
        %v2175 = vshrl.u32 %v2174, 7
        %v2176 = vsub.s32 %v2173, %v2175
        %v2177 = vrot.slane %v2168, %v2176
        %v2179 = vunpack.c.l.s4 1966171168
        %v2180 = vunpack.c.0.s8 %v2179
        %v2181 = vlaneseq
        %v2182 = vshrl.u32 %v2181, 7
        %v2183 = vsub.s32 %v2180, %v2182
        %v2184 = vrot.slane %v2170, %v2183
        %v2185 = vcombine.high %v2177, %v2177
        %v2186 = vcombine.high %v2184, %v2184
        %v2188 = vunpack.c.l.s4 1966171168
        %v2189 = vunpack.c.0.s8 %v2188
        %v2190 = vlaneseq
        %v2191 = vshrl.u32 %v2190, 7
        %v2192 = vsub.s32 %v2189, %v2191
        %v2193 = vrot.slane %v2177, %v2192
        %v2195 = vunpack.c.l.s4 1966171168
        %v2196 = vunpack.c.0.s8 %v2195
        %v2197 = vlaneseq
        %v2198 = vshrl.u32 %v2197, 7
        %v2199 = vsub.s32 %v2196, %v2198
        %v2200 = vrot.slane %v2184, %v2199
        %v2202 = vunpack.c.l.s4 1966171168
        %v2203 = vunpack.c.0.s8 %v2202
        %v2204 = vlaneseq
        %v2205 = vshrl.u32 %v2204, 7
        %v2206 = vsub.s32 %v2203, %v2205
        %v2207 = vrot.slane %v2185, %v2206
        %v2209 = vunpack.c.l.s4 1966171168
        %v2210 = vunpack.c.0.s8 %v2209
        %v2211 = vlaneseq
        %v2212 = vshrl.u32 %v2211, 7
        %v2213 = vsub.s32 %v2210, %v2212
        %v2214 = vrot.slane %v2186, %v2213
        %v2215 = vcombine.high %v2193, %v2193
        %v2216 = vcombine.high %v2200, %v2200
        %v2217 = vcombine.high %v2207, %v2207
        %v2218 = vcombine.high %v2214, %v2214
        %2227 = vst.msk [vmem:[%s262 + $0x1] sm:$0x1] %vm1125, %v2193
        %2228 = vst.msk [vmem:[%s262 + $0x9] sm:$0x1] %vm1125, %v2207
        %2229 = vst.msk [vmem:[%s262 + $0x11] sm:$0x1] %vm1125, %v2215
        %2230 = vst.msk [vmem:[%s262 + $0x19] sm:$0x1] %vm1125, %v2217
        %2231 = vst.msk [vmem:[%s262 + $0x21] sm:$0x1] %vm1125, %v2200
        %2232 = vst.msk [vmem:[%s262 + $0x29] sm:$0x1] %vm1125, %v2214
        %2233 = vst.msk [vmem:[%s262 + $0x31] sm:$0x1] %vm1125, %v2216
        %2234 = vst.msk [vmem:[%s262 + $0x39] sm:$0x1] %vm1125, %v2218
        %v2235 = vld [vmem:[%s267 + $0x2] sm:$0x1]
        %v2236 = vld [vmem:[%s267 + $0x12] sm:$0x1]
        %v2237 = vld [vmem:[%s267 + $0x22] sm:$0x1]
        %v2238 = vld [vmem:[%s267 + $0x32] sm:$0x1]
        %v2239 = vld [vmem:[%s291 + $0x2] sm:$0x1]
        %v2240 = vld [vmem:[%s291 + $0x12] sm:$0x1]
        %v2241 = vld [vmem:[%s291 + $0x22] sm:$0x1]
        %v2242 = vld [vmem:[%s291 + $0x32] sm:$0x1]
        %v2247 = vrot.slane %v2240, 7
        %v2248 = vsel %vm301, %v2247, %v2239
        %v2249 = vrot.slane %v2241, 6
        %v2250 = vsel %vm304, %v2249, %v2248
        %v2251 = vrot.slane %v2242, 5
        %v2252 = vsel %vm307, %v2251, %v2250
        %v2253 = vsel %vm313, %v2252, 0
        %2255 = vmatprep.subr.mxu0 0.0
        %2256 = vmatpush1.msra.mxu0 %v2253
        %2257 = vmatprep.subr.mxu0 0.0
        %2258 = vmatpush1.msra.mxu0 0.0
        %2259 = vmatprep.subr.mxu0 0.0
        %2260 = vmatpush1.msra.mxu0 0.0
        %2261 = vmatprep.subr.mxu0 0.0
        %2262 = vmatpush1.msra.mxu0 0.0
        %2263 = vmatprep.subr.mxu0 0.0
        %2264 = vmatpush1.msra.mxu0 0.0
        %2265 = vmatprep.subr.mxu0 0.0
        %2266 = vmatpush1.msra.mxu0 0.0
        %2267 = vmatprep.subr.mxu0 0.0
        %2268 = vmatpush1.msra.mxu0 0.0
        %2269 = vmatprep.subr.mxu0 0.0
        %2270 = vmatpush1.msra.mxu0 0.0
        %2271 = vmatprep.subr.mxu0 0.0
        %2272 = vmatpush1.msra.mxu0 0.0
        %2273 = vmatprep.subr.mxu0 0.0
        %2274 = vmatpush1.msra.mxu0 0.0
        %2275 = vmatprep.subr.mxu0 0.0
        %2276 = vmatpush1.msra.mxu0 0.0
        %2277 = vmatprep.subr.mxu0 0.0
        %2278 = vmatpush1.msra.mxu0 0.0
        %2279 = vmatprep.subr.mxu0 0.0
        %2280 = vmatpush1.msra.mxu0 0.0
        %2281 = vmatprep.subr.mxu0 0.0
        %2282 = vmatpush1.msra.mxu0 0.0
        %2283 = vmatprep.subr.mxu0 0.0
        %2284 = vmatpush1.msra.mxu0 0.0
        %2285 = vmatprep.subr.mxu0 0.0
        %2286 = vmatpush1.msra.mxu0 0.0
        %2287 = vmatprep.subr.mxu0 0.0
        %2288 = vmatpush1.msra.mxu0 0.0
        %2289 = vmatprep.subr.mxu0 0.0
        %2290 = vmatpush1.msra.mxu0 0.0
        %2291 = vmatprep.subr.mxu0 0.0
        %2292 = vmatpush1.msra.mxu0 0.0
        %2293 = vmatprep.subr.mxu0 0.0
        %2294 = vmatpush1.msra.mxu0 0.0
        %2295 = vmatprep.subr.mxu0 0.0
        %2296 = vmatpush1.msra.mxu0 0.0
        %2297 = vmatprep.subr.mxu0 0.0
        %2298 = vmatpush1.msra.mxu0 0.0
        %2299 = vmatprep.subr.mxu0 0.0
        %2300 = vmatpush1.msra.mxu0 0.0
        %2301 = vmatprep.subr.mxu0 0.0
        %2302 = vmatpush1.msra.mxu0 0.0
        %2303 = vmatprep.subr.mxu0 0.0
        %2304 = vmatpush1.msra.mxu0 0.0
        %2305 = vmatprep.subr.mxu0 0.0
        %2306 = vmatpush1.msra.mxu0 0.0
        %2307 = vmatprep.subr.mxu0 0.0
        %2308 = vmatpush1.msra.mxu0 0.0
        %2309 = vmatprep.subr.mxu0 0.0
        %2310 = vmatpush1.msra.mxu0 0.0
        %2311 = vmatprep.subr.mxu0 0.0
        %2312 = vmatpush1.msra.mxu0 0.0
        %2313 = vmatprep.subr.mxu0 0.0
        %2314 = vmatpush1.msra.mxu0 0.0
        %2315 = vmatprep.subr.mxu0 0.0
        %2316 = vmatpush1.msra.mxu0 0.0
        %2317 = vmatprep.subr.mxu0 0.0
        %2318 = vmatpush1.msra.mxu0 0.0
        %2319 = vmatprep.mubr.f32.mxu0 0.0
        %2320 = vmatmul.mubr.f32.gmra.mrb[0].mxu0 %v311
        %v2321 = vpop.f32.mrb[0].mxu0
        %v2322 = vadd.f32 0.0, %v2321
        %v2323 = vpop.f32.mrb[0].mxu0
        %2324 = vdwg.mxu0
        %v2329 = vrot.slane %v2236, 7
        %v2330 = vsel %vm301, %v2329, %v2235
        %v2331 = vrot.slane %v2237, 6
        %v2332 = vsel %vm304, %v2331, %v2330
        %v2333 = vrot.slane %v2238, 5
        %v2334 = vsel %vm307, %v2333, %v2332
        %v2335 = vsel %vm313, %v2334, 0
        %2337 = vmatprep.subr.mxu0 0.0
        %2338 = vmatpush1.msra.mxu0 %v2335
        %2339 = vmatprep.subr.mxu0 0.0
        %2340 = vmatpush1.msra.mxu0 0.0
        %2341 = vmatprep.subr.mxu0 0.0
        %2342 = vmatpush1.msra.mxu0 0.0
        %2343 = vmatprep.subr.mxu0 0.0
        %2344 = vmatpush1.msra.mxu0 0.0
        %2345 = vmatprep.subr.mxu0 0.0
        %2346 = vmatpush1.msra.mxu0 0.0
        %2347 = vmatprep.subr.mxu0 0.0
        %2348 = vmatpush1.msra.mxu0 0.0
        %2349 = vmatprep.subr.mxu0 0.0
        %2350 = vmatpush1.msra.mxu0 0.0
        %2351 = vmatprep.subr.mxu0 0.0
        %2352 = vmatpush1.msra.mxu0 0.0
        %2353 = vmatprep.subr.mxu0 0.0
        %2354 = vmatpush1.msra.mxu0 0.0
        %2355 = vmatprep.subr.mxu0 0.0
        %2356 = vmatpush1.msra.mxu0 0.0
        %2357 = vmatprep.subr.mxu0 0.0
        %2358 = vmatpush1.msra.mxu0 0.0
        %2359 = vmatprep.subr.mxu0 0.0
        %2360 = vmatpush1.msra.mxu0 0.0
        %2361 = vmatprep.subr.mxu0 0.0
        %2362 = vmatpush1.msra.mxu0 0.0
        %2363 = vmatprep.subr.mxu0 0.0
        %2364 = vmatpush1.msra.mxu0 0.0
        %2365 = vmatprep.subr.mxu0 0.0
        %2366 = vmatpush1.msra.mxu0 0.0
        %2367 = vmatprep.subr.mxu0 0.0
        %2368 = vmatpush1.msra.mxu0 0.0
        %2369 = vmatprep.subr.mxu0 0.0
        %2370 = vmatpush1.msra.mxu0 0.0
        %2371 = vmatprep.subr.mxu0 0.0
        %2372 = vmatpush1.msra.mxu0 0.0
        %2373 = vmatprep.subr.mxu0 0.0
        %2374 = vmatpush1.msra.mxu0 0.0
        %2375 = vmatprep.subr.mxu0 0.0
        %2376 = vmatpush1.msra.mxu0 0.0
        %2377 = vmatprep.subr.mxu0 0.0
        %2378 = vmatpush1.msra.mxu0 0.0
        %2379 = vmatprep.subr.mxu0 0.0
        %2380 = vmatpush1.msra.mxu0 0.0
        %2381 = vmatprep.subr.mxu0 0.0
        %2382 = vmatpush1.msra.mxu0 0.0
        %2383 = vmatprep.subr.mxu0 0.0
        %2384 = vmatpush1.msra.mxu0 0.0
        %2385 = vmatprep.subr.mxu0 0.0
        %2386 = vmatpush1.msra.mxu0 0.0
        %2387 = vmatprep.subr.mxu0 0.0
        %2388 = vmatpush1.msra.mxu0 0.0
        %2389 = vmatprep.subr.mxu0 0.0
        %2390 = vmatpush1.msra.mxu0 0.0
        %2391 = vmatprep.subr.mxu0 0.0
        %2392 = vmatpush1.msra.mxu0 0.0
        %2393 = vmatprep.subr.mxu0 0.0
        %2394 = vmatpush1.msra.mxu0 0.0
        %2395 = vmatprep.subr.mxu0 0.0
        %2396 = vmatpush1.msra.mxu0 0.0
        %2397 = vmatprep.subr.mxu0 0.0
        %2398 = vmatpush1.msra.mxu0 0.0
        %2399 = vmatprep.subr.mxu0 0.0
        %2400 = vmatpush1.msra.mxu0 0.0
        %2401 = vmatprep.mubr.f32.mxu0 0.0
        %2402 = vmatmul.mubr.f32.gmra.mrb[0].mxu0 %v397
        %v2403 = vpop.f32.mrb[0].mxu0
        %v2404 = vadd.f32 %v2322, %v2403
        %v2405 = vpop.f32.mrb[0].mxu0
        %2406 = vdwg.mxu0
        %2407 = vrot.lane.b32.xlu0 %v2334, 127
        %v2408 = vpop.permute.xlu0 %2407
        %v2409 = vsel %vm313, %v2408, 0
        %2411 = vmatprep.subr.mxu0 0.0
        %2412 = vmatpush1.msra.mxu0 %v2409
        %2413 = vmatprep.subr.mxu0 0.0
        %2414 = vmatpush1.msra.mxu0 0.0
        %2415 = vmatprep.subr.mxu0 0.0
        %2416 = vmatpush1.msra.mxu0 0.0
        %2417 = vmatprep.subr.mxu0 0.0
        %2418 = vmatpush1.msra.mxu0 0.0
        %2419 = vmatprep.subr.mxu0 0.0
        %2420 = vmatpush1.msra.mxu0 0.0
        %2421 = vmatprep.subr.mxu0 0.0
        %2422 = vmatpush1.msra.mxu0 0.0
        %2423 = vmatprep.subr.mxu0 0.0
        %2424 = vmatpush1.msra.mxu0 0.0
        %2425 = vmatprep.subr.mxu0 0.0
        %2426 = vmatpush1.msra.mxu0 0.0
        %2427 = vmatprep.subr.mxu0 0.0
        %2428 = vmatpush1.msra.mxu0 0.0
        %2429 = vmatprep.subr.mxu0 0.0
        %2430 = vmatpush1.msra.mxu0 0.0
        %2431 = vmatprep.subr.mxu0 0.0
        %2432 = vmatpush1.msra.mxu0 0.0
        %2433 = vmatprep.subr.mxu0 0.0
        %2434 = vmatpush1.msra.mxu0 0.0
        %2435 = vmatprep.subr.mxu0 0.0
        %2436 = vmatpush1.msra.mxu0 0.0
        %2437 = vmatprep.subr.mxu0 0.0
        %2438 = vmatpush1.msra.mxu0 0.0
        %2439 = vmatprep.subr.mxu0 0.0
        %2440 = vmatpush1.msra.mxu0 0.0
        %2441 = vmatprep.subr.mxu0 0.0
        %2442 = vmatpush1.msra.mxu0 0.0
        %2443 = vmatprep.subr.mxu0 0.0
        %2444 = vmatpush1.msra.mxu0 0.0
        %2445 = vmatprep.subr.mxu0 0.0
        %2446 = vmatpush1.msra.mxu0 0.0
        %2447 = vmatprep.subr.mxu0 0.0
        %2448 = vmatpush1.msra.mxu0 0.0
        %2449 = vmatprep.subr.mxu0 0.0
        %2450 = vmatpush1.msra.mxu0 0.0
        %2451 = vmatprep.subr.mxu0 0.0
        %2452 = vmatpush1.msra.mxu0 0.0
        %2453 = vmatprep.subr.mxu0 0.0
        %2454 = vmatpush1.msra.mxu0 0.0
        %2455 = vmatprep.subr.mxu0 0.0
        %2456 = vmatpush1.msra.mxu0 0.0
        %2457 = vmatprep.subr.mxu0 0.0
        %2458 = vmatpush1.msra.mxu0 0.0
        %2459 = vmatprep.subr.mxu0 0.0
        %2460 = vmatpush1.msra.mxu0 0.0
        %2461 = vmatprep.subr.mxu0 0.0
        %2462 = vmatpush1.msra.mxu0 0.0
        %2463 = vmatprep.subr.mxu0 0.0
        %2464 = vmatpush1.msra.mxu0 0.0
        %2465 = vmatprep.subr.mxu0 0.0
        %2466 = vmatpush1.msra.mxu0 0.0
        %2467 = vmatprep.subr.mxu0 0.0
        %2468 = vmatpush1.msra.mxu0 0.0
        %2469 = vmatprep.subr.mxu0 0.0
        %2470 = vmatpush1.msra.mxu0 0.0
        %2471 = vmatprep.subr.mxu0 0.0
        %2472 = vmatpush1.msra.mxu0 0.0
        %2473 = vmatprep.subr.mxu0 0.0
        %2474 = vmatpush1.msra.mxu0 0.0
        %2475 = vmatprep.mubr.f32.mxu0 0.0
        %2476 = vmatmul.mubr.f32.gmra.mrb[0].mxu0 %v474
        %v2477 = vpop.f32.mrb[0].mxu0
        %v2478 = vadd.f32 0.0, %v2477
        %v2479 = vpop.f32.mrb[0].mxu0
        %2480 = vdwg.mxu0
        %v2481 = vadd.f32 %v2404, %v2478
        %v2482 = vld [vmem:[%s549 + $0x2] sm:$0x1]
        %v2483 = vld [vmem:[%s549 + $0x12] sm:$0x1]
        %v2484 = vld [vmem:[%s549 + $0x22] sm:$0x1]
        %v2485 = vld [vmem:[%s549 + $0x32] sm:$0x1]
        %v2490 = vrot.slane %v2483, 7
        %v2491 = vsel %vm301, %v2490, %v2482
        %v2492 = vrot.slane %v2484, 6
        %v2493 = vsel %vm304, %v2492, %v2491
        %v2494 = vrot.slane %v2485, 5
        %v2495 = vsel %vm307, %v2494, %v2493
        %v2496 = vsel %vm313, %v2495, 0
        %2498 = vmatprep.subr.mxu0 0.0
        %2499 = vmatpush1.msra.mxu0 %v2496
        %2500 = vmatprep.subr.mxu0 0.0
        %2501 = vmatpush1.msra.mxu0 0.0
        %2502 = vmatprep.subr.mxu0 0.0
        %2503 = vmatpush1.msra.mxu0 0.0
        %2504 = vmatprep.subr.mxu0 0.0
        %2505 = vmatpush1.msra.mxu0 0.0
        %2506 = vmatprep.subr.mxu0 0.0
        %2507 = vmatpush1.msra.mxu0 0.0
        %2508 = vmatprep.subr.mxu0 0.0
        %2509 = vmatpush1.msra.mxu0 0.0
        %2510 = vmatprep.subr.mxu0 0.0
        %2511 = vmatpush1.msra.mxu0 0.0
        %2512 = vmatprep.subr.mxu0 0.0
        %2513 = vmatpush1.msra.mxu0 0.0
        %2514 = vmatprep.subr.mxu0 0.0
        %2515 = vmatpush1.msra.mxu0 0.0
        %2516 = vmatprep.subr.mxu0 0.0
        %2517 = vmatpush1.msra.mxu0 0.0
        %2518 = vmatprep.subr.mxu0 0.0
        %2519 = vmatpush1.msra.mxu0 0.0
        %2520 = vmatprep.subr.mxu0 0.0
        %2521 = vmatpush1.msra.mxu0 0.0
        %2522 = vmatprep.subr.mxu0 0.0
        %2523 = vmatpush1.msra.mxu0 0.0
        %2524 = vmatprep.subr.mxu0 0.0
        %2525 = vmatpush1.msra.mxu0 0.0
        %2526 = vmatprep.subr.mxu0 0.0
        %2527 = vmatpush1.msra.mxu0 0.0
        %2528 = vmatprep.subr.mxu0 0.0
        %2529 = vmatpush1.msra.mxu0 0.0
        %2530 = vmatprep.subr.mxu0 0.0
        %2531 = vmatpush1.msra.mxu0 0.0
        %2532 = vmatprep.subr.mxu0 0.0
        %2533 = vmatpush1.msra.mxu0 0.0
        %2534 = vmatprep.subr.mxu0 0.0
        %2535 = vmatpush1.msra.mxu0 0.0
        %2536 = vmatprep.subr.mxu0 0.0
        %2537 = vmatpush1.msra.mxu0 0.0
        %2538 = vmatprep.subr.mxu0 0.0
        %2539 = vmatpush1.msra.mxu0 0.0
        %2540 = vmatprep.subr.mxu0 0.0
        %2541 = vmatpush1.msra.mxu0 0.0
        %2542 = vmatprep.subr.mxu0 0.0
        %2543 = vmatpush1.msra.mxu0 0.0
        %2544 = vmatprep.subr.mxu0 0.0
        %2545 = vmatpush1.msra.mxu0 0.0
        %2546 = vmatprep.subr.mxu0 0.0
        %2547 = vmatpush1.msra.mxu0 0.0
        %2548 = vmatprep.subr.mxu0 0.0
        %2549 = vmatpush1.msra.mxu0 0.0
        %2550 = vmatprep.subr.mxu0 0.0
        %2551 = vmatpush1.msra.mxu0 0.0
        %2552 = vmatprep.subr.mxu0 0.0
        %2553 = vmatpush1.msra.mxu0 0.0
        %2554 = vmatprep.subr.mxu0 0.0
        %2555 = vmatpush1.msra.mxu0 0.0
        %2556 = vmatprep.subr.mxu0 0.0
        %2557 = vmatpush1.msra.mxu0 0.0
        %2558 = vmatprep.subr.mxu0 0.0
        %2559 = vmatpush1.msra.mxu0 0.0
        %2560 = vmatprep.subr.mxu0 0.0
        %2561 = vmatpush1.msra.mxu0 0.0
        %2562 = vmatprep.mubr.f32.mxu0 0.0
        %2563 = vmatmul.mubr.f32.gmra.mrb[0].mxu0 %v565
        %v2564 = vpop.f32.mrb[0].mxu0
        %v2565 = vadd.f32 0.0, %v2564
        %v2566 = vpop.f32.mrb[0].mxu0
        %2567 = vdwg.mxu0
        %v2568 = vadd.f32 %v2481, %v2565
        %v2569 = vld [vmem:[%s640 + $0x2] sm:$0x1]
        %v2570 = vld [vmem:[%s640 + $0x12] sm:$0x1]
        %v2571 = vld [vmem:[%s640 + $0x22] sm:$0x1]
        %v2572 = vld [vmem:[%s640 + $0x32] sm:$0x1]
        %v2577 = vrot.slane %v2570, 7
        %v2578 = vsel %vm301, %v2577, %v2569
        %v2579 = vrot.slane %v2571, 6
        %v2580 = vsel %vm304, %v2579, %v2578
        %v2581 = vrot.slane %v2572, 5
        %v2582 = vsel %vm307, %v2581, %v2580
        %v2583 = vsel %vm313, %v2582, 0
        %2585 = vmatprep.subr.mxu0 0.0
        %2586 = vmatpush1.msra.mxu0 %v2583
        %2587 = vmatprep.subr.mxu0 0.0
        %2588 = vmatpush1.msra.mxu0 0.0
        %2589 = vmatprep.subr.mxu0 0.0
        %2590 = vmatpush1.msra.mxu0 0.0
        %2591 = vmatprep.subr.mxu0 0.0
        %2592 = vmatpush1.msra.mxu0 0.0
        %2593 = vmatprep.subr.mxu0 0.0
        %2594 = vmatpush1.msra.mxu0 0.0
        %2595 = vmatprep.subr.mxu0 0.0
        %2596 = vmatpush1.msra.mxu0 0.0
        %2597 = vmatprep.subr.mxu0 0.0
        %2598 = vmatpush1.msra.mxu0 0.0
        %2599 = vmatprep.subr.mxu0 0.0
        %2600 = vmatpush1.msra.mxu0 0.0
        %2601 = vmatprep.subr.mxu0 0.0
        %2602 = vmatpush1.msra.mxu0 0.0
        %2603 = vmatprep.subr.mxu0 0.0
        %2604 = vmatpush1.msra.mxu0 0.0
        %2605 = vmatprep.subr.mxu0 0.0
        %2606 = vmatpush1.msra.mxu0 0.0
        %2607 = vmatprep.subr.mxu0 0.0
        %2608 = vmatpush1.msra.mxu0 0.0
        %2609 = vmatprep.subr.mxu0 0.0
        %2610 = vmatpush1.msra.mxu0 0.0
        %2611 = vmatprep.subr.mxu0 0.0
        %2612 = vmatpush1.msra.mxu0 0.0
        %2613 = vmatprep.subr.mxu0 0.0
        %2614 = vmatpush1.msra.mxu0 0.0
        %2615 = vmatprep.subr.mxu0 0.0
        %2616 = vmatpush1.msra.mxu0 0.0
        %2617 = vmatprep.subr.mxu0 0.0
        %2618 = vmatpush1.msra.mxu0 0.0
        %2619 = vmatprep.subr.mxu0 0.0
        %2620 = vmatpush1.msra.mxu0 0.0
        %2621 = vmatprep.subr.mxu0 0.0
        %2622 = vmatpush1.msra.mxu0 0.0
        %2623 = vmatprep.subr.mxu0 0.0
        %2624 = vmatpush1.msra.mxu0 0.0
        %2625 = vmatprep.subr.mxu0 0.0
        %2626 = vmatpush1.msra.mxu0 0.0
        %2627 = vmatprep.subr.mxu0 0.0
        %2628 = vmatpush1.msra.mxu0 0.0
        %2629 = vmatprep.subr.mxu0 0.0
        %2630 = vmatpush1.msra.mxu0 0.0
        %2631 = vmatprep.subr.mxu0 0.0
        %2632 = vmatpush1.msra.mxu0 0.0
        %2633 = vmatprep.subr.mxu0 0.0
        %2634 = vmatpush1.msra.mxu0 0.0
        %2635 = vmatprep.subr.mxu0 0.0
        %2636 = vmatpush1.msra.mxu0 0.0
        %2637 = vmatprep.subr.mxu0 0.0
        %2638 = vmatpush1.msra.mxu0 0.0
        %2639 = vmatprep.subr.mxu0 0.0
        %2640 = vmatpush1.msra.mxu0 0.0
        %2641 = vmatprep.subr.mxu0 0.0
        %2642 = vmatpush1.msra.mxu0 0.0
        %2643 = vmatprep.subr.mxu0 0.0
        %2644 = vmatpush1.msra.mxu0 0.0
        %2645 = vmatprep.subr.mxu0 0.0
        %2646 = vmatpush1.msra.mxu0 0.0
        %2647 = vmatprep.subr.mxu0 0.0
        %2648 = vmatpush1.msra.mxu0 0.0
        %2649 = vmatprep.mubr.f32.mxu0 0.0
        %2650 = vmatmul.mubr.f32.gmra.mrb[0].mxu0 %v656
        %v2651 = vpop.f32.mrb[0].mxu0
        %v2652 = vadd.f32 0.0, %v2651
        %v2653 = vpop.f32.mrb[0].mxu0
        %2654 = vdwg.mxu0
        %v2655 = vadd.f32 %v2568, %v2652
        %2656 = vrot.lane.b32.xlu0 %v2495, 127
        %v2657 = vpop.permute.xlu0 %2656
        %v2658 = vsel %vm313, %v2657, 0
        %2660 = vmatprep.subr.mxu0 0.0
        %2661 = vmatpush1.msra.mxu0 %v2658
        %2662 = vmatprep.subr.mxu0 0.0
        %2663 = vmatpush1.msra.mxu0 0.0
        %2664 = vmatprep.subr.mxu0 0.0
        %2665 = vmatpush1.msra.mxu0 0.0
        %2666 = vmatprep.subr.mxu0 0.0
        %2667 = vmatpush1.msra.mxu0 0.0
        %2668 = vmatprep.subr.mxu0 0.0
        %2669 = vmatpush1.msra.mxu0 0.0
        %2670 = vmatprep.subr.mxu0 0.0
        %2671 = vmatpush1.msra.mxu0 0.0
        %2672 = vmatprep.subr.mxu0 0.0
        %2673 = vmatpush1.msra.mxu0 0.0
        %2674 = vmatprep.subr.mxu0 0.0
        %2675 = vmatpush1.msra.mxu0 0.0
        %2676 = vmatprep.subr.mxu0 0.0
        %2677 = vmatpush1.msra.mxu0 0.0
        %2678 = vmatprep.subr.mxu0 0.0
        %2679 = vmatpush1.msra.mxu0 0.0
        %2680 = vmatprep.subr.mxu0 0.0
        %2681 = vmatpush1.msra.mxu0 0.0
        %2682 = vmatprep.subr.mxu0 0.0
        %2683 = vmatpush1.msra.mxu0 0.0
        %2684 = vmatprep.subr.mxu0 0.0
        %2685 = vmatpush1.msra.mxu0 0.0
        %2686 = vmatprep.subr.mxu0 0.0
        %2687 = vmatpush1.msra.mxu0 0.0
        %2688 = vmatprep.subr.mxu0 0.0
        %2689 = vmatpush1.msra.mxu0 0.0
        %2690 = vmatprep.subr.mxu0 0.0
        %2691 = vmatpush1.msra.mxu0 0.0
        %2692 = vmatprep.subr.mxu0 0.0
        %2693 = vmatpush1.msra.mxu0 0.0
        %2694 = vmatprep.subr.mxu0 0.0
        %2695 = vmatpush1.msra.mxu0 0.0
        %2696 = vmatprep.subr.mxu0 0.0
        %2697 = vmatpush1.msra.mxu0 0.0
        %2698 = vmatprep.subr.mxu0 0.0
        %2699 = vmatpush1.msra.mxu0 0.0
        %2700 = vmatprep.subr.mxu0 0.0
        %2701 = vmatpush1.msra.mxu0 0.0
        %2702 = vmatprep.subr.mxu0 0.0
        %2703 = vmatpush1.msra.mxu0 0.0
        %2704 = vmatprep.subr.mxu0 0.0
        %2705 = vmatpush1.msra.mxu0 0.0
        %2706 = vmatprep.subr.mxu0 0.0
        %2707 = vmatpush1.msra.mxu0 0.0
        %2708 = vmatprep.subr.mxu0 0.0
        %2709 = vmatpush1.msra.mxu0 0.0
        %2710 = vmatprep.subr.mxu0 0.0
        %2711 = vmatpush1.msra.mxu0 0.0
        %2712 = vmatprep.subr.mxu0 0.0
        %2713 = vmatpush1.msra.mxu0 0.0
        %2714 = vmatprep.subr.mxu0 0.0
        %2715 = vmatpush1.msra.mxu0 0.0
        %2716 = vmatprep.subr.mxu0 0.0
        %2717 = vmatpush1.msra.mxu0 0.0
        %2718 = vmatprep.subr.mxu0 0.0
        %2719 = vmatpush1.msra.mxu0 0.0
        %2720 = vmatprep.subr.mxu0 0.0
        %2721 = vmatpush1.msra.mxu0 0.0
        %2722 = vmatprep.subr.mxu0 0.0
        %2723 = vmatpush1.msra.mxu0 0.0
        %2724 = vmatprep.mubr.f32.mxu0 0.0
        %2725 = vmatmul.mubr.f32.gmra.mrb[0].mxu0 %v734
        %v2726 = vpop.f32.mrb[0].mxu0
        %v2727 = vadd.f32 0.0, %v2726
        %v2728 = vpop.f32.mrb[0].mxu0
        %2729 = vdwg.mxu0
        %v2730 = vadd.f32 %v2655, %v2727
        %v2731 = vld [vmem:[%s267 + $0x3] sm:$0x1]
        %v2732 = vld [vmem:[%s267 + $0x13] sm:$0x1]
        %v2733 = vld [vmem:[%s267 + $0x23] sm:$0x1]
        %v2734 = vld [vmem:[%s267 + $0x33] sm:$0x1]
        %v2739 = vrot.slane %v2732, 7
        %v2740 = vsel %vm301, %v2739, %v2731
        %v2741 = vrot.slane %v2733, 6
        %v2742 = vsel %vm304, %v2741, %v2740
        %v2743 = vrot.slane %v2734, 5
        %v2744 = vsel %vm307, %v2743, %v2742
        %v2745 = vsel %vm313, %v2744, 0
        %2747 = vmatprep.subr.mxu0 0.0
        %2748 = vmatpush1.msra.mxu0 %v2745
        %2749 = vmatprep.subr.mxu0 0.0
        %2750 = vmatpush1.msra.mxu0 0.0
        %2751 = vmatprep.subr.mxu0 0.0
        %2752 = vmatpush1.msra.mxu0 0.0
        %2753 = vmatprep.subr.mxu0 0.0
        %2754 = vmatpush1.msra.mxu0 0.0
        %2755 = vmatprep.subr.mxu0 0.0
        %2756 = vmatpush1.msra.mxu0 0.0
        %2757 = vmatprep.subr.mxu0 0.0
        %2758 = vmatpush1.msra.mxu0 0.0
        %2759 = vmatprep.subr.mxu0 0.0
        %2760 = vmatpush1.msra.mxu0 0.0
        %2761 = vmatprep.subr.mxu0 0.0
        %2762 = vmatpush1.msra.mxu0 0.0
        %2763 = vmatprep.subr.mxu0 0.0
        %2764 = vmatpush1.msra.mxu0 0.0
        %2765 = vmatprep.subr.mxu0 0.0
        %2766 = vmatpush1.msra.mxu0 0.0
        %2767 = vmatprep.subr.mxu0 0.0
        %2768 = vmatpush1.msra.mxu0 0.0
        %2769 = vmatprep.subr.mxu0 0.0
        %2770 = vmatpush1.msra.mxu0 0.0
        %2771 = vmatprep.subr.mxu0 0.0
        %2772 = vmatpush1.msra.mxu0 0.0
        %2773 = vmatprep.subr.mxu0 0.0
        %2774 = vmatpush1.msra.mxu0 0.0
        %2775 = vmatprep.subr.mxu0 0.0
        %2776 = vmatpush1.msra.mxu0 0.0
        %2777 = vmatprep.subr.mxu0 0.0
        %2778 = vmatpush1.msra.mxu0 0.0
        %2779 = vmatprep.subr.mxu0 0.0
        %2780 = vmatpush1.msra.mxu0 0.0
        %2781 = vmatprep.subr.mxu0 0.0
        %2782 = vmatpush1.msra.mxu0 0.0
        %2783 = vmatprep.subr.mxu0 0.0
        %2784 = vmatpush1.msra.mxu0 0.0
        %2785 = vmatprep.subr.mxu0 0.0
        %2786 = vmatpush1.msra.mxu0 0.0
        %2787 = vmatprep.subr.mxu0 0.0
        %2788 = vmatpush1.msra.mxu0 0.0
        %2789 = vmatprep.subr.mxu0 0.0
        %2790 = vmatpush1.msra.mxu0 0.0
        %2791 = vmatprep.subr.mxu0 0.0
        %2792 = vmatpush1.msra.mxu0 0.0
        %2793 = vmatprep.subr.mxu0 0.0
        %2794 = vmatpush1.msra.mxu0 0.0
        %2795 = vmatprep.subr.mxu0 0.0
        %2796 = vmatpush1.msra.mxu0 0.0
        %2797 = vmatprep.subr.mxu0 0.0
        %2798 = vmatpush1.msra.mxu0 0.0
        %2799 = vmatprep.subr.mxu0 0.0
        %2800 = vmatpush1.msra.mxu0 0.0
        %2801 = vmatprep.subr.mxu0 0.0
        %2802 = vmatpush1.msra.mxu0 0.0
        %2803 = vmatprep.subr.mxu0 0.0
        %2804 = vmatpush1.msra.mxu0 0.0
        %2805 = vmatprep.subr.mxu0 0.0
        %2806 = vmatpush1.msra.mxu0 0.0
        %2807 = vmatprep.subr.mxu0 0.0
        %2808 = vmatpush1.msra.mxu0 0.0
        %2809 = vmatprep.subr.mxu0 0.0
        %2810 = vmatpush1.msra.mxu0 0.0
        %2811 = vmatprep.mubr.f32.mxu0 0.0
        %2812 = vmatmul.mubr.f32.gmra.mrb[0].mxu0 %v824
        %v2813 = vpop.f32.mrb[0].mxu0
        %v2814 = vadd.f32 0.0, %v2813
        %v2815 = vpop.f32.mrb[0].mxu0
        %2816 = vdwg.mxu0
        %v2817 = vadd.f32 %v2730, %v2814
        %v2818 = vld [vmem:[%s291 + $0x3] sm:$0x1]
        %v2819 = vld [vmem:[%s291 + $0x13] sm:$0x1]
        %v2820 = vld [vmem:[%s291 + $0x23] sm:$0x1]
        %v2821 = vld [vmem:[%s291 + $0x33] sm:$0x1]
        %v2826 = vrot.slane %v2819, 7
        %v2827 = vsel %vm301, %v2826, %v2818
        %v2828 = vrot.slane %v2820, 6
        %v2829 = vsel %vm304, %v2828, %v2827
        %v2830 = vrot.slane %v2821, 5
        %v2831 = vsel %vm307, %v2830, %v2829
        %v2832 = vsel %vm313, %v2831, 0
        %2834 = vmatprep.subr.mxu0 0.0
        %2835 = vmatpush1.msra.mxu0 %v2832
        %2836 = vmatprep.subr.mxu0 0.0
        %2837 = vmatpush1.msra.mxu0 0.0
        %2838 = vmatprep.subr.mxu0 0.0
        %2839 = vmatpush1.msra.mxu0 0.0
        %2840 = vmatprep.subr.mxu0 0.0
        %2841 = vmatpush1.msra.mxu0 0.0
        %2842 = vmatprep.subr.mxu0 0.0
        %2843 = vmatpush1.msra.mxu0 0.0
        %2844 = vmatprep.subr.mxu0 0.0
        %2845 = vmatpush1.msra.mxu0 0.0
        %2846 = vmatprep.subr.mxu0 0.0
        %2847 = vmatpush1.msra.mxu0 0.0
        %2848 = vmatprep.subr.mxu0 0.0
        %2849 = vmatpush1.msra.mxu0 0.0
        %2850 = vmatprep.subr.mxu0 0.0
        %2851 = vmatpush1.msra.mxu0 0.0
        %2852 = vmatprep.subr.mxu0 0.0
        %2853 = vmatpush1.msra.mxu0 0.0
        %2854 = vmatprep.subr.mxu0 0.0
        %2855 = vmatpush1.msra.mxu0 0.0
        %2856 = vmatprep.subr.mxu0 0.0
        %2857 = vmatpush1.msra.mxu0 0.0
        %2858 = vmatprep.subr.mxu0 0.0
        %2859 = vmatpush1.msra.mxu0 0.0
        %2860 = vmatprep.subr.mxu0 0.0
        %2861 = vmatpush1.msra.mxu0 0.0
        %2862 = vmatprep.subr.mxu0 0.0
        %2863 = vmatpush1.msra.mxu0 0.0
        %2864 = vmatprep.subr.mxu0 0.0
        %2865 = vmatpush1.msra.mxu0 0.0
        %2866 = vmatprep.subr.mxu0 0.0
        %2867 = vmatpush1.msra.mxu0 0.0
        %2868 = vmatprep.subr.mxu0 0.0
        %2869 = vmatpush1.msra.mxu0 0.0
        %2870 = vmatprep.subr.mxu0 0.0
        %2871 = vmatpush1.msra.mxu0 0.0
        %2872 = vmatprep.subr.mxu0 0.0
        %2873 = vmatpush1.msra.mxu0 0.0
        %2874 = vmatprep.subr.mxu0 0.0
        %2875 = vmatpush1.msra.mxu0 0.0
        %2876 = vmatprep.subr.mxu0 0.0
        %2877 = vmatpush1.msra.mxu0 0.0
        %2878 = vmatprep.subr.mxu0 0.0
        %2879 = vmatpush1.msra.mxu0 0.0
        %2880 = vmatprep.subr.mxu0 0.0
        %2881 = vmatpush1.msra.mxu0 0.0
        %2882 = vmatprep.subr.mxu0 0.0
        %2883 = vmatpush1.msra.mxu0 0.0
        %2884 = vmatprep.subr.mxu0 0.0
        %2885 = vmatpush1.msra.mxu0 0.0
        %2886 = vmatprep.subr.mxu0 0.0
        %2887 = vmatpush1.msra.mxu0 0.0
        %2888 = vmatprep.subr.mxu0 0.0
        %2889 = vmatpush1.msra.mxu0 0.0
        %2890 = vmatprep.subr.mxu0 0.0
        %2891 = vmatpush1.msra.mxu0 0.0
        %2892 = vmatprep.subr.mxu0 0.0
        %2893 = vmatpush1.msra.mxu0 0.0
        %2894 = vmatprep.subr.mxu0 0.0
        %2895 = vmatpush1.msra.mxu0 0.0
        %2896 = vmatprep.subr.mxu0 0.0
        %2897 = vmatpush1.msra.mxu0 0.0
        %2898 = vmatprep.mubr.f32.mxu0 0.0
        %2899 = vmatmul.mubr.f32.gmra.mrb[0].mxu0 %v914
        %v2900 = vpop.f32.mrb[0].mxu0
        %v2901 = vadd.f32 0.0, %v2900
        %v2902 = vpop.f32.mrb[0].mxu0
        %2903 = vdwg.mxu0
        %v2904 = vadd.f32 %v2817, %v2901
        %2905 = vrot.lane.b32.xlu0 %v2744, 127
        %v2906 = vpop.permute.xlu0 %2905
        %v2907 = vsel %vm313, %v2906, 0
        %2909 = vmatprep.subr.mxu0 0.0
        %2910 = vmatpush1.msra.mxu0 %v2907
        %2911 = vmatprep.subr.mxu0 0.0
        %2912 = vmatpush1.msra.mxu0 0.0
        %2913 = vmatprep.subr.mxu0 0.0
        %2914 = vmatpush1.msra.mxu0 0.0
        %2915 = vmatprep.subr.mxu0 0.0
        %2916 = vmatpush1.msra.mxu0 0.0
        %2917 = vmatprep.subr.mxu0 0.0
        %2918 = vmatpush1.msra.mxu0 0.0
        %2919 = vmatprep.subr.mxu0 0.0
        %2920 = vmatpush1.msra.mxu0 0.0
        %2921 = vmatprep.subr.mxu0 0.0
        %2922 = vmatpush1.msra.mxu0 0.0
        %2923 = vmatprep.subr.mxu0 0.0
        %2924 = vmatpush1.msra.mxu0 0.0
        %2925 = vmatprep.subr.mxu0 0.0
        %2926 = vmatpush1.msra.mxu0 0.0
        %2927 = vmatprep.subr.mxu0 0.0
        %2928 = vmatpush1.msra.mxu0 0.0
        %2929 = vmatprep.subr.mxu0 0.0
        %2930 = vmatpush1.msra.mxu0 0.0
        %2931 = vmatprep.subr.mxu0 0.0
        %2932 = vmatpush1.msra.mxu0 0.0
        %2933 = vmatprep.subr.mxu0 0.0
        %2934 = vmatpush1.msra.mxu0 0.0
        %2935 = vmatprep.subr.mxu0 0.0
        %2936 = vmatpush1.msra.mxu0 0.0
        %2937 = vmatprep.subr.mxu0 0.0
        %2938 = vmatpush1.msra.mxu0 0.0
        %2939 = vmatprep.subr.mxu0 0.0
        %2940 = vmatpush1.msra.mxu0 0.0
        %2941 = vmatprep.subr.mxu0 0.0
        %2942 = vmatpush1.msra.mxu0 0.0
        %2943 = vmatprep.subr.mxu0 0.0
        %2944 = vmatpush1.msra.mxu0 0.0
        %2945 = vmatprep.subr.mxu0 0.0
        %2946 = vmatpush1.msra.mxu0 0.0
        %2947 = vmatprep.subr.mxu0 0.0
        %2948 = vmatpush1.msra.mxu0 0.0
        %2949 = vmatprep.subr.mxu0 0.0
        %2950 = vmatpush1.msra.mxu0 0.0
        %2951 = vmatprep.subr.mxu0 0.0
        %2952 = vmatpush1.msra.mxu0 0.0
        %2953 = vmatprep.subr.mxu0 0.0
        %2954 = vmatpush1.msra.mxu0 0.0
        %2955 = vmatprep.subr.mxu0 0.0
        %2956 = vmatpush1.msra.mxu0 0.0
        %2957 = vmatprep.subr.mxu0 0.0
        %2958 = vmatpush1.msra.mxu0 0.0
        %2959 = vmatprep.subr.mxu0 0.0
        %2960 = vmatpush1.msra.mxu0 0.0
        %2961 = vmatprep.subr.mxu0 0.0
        %2962 = vmatpush1.msra.mxu0 0.0
        %2963 = vmatprep.subr.mxu0 0.0
        %2964 = vmatpush1.msra.mxu0 0.0
        %2965 = vmatprep.subr.mxu0 0.0
        %2966 = vmatpush1.msra.mxu0 0.0
        %2967 = vmatprep.subr.mxu0 0.0
        %2968 = vmatpush1.msra.mxu0 0.0
        %2969 = vmatprep.subr.mxu0 0.0
        %2970 = vmatpush1.msra.mxu0 0.0
        %2971 = vmatprep.subr.mxu0 0.0
        %2972 = vmatpush1.msra.mxu0 0.0
        %2973 = vmatprep.mubr.f32.mxu0 0.0
        %2974 = vmatmul.mubr.f32.gmra.mrb[0].mxu0 %v992
        %v2975 = vpop.f32.mrb[0].mxu0
        %v2976 = vadd.f32 0.0, %v2975
        %v2977 = vpop.f32.mrb[0].mxu0
        %2978 = vdwg.mxu0
        %v2979 = vadd.f32 %v2904, %v2976
        %v2981 = vcombine.high %v2979, %v2979
        %v2983 = vunpack.c.l.s4 1966171168
        %v2984 = vunpack.c.0.s8 %v2983
        %v2985 = vlaneseq
        %v2986 = vshrl.u32 %v2985, 7
        %v2987 = vsub.s32 %v2984, %v2986
        %v2988 = vrot.slane %v2979, %v2987
        %v2990 = vunpack.c.l.s4 1966171168
        %v2991 = vunpack.c.0.s8 %v2990
        %v2992 = vlaneseq
        %v2993 = vshrl.u32 %v2992, 7
        %v2994 = vsub.s32 %v2991, %v2993
        %v2995 = vrot.slane %v2981, %v2994
        %v2996 = vcombine.high %v2988, %v2988
        %v2997 = vcombine.high %v2995, %v2995
        %v2999 = vunpack.c.l.s4 1966171168
        %v3000 = vunpack.c.0.s8 %v2999
        %v3001 = vlaneseq
        %v3002 = vshrl.u32 %v3001, 7
        %v3003 = vsub.s32 %v3000, %v3002
        %v3004 = vrot.slane %v2988, %v3003
        %v3006 = vunpack.c.l.s4 1966171168
        %v3007 = vunpack.c.0.s8 %v3006
        %v3008 = vlaneseq
        %v3009 = vshrl.u32 %v3008, 7
        %v3010 = vsub.s32 %v3007, %v3009
        %v3011 = vrot.slane %v2995, %v3010
        %v3013 = vunpack.c.l.s4 1966171168
        %v3014 = vunpack.c.0.s8 %v3013
        %v3015 = vlaneseq
        %v3016 = vshrl.u32 %v3015, 7
        %v3017 = vsub.s32 %v3014, %v3016
        %v3018 = vrot.slane %v2996, %v3017
        %v3020 = vunpack.c.l.s4 1966171168
        %v3021 = vunpack.c.0.s8 %v3020
        %v3022 = vlaneseq
        %v3023 = vshrl.u32 %v3022, 7
        %v3024 = vsub.s32 %v3021, %v3023
        %v3025 = vrot.slane %v2997, %v3024
        %v3026 = vcombine.high %v3004, %v3004
        %v3027 = vcombine.high %v3011, %v3011
        %v3028 = vcombine.high %v3018, %v3018
        %v3029 = vcombine.high %v3025, %v3025
        %3038 = vst.msk [vmem:[%s248 + $0x2] sm:$0x1] %vm1125, %v3004
        %3039 = vst.msk [vmem:[%s248 + $0xa] sm:$0x1] %vm1125, %v3018
        %3040 = vst.msk [vmem:[%s248 + $0x12] sm:$0x1] %vm1125, %v3026
        %3041 = vst.msk [vmem:[%s248 + $0x1a] sm:$0x1] %vm1125, %v3028
        %3042 = vst.msk [vmem:[%s248 + $0x22] sm:$0x1] %vm1125, %v3011
        %3043 = vst.msk [vmem:[%s248 + $0x2a] sm:$0x1] %vm1125, %v3025
        %3044 = vst.msk [vmem:[%s248 + $0x32] sm:$0x1] %vm1125, %v3027
        %3045 = vst.msk [vmem:[%s248 + $0x3a] sm:$0x1] %vm1125, %v3029
        %v3046 = vmul.f32 %v2979, %v1137
        %v3047 = vadd.f32 %v3046, %v1143
        %v3049 = vcombine.high %v3047, %v3047
        %v3051 = vunpack.c.l.s4 1966171168
        %v3052 = vunpack.c.0.s8 %v3051
        %v3053 = vlaneseq
        %v3054 = vshrl.u32 %v3053, 7
        %v3055 = vsub.s32 %v3052, %v3054
        %v3056 = vrot.slane %v3047, %v3055
        %v3058 = vunpack.c.l.s4 1966171168
        %v3059 = vunpack.c.0.s8 %v3058
        %v3060 = vlaneseq
        %v3061 = vshrl.u32 %v3060, 7
        %v3062 = vsub.s32 %v3059, %v3061
        %v3063 = vrot.slane %v3049, %v3062
        %v3064 = vcombine.high %v3056, %v3056
        %v3065 = vcombine.high %v3063, %v3063
        %v3067 = vunpack.c.l.s4 1966171168
        %v3068 = vunpack.c.0.s8 %v3067
        %v3069 = vlaneseq
        %v3070 = vshrl.u32 %v3069, 7
        %v3071 = vsub.s32 %v3068, %v3070
        %v3072 = vrot.slane %v3056, %v3071
        %v3074 = vunpack.c.l.s4 1966171168
        %v3075 = vunpack.c.0.s8 %v3074
        %v3076 = vlaneseq
        %v3077 = vshrl.u32 %v3076, 7
        %v3078 = vsub.s32 %v3075, %v3077
        %v3079 = vrot.slane %v3063, %v3078
        %v3081 = vunpack.c.l.s4 1966171168
        %v3082 = vunpack.c.0.s8 %v3081
        %v3083 = vlaneseq
        %v3084 = vshrl.u32 %v3083, 7
        %v3085 = vsub.s32 %v3082, %v3084
        %v3086 = vrot.slane %v3064, %v3085
        %v3088 = vunpack.c.l.s4 1966171168
        %v3089 = vunpack.c.0.s8 %v3088
        %v3090 = vlaneseq
        %v3091 = vshrl.u32 %v3090, 7
        %v3092 = vsub.s32 %v3089, %v3091
        %v3093 = vrot.slane %v3065, %v3092
        %v3094 = vcombine.high %v3072, %v3072
        %v3095 = vcombine.high %v3079, %v3079
        %v3096 = vcombine.high %v3086, %v3086
        %v3097 = vcombine.high %v3093, %v3093
        %3106 = vst.msk [vmem:[%s255 + $0x2] sm:$0x1] %vm1125, %v3072
        %3107 = vst.msk [vmem:[%s255 + $0xa] sm:$0x1] %vm1125, %v3086
        %3108 = vst.msk [vmem:[%s255 + $0x12] sm:$0x1] %vm1125, %v3094
        %3109 = vst.msk [vmem:[%s255 + $0x1a] sm:$0x1] %vm1125, %v3096
        %3110 = vst.msk [vmem:[%s255 + $0x22] sm:$0x1] %vm1125, %v3079
        %3111 = vst.msk [vmem:[%s255 + $0x2a] sm:$0x1] %vm1125, %v3093
        %3112 = vst.msk [vmem:[%s255 + $0x32] sm:$0x1] %vm1125, %v3095
        %3113 = vst.msk [vmem:[%s255 + $0x3a] sm:$0x1] %vm1125, %v3097
        %v3114 = vsub.f32 0.0, %v3047
        %v3115 = vmul.f32 %v3114, 1.442695
        %v3116 = vpow.pop %v3115
        %v3117 = vadd.f32 %v3116, 1.0
        %v3118 = vrcp.pop %v3117
        %v3119 = vmul.f32 %v3047, %v3118
        %v3121 = vcombine.high %v3119, %v3119
        %v3123 = vunpack.c.l.s4 1966171168
        %v3124 = vunpack.c.0.s8 %v3123
        %v3125 = vlaneseq
        %v3126 = vshrl.u32 %v3125, 7
        %v3127 = vsub.s32 %v3124, %v3126
        %v3128 = vrot.slane %v3119, %v3127
        %v3130 = vunpack.c.l.s4 1966171168
        %v3131 = vunpack.c.0.s8 %v3130
        %v3132 = vlaneseq
        %v3133 = vshrl.u32 %v3132, 7
        %v3134 = vsub.s32 %v3131, %v3133
        %v3135 = vrot.slane %v3121, %v3134
        %v3136 = vcombine.high %v3128, %v3128
        %v3137 = vcombine.high %v3135, %v3135
        %v3139 = vunpack.c.l.s4 1966171168
        %v3140 = vunpack.c.0.s8 %v3139
        %v3141 = vlaneseq
        %v3142 = vshrl.u32 %v3141, 7
        %v3143 = vsub.s32 %v3140, %v3142
        %v3144 = vrot.slane %v3128, %v3143
        %v3146 = vunpack.c.l.s4 1966171168
        %v3147 = vunpack.c.0.s8 %v3146
        %v3148 = vlaneseq
        %v3149 = vshrl.u32 %v3148, 7
        %v3150 = vsub.s32 %v3147, %v3149
        %v3151 = vrot.slane %v3135, %v3150
        %v3153 = vunpack.c.l.s4 1966171168
        %v3154 = vunpack.c.0.s8 %v3153
        %v3155 = vlaneseq
        %v3156 = vshrl.u32 %v3155, 7
        %v3157 = vsub.s32 %v3154, %v3156
        %v3158 = vrot.slane %v3136, %v3157
        %v3160 = vunpack.c.l.s4 1966171168
        %v3161 = vunpack.c.0.s8 %v3160
        %v3162 = vlaneseq
        %v3163 = vshrl.u32 %v3162, 7
        %v3164 = vsub.s32 %v3161, %v3163
        %v3165 = vrot.slane %v3137, %v3164
        %v3166 = vcombine.high %v3144, %v3144
        %v3167 = vcombine.high %v3151, %v3151
        %v3168 = vcombine.high %v3158, %v3158
        %v3169 = vcombine.high %v3165, %v3165
        %3178 = vst.msk [vmem:[%s262 + $0x2] sm:$0x1] %vm1125, %v3144
        %3179 = vst.msk [vmem:[%s262 + $0xa] sm:$0x1] %vm1125, %v3158
        %3180 = vst.msk [vmem:[%s262 + $0x12] sm:$0x1] %vm1125, %v3166
        %3181 = vst.msk [vmem:[%s262 + $0x1a] sm:$0x1] %vm1125, %v3168
        %3182 = vst.msk [vmem:[%s262 + $0x22] sm:$0x1] %vm1125, %v3151
        %3183 = vst.msk [vmem:[%s262 + $0x2a] sm:$0x1] %vm1125, %v3165
        %3184 = vst.msk [vmem:[%s262 + $0x32] sm:$0x1] %vm1125, %v3167
        %3185 = vst.msk [vmem:[%s262 + $0x3a] sm:$0x1] %vm1125, %v3169
        %v3186 = vld [vmem:[%s267 + $0x3] sm:$0x1]
        %v3187 = vld [vmem:[%s267 + $0x13] sm:$0x1]
        %v3188 = vld [vmem:[%s267 + $0x23] sm:$0x1]
        %v3189 = vld [vmem:[%s267 + $0x33] sm:$0x1]
        %v3190 = vld [vmem:[%s291 + $0x3] sm:$0x1]
        %v3191 = vld [vmem:[%s291 + $0x13] sm:$0x1]
        %v3192 = vld [vmem:[%s291 + $0x23] sm:$0x1]
        %v3193 = vld [vmem:[%s291 + $0x33] sm:$0x1]
        %v3198 = vrot.slane %v3191, 7
        %v3199 = vsel %vm301, %v3198, %v3190
        %v3200 = vrot.slane %v3192, 6
        %v3201 = vsel %vm304, %v3200, %v3199
        %v3202 = vrot.slane %v3193, 5
        %v3203 = vsel %vm307, %v3202, %v3201
        %v3204 = vsel %vm313, %v3203, 0
        %3206 = vmatprep.subr.mxu0 0.0
        %3207 = vmatpush1.msra.mxu0 %v3204
        %3208 = vmatprep.subr.mxu0 0.0
        %3209 = vmatpush1.msra.mxu0 0.0
        %3210 = vmatprep.subr.mxu0 0.0
        %3211 = vmatpush1.msra.mxu0 0.0
        %3212 = vmatprep.subr.mxu0 0.0
        %3213 = vmatpush1.msra.mxu0 0.0
        %3214 = vmatprep.subr.mxu0 0.0
        %3215 = vmatpush1.msra.mxu0 0.0
        %3216 = vmatprep.subr.mxu0 0.0
        %3217 = vmatpush1.msra.mxu0 0.0
        %3218 = vmatprep.subr.mxu0 0.0
        %3219 = vmatpush1.msra.mxu0 0.0
        %3220 = vmatprep.subr.mxu0 0.0
        %3221 = vmatpush1.msra.mxu0 0.0
        %3222 = vmatprep.subr.mxu0 0.0
        %3223 = vmatpush1.msra.mxu0 0.0
        %3224 = vmatprep.subr.mxu0 0.0
        %3225 = vmatpush1.msra.mxu0 0.0
        %3226 = vmatprep.subr.mxu0 0.0
        %3227 = vmatpush1.msra.mxu0 0.0
        %3228 = vmatprep.subr.mxu0 0.0
        %3229 = vmatpush1.msra.mxu0 0.0
        %3230 = vmatprep.subr.mxu0 0.0
        %3231 = vmatpush1.msra.mxu0 0.0
        %3232 = vmatprep.subr.mxu0 0.0
        %3233 = vmatpush1.msra.mxu0 0.0
        %3234 = vmatprep.subr.mxu0 0.0
        %3235 = vmatpush1.msra.mxu0 0.0
        %3236 = vmatprep.subr.mxu0 0.0
        %3237 = vmatpush1.msra.mxu0 0.0
        %3238 = vmatprep.subr.mxu0 0.0
        %3239 = vmatpush1.msra.mxu0 0.0
        %3240 = vmatprep.subr.mxu0 0.0
        %3241 = vmatpush1.msra.mxu0 0.0
        %3242 = vmatprep.subr.mxu0 0.0
        %3243 = vmatpush1.msra.mxu0 0.0
        %3244 = vmatprep.subr.mxu0 0.0
        %3245 = vmatpush1.msra.mxu0 0.0
        %3246 = vmatprep.subr.mxu0 0.0
        %3247 = vmatpush1.msra.mxu0 0.0
        %3248 = vmatprep.subr.mxu0 0.0
        %3249 = vmatpush1.msra.mxu0 0.0
        %3250 = vmatprep.subr.mxu0 0.0
        %3251 = vmatpush1.msra.mxu0 0.0
        %3252 = vmatprep.subr.mxu0 0.0
        %3253 = vmatpush1.msra.mxu0 0.0
        %3254 = vmatprep.subr.mxu0 0.0
        %3255 = vmatpush1.msra.mxu0 0.0
        %3256 = vmatprep.subr.mxu0 0.0
        %3257 = vmatpush1.msra.mxu0 0.0
        %3258 = vmatprep.subr.mxu0 0.0
        %3259 = vmatpush1.msra.mxu0 0.0
        %3260 = vmatprep.subr.mxu0 0.0
        %3261 = vmatpush1.msra.mxu0 0.0
        %3262 = vmatprep.subr.mxu0 0.0
        %3263 = vmatpush1.msra.mxu0 0.0
        %3264 = vmatprep.subr.mxu0 0.0
        %3265 = vmatpush1.msra.mxu0 0.0
        %3266 = vmatprep.subr.mxu0 0.0
        %3267 = vmatpush1.msra.mxu0 0.0
        %3268 = vmatprep.subr.mxu0 0.0
        %3269 = vmatpush1.msra.mxu0 0.0
        %3270 = vmatprep.mubr.f32.mxu0 0.0
        %3271 = vmatmul.mubr.f32.gmra.mrb[0].mxu0 %v311
        %v3272 = vpop.f32.mrb[0].mxu0
        %v3273 = vadd.f32 0.0, %v3272
        %v3274 = vpop.f32.mrb[0].mxu0
        %3275 = vdwg.mxu0
        %v3280 = vrot.slane %v3187, 7
        %v3281 = vsel %vm301, %v3280, %v3186
        %v3282 = vrot.slane %v3188, 6
        %v3283 = vsel %vm304, %v3282, %v3281
        %v3284 = vrot.slane %v3189, 5
        %v3285 = vsel %vm307, %v3284, %v3283
        %v3286 = vsel %vm313, %v3285, 0
        %3288 = vmatprep.subr.mxu0 0.0
        %3289 = vmatpush1.msra.mxu0 %v3286
        %3290 = vmatprep.subr.mxu0 0.0
        %3291 = vmatpush1.msra.mxu0 0.0
        %3292 = vmatprep.subr.mxu0 0.0
        %3293 = vmatpush1.msra.mxu0 0.0
        %3294 = vmatprep.subr.mxu0 0.0
        %3295 = vmatpush1.msra.mxu0 0.0
        %3296 = vmatprep.subr.mxu0 0.0
        %3297 = vmatpush1.msra.mxu0 0.0
        %3298 = vmatprep.subr.mxu0 0.0
        %3299 = vmatpush1.msra.mxu0 0.0
        %3300 = vmatprep.subr.mxu0 0.0
        %3301 = vmatpush1.msra.mxu0 0.0
        %3302 = vmatprep.subr.mxu0 0.0
        %3303 = vmatpush1.msra.mxu0 0.0
        %3304 = vmatprep.subr.mxu0 0.0
        %3305 = vmatpush1.msra.mxu0 0.0
        %3306 = vmatprep.subr.mxu0 0.0
        %3307 = vmatpush1.msra.mxu0 0.0
        %3308 = vmatprep.subr.mxu0 0.0
        %3309 = vmatpush1.msra.mxu0 0.0
        %3310 = vmatprep.subr.mxu0 0.0
        %3311 = vmatpush1.msra.mxu0 0.0
        %3312 = vmatprep.subr.mxu0 0.0
        %3313 = vmatpush1.msra.mxu0 0.0
        %3314 = vmatprep.subr.mxu0 0.0
        %3315 = vmatpush1.msra.mxu0 0.0
        %3316 = vmatprep.subr.mxu0 0.0
        %3317 = vmatpush1.msra.mxu0 0.0
        %3318 = vmatprep.subr.mxu0 0.0
        %3319 = vmatpush1.msra.mxu0 0.0
        %3320 = vmatprep.subr.mxu0 0.0
        %3321 = vmatpush1.msra.mxu0 0.0
        %3322 = vmatprep.subr.mxu0 0.0
        %3323 = vmatpush1.msra.mxu0 0.0
        %3324 = vmatprep.subr.mxu0 0.0
        %3325 = vmatpush1.msra.mxu0 0.0
        %3326 = vmatprep.subr.mxu0 0.0
        %3327 = vmatpush1.msra.mxu0 0.0
        %3328 = vmatprep.subr.mxu0 0.0
        %3329 = vmatpush1.msra.mxu0 0.0
        %3330 = vmatprep.subr.mxu0 0.0
        %3331 = vmatpush1.msra.mxu0 0.0
        %3332 = vmatprep.subr.mxu0 0.0
        %3333 = vmatpush1.msra.mxu0 0.0
        %3334 = vmatprep.subr.mxu0 0.0
        %3335 = vmatpush1.msra.mxu0 0.0
        %3336 = vmatprep.subr.mxu0 0.0
        %3337 = vmatpush1.msra.mxu0 0.0
        %3338 = vmatprep.subr.mxu0 0.0
        %3339 = vmatpush1.msra.mxu0 0.0
        %3340 = vmatprep.subr.mxu0 0.0
        %3341 = vmatpush1.msra.mxu0 0.0
        %3342 = vmatprep.subr.mxu0 0.0
        %3343 = vmatpush1.msra.mxu0 0.0
        %3344 = vmatprep.subr.mxu0 0.0
        %3345 = vmatpush1.msra.mxu0 0.0
        %3346 = vmatprep.subr.mxu0 0.0
        %3347 = vmatpush1.msra.mxu0 0.0
        %3348 = vmatprep.subr.mxu0 0.0
        %3349 = vmatpush1.msra.mxu0 0.0
        %3350 = vmatprep.subr.mxu0 0.0
        %3351 = vmatpush1.msra.mxu0 0.0
        %3352 = vmatprep.mubr.f32.mxu0 0.0
        %3353 = vmatmul.mubr.f32.gmra.mrb[0].mxu0 %v397
        %v3354 = vpop.f32.mrb[0].mxu0
        %v3355 = vadd.f32 %v3273, %v3354
        %v3356 = vpop.f32.mrb[0].mxu0
        %3357 = vdwg.mxu0
        %3358 = vrot.lane.b32.xlu0 %v3285, 127
        %v3359 = vpop.permute.xlu0 %3358
        %v3360 = vsel %vm313, %v3359, 0
        %3362 = vmatprep.subr.mxu0 0.0
        %3363 = vmatpush1.msra.mxu0 %v3360
        %3364 = vmatprep.subr.mxu0 0.0
        %3365 = vmatpush1.msra.mxu0 0.0
        %3366 = vmatprep.subr.mxu0 0.0
        %3367 = vmatpush1.msra.mxu0 0.0
        %3368 = vmatprep.subr.mxu0 0.0
        %3369 = vmatpush1.msra.mxu0 0.0
        %3370 = vmatprep.subr.mxu0 0.0
        %3371 = vmatpush1.msra.mxu0 0.0
        %3372 = vmatprep.subr.mxu0 0.0
        %3373 = vmatpush1.msra.mxu0 0.0
        %3374 = vmatprep.subr.mxu0 0.0
        %3375 = vmatpush1.msra.mxu0 0.0
        %3376 = vmatprep.subr.mxu0 0.0
        %3377 = vmatpush1.msra.mxu0 0.0
        %3378 = vmatprep.subr.mxu0 0.0
        %3379 = vmatpush1.msra.mxu0 0.0
        %3380 = vmatprep.subr.mxu0 0.0
        %3381 = vmatpush1.msra.mxu0 0.0
        %3382 = vmatprep.subr.mxu0 0.0
        %3383 = vmatpush1.msra.mxu0 0.0
        %3384 = vmatprep.subr.mxu0 0.0
        %3385 = vmatpush1.msra.mxu0 0.0
        %3386 = vmatprep.subr.mxu0 0.0
        %3387 = vmatpush1.msra.mxu0 0.0
        %3388 = vmatprep.subr.mxu0 0.0
        %3389 = vmatpush1.msra.mxu0 0.0
        %3390 = vmatprep.subr.mxu0 0.0
        %3391 = vmatpush1.msra.mxu0 0.0
        %3392 = vmatprep.subr.mxu0 0.0
        %3393 = vmatpush1.msra.mxu0 0.0
        %3394 = vmatprep.subr.mxu0 0.0
        %3395 = vmatpush1.msra.mxu0 0.0
        %3396 = vmatprep.subr.mxu0 0.0
        %3397 = vmatpush1.msra.mxu0 0.0
        %3398 = vmatprep.subr.mxu0 0.0
        %3399 = vmatpush1.msra.mxu0 0.0
        %3400 = vmatprep.subr.mxu0 0.0
        %3401 = vmatpush1.msra.mxu0 0.0
        %3402 = vmatprep.subr.mxu0 0.0
        %3403 = vmatpush1.msra.mxu0 0.0
        %3404 = vmatprep.subr.mxu0 0.0
        %3405 = vmatpush1.msra.mxu0 0.0
        %3406 = vmatprep.subr.mxu0 0.0
        %3407 = vmatpush1.msra.mxu0 0.0
        %3408 = vmatprep.subr.mxu0 0.0
        %3409 = vmatpush1.msra.mxu0 0.0
        %3410 = vmatprep.subr.mxu0 0.0
        %3411 = vmatpush1.msra.mxu0 0.0
        %3412 = vmatprep.subr.mxu0 0.0
        %3413 = vmatpush1.msra.mxu0 0.0
        %3414 = vmatprep.subr.mxu0 0.0
        %3415 = vmatpush1.msra.mxu0 0.0
        %3416 = vmatprep.subr.mxu0 0.0
        %3417 = vmatpush1.msra.mxu0 0.0
        %3418 = vmatprep.subr.mxu0 0.0
        %3419 = vmatpush1.msra.mxu0 0.0
        %3420 = vmatprep.subr.mxu0 0.0
        %3421 = vmatpush1.msra.mxu0 0.0
        %3422 = vmatprep.subr.mxu0 0.0
        %3423 = vmatpush1.msra.mxu0 0.0
        %3424 = vmatprep.subr.mxu0 0.0
        %3425 = vmatpush1.msra.mxu0 0.0
        %3426 = vmatprep.mubr.f32.mxu0 0.0
        %3427 = vmatmul.mubr.f32.gmra.mrb[0].mxu0 %v474
        %v3428 = vpop.f32.mrb[0].mxu0
        %v3429 = vadd.f32 0.0, %v3428
        %v3430 = vpop.f32.mrb[0].mxu0
        %3431 = vdwg.mxu0
        %v3432 = vadd.f32 %v3355, %v3429
        %v3433 = vld [vmem:[%s549 + $0x3] sm:$0x1]
        %v3434 = vld [vmem:[%s549 + $0x13] sm:$0x1]
        %v3435 = vld [vmem:[%s549 + $0x23] sm:$0x1]
        %v3436 = vld [vmem:[%s549 + $0x33] sm:$0x1]
        %v3441 = vrot.slane %v3434, 7
        %v3442 = vsel %vm301, %v3441, %v3433
        %v3443 = vrot.slane %v3435, 6
        %v3444 = vsel %vm304, %v3443, %v3442
        %v3445 = vrot.slane %v3436, 5
        %v3446 = vsel %vm307, %v3445, %v3444
        %v3447 = vsel %vm313, %v3446, 0
        %3449 = vmatprep.subr.mxu0 0.0
        %3450 = vmatpush1.msra.mxu0 %v3447
        %3451 = vmatprep.subr.mxu0 0.0
        %3452 = vmatpush1.msra.mxu0 0.0
        %3453 = vmatprep.subr.mxu0 0.0
        %3454 = vmatpush1.msra.mxu0 0.0
        %3455 = vmatprep.subr.mxu0 0.0
        %3456 = vmatpush1.msra.mxu0 0.0
        %3457 = vmatprep.subr.mxu0 0.0
        %3458 = vmatpush1.msra.mxu0 0.0
        %3459 = vmatprep.subr.mxu0 0.0
        %3460 = vmatpush1.msra.mxu0 0.0
        %3461 = vmatprep.subr.mxu0 0.0
        %3462 = vmatpush1.msra.mxu0 0.0
        %3463 = vmatprep.subr.mxu0 0.0
        %3464 = vmatpush1.msra.mxu0 0.0
        %3465 = vmatprep.subr.mxu0 0.0
        %3466 = vmatpush1.msra.mxu0 0.0
        %3467 = vmatprep.subr.mxu0 0.0
        %3468 = vmatpush1.msra.mxu0 0.0
        %3469 = vmatprep.subr.mxu0 0.0
        %3470 = vmatpush1.msra.mxu0 0.0
        %3471 = vmatprep.subr.mxu0 0.0
        %3472 = vmatpush1.msra.mxu0 0.0
        %3473 = vmatprep.subr.mxu0 0.0
        %3474 = vmatpush1.msra.mxu0 0.0
        %3475 = vmatprep.subr.mxu0 0.0
        %3476 = vmatpush1.msra.mxu0 0.0
        %3477 = vmatprep.subr.mxu0 0.0
        %3478 = vmatpush1.msra.mxu0 0.0
        %3479 = vmatprep.subr.mxu0 0.0
        %3480 = vmatpush1.msra.mxu0 0.0
        %3481 = vmatprep.subr.mxu0 0.0
        %3482 = vmatpush1.msra.mxu0 0.0
        %3483 = vmatprep.subr.mxu0 0.0
        %3484 = vmatpush1.msra.mxu0 0.0
        %3485 = vmatprep.subr.mxu0 0.0
        %3486 = vmatpush1.msra.mxu0 0.0
        %3487 = vmatprep.subr.mxu0 0.0
        %3488 = vmatpush1.msra.mxu0 0.0
        %3489 = vmatprep.subr.mxu0 0.0
        %3490 = vmatpush1.msra.mxu0 0.0
        %3491 = vmatprep.subr.mxu0 0.0
        %3492 = vmatpush1.msra.mxu0 0.0
        %3493 = vmatprep.subr.mxu0 0.0
        %3494 = vmatpush1.msra.mxu0 0.0
        %3495 = vmatprep.subr.mxu0 0.0
        %3496 = vmatpush1.msra.mxu0 0.0
        %3497 = vmatprep.subr.mxu0 0.0
        %3498 = vmatpush1.msra.mxu0 0.0
        %3499 = vmatprep.subr.mxu0 0.0
        %3500 = vmatpush1.msra.mxu0 0.0
        %3501 = vmatprep.subr.mxu0 0.0
        %3502 = vmatpush1.msra.mxu0 0.0
        %3503 = vmatprep.subr.mxu0 0.0
        %3504 = vmatpush1.msra.mxu0 0.0
        %3505 = vmatprep.subr.mxu0 0.0
        %3506 = vmatpush1.msra.mxu0 0.0
        %3507 = vmatprep.subr.mxu0 0.0
        %3508 = vmatpush1.msra.mxu0 0.0
        %3509 = vmatprep.subr.mxu0 0.0
        %3510 = vmatpush1.msra.mxu0 0.0
        %3511 = vmatprep.subr.mxu0 0.0
        %3512 = vmatpush1.msra.mxu0 0.0
        %3513 = vmatprep.mubr.f32.mxu0 0.0
        %3514 = vmatmul.mubr.f32.gmra.mrb[0].mxu0 %v565
        %v3515 = vpop.f32.mrb[0].mxu0
        %v3516 = vadd.f32 0.0, %v3515
        %v3517 = vpop.f32.mrb[0].mxu0
        %3518 = vdwg.mxu0
        %v3519 = vadd.f32 %v3432, %v3516
        %v3520 = vld [vmem:[%s640 + $0x3] sm:$0x1]
        %v3521 = vld [vmem:[%s640 + $0x13] sm:$0x1]
        %v3522 = vld [vmem:[%s640 + $0x23] sm:$0x1]
        %v3523 = vld [vmem:[%s640 + $0x33] sm:$0x1]
        %v3528 = vrot.slane %v3521, 7
        %v3529 = vsel %vm301, %v3528, %v3520
        %v3530 = vrot.slane %v3522, 6
        %v3531 = vsel %vm304, %v3530, %v3529
        %v3532 = vrot.slane %v3523, 5
        %v3533 = vsel %vm307, %v3532, %v3531
        %v3534 = vsel %vm313, %v3533, 0
        %3536 = vmatprep.subr.mxu0 0.0
        %3537 = vmatpush1.msra.mxu0 %v3534
        %3538 = vmatprep.subr.mxu0 0.0
        %3539 = vmatpush1.msra.mxu0 0.0
        %3540 = vmatprep.subr.mxu0 0.0
        %3541 = vmatpush1.msra.mxu0 0.0
        %3542 = vmatprep.subr.mxu0 0.0
        %3543 = vmatpush1.msra.mxu0 0.0
        %3544 = vmatprep.subr.mxu0 0.0
        %3545 = vmatpush1.msra.mxu0 0.0
        %3546 = vmatprep.subr.mxu0 0.0
        %3547 = vmatpush1.msra.mxu0 0.0
        %3548 = vmatprep.subr.mxu0 0.0
        %3549 = vmatpush1.msra.mxu0 0.0
        %3550 = vmatprep.subr.mxu0 0.0
        %3551 = vmatpush1.msra.mxu0 0.0
        %3552 = vmatprep.subr.mxu0 0.0
        %3553 = vmatpush1.msra.mxu0 0.0
        %3554 = vmatprep.subr.mxu0 0.0
        %3555 = vmatpush1.msra.mxu0 0.0
        %3556 = vmatprep.subr.mxu0 0.0
        %3557 = vmatpush1.msra.mxu0 0.0
        %3558 = vmatprep.subr.mxu0 0.0
        %3559 = vmatpush1.msra.mxu0 0.0
        %3560 = vmatprep.subr.mxu0 0.0
        %3561 = vmatpush1.msra.mxu0 0.0
        %3562 = vmatprep.subr.mxu0 0.0
        %3563 = vmatpush1.msra.mxu0 0.0
        %3564 = vmatprep.subr.mxu0 0.0
        %3565 = vmatpush1.msra.mxu0 0.0
        %3566 = vmatprep.subr.mxu0 0.0
        %3567 = vmatpush1.msra.mxu0 0.0
        %3568 = vmatprep.subr.mxu0 0.0
        %3569 = vmatpush1.msra.mxu0 0.0
        %3570 = vmatprep.subr.mxu0 0.0
        %3571 = vmatpush1.msra.mxu0 0.0
        %3572 = vmatprep.subr.mxu0 0.0
        %3573 = vmatpush1.msra.mxu0 0.0
        %3574 = vmatprep.subr.mxu0 0.0
        %3575 = vmatpush1.msra.mxu0 0.0
        %3576 = vmatprep.subr.mxu0 0.0
        %3577 = vmatpush1.msra.mxu0 0.0
        %3578 = vmatprep.subr.mxu0 0.0
        %3579 = vmatpush1.msra.mxu0 0.0
        %3580 = vmatprep.subr.mxu0 0.0
        %3581 = vmatpush1.msra.mxu0 0.0
        %3582 = vmatprep.subr.mxu0 0.0
        %3583 = vmatpush1.msra.mxu0 0.0
        %3584 = vmatprep.subr.mxu0 0.0
        %3585 = vmatpush1.msra.mxu0 0.0
        %3586 = vmatprep.subr.mxu0 0.0
        %3587 = vmatpush1.msra.mxu0 0.0
        %3588 = vmatprep.subr.mxu0 0.0
        %3589 = vmatpush1.msra.mxu0 0.0
        %3590 = vmatprep.subr.mxu0 0.0
        %3591 = vmatpush1.msra.mxu0 0.0
        %3592 = vmatprep.subr.mxu0 0.0
        %3593 = vmatpush1.msra.mxu0 0.0
        %3594 = vmatprep.subr.mxu0 0.0
        %3595 = vmatpush1.msra.mxu0 0.0
        %3596 = vmatprep.subr.mxu0 0.0
        %3597 = vmatpush1.msra.mxu0 0.0
        %3598 = vmatprep.subr.mxu0 0.0
        %3599 = vmatpush1.msra.mxu0 0.0
        %3600 = vmatprep.mubr.f32.mxu0 0.0
        %3601 = vmatmul.mubr.f32.gmra.mrb[0].mxu0 %v656
        %v3602 = vpop.f32.mrb[0].mxu0
        %v3603 = vadd.f32 0.0, %v3602
        %v3604 = vpop.f32.mrb[0].mxu0
        %3605 = vdwg.mxu0
        %v3606 = vadd.f32 %v3519, %v3603
        %3607 = vrot.lane.b32.xlu0 %v3446, 127
        %v3608 = vpop.permute.xlu0 %3607
        %v3609 = vsel %vm313, %v3608, 0
        %3611 = vmatprep.subr.mxu0 0.0
        %3612 = vmatpush1.msra.mxu0 %v3609
        %3613 = vmatprep.subr.mxu0 0.0
        %3614 = vmatpush1.msra.mxu0 0.0
        %3615 = vmatprep.subr.mxu0 0.0
        %3616 = vmatpush1.msra.mxu0 0.0
        %3617 = vmatprep.subr.mxu0 0.0
        %3618 = vmatpush1.msra.mxu0 0.0
        %3619 = vmatprep.subr.mxu0 0.0
        %3620 = vmatpush1.msra.mxu0 0.0
        %3621 = vmatprep.subr.mxu0 0.0
        %3622 = vmatpush1.msra.mxu0 0.0
        %3623 = vmatprep.subr.mxu0 0.0
        %3624 = vmatpush1.msra.mxu0 0.0
        %3625 = vmatprep.subr.mxu0 0.0
        %3626 = vmatpush1.msra.mxu0 0.0
        %3627 = vmatprep.subr.mxu0 0.0
        %3628 = vmatpush1.msra.mxu0 0.0
        %3629 = vmatprep.subr.mxu0 0.0
        %3630 = vmatpush1.msra.mxu0 0.0
        %3631 = vmatprep.subr.mxu0 0.0
        %3632 = vmatpush1.msra.mxu0 0.0
        %3633 = vmatprep.subr.mxu0 0.0
        %3634 = vmatpush1.msra.mxu0 0.0
        %3635 = vmatprep.subr.mxu0 0.0
        %3636 = vmatpush1.msra.mxu0 0.0
        %3637 = vmatprep.subr.mxu0 0.0
        %3638 = vmatpush1.msra.mxu0 0.0
        %3639 = vmatprep.subr.mxu0 0.0
        %3640 = vmatpush1.msra.mxu0 0.0
        %3641 = vmatprep.subr.mxu0 0.0
        %3642 = vmatpush1.msra.mxu0 0.0
        %3643 = vmatprep.subr.mxu0 0.0
        %3644 = vmatpush1.msra.mxu0 0.0
        %3645 = vmatprep.subr.mxu0 0.0
        %3646 = vmatpush1.msra.mxu0 0.0
        %3647 = vmatprep.subr.mxu0 0.0
        %3648 = vmatpush1.msra.mxu0 0.0
        %3649 = vmatprep.subr.mxu0 0.0
        %3650 = vmatpush1.msra.mxu0 0.0
        %3651 = vmatprep.subr.mxu0 0.0
        %3652 = vmatpush1.msra.mxu0 0.0
        %3653 = vmatprep.subr.mxu0 0.0
        %3654 = vmatpush1.msra.mxu0 0.0
        %3655 = vmatprep.subr.mxu0 0.0
        %3656 = vmatpush1.msra.mxu0 0.0
        %3657 = vmatprep.subr.mxu0 0.0
        %3658 = vmatpush1.msra.mxu0 0.0
        %3659 = vmatprep.subr.mxu0 0.0
        %3660 = vmatpush1.msra.mxu0 0.0
        %3661 = vmatprep.subr.mxu0 0.0
        %3662 = vmatpush1.msra.mxu0 0.0
        %3663 = vmatprep.subr.mxu0 0.0
        %3664 = vmatpush1.msra.mxu0 0.0
        %3665 = vmatprep.subr.mxu0 0.0
        %3666 = vmatpush1.msra.mxu0 0.0
        %3667 = vmatprep.subr.mxu0 0.0
        %3668 = vmatpush1.msra.mxu0 0.0
        %3669 = vmatprep.subr.mxu0 0.0
        %3670 = vmatpush1.msra.mxu0 0.0
        %3671 = vmatprep.subr.mxu0 0.0
        %3672 = vmatpush1.msra.mxu0 0.0
        %3673 = vmatprep.subr.mxu0 0.0
        %3674 = vmatpush1.msra.mxu0 0.0
        %3675 = vmatprep.mubr.f32.mxu0 0.0
        %3676 = vmatmul.mubr.f32.gmra.mrb[0].mxu0 %v734
        %v3677 = vpop.f32.mrb[0].mxu0
        %v3678 = vadd.f32 0.0, %v3677
        %v3679 = vpop.f32.mrb[0].mxu0
        %3680 = vdwg.mxu0
        %v3681 = vadd.f32 %v3606, %v3678
        %v3682 = vld [vmem:[%s267 + $0x4] sm:$0x1]
        %v3683 = vld [vmem:[%s267 + $0x14] sm:$0x1]
        %v3684 = vld [vmem:[%s267 + $0x24] sm:$0x1]
        %v3685 = vld [vmem:[%s267 + $0x34] sm:$0x1]
        %v3690 = vrot.slane %v3683, 7
        %v3691 = vsel %vm301, %v3690, %v3682
        %v3692 = vrot.slane %v3684, 6
        %v3693 = vsel %vm304, %v3692, %v3691
        %v3694 = vrot.slane %v3685, 5
        %v3695 = vsel %vm307, %v3694, %v3693
        %v3696 = vsel %vm313, %v3695, 0
        %3698 = vmatprep.subr.mxu0 0.0
        %3699 = vmatpush1.msra.mxu0 %v3696
        %3700 = vmatprep.subr.mxu0 0.0
        %3701 = vmatpush1.msra.mxu0 0.0
        %3702 = vmatprep.subr.mxu0 0.0
        %3703 = vmatpush1.msra.mxu0 0.0
        %3704 = vmatprep.subr.mxu0 0.0
        %3705 = vmatpush1.msra.mxu0 0.0
        %3706 = vmatprep.subr.mxu0 0.0
        %3707 = vmatpush1.msra.mxu0 0.0
        %3708 = vmatprep.subr.mxu0 0.0
        %3709 = vmatpush1.msra.mxu0 0.0
        %3710 = vmatprep.subr.mxu0 0.0
        %3711 = vmatpush1.msra.mxu0 0.0
        %3712 = vmatprep.subr.mxu0 0.0
        %3713 = vmatpush1.msra.mxu0 0.0
        %3714 = vmatprep.subr.mxu0 0.0
        %3715 = vmatpush1.msra.mxu0 0.0
        %3716 = vmatprep.subr.mxu0 0.0
        %3717 = vmatpush1.msra.mxu0 0.0
        %3718 = vmatprep.subr.mxu0 0.0
        %3719 = vmatpush1.msra.mxu0 0.0
        %3720 = vmatprep.subr.mxu0 0.0
        %3721 = vmatpush1.msra.mxu0 0.0
        %3722 = vmatprep.subr.mxu0 0.0
        %3723 = vmatpush1.msra.mxu0 0.0
        %3724 = vmatprep.subr.mxu0 0.0
        %3725 = vmatpush1.msra.mxu0 0.0
        %3726 = vmatprep.subr.mxu0 0.0
        %3727 = vmatpush1.msra.mxu0 0.0
        %3728 = vmatprep.subr.mxu0 0.0
        %3729 = vmatpush1.msra.mxu0 0.0
        %3730 = vmatprep.subr.mxu0 0.0
        %3731 = vmatpush1.msra.mxu0 0.0
        %3732 = vmatprep.subr.mxu0 0.0
        %3733 = vmatpush1.msra.mxu0 0.0
        %3734 = vmatprep.subr.mxu0 0.0
        %3735 = vmatpush1.msra.mxu0 0.0
        %3736 = vmatprep.subr.mxu0 0.0
        %3737 = vmatpush1.msra.mxu0 0.0
        %3738 = vmatprep.subr.mxu0 0.0
        %3739 = vmatpush1.msra.mxu0 0.0
        %3740 = vmatprep.subr.mxu0 0.0
        %3741 = vmatpush1.msra.mxu0 0.0
        %3742 = vmatprep.subr.mxu0 0.0
        %3743 = vmatpush1.msra.mxu0 0.0
        %3744 = vmatprep.subr.mxu0 0.0
        %3745 = vmatpush1.msra.mxu0 0.0
        %3746 = vmatprep.subr.mxu0 0.0
        %3747 = vmatpush1.msra.mxu0 0.0
        %3748 = vmatprep.subr.mxu0 0.0
        %3749 = vmatpush1.msra.mxu0 0.0
        %3750 = vmatprep.subr.mxu0 0.0
        %3751 = vmatpush1.msra.mxu0 0.0
        %3752 = vmatprep.subr.mxu0 0.0
        %3753 = vmatpush1.msra.mxu0 0.0
        %3754 = vmatprep.subr.mxu0 0.0
        %3755 = vmatpush1.msra.mxu0 0.0
        %3756 = vmatprep.subr.mxu0 0.0
        %3757 = vmatpush1.msra.mxu0 0.0
        %3758 = vmatprep.subr.mxu0 0.0
        %3759 = vmatpush1.msra.mxu0 0.0
        %3760 = vmatprep.subr.mxu0 0.0
        %3761 = vmatpush1.msra.mxu0 0.0
        %3762 = vmatprep.mubr.f32.mxu0 0.0
        %3763 = vmatmul.mubr.f32.gmra.mrb[0].mxu0 %v824
        %v3764 = vpop.f32.mrb[0].mxu0
        %v3765 = vadd.f32 0.0, %v3764
        %v3766 = vpop.f32.mrb[0].mxu0
        %3767 = vdwg.mxu0
        %v3768 = vadd.f32 %v3681, %v3765
        %v3769 = vld [vmem:[%s291 + $0x4] sm:$0x1]
        %v3770 = vld [vmem:[%s291 + $0x14] sm:$0x1]
        %v3771 = vld [vmem:[%s291 + $0x24] sm:$0x1]
        %v3772 = vld [vmem:[%s291 + $0x34] sm:$0x1]
        %v3777 = vrot.slane %v3770, 7
        %v3778 = vsel %vm301, %v3777, %v3769
        %v3779 = vrot.slane %v3771, 6
        %v3780 = vsel %vm304, %v3779, %v3778
        %v3781 = vrot.slane %v3772, 5
        %v3782 = vsel %vm307, %v3781, %v3780
        %v3783 = vsel %vm313, %v3782, 0
        %3785 = vmatprep.subr.mxu0 0.0
        %3786 = vmatpush1.msra.mxu0 %v3783
        %3787 = vmatprep.subr.mxu0 0.0
        %3788 = vmatpush1.msra.mxu0 0.0
        %3789 = vmatprep.subr.mxu0 0.0
        %3790 = vmatpush1.msra.mxu0 0.0
        %3791 = vmatprep.subr.mxu0 0.0
        %3792 = vmatpush1.msra.mxu0 0.0
        %3793 = vmatprep.subr.mxu0 0.0
        %3794 = vmatpush1.msra.mxu0 0.0
        %3795 = vmatprep.subr.mxu0 0.0
        %3796 = vmatpush1.msra.mxu0 0.0
        %3797 = vmatprep.subr.mxu0 0.0
        %3798 = vmatpush1.msra.mxu0 0.0
        %3799 = vmatprep.subr.mxu0 0.0
        %3800 = vmatpush1.msra.mxu0 0.0
        %3801 = vmatprep.subr.mxu0 0.0
        %3802 = vmatpush1.msra.mxu0 0.0
        %3803 = vmatprep.subr.mxu0 0.0
        %3804 = vmatpush1.msra.mxu0 0.0
        %3805 = vmatprep.subr.mxu0 0.0
        %3806 = vmatpush1.msra.mxu0 0.0
        %3807 = vmatprep.subr.mxu0 0.0
        %3808 = vmatpush1.msra.mxu0 0.0
        %3809 = vmatprep.subr.mxu0 0.0
        %3810 = vmatpush1.msra.mxu0 0.0
        %3811 = vmatprep.subr.mxu0 0.0
        %3812 = vmatpush1.msra.mxu0 0.0
        %3813 = vmatprep.subr.mxu0 0.0
        %3814 = vmatpush1.msra.mxu0 0.0
        %3815 = vmatprep.subr.mxu0 0.0
        %3816 = vmatpush1.msra.mxu0 0.0
        %3817 = vmatprep.subr.mxu0 0.0
        %3818 = vmatpush1.msra.mxu0 0.0
        %3819 = vmatprep.subr.mxu0 0.0
        %3820 = vmatpush1.msra.mxu0 0.0
        %3821 = vmatprep.subr.mxu0 0.0
        %3822 = vmatpush1.msra.mxu0 0.0
        %3823 = vmatprep.subr.mxu0 0.0
        %3824 = vmatpush1.msra.mxu0 0.0
        %3825 = vmatprep.subr.mxu0 0.0
        %3826 = vmatpush1.msra.mxu0 0.0
        %3827 = vmatprep.subr.mxu0 0.0
        %3828 = vmatpush1.msra.mxu0 0.0
        %3829 = vmatprep.subr.mxu0 0.0
        %3830 = vmatpush1.msra.mxu0 0.0
        %3831 = vmatprep.subr.mxu0 0.0
        %3832 = vmatpush1.msra.mxu0 0.0
        %3833 = vmatprep.subr.mxu0 0.0
        %3834 = vmatpush1.msra.mxu0 0.0
        %3835 = vmatprep.subr.mxu0 0.0
        %3836 = vmatpush1.msra.mxu0 0.0
        %3837 = vmatprep.subr.mxu0 0.0
        %3838 = vmatpush1.msra.mxu0 0.0
        %3839 = vmatprep.subr.mxu0 0.0
        %3840 = vmatpush1.msra.mxu0 0.0
        %3841 = vmatprep.subr.mxu0 0.0
        %3842 = vmatpush1.msra.mxu0 0.0
        %3843 = vmatprep.subr.mxu0 0.0
        %3844 = vmatpush1.msra.mxu0 0.0
        %3845 = vmatprep.subr.mxu0 0.0
        %3846 = vmatpush1.msra.mxu0 0.0
        %3847 = vmatprep.subr.mxu0 0.0
        %3848 = vmatpush1.msra.mxu0 0.0
        %3849 = vmatprep.mubr.f32.mxu0 0.0
        %3850 = vmatmul.mubr.f32.gmra.mrb[0].mxu0 %v914
        %v3851 = vpop.f32.mrb[0].mxu0
        %v3852 = vadd.f32 0.0, %v3851
        %v3853 = vpop.f32.mrb[0].mxu0
        %3854 = vdwg.mxu0
        %v3855 = vadd.f32 %v3768, %v3852
        %3856 = vrot.lane.b32.xlu0 %v3695, 127
        %v3857 = vpop.permute.xlu0 %3856
        %v3858 = vsel %vm313, %v3857, 0
        %3860 = vmatprep.subr.mxu0 0.0
        %3861 = vmatpush1.msra.mxu0 %v3858
        %3862 = vmatprep.subr.mxu0 0.0
        %3863 = vmatpush1.msra.mxu0 0.0
        %3864 = vmatprep.subr.mxu0 0.0
        %3865 = vmatpush1.msra.mxu0 0.0
        %3866 = vmatprep.subr.mxu0 0.0
        %3867 = vmatpush1.msra.mxu0 0.0
        %3868 = vmatprep.subr.mxu0 0.0
        %3869 = vmatpush1.msra.mxu0 0.0
        %3870 = vmatprep.subr.mxu0 0.0
        %3871 = vmatpush1.msra.mxu0 0.0
        %3872 = vmatprep.subr.mxu0 0.0
        %3873 = vmatpush1.msra.mxu0 0.0
        %3874 = vmatprep.subr.mxu0 0.0
        %3875 = vmatpush1.msra.mxu0 0.0
        %3876 = vmatprep.subr.mxu0 0.0
        %3877 = vmatpush1.msra.mxu0 0.0
        %3878 = vmatprep.subr.mxu0 0.0
        %3879 = vmatpush1.msra.mxu0 0.0
        %3880 = vmatprep.subr.mxu0 0.0
        %3881 = vmatpush1.msra.mxu0 0.0
        %3882 = vmatprep.subr.mxu0 0.0
        %3883 = vmatpush1.msra.mxu0 0.0
        %3884 = vmatprep.subr.mxu0 0.0
        %3885 = vmatpush1.msra.mxu0 0.0
        %3886 = vmatprep.subr.mxu0 0.0
        %3887 = vmatpush1.msra.mxu0 0.0
        %3888 = vmatprep.subr.mxu0 0.0
        %3889 = vmatpush1.msra.mxu0 0.0
        %3890 = vmatprep.subr.mxu0 0.0
        %3891 = vmatpush1.msra.mxu0 0.0
        %3892 = vmatprep.subr.mxu0 0.0
        %3893 = vmatpush1.msra.mxu0 0.0
        %3894 = vmatprep.subr.mxu0 0.0
        %3895 = vmatpush1.msra.mxu0 0.0
        %3896 = vmatprep.subr.mxu0 0.0
        %3897 = vmatpush1.msra.mxu0 0.0
        %3898 = vmatprep.subr.mxu0 0.0
        %3899 = vmatpush1.msra.mxu0 0.0
        %3900 = vmatprep.subr.mxu0 0.0
        %3901 = vmatpush1.msra.mxu0 0.0
        %3902 = vmatprep.subr.mxu0 0.0
        %3903 = vmatpush1.msra.mxu0 0.0
        %3904 = vmatprep.subr.mxu0 0.0
        %3905 = vmatpush1.msra.mxu0 0.0
        %3906 = vmatprep.subr.mxu0 0.0
        %3907 = vmatpush1.msra.mxu0 0.0
        %3908 = vmatprep.subr.mxu0 0.0
        %3909 = vmatpush1.msra.mxu0 0.0
        %3910 = vmatprep.subr.mxu0 0.0
        %3911 = vmatpush1.msra.mxu0 0.0
        %3912 = vmatprep.subr.mxu0 0.0
        %3913 = vmatpush1.msra.mxu0 0.0
        %3914 = vmatprep.subr.mxu0 0.0
        %3915 = vmatpush1.msra.mxu0 0.0
        %3916 = vmatprep.subr.mxu0 0.0
        %3917 = vmatpush1.msra.mxu0 0.0
        %3918 = vmatprep.subr.mxu0 0.0
        %3919 = vmatpush1.msra.mxu0 0.0
        %3920 = vmatprep.subr.mxu0 0.0
        %3921 = vmatpush1.msra.mxu0 0.0
        %3922 = vmatprep.subr.mxu0 0.0
        %3923 = vmatpush1.msra.mxu0 0.0
        %3924 = vmatprep.mubr.f32.mxu0 0.0
        %3925 = vmatmul.mubr.f32.gmra.mrb[0].mxu0 %v992
        %v3926 = vpop.f32.mrb[0].mxu0
        %v3927 = vadd.f32 0.0, %v3926
        %v3928 = vpop.f32.mrb[0].mxu0
        %3929 = vdwg.mxu0
        %v3930 = vadd.f32 %v3855, %v3927
        %v3932 = vcombine.high %v3930, %v3930
        %v3934 = vunpack.c.l.s4 1966171168
        %v3935 = vunpack.c.0.s8 %v3934
        %v3936 = vlaneseq
        %v3937 = vshrl.u32 %v3936, 7
        %v3938 = vsub.s32 %v3935, %v3937
        %v3939 = vrot.slane %v3930, %v3938
        %v3941 = vunpack.c.l.s4 1966171168
        %v3942 = vunpack.c.0.s8 %v3941
        %v3943 = vlaneseq
        %v3944 = vshrl.u32 %v3943, 7
        %v3945 = vsub.s32 %v3942, %v3944
        %v3946 = vrot.slane %v3932, %v3945
        %v3947 = vcombine.high %v3939, %v3939
        %v3948 = vcombine.high %v3946, %v3946
        %v3950 = vunpack.c.l.s4 1966171168
        %v3951 = vunpack.c.0.s8 %v3950
        %v3952 = vlaneseq
        %v3953 = vshrl.u32 %v3952, 7
        %v3954 = vsub.s32 %v3951, %v3953
        %v3955 = vrot.slane %v3939, %v3954
        %v3957 = vunpack.c.l.s4 1966171168
        %v3958 = vunpack.c.0.s8 %v3957
        %v3959 = vlaneseq
        %v3960 = vshrl.u32 %v3959, 7
        %v3961 = vsub.s32 %v3958, %v3960
        %v3962 = vrot.slane %v3946, %v3961
        %v3964 = vunpack.c.l.s4 1966171168
        %v3965 = vunpack.c.0.s8 %v3964
        %v3966 = vlaneseq
        %v3967 = vshrl.u32 %v3966, 7
        %v3968 = vsub.s32 %v3965, %v3967
        %v3969 = vrot.slane %v3947, %v3968
        %v3971 = vunpack.c.l.s4 1966171168
        %v3972 = vunpack.c.0.s8 %v3971
        %v3973 = vlaneseq
        %v3974 = vshrl.u32 %v3973, 7
        %v3975 = vsub.s32 %v3972, %v3974
        %v3976 = vrot.slane %v3948, %v3975
        %v3977 = vcombine.high %v3955, %v3955
        %v3978 = vcombine.high %v3962, %v3962
        %v3979 = vcombine.high %v3969, %v3969
        %v3980 = vcombine.high %v3976, %v3976
        %3989 = vst.msk [vmem:[%s248 + $0x3] sm:$0x1] %vm1125, %v3955
        %3990 = vst.msk [vmem:[%s248 + $0xb] sm:$0x1] %vm1125, %v3969
        %3991 = vst.msk [vmem:[%s248 + $0x13] sm:$0x1] %vm1125, %v3977
        %3992 = vst.msk [vmem:[%s248 + $0x1b] sm:$0x1] %vm1125, %v3979
        %3993 = vst.msk [vmem:[%s248 + $0x23] sm:$0x1] %vm1125, %v3962
        %3994 = vst.msk [vmem:[%s248 + $0x2b] sm:$0x1] %vm1125, %v3976
        %3995 = vst.msk [vmem:[%s248 + $0x33] sm:$0x1] %vm1125, %v3978
        %3996 = vst.msk [vmem:[%s248 + $0x3b] sm:$0x1] %vm1125, %v3980
        %v3997 = vmul.f32 %v3930, %v1137
        %v3998 = vadd.f32 %v3997, %v1143
        %v4000 = vcombine.high %v3998, %v3998
        %v4002 = vunpack.c.l.s4 1966171168
        %v4003 = vunpack.c.0.s8 %v4002
        %v4004 = vlaneseq
        %v4005 = vshrl.u32 %v4004, 7
        %v4006 = vsub.s32 %v4003, %v4005
        %v4007 = vrot.slane %v3998, %v4006
        %v4009 = vunpack.c.l.s4 1966171168
        %v4010 = vunpack.c.0.s8 %v4009
        %v4011 = vlaneseq
        %v4012 = vshrl.u32 %v4011, 7
        %v4013 = vsub.s32 %v4010, %v4012
        %v4014 = vrot.slane %v4000, %v4013
        %v4015 = vcombine.high %v4007, %v4007
        %v4016 = vcombine.high %v4014, %v4014
        %v4018 = vunpack.c.l.s4 1966171168
        %v4019 = vunpack.c.0.s8 %v4018
        %v4020 = vlaneseq
        %v4021 = vshrl.u32 %v4020, 7
        %v4022 = vsub.s32 %v4019, %v4021
        %v4023 = vrot.slane %v4007, %v4022
        %v4025 = vunpack.c.l.s4 1966171168
        %v4026 = vunpack.c.0.s8 %v4025
        %v4027 = vlaneseq
        %v4028 = vshrl.u32 %v4027, 7
        %v4029 = vsub.s32 %v4026, %v4028
        %v4030 = vrot.slane %v4014, %v4029
        %v4032 = vunpack.c.l.s4 1966171168
        %v4033 = vunpack.c.0.s8 %v4032
        %v4034 = vlaneseq
        %v4035 = vshrl.u32 %v4034, 7
        %v4036 = vsub.s32 %v4033, %v4035
        %v4037 = vrot.slane %v4015, %v4036
        %v4039 = vunpack.c.l.s4 1966171168
        %v4040 = vunpack.c.0.s8 %v4039
        %v4041 = vlaneseq
        %v4042 = vshrl.u32 %v4041, 7
        %v4043 = vsub.s32 %v4040, %v4042
        %v4044 = vrot.slane %v4016, %v4043
        %v4045 = vcombine.high %v4023, %v4023
        %v4046 = vcombine.high %v4030, %v4030
        %v4047 = vcombine.high %v4037, %v4037
        %v4048 = vcombine.high %v4044, %v4044
        %4057 = vst.msk [vmem:[%s255 + $0x3] sm:$0x1] %vm1125, %v4023
        %4058 = vst.msk [vmem:[%s255 + $0xb] sm:$0x1] %vm1125, %v4037
        %4059 = vst.msk [vmem:[%s255 + $0x13] sm:$0x1] %vm1125, %v4045
        %4060 = vst.msk [vmem:[%s255 + $0x1b] sm:$0x1] %vm1125, %v4047
        %4061 = vst.msk [vmem:[%s255 + $0x23] sm:$0x1] %vm1125, %v4030
        %4062 = vst.msk [vmem:[%s255 + $0x2b] sm:$0x1] %vm1125, %v4044
        %4063 = vst.msk [vmem:[%s255 + $0x33] sm:$0x1] %vm1125, %v4046
        %4064 = vst.msk [vmem:[%s255 + $0x3b] sm:$0x1] %vm1125, %v4048
        %v4065 = vsub.f32 0.0, %v3998
        %v4066 = vmul.f32 %v4065, 1.442695
        %v4067 = vpow.pop %v4066
        %v4068 = vadd.f32 %v4067, 1.0
        %v4069 = vrcp.pop %v4068
        %v4070 = vmul.f32 %v3998, %v4069
        %v4072 = vcombine.high %v4070, %v4070
        %v4074 = vunpack.c.l.s4 1966171168
        %v4075 = vunpack.c.0.s8 %v4074
        %v4076 = vlaneseq
        %v4077 = vshrl.u32 %v4076, 7
        %v4078 = vsub.s32 %v4075, %v4077
        %v4079 = vrot.slane %v4070, %v4078
        %v4081 = vunpack.c.l.s4 1966171168
        %v4082 = vunpack.c.0.s8 %v4081
        %v4083 = vlaneseq
        %v4084 = vshrl.u32 %v4083, 7
        %v4085 = vsub.s32 %v4082, %v4084
        %v4086 = vrot.slane %v4072, %v4085
        %v4087 = vcombine.high %v4079, %v4079
        %v4088 = vcombine.high %v4086, %v4086
        %v4090 = vunpack.c.l.s4 1966171168
        %v4091 = vunpack.c.0.s8 %v4090
        %v4092 = vlaneseq
        %v4093 = vshrl.u32 %v4092, 7
        %v4094 = vsub.s32 %v4091, %v4093
        %v4095 = vrot.slane %v4079, %v4094
        %v4097 = vunpack.c.l.s4 1966171168
        %v4098 = vunpack.c.0.s8 %v4097
        %v4099 = vlaneseq
        %v4100 = vshrl.u32 %v4099, 7
        %v4101 = vsub.s32 %v4098, %v4100
        %v4102 = vrot.slane %v4086, %v4101
        %v4104 = vunpack.c.l.s4 1966171168
        %v4105 = vunpack.c.0.s8 %v4104
        %v4106 = vlaneseq
        %v4107 = vshrl.u32 %v4106, 7
        %v4108 = vsub.s32 %v4105, %v4107
        %v4109 = vrot.slane %v4087, %v4108
        %v4111 = vunpack.c.l.s4 1966171168
        %v4112 = vunpack.c.0.s8 %v4111
        %v4113 = vlaneseq
        %v4114 = vshrl.u32 %v4113, 7
        %v4115 = vsub.s32 %v4112, %v4114
        %v4116 = vrot.slane %v4088, %v4115
        %v4117 = vcombine.high %v4095, %v4095
        %v4118 = vcombine.high %v4102, %v4102
        %v4119 = vcombine.high %v4109, %v4109
        %v4120 = vcombine.high %v4116, %v4116
        %4129 = vst.msk [vmem:[%s262 + $0x3] sm:$0x1] %vm1125, %v4095
        %4130 = vst.msk [vmem:[%s262 + $0xb] sm:$0x1] %vm1125, %v4109
        %4131 = vst.msk [vmem:[%s262 + $0x13] sm:$0x1] %vm1125, %v4117
        %4132 = vst.msk [vmem:[%s262 + $0x1b] sm:$0x1] %vm1125, %v4119
        %4133 = vst.msk [vmem:[%s262 + $0x23] sm:$0x1] %vm1125, %v4102
        %4134 = vst.msk [vmem:[%s262 + $0x2b] sm:$0x1] %vm1125, %v4116
        %4135 = vst.msk [vmem:[%s262 + $0x33] sm:$0x1] %vm1125, %v4118
        %4136 = vst.msk [vmem:[%s262 + $0x3b] sm:$0x1] %vm1125, %v4120
        %v4137 = vld [vmem:[%s267 + $0x4] sm:$0x1]
        %v4138 = vld [vmem:[%s267 + $0x14] sm:$0x1]
        %v4139 = vld [vmem:[%s267 + $0x24] sm:$0x1]
        %v4140 = vld [vmem:[%s267 + $0x34] sm:$0x1]
        %v4141 = vld [vmem:[%s291 + $0x4] sm:$0x1]
        %v4142 = vld [vmem:[%s291 + $0x14] sm:$0x1]
        %v4143 = vld [vmem:[%s291 + $0x24] sm:$0x1]
        %v4144 = vld [vmem:[%s291 + $0x34] sm:$0x1]
        %v4149 = vrot.slane %v4142, 7
        %v4150 = vsel %vm301, %v4149, %v4141
        %v4151 = vrot.slane %v4143, 6
        %v4152 = vsel %vm304, %v4151, %v4150
        %v4153 = vrot.slane %v4144, 5
        %v4154 = vsel %vm307, %v4153, %v4152
        %v4155 = vsel %vm313, %v4154, 0
        %4157 = vmatprep.subr.mxu0 0.0
        %4158 = vmatpush1.msra.mxu0 %v4155
        %4159 = vmatprep.subr.mxu0 0.0
        %4160 = vmatpush1.msra.mxu0 0.0
        %4161 = vmatprep.subr.mxu0 0.0
        %4162 = vmatpush1.msra.mxu0 0.0
        %4163 = vmatprep.subr.mxu0 0.0
        %4164 = vmatpush1.msra.mxu0 0.0
        %4165 = vmatprep.subr.mxu0 0.0
        %4166 = vmatpush1.msra.mxu0 0.0
        %4167 = vmatprep.subr.mxu0 0.0
        %4168 = vmatpush1.msra.mxu0 0.0
        %4169 = vmatprep.subr.mxu0 0.0
        %4170 = vmatpush1.msra.mxu0 0.0
        %4171 = vmatprep.subr.mxu0 0.0
        %4172 = vmatpush1.msra.mxu0 0.0
        %4173 = vmatprep.subr.mxu0 0.0
        %4174 = vmatpush1.msra.mxu0 0.0
        %4175 = vmatprep.subr.mxu0 0.0
        %4176 = vmatpush1.msra.mxu0 0.0
        %4177 = vmatprep.subr.mxu0 0.0
        %4178 = vmatpush1.msra.mxu0 0.0
        %4179 = vmatprep.subr.mxu0 0.0
        %4180 = vmatpush1.msra.mxu0 0.0
        %4181 = vmatprep.subr.mxu0 0.0
        %4182 = vmatpush1.msra.mxu0 0.0
        %4183 = vmatprep.subr.mxu0 0.0
        %4184 = vmatpush1.msra.mxu0 0.0
        %4185 = vmatprep.subr.mxu0 0.0
        %4186 = vmatpush1.msra.mxu0 0.0
        %4187 = vmatprep.subr.mxu0 0.0
        %4188 = vmatpush1.msra.mxu0 0.0
        %4189 = vmatprep.subr.mxu0 0.0
        %4190 = vmatpush1.msra.mxu0 0.0
        %4191 = vmatprep.subr.mxu0 0.0
        %4192 = vmatpush1.msra.mxu0 0.0
        %4193 = vmatprep.subr.mxu0 0.0
        %4194 = vmatpush1.msra.mxu0 0.0
        %4195 = vmatprep.subr.mxu0 0.0
        %4196 = vmatpush1.msra.mxu0 0.0
        %4197 = vmatprep.subr.mxu0 0.0
        %4198 = vmatpush1.msra.mxu0 0.0
        %4199 = vmatprep.subr.mxu0 0.0
        %4200 = vmatpush1.msra.mxu0 0.0
        %4201 = vmatprep.subr.mxu0 0.0
        %4202 = vmatpush1.msra.mxu0 0.0
        %4203 = vmatprep.subr.mxu0 0.0
        %4204 = vmatpush1.msra.mxu0 0.0
        %4205 = vmatprep.subr.mxu0 0.0
        %4206 = vmatpush1.msra.mxu0 0.0
        %4207 = vmatprep.subr.mxu0 0.0
        %4208 = vmatpush1.msra.mxu0 0.0
        %4209 = vmatprep.subr.mxu0 0.0
        %4210 = vmatpush1.msra.mxu0 0.0
        %4211 = vmatprep.subr.mxu0 0.0
        %4212 = vmatpush1.msra.mxu0 0.0
        %4213 = vmatprep.subr.mxu0 0.0
        %4214 = vmatpush1.msra.mxu0 0.0
        %4215 = vmatprep.subr.mxu0 0.0
        %4216 = vmatpush1.msra.mxu0 0.0
        %4217 = vmatprep.subr.mxu0 0.0
        %4218 = vmatpush1.msra.mxu0 0.0
        %4219 = vmatprep.subr.mxu0 0.0
        %4220 = vmatpush1.msra.mxu0 0.0
        %4221 = vmatprep.mubr.f32.mxu0 0.0
        %4222 = vmatmul.mubr.f32.gmra.mrb[0].mxu0 %v311
        %v4223 = vpop.f32.mrb[0].mxu0
        %v4224 = vadd.f32 0.0, %v4223
        %v4225 = vpop.f32.mrb[0].mxu0
        %4226 = vdwg.mxu0
        %v4231 = vrot.slane %v4138, 7
        %v4232 = vsel %vm301, %v4231, %v4137
        %v4233 = vrot.slane %v4139, 6
        %v4234 = vsel %vm304, %v4233, %v4232
        %v4235 = vrot.slane %v4140, 5
        %v4236 = vsel %vm307, %v4235, %v4234
        %v4237 = vsel %vm313, %v4236, 0
        %4239 = vmatprep.subr.mxu0 0.0
        %4240 = vmatpush1.msra.mxu0 %v4237
        %4241 = vmatprep.subr.mxu0 0.0
        %4242 = vmatpush1.msra.mxu0 0.0
        %4243 = vmatprep.subr.mxu0 0.0
        %4244 = vmatpush1.msra.mxu0 0.0
        %4245 = vmatprep.subr.mxu0 0.0
        %4246 = vmatpush1.msra.mxu0 0.0
        %4247 = vmatprep.subr.mxu0 0.0
        %4248 = vmatpush1.msra.mxu0 0.0
        %4249 = vmatprep.subr.mxu0 0.0
        %4250 = vmatpush1.msra.mxu0 0.0
        %4251 = vmatprep.subr.mxu0 0.0
        %4252 = vmatpush1.msra.mxu0 0.0
        %4253 = vmatprep.subr.mxu0 0.0
        %4254 = vmatpush1.msra.mxu0 0.0
        %4255 = vmatprep.subr.mxu0 0.0
        %4256 = vmatpush1.msra.mxu0 0.0
        %4257 = vmatprep.subr.mxu0 0.0
        %4258 = vmatpush1.msra.mxu0 0.0
        %4259 = vmatprep.subr.mxu0 0.0
        %4260 = vmatpush1.msra.mxu0 0.0
        %4261 = vmatprep.subr.mxu0 0.0
        %4262 = vmatpush1.msra.mxu0 0.0
        %4263 = vmatprep.subr.mxu0 0.0
        %4264 = vmatpush1.msra.mxu0 0.0
        %4265 = vmatprep.subr.mxu0 0.0
        %4266 = vmatpush1.msra.mxu0 0.0
        %4267 = vmatprep.subr.mxu0 0.0
        %4268 = vmatpush1.msra.mxu0 0.0
        %4269 = vmatprep.subr.mxu0 0.0
        %4270 = vmatpush1.msra.mxu0 0.0
        %4271 = vmatprep.subr.mxu0 0.0
        %4272 = vmatpush1.msra.mxu0 0.0
        %4273 = vmatprep.subr.mxu0 0.0
        %4274 = vmatpush1.msra.mxu0 0.0
        %4275 = vmatprep.subr.mxu0 0.0
        %4276 = vmatpush1.msra.mxu0 0.0
        %4277 = vmatprep.subr.mxu0 0.0
        %4278 = vmatpush1.msra.mxu0 0.0
        %4279 = vmatprep.subr.mxu0 0.0
        %4280 = vmatpush1.msra.mxu0 0.0
        %4281 = vmatprep.subr.mxu0 0.0
        %4282 = vmatpush1.msra.mxu0 0.0
        %4283 = vmatprep.subr.mxu0 0.0
        %4284 = vmatpush1.msra.mxu0 0.0
        %4285 = vmatprep.subr.mxu0 0.0
        %4286 = vmatpush1.msra.mxu0 0.0
        %4287 = vmatprep.subr.mxu0 0.0
        %4288 = vmatpush1.msra.mxu0 0.0
        %4289 = vmatprep.subr.mxu0 0.0
        %4290 = vmatpush1.msra.mxu0 0.0
        %4291 = vmatprep.subr.mxu0 0.0
        %4292 = vmatpush1.msra.mxu0 0.0
        %4293 = vmatprep.subr.mxu0 0.0
        %4294 = vmatpush1.msra.mxu0 0.0
        %4295 = vmatprep.subr.mxu0 0.0
        %4296 = vmatpush1.msra.mxu0 0.0
        %4297 = vmatprep.subr.mxu0 0.0
        %4298 = vmatpush1.msra.mxu0 0.0
        %4299 = vmatprep.subr.mxu0 0.0
        %4300 = vmatpush1.msra.mxu0 0.0
        %4301 = vmatprep.subr.mxu0 0.0
        %4302 = vmatpush1.msra.mxu0 0.0
        %4303 = vmatprep.mubr.f32.mxu0 0.0
        %4304 = vmatmul.mubr.f32.gmra.mrb[0].mxu0 %v397
        %v4305 = vpop.f32.mrb[0].mxu0
        %v4306 = vadd.f32 %v4224, %v4305
        %v4307 = vpop.f32.mrb[0].mxu0
        %4308 = vdwg.mxu0
        %4309 = vrot.lane.b32.xlu0 %v4236, 127
        %v4310 = vpop.permute.xlu0 %4309
        %v4311 = vsel %vm313, %v4310, 0
        %4313 = vmatprep.subr.mxu0 0.0
        %4314 = vmatpush1.msra.mxu0 %v4311
        %4315 = vmatprep.subr.mxu0 0.0
        %4316 = vmatpush1.msra.mxu0 0.0
        %4317 = vmatprep.subr.mxu0 0.0
        %4318 = vmatpush1.msra.mxu0 0.0
        %4319 = vmatprep.subr.mxu0 0.0
        %4320 = vmatpush1.msra.mxu0 0.0
        %4321 = vmatprep.subr.mxu0 0.0
        %4322 = vmatpush1.msra.mxu0 0.0
        %4323 = vmatprep.subr.mxu0 0.0
        %4324 = vmatpush1.msra.mxu0 0.0
        %4325 = vmatprep.subr.mxu0 0.0
        %4326 = vmatpush1.msra.mxu0 0.0
        %4327 = vmatprep.subr.mxu0 0.0
        %4328 = vmatpush1.msra.mxu0 0.0
        %4329 = vmatprep.subr.mxu0 0.0
        %4330 = vmatpush1.msra.mxu0 0.0
        %4331 = vmatprep.subr.mxu0 0.0
        %4332 = vmatpush1.msra.mxu0 0.0
        %4333 = vmatprep.subr.mxu0 0.0
        %4334 = vmatpush1.msra.mxu0 0.0
        %4335 = vmatprep.subr.mxu0 0.0
        %4336 = vmatpush1.msra.mxu0 0.0
        %4337 = vmatprep.subr.mxu0 0.0
        %4338 = vmatpush1.msra.mxu0 0.0
        %4339 = vmatprep.subr.mxu0 0.0
        %4340 = vmatpush1.msra.mxu0 0.0
        %4341 = vmatprep.subr.mxu0 0.0
        %4342 = vmatpush1.msra.mxu0 0.0
        %4343 = vmatprep.subr.mxu0 0.0
        %4344 = vmatpush1.msra.mxu0 0.0
        %4345 = vmatprep.subr.mxu0 0.0
        %4346 = vmatpush1.msra.mxu0 0.0
        %4347 = vmatprep.subr.mxu0 0.0
        %4348 = vmatpush1.msra.mxu0 0.0
        %4349 = vmatprep.subr.mxu0 0.0
        %4350 = vmatpush1.msra.mxu0 0.0
        %4351 = vmatprep.subr.mxu0 0.0
        %4352 = vmatpush1.msra.mxu0 0.0
        %4353 = vmatprep.subr.mxu0 0.0
        %4354 = vmatpush1.msra.mxu0 0.0
        %4355 = vmatprep.subr.mxu0 0.0
        %4356 = vmatpush1.msra.mxu0 0.0
        %4357 = vmatprep.subr.mxu0 0.0
        %4358 = vmatpush1.msra.mxu0 0.0
        %4359 = vmatprep.subr.mxu0 0.0
        %4360 = vmatpush1.msra.mxu0 0.0
        %4361 = vmatprep.subr.mxu0 0.0
        %4362 = vmatpush1.msra.mxu0 0.0
        %4363 = vmatprep.subr.mxu0 0.0
        %4364 = vmatpush1.msra.mxu0 0.0
        %4365 = vmatprep.subr.mxu0 0.0
        %4366 = vmatpush1.msra.mxu0 0.0
        %4367 = vmatprep.subr.mxu0 0.0
        %4368 = vmatpush1.msra.mxu0 0.0
        %4369 = vmatprep.subr.mxu0 0.0
        %4370 = vmatpush1.msra.mxu0 0.0
        %4371 = vmatprep.subr.mxu0 0.0
        %4372 = vmatpush1.msra.mxu0 0.0
        %4373 = vmatprep.subr.mxu0 0.0
        %4374 = vmatpush1.msra.mxu0 0.0
        %4375 = vmatprep.subr.mxu0 0.0
        %4376 = vmatpush1.msra.mxu0 0.0
        %4377 = vmatprep.mubr.f32.mxu0 0.0
        %4378 = vmatmul.mubr.f32.gmra.mrb[0].mxu0 %v474
        %v4379 = vpop.f32.mrb[0].mxu0
        %v4380 = vadd.f32 0.0, %v4379
        %v4381 = vpop.f32.mrb[0].mxu0
        %4382 = vdwg.mxu0
        %v4383 = vadd.f32 %v4306, %v4380
        %v4384 = vld [vmem:[%s549 + $0x4] sm:$0x1]
        %v4385 = vld [vmem:[%s549 + $0x14] sm:$0x1]
        %v4386 = vld [vmem:[%s549 + $0x24] sm:$0x1]
        %v4387 = vld [vmem:[%s549 + $0x34] sm:$0x1]
        %v4392 = vrot.slane %v4385, 7
        %v4393 = vsel %vm301, %v4392, %v4384
        %v4394 = vrot.slane %v4386, 6
        %v4395 = vsel %vm304, %v4394, %v4393
        %v4396 = vrot.slane %v4387, 5
        %v4397 = vsel %vm307, %v4396, %v4395
        %v4398 = vsel %vm313, %v4397, 0
        %4400 = vmatprep.subr.mxu0 0.0
        %4401 = vmatpush1.msra.mxu0 %v4398
        %4402 = vmatprep.subr.mxu0 0.0
        %4403 = vmatpush1.msra.mxu0 0.0
        %4404 = vmatprep.subr.mxu0 0.0
        %4405 = vmatpush1.msra.mxu0 0.0
        %4406 = vmatprep.subr.mxu0 0.0
        %4407 = vmatpush1.msra.mxu0 0.0
        %4408 = vmatprep.subr.mxu0 0.0
        %4409 = vmatpush1.msra.mxu0 0.0
        %4410 = vmatprep.subr.mxu0 0.0
        %4411 = vmatpush1.msra.mxu0 0.0
        %4412 = vmatprep.subr.mxu0 0.0
        %4413 = vmatpush1.msra.mxu0 0.0
        %4414 = vmatprep.subr.mxu0 0.0
        %4415 = vmatpush1.msra.mxu0 0.0
        %4416 = vmatprep.subr.mxu0 0.0
        %4417 = vmatpush1.msra.mxu0 0.0
        %4418 = vmatprep.subr.mxu0 0.0
        %4419 = vmatpush1.msra.mxu0 0.0
        %4420 = vmatprep.subr.mxu0 0.0
        %4421 = vmatpush1.msra.mxu0 0.0
        %4422 = vmatprep.subr.mxu0 0.0
        %4423 = vmatpush1.msra.mxu0 0.0
        %4424 = vmatprep.subr.mxu0 0.0
        %4425 = vmatpush1.msra.mxu0 0.0
        %4426 = vmatprep.subr.mxu0 0.0
        %4427 = vmatpush1.msra.mxu0 0.0
        %4428 = vmatprep.subr.mxu0 0.0
        %4429 = vmatpush1.msra.mxu0 0.0
        %4430 = vmatprep.subr.mxu0 0.0
        %4431 = vmatpush1.msra.mxu0 0.0
        %4432 = vmatprep.subr.mxu0 0.0
        %4433 = vmatpush1.msra.mxu0 0.0
        %4434 = vmatprep.subr.mxu0 0.0
        %4435 = vmatpush1.msra.mxu0 0.0
        %4436 = vmatprep.subr.mxu0 0.0
        %4437 = vmatpush1.msra.mxu0 0.0
        %4438 = vmatprep.subr.mxu0 0.0
        %4439 = vmatpush1.msra.mxu0 0.0
        %4440 = vmatprep.subr.mxu0 0.0
        %4441 = vmatpush1.msra.mxu0 0.0
        %4442 = vmatprep.subr.mxu0 0.0
        %4443 = vmatpush1.msra.mxu0 0.0
        %4444 = vmatprep.subr.mxu0 0.0
        %4445 = vmatpush1.msra.mxu0 0.0
        %4446 = vmatprep.subr.mxu0 0.0
        %4447 = vmatpush1.msra.mxu0 0.0
        %4448 = vmatprep.subr.mxu0 0.0
        %4449 = vmatpush1.msra.mxu0 0.0
        %4450 = vmatprep.subr.mxu0 0.0
        %4451 = vmatpush1.msra.mxu0 0.0
        %4452 = vmatprep.subr.mxu0 0.0
        %4453 = vmatpush1.msra.mxu0 0.0
        %4454 = vmatprep.subr.mxu0 0.0
        %4455 = vmatpush1.msra.mxu0 0.0
        %4456 = vmatprep.subr.mxu0 0.0
        %4457 = vmatpush1.msra.mxu0 0.0
        %4458 = vmatprep.subr.mxu0 0.0
        %4459 = vmatpush1.msra.mxu0 0.0
        %4460 = vmatprep.subr.mxu0 0.0
        %4461 = vmatpush1.msra.mxu0 0.0
        %4462 = vmatprep.subr.mxu0 0.0
        %4463 = vmatpush1.msra.mxu0 0.0
        %4464 = vmatprep.mubr.f32.mxu0 0.0
        %4465 = vmatmul.mubr.f32.gmra.mrb[0].mxu0 %v565
        %v4466 = vpop.f32.mrb[0].mxu0
        %v4467 = vadd.f32 0.0, %v4466
        %v4468 = vpop.f32.mrb[0].mxu0
        %4469 = vdwg.mxu0
        %v4470 = vadd.f32 %v4383, %v4467
        %v4471 = vld [vmem:[%s640 + $0x4] sm:$0x1]
        %v4472 = vld [vmem:[%s640 + $0x14] sm:$0x1]
        %v4473 = vld [vmem:[%s640 + $0x24] sm:$0x1]
        %v4474 = vld [vmem:[%s640 + $0x34] sm:$0x1]
        %v4479 = vrot.slane %v4472, 7
        %v4480 = vsel %vm301, %v4479, %v4471
        %v4481 = vrot.slane %v4473, 6
        %v4482 = vsel %vm304, %v4481, %v4480
        %v4483 = vrot.slane %v4474, 5
        %v4484 = vsel %vm307, %v4483, %v4482
        %v4485 = vsel %vm313, %v4484, 0
        %4487 = vmatprep.subr.mxu0 0.0
        %4488 = vmatpush1.msra.mxu0 %v4485
        %4489 = vmatprep.subr.mxu0 0.0
        %4490 = vmatpush1.msra.mxu0 0.0
        %4491 = vmatprep.subr.mxu0 0.0
        %4492 = vmatpush1.msra.mxu0 0.0
        %4493 = vmatprep.subr.mxu0 0.0
        %4494 = vmatpush1.msra.mxu0 0.0
        %4495 = vmatprep.subr.mxu0 0.0
        %4496 = vmatpush1.msra.mxu0 0.0
        %4497 = vmatprep.subr.mxu0 0.0
        %4498 = vmatpush1.msra.mxu0 0.0
        %4499 = vmatprep.subr.mxu0 0.0
        %4500 = vmatpush1.msra.mxu0 0.0
        %4501 = vmatprep.subr.mxu0 0.0
        %4502 = vmatpush1.msra.mxu0 0.0
        %4503 = vmatprep.subr.mxu0 0.0
        %4504 = vmatpush1.msra.mxu0 0.0
        %4505 = vmatprep.subr.mxu0 0.0
        %4506 = vmatpush1.msra.mxu0 0.0
        %4507 = vmatprep.subr.mxu0 0.0
        %4508 = vmatpush1.msra.mxu0 0.0
        %4509 = vmatprep.subr.mxu0 0.0
        %4510 = vmatpush1.msra.mxu0 0.0
        %4511 = vmatprep.subr.mxu0 0.0
        %4512 = vmatpush1.msra.mxu0 0.0
        %4513 = vmatprep.subr.mxu0 0.0
        %4514 = vmatpush1.msra.mxu0 0.0
        %4515 = vmatprep.subr.mxu0 0.0
        %4516 = vmatpush1.msra.mxu0 0.0
        %4517 = vmatprep.subr.mxu0 0.0
        %4518 = vmatpush1.msra.mxu0 0.0
        %4519 = vmatprep.subr.mxu0 0.0
        %4520 = vmatpush1.msra.mxu0 0.0
        %4521 = vmatprep.subr.mxu0 0.0
        %4522 = vmatpush1.msra.mxu0 0.0
        %4523 = vmatprep.subr.mxu0 0.0
        %4524 = vmatpush1.msra.mxu0 0.0
        %4525 = vmatprep.subr.mxu0 0.0
        %4526 = vmatpush1.msra.mxu0 0.0
        %4527 = vmatprep.subr.mxu0 0.0
        %4528 = vmatpush1.msra.mxu0 0.0
        %4529 = vmatprep.subr.mxu0 0.0
        %4530 = vmatpush1.msra.mxu0 0.0
        %4531 = vmatprep.subr.mxu0 0.0
        %4532 = vmatpush1.msra.mxu0 0.0
        %4533 = vmatprep.subr.mxu0 0.0
        %4534 = vmatpush1.msra.mxu0 0.0
        %4535 = vmatprep.subr.mxu0 0.0
        %4536 = vmatpush1.msra.mxu0 0.0
        %4537 = vmatprep.subr.mxu0 0.0
        %4538 = vmatpush1.msra.mxu0 0.0
        %4539 = vmatprep.subr.mxu0 0.0
        %4540 = vmatpush1.msra.mxu0 0.0
        %4541 = vmatprep.subr.mxu0 0.0
        %4542 = vmatpush1.msra.mxu0 0.0
        %4543 = vmatprep.subr.mxu0 0.0
        %4544 = vmatpush1.msra.mxu0 0.0
        %4545 = vmatprep.subr.mxu0 0.0
        %4546 = vmatpush1.msra.mxu0 0.0
        %4547 = vmatprep.subr.mxu0 0.0
        %4548 = vmatpush1.msra.mxu0 0.0
        %4549 = vmatprep.subr.mxu0 0.0
        %4550 = vmatpush1.msra.mxu0 0.0
        %4551 = vmatprep.mubr.f32.mxu0 0.0
        %4552 = vmatmul.mubr.f32.gmra.mrb[0].mxu0 %v656
        %v4553 = vpop.f32.mrb[0].mxu0
        %v4554 = vadd.f32 0.0, %v4553
        %v4555 = vpop.f32.mrb[0].mxu0
        %4556 = vdwg.mxu0
        %v4557 = vadd.f32 %v4470, %v4554
        %4558 = vrot.lane.b32.xlu0 %v4397, 127
        %v4559 = vpop.permute.xlu0 %4558
        %v4560 = vsel %vm313, %v4559, 0
        %4562 = vmatprep.subr.mxu0 0.0
        %4563 = vmatpush1.msra.mxu0 %v4560
        %4564 = vmatprep.subr.mxu0 0.0
        %4565 = vmatpush1.msra.mxu0 0.0
        %4566 = vmatprep.subr.mxu0 0.0
        %4567 = vmatpush1.msra.mxu0 0.0
        %4568 = vmatprep.subr.mxu0 0.0
        %4569 = vmatpush1.msra.mxu0 0.0
        %4570 = vmatprep.subr.mxu0 0.0
        %4571 = vmatpush1.msra.mxu0 0.0
        %4572 = vmatprep.subr.mxu0 0.0
        %4573 = vmatpush1.msra.mxu0 0.0
        %4574 = vmatprep.subr.mxu0 0.0
        %4575 = vmatpush1.msra.mxu0 0.0
        %4576 = vmatprep.subr.mxu0 0.0
        %4577 = vmatpush1.msra.mxu0 0.0
        %4578 = vmatprep.subr.mxu0 0.0
        %4579 = vmatpush1.msra.mxu0 0.0
        %4580 = vmatprep.subr.mxu0 0.0
        %4581 = vmatpush1.msra.mxu0 0.0
        %4582 = vmatprep.subr.mxu0 0.0
        %4583 = vmatpush1.msra.mxu0 0.0
        %4584 = vmatprep.subr.mxu0 0.0
        %4585 = vmatpush1.msra.mxu0 0.0
        %4586 = vmatprep.subr.mxu0 0.0
        %4587 = vmatpush1.msra.mxu0 0.0
        %4588 = vmatprep.subr.mxu0 0.0
        %4589 = vmatpush1.msra.mxu0 0.0
        %4590 = vmatprep.subr.mxu0 0.0
        %4591 = vmatpush1.msra.mxu0 0.0
        %4592 = vmatprep.subr.mxu0 0.0
        %4593 = vmatpush1.msra.mxu0 0.0
        %4594 = vmatprep.subr.mxu0 0.0
        %4595 = vmatpush1.msra.mxu0 0.0
        %4596 = vmatprep.subr.mxu0 0.0
        %4597 = vmatpush1.msra.mxu0 0.0
        %4598 = vmatprep.subr.mxu0 0.0
        %4599 = vmatpush1.msra.mxu0 0.0
        %4600 = vmatprep.subr.mxu0 0.0
        %4601 = vmatpush1.msra.mxu0 0.0
        %4602 = vmatprep.subr.mxu0 0.0
        %4603 = vmatpush1.msra.mxu0 0.0
        %4604 = vmatprep.subr.mxu0 0.0
        %4605 = vmatpush1.msra.mxu0 0.0
        %4606 = vmatprep.subr.mxu0 0.0
        %4607 = vmatpush1.msra.mxu0 0.0
        %4608 = vmatprep.subr.mxu0 0.0
        %4609 = vmatpush1.msra.mxu0 0.0
        %4610 = vmatprep.subr.mxu0 0.0
        %4611 = vmatpush1.msra.mxu0 0.0
        %4612 = vmatprep.subr.mxu0 0.0
        %4613 = vmatpush1.msra.mxu0 0.0
        %4614 = vmatprep.subr.mxu0 0.0
        %4615 = vmatpush1.msra.mxu0 0.0
        %4616 = vmatprep.subr.mxu0 0.0
        %4617 = vmatpush1.msra.mxu0 0.0
        %4618 = vmatprep.subr.mxu0 0.0
        %4619 = vmatpush1.msra.mxu0 0.0
        %4620 = vmatprep.subr.mxu0 0.0
        %4621 = vmatpush1.msra.mxu0 0.0
        %4622 = vmatprep.subr.mxu0 0.0
        %4623 = vmatpush1.msra.mxu0 0.0
        %4624 = vmatprep.subr.mxu0 0.0
        %4625 = vmatpush1.msra.mxu0 0.0
        %4626 = vmatprep.mubr.f32.mxu0 0.0
        %4627 = vmatmul.mubr.f32.gmra.mrb[0].mxu0 %v734
        %v4628 = vpop.f32.mrb[0].mxu0
        %v4629 = vadd.f32 0.0, %v4628
        %v4630 = vpop.f32.mrb[0].mxu0
        %4631 = vdwg.mxu0
        %v4632 = vadd.f32 %v4557, %v4629
        %v4633 = vld [vmem:[%s267 + $0x5] sm:$0x1]
        %v4634 = vld [vmem:[%s267 + $0x15] sm:$0x1]
        %v4635 = vld [vmem:[%s267 + $0x25] sm:$0x1]
        %v4636 = vld [vmem:[%s267 + $0x35] sm:$0x1]
        %v4641 = vrot.slane %v4634, 7
        %v4642 = vsel %vm301, %v4641, %v4633
        %v4643 = vrot.slane %v4635, 6
        %v4644 = vsel %vm304, %v4643, %v4642
        %v4645 = vrot.slane %v4636, 5
        %v4646 = vsel %vm307, %v4645, %v4644
        %v4647 = vsel %vm313, %v4646, 0
        %4649 = vmatprep.subr.mxu0 0.0
        %4650 = vmatpush1.msra.mxu0 %v4647
        %4651 = vmatprep.subr.mxu0 0.0
        %4652 = vmatpush1.msra.mxu0 0.0
        %4653 = vmatprep.subr.mxu0 0.0
        %4654 = vmatpush1.msra.mxu0 0.0
        %4655 = vmatprep.subr.mxu0 0.0
        %4656 = vmatpush1.msra.mxu0 0.0
        %4657 = vmatprep.subr.mxu0 0.0
        %4658 = vmatpush1.msra.mxu0 0.0
        %4659 = vmatprep.subr.mxu0 0.0
        %4660 = vmatpush1.msra.mxu0 0.0
        %4661 = vmatprep.subr.mxu0 0.0
        %4662 = vmatpush1.msra.mxu0 0.0
        %4663 = vmatprep.subr.mxu0 0.0
        %4664 = vmatpush1.msra.mxu0 0.0
        %4665 = vmatprep.subr.mxu0 0.0
        %4666 = vmatpush1.msra.mxu0 0.0
        %4667 = vmatprep.subr.mxu0 0.0
        %4668 = vmatpush1.msra.mxu0 0.0
        %4669 = vmatprep.subr.mxu0 0.0
        %4670 = vmatpush1.msra.mxu0 0.0
        %4671 = vmatprep.subr.mxu0 0.0
        %4672 = vmatpush1.msra.mxu0 0.0
        %4673 = vmatprep.subr.mxu0 0.0
        %4674 = vmatpush1.msra.mxu0 0.0
        %4675 = vmatprep.subr.mxu0 0.0
        %4676 = vmatpush1.msra.mxu0 0.0
        %4677 = vmatprep.subr.mxu0 0.0
        %4678 = vmatpush1.msra.mxu0 0.0
        %4679 = vmatprep.subr.mxu0 0.0
        %4680 = vmatpush1.msra.mxu0 0.0
        %4681 = vmatprep.subr.mxu0 0.0
        %4682 = vmatpush1.msra.mxu0 0.0
        %4683 = vmatprep.subr.mxu0 0.0
        %4684 = vmatpush1.msra.mxu0 0.0
        %4685 = vmatprep.subr.mxu0 0.0
        %4686 = vmatpush1.msra.mxu0 0.0
        %4687 = vmatprep.subr.mxu0 0.0
        %4688 = vmatpush1.msra.mxu0 0.0
        %4689 = vmatprep.subr.mxu0 0.0
        %4690 = vmatpush1.msra.mxu0 0.0
        %4691 = vmatprep.subr.mxu0 0.0
        %4692 = vmatpush1.msra.mxu0 0.0
        %4693 = vmatprep.subr.mxu0 0.0
        %4694 = vmatpush1.msra.mxu0 0.0
        %4695 = vmatprep.subr.mxu0 0.0
        %4696 = vmatpush1.msra.mxu0 0.0
        %4697 = vmatprep.subr.mxu0 0.0
        %4698 = vmatpush1.msra.mxu0 0.0
        %4699 = vmatprep.subr.mxu0 0.0
        %4700 = vmatpush1.msra.mxu0 0.0
        %4701 = vmatprep.subr.mxu0 0.0
        %4702 = vmatpush1.msra.mxu0 0.0
        %4703 = vmatprep.subr.mxu0 0.0
        %4704 = vmatpush1.msra.mxu0 0.0
        %4705 = vmatprep.subr.mxu0 0.0
        %4706 = vmatpush1.msra.mxu0 0.0
        %4707 = vmatprep.subr.mxu0 0.0
        %4708 = vmatpush1.msra.mxu0 0.0
        %4709 = vmatprep.subr.mxu0 0.0
        %4710 = vmatpush1.msra.mxu0 0.0
        %4711 = vmatprep.subr.mxu0 0.0
        %4712 = vmatpush1.msra.mxu0 0.0
        %4713 = vmatprep.mubr.f32.mxu0 0.0
        %4714 = vmatmul.mubr.f32.gmra.mrb[0].mxu0 %v824
        %v4715 = vpop.f32.mrb[0].mxu0
        %v4716 = vadd.f32 0.0, %v4715
        %v4717 = vpop.f32.mrb[0].mxu0
        %4718 = vdwg.mxu0
        %v4719 = vadd.f32 %v4632, %v4716
        %v4720 = vld [vmem:[%s291 + $0x5] sm:$0x1]
        %v4721 = vld [vmem:[%s291 + $0x15] sm:$0x1]
        %v4722 = vld [vmem:[%s291 + $0x25] sm:$0x1]
        %v4723 = vld [vmem:[%s291 + $0x35] sm:$0x1]
        %v4728 = vrot.slane %v4721, 7
        %v4729 = vsel %vm301, %v4728, %v4720
        %v4730 = vrot.slane %v4722, 6
        %v4731 = vsel %vm304, %v4730, %v4729
        %v4732 = vrot.slane %v4723, 5
        %v4733 = vsel %vm307, %v4732, %v4731
        %v4734 = vsel %vm313, %v4733, 0
        %4736 = vmatprep.subr.mxu0 0.0
        %4737 = vmatpush1.msra.mxu0 %v4734
        %4738 = vmatprep.subr.mxu0 0.0
        %4739 = vmatpush1.msra.mxu0 0.0
        %4740 = vmatprep.subr.mxu0 0.0
        %4741 = vmatpush1.msra.mxu0 0.0
        %4742 = vmatprep.subr.mxu0 0.0
        %4743 = vmatpush1.msra.mxu0 0.0
        %4744 = vmatprep.subr.mxu0 0.0
        %4745 = vmatpush1.msra.mxu0 0.0
        %4746 = vmatprep.subr.mxu0 0.0
        %4747 = vmatpush1.msra.mxu0 0.0
        %4748 = vmatprep.subr.mxu0 0.0
        %4749 = vmatpush1.msra.mxu0 0.0
        %4750 = vmatprep.subr.mxu0 0.0
        %4751 = vmatpush1.msra.mxu0 0.0
        %4752 = vmatprep.subr.mxu0 0.0
        %4753 = vmatpush1.msra.mxu0 0.0
        %4754 = vmatprep.subr.mxu0 0.0
        %4755 = vmatpush1.msra.mxu0 0.0
        %4756 = vmatprep.subr.mxu0 0.0
        %4757 = vmatpush1.msra.mxu0 0.0
        %4758 = vmatprep.subr.mxu0 0.0
        %4759 = vmatpush1.msra.mxu0 0.0
        %4760 = vmatprep.subr.mxu0 0.0
        %4761 = vmatpush1.msra.mxu0 0.0
        %4762 = vmatprep.subr.mxu0 0.0
        %4763 = vmatpush1.msra.mxu0 0.0
        %4764 = vmatprep.subr.mxu0 0.0
        %4765 = vmatpush1.msra.mxu0 0.0
        %4766 = vmatprep.subr.mxu0 0.0
        %4767 = vmatpush1.msra.mxu0 0.0
        %4768 = vmatprep.subr.mxu0 0.0
        %4769 = vmatpush1.msra.mxu0 0.0
        %4770 = vmatprep.subr.mxu0 0.0
        %4771 = vmatpush1.msra.mxu0 0.0
        %4772 = vmatprep.subr.mxu0 0.0
        %4773 = vmatpush1.msra.mxu0 0.0
        %4774 = vmatprep.subr.mxu0 0.0
        %4775 = vmatpush1.msra.mxu0 0.0
        %4776 = vmatprep.subr.mxu0 0.0
        %4777 = vmatpush1.msra.mxu0 0.0
        %4778 = vmatprep.subr.mxu0 0.0
        %4779 = vmatpush1.msra.mxu0 0.0
        %4780 = vmatprep.subr.mxu0 0.0
        %4781 = vmatpush1.msra.mxu0 0.0
        %4782 = vmatprep.subr.mxu0 0.0
        %4783 = vmatpush1.msra.mxu0 0.0
        %4784 = vmatprep.subr.mxu0 0.0
        %4785 = vmatpush1.msra.mxu0 0.0
        %4786 = vmatprep.subr.mxu0 0.0
        %4787 = vmatpush1.msra.mxu0 0.0
        %4788 = vmatprep.subr.mxu0 0.0
        %4789 = vmatpush1.msra.mxu0 0.0
        %4790 = vmatprep.subr.mxu0 0.0
        %4791 = vmatpush1.msra.mxu0 0.0
        %4792 = vmatprep.subr.mxu0 0.0
        %4793 = vmatpush1.msra.mxu0 0.0
        %4794 = vmatprep.subr.mxu0 0.0
        %4795 = vmatpush1.msra.mxu0 0.0
        %4796 = vmatprep.subr.mxu0 0.0
        %4797 = vmatpush1.msra.mxu0 0.0
        %4798 = vmatprep.subr.mxu0 0.0
        %4799 = vmatpush1.msra.mxu0 0.0
        %4800 = vmatprep.mubr.f32.mxu0 0.0
        %4801 = vmatmul.mubr.f32.gmra.mrb[0].mxu0 %v914
        %v4802 = vpop.f32.mrb[0].mxu0
        %v4803 = vadd.f32 0.0, %v4802
        %v4804 = vpop.f32.mrb[0].mxu0
        %4805 = vdwg.mxu0
        %v4806 = vadd.f32 %v4719, %v4803
        %4807 = vrot.lane.b32.xlu0 %v4646, 127
        %v4808 = vpop.permute.xlu0 %4807
        %v4809 = vsel %vm313, %v4808, 0
        %4811 = vmatprep.subr.mxu0 0.0
        %4812 = vmatpush1.msra.mxu0 %v4809
        %4813 = vmatprep.subr.mxu0 0.0
        %4814 = vmatpush1.msra.mxu0 0.0
        %4815 = vmatprep.subr.mxu0 0.0
        %4816 = vmatpush1.msra.mxu0 0.0
        %4817 = vmatprep.subr.mxu0 0.0
        %4818 = vmatpush1.msra.mxu0 0.0
        %4819 = vmatprep.subr.mxu0 0.0
        %4820 = vmatpush1.msra.mxu0 0.0
        %4821 = vmatprep.subr.mxu0 0.0
        %4822 = vmatpush1.msra.mxu0 0.0
        %4823 = vmatprep.subr.mxu0 0.0
        %4824 = vmatpush1.msra.mxu0 0.0
        %4825 = vmatprep.subr.mxu0 0.0
        %4826 = vmatpush1.msra.mxu0 0.0
        %4827 = vmatprep.subr.mxu0 0.0
        %4828 = vmatpush1.msra.mxu0 0.0
        %4829 = vmatprep.subr.mxu0 0.0
        %4830 = vmatpush1.msra.mxu0 0.0
        %4831 = vmatprep.subr.mxu0 0.0
        %4832 = vmatpush1.msra.mxu0 0.0
        %4833 = vmatprep.subr.mxu0 0.0
        %4834 = vmatpush1.msra.mxu0 0.0
        %4835 = vmatprep.subr.mxu0 0.0
        %4836 = vmatpush1.msra.mxu0 0.0
        %4837 = vmatprep.subr.mxu0 0.0
        %4838 = vmatpush1.msra.mxu0 0.0
        %4839 = vmatprep.subr.mxu0 0.0
        %4840 = vmatpush1.msra.mxu0 0.0
        %4841 = vmatprep.subr.mxu0 0.0
        %4842 = vmatpush1.msra.mxu0 0.0
        %4843 = vmatprep.subr.mxu0 0.0
        %4844 = vmatpush1.msra.mxu0 0.0
        %4845 = vmatprep.subr.mxu0 0.0
        %4846 = vmatpush1.msra.mxu0 0.0
        %4847 = vmatprep.subr.mxu0 0.0
        %4848 = vmatpush1.msra.mxu0 0.0
        %4849 = vmatprep.subr.mxu0 0.0
        %4850 = vmatpush1.msra.mxu0 0.0
        %4851 = vmatprep.subr.mxu0 0.0
        %4852 = vmatpush1.msra.mxu0 0.0
        %4853 = vmatprep.subr.mxu0 0.0
        %4854 = vmatpush1.msra.mxu0 0.0
        %4855 = vmatprep.subr.mxu0 0.0
        %4856 = vmatpush1.msra.mxu0 0.0
        %4857 = vmatprep.subr.mxu0 0.0
        %4858 = vmatpush1.msra.mxu0 0.0
        %4859 = vmatprep.subr.mxu0 0.0
        %4860 = vmatpush1.msra.mxu0 0.0
        %4861 = vmatprep.subr.mxu0 0.0
        %4862 = vmatpush1.msra.mxu0 0.0
        %4863 = vmatprep.subr.mxu0 0.0
        %4864 = vmatpush1.msra.mxu0 0.0
        %4865 = vmatprep.subr.mxu0 0.0
        %4866 = vmatpush1.msra.mxu0 0.0
        %4867 = vmatprep.subr.mxu0 0.0
        %4868 = vmatpush1.msra.mxu0 0.0
        %4869 = vmatprep.subr.mxu0 0.0
        %4870 = vmatpush1.msra.mxu0 0.0
        %4871 = vmatprep.subr.mxu0 0.0
        %4872 = vmatpush1.msra.mxu0 0.0
        %4873 = vmatprep.subr.mxu0 0.0
        %4874 = vmatpush1.msra.mxu0 0.0
        %4875 = vmatprep.mubr.f32.mxu0 0.0
        %4876 = vmatmul.mubr.f32.gmra.mrb[0].mxu0 %v992
        %v4877 = vpop.f32.mrb[0].mxu0
        %v4878 = vadd.f32 0.0, %v4877
        %v4879 = vpop.f32.mrb[0].mxu0
        %4880 = vdwg.mxu0
        %v4881 = vadd.f32 %v4806, %v4878
        %v4883 = vcombine.high %v4881, %v4881
        %v4885 = vunpack.c.l.s4 1966171168
        %v4886 = vunpack.c.0.s8 %v4885
        %v4887 = vlaneseq
        %v4888 = vshrl.u32 %v4887, 7
        %v4889 = vsub.s32 %v4886, %v4888
        %v4890 = vrot.slane %v4881, %v4889
        %v4892 = vunpack.c.l.s4 1966171168
        %v4893 = vunpack.c.0.s8 %v4892
        %v4894 = vlaneseq
        %v4895 = vshrl.u32 %v4894, 7
        %v4896 = vsub.s32 %v4893, %v4895
        %v4897 = vrot.slane %v4883, %v4896
        %v4898 = vcombine.high %v4890, %v4890
        %v4899 = vcombine.high %v4897, %v4897
        %v4901 = vunpack.c.l.s4 1966171168
        %v4902 = vunpack.c.0.s8 %v4901
        %v4903 = vlaneseq
        %v4904 = vshrl.u32 %v4903, 7
        %v4905 = vsub.s32 %v4902, %v4904
        %v4906 = vrot.slane %v4890, %v4905
        %v4908 = vunpack.c.l.s4 1966171168
        %v4909 = vunpack.c.0.s8 %v4908
        %v4910 = vlaneseq
        %v4911 = vshrl.u32 %v4910, 7
        %v4912 = vsub.s32 %v4909, %v4911
        %v4913 = vrot.slane %v4897, %v4912
        %v4915 = vunpack.c.l.s4 1966171168
        %v4916 = vunpack.c.0.s8 %v4915
        %v4917 = vlaneseq
        %v4918 = vshrl.u32 %v4917, 7
        %v4919 = vsub.s32 %v4916, %v4918
        %v4920 = vrot.slane %v4898, %v4919
        %v4922 = vunpack.c.l.s4 1966171168
        %v4923 = vunpack.c.0.s8 %v4922
        %v4924 = vlaneseq
        %v4925 = vshrl.u32 %v4924, 7
        %v4926 = vsub.s32 %v4923, %v4925
        %v4927 = vrot.slane %v4899, %v4926
        %v4928 = vcombine.high %v4906, %v4906
        %v4929 = vcombine.high %v4913, %v4913
        %v4930 = vcombine.high %v4920, %v4920
        %v4931 = vcombine.high %v4927, %v4927
        %4940 = vst.msk [vmem:[%s248 + $0x4] sm:$0x1] %vm1125, %v4906
        %4941 = vst.msk [vmem:[%s248 + $0xc] sm:$0x1] %vm1125, %v4920
        %4942 = vst.msk [vmem:[%s248 + $0x14] sm:$0x1] %vm1125, %v4928
        %4943 = vst.msk [vmem:[%s248 + $0x1c] sm:$0x1] %vm1125, %v4930
        %4944 = vst.msk [vmem:[%s248 + $0x24] sm:$0x1] %vm1125, %v4913
        %4945 = vst.msk [vmem:[%s248 + $0x2c] sm:$0x1] %vm1125, %v4927
        %4946 = vst.msk [vmem:[%s248 + $0x34] sm:$0x1] %vm1125, %v4929
        %4947 = vst.msk [vmem:[%s248 + $0x3c] sm:$0x1] %vm1125, %v4931
        %v4948 = vmul.f32 %v4881, %v1137
        %v4949 = vadd.f32 %v4948, %v1143
        %v4951 = vcombine.high %v4949, %v4949
        %v4953 = vunpack.c.l.s4 1966171168
        %v4954 = vunpack.c.0.s8 %v4953
        %v4955 = vlaneseq
        %v4956 = vshrl.u32 %v4955, 7
        %v4957 = vsub.s32 %v4954, %v4956
        %v4958 = vrot.slane %v4949, %v4957
        %v4960 = vunpack.c.l.s4 1966171168
        %v4961 = vunpack.c.0.s8 %v4960
        %v4962 = vlaneseq
        %v4963 = vshrl.u32 %v4962, 7
        %v4964 = vsub.s32 %v4961, %v4963
        %v4965 = vrot.slane %v4951, %v4964
        %v4966 = vcombine.high %v4958, %v4958
        %v4967 = vcombine.high %v4965, %v4965
        %v4969 = vunpack.c.l.s4 1966171168
        %v4970 = vunpack.c.0.s8 %v4969
        %v4971 = vlaneseq
        %v4972 = vshrl.u32 %v4971, 7
        %v4973 = vsub.s32 %v4970, %v4972
        %v4974 = vrot.slane %v4958, %v4973
        %v4976 = vunpack.c.l.s4 1966171168
        %v4977 = vunpack.c.0.s8 %v4976
        %v4978 = vlaneseq
        %v4979 = vshrl.u32 %v4978, 7
        %v4980 = vsub.s32 %v4977, %v4979
        %v4981 = vrot.slane %v4965, %v4980
        %v4983 = vunpack.c.l.s4 1966171168
        %v4984 = vunpack.c.0.s8 %v4983
        %v4985 = vlaneseq
        %v4986 = vshrl.u32 %v4985, 7
        %v4987 = vsub.s32 %v4984, %v4986
        %v4988 = vrot.slane %v4966, %v4987
        %v4990 = vunpack.c.l.s4 1966171168
        %v4991 = vunpack.c.0.s8 %v4990
        %v4992 = vlaneseq
        %v4993 = vshrl.u32 %v4992, 7
        %v4994 = vsub.s32 %v4991, %v4993
        %v4995 = vrot.slane %v4967, %v4994
        %v4996 = vcombine.high %v4974, %v4974
        %v4997 = vcombine.high %v4981, %v4981
        %v4998 = vcombine.high %v4988, %v4988
        %v4999 = vcombine.high %v4995, %v4995
        %5008 = vst.msk [vmem:[%s255 + $0x4] sm:$0x1] %vm1125, %v4974
        %5009 = vst.msk [vmem:[%s255 + $0xc] sm:$0x1] %vm1125, %v4988
        %5010 = vst.msk [vmem:[%s255 + $0x14] sm:$0x1] %vm1125, %v4996
        %5011 = vst.msk [vmem:[%s255 + $0x1c] sm:$0x1] %vm1125, %v4998
        %5012 = vst.msk [vmem:[%s255 + $0x24] sm:$0x1] %vm1125, %v4981
        %5013 = vst.msk [vmem:[%s255 + $0x2c] sm:$0x1] %vm1125, %v4995
        %5014 = vst.msk [vmem:[%s255 + $0x34] sm:$0x1] %vm1125, %v4997
        %5015 = vst.msk [vmem:[%s255 + $0x3c] sm:$0x1] %vm1125, %v4999
        %v5016 = vsub.f32 0.0, %v4949
        %v5017 = vmul.f32 %v5016, 1.442695
        %v5018 = vpow.pop %v5017
        %v5019 = vadd.f32 %v5018, 1.0
        %v5020 = vrcp.pop %v5019
        %v5021 = vmul.f32 %v4949, %v5020
        %v5023 = vcombine.high %v5021, %v5021
        %v5025 = vunpack.c.l.s4 1966171168
        %v5026 = vunpack.c.0.s8 %v5025
        %v5027 = vlaneseq
        %v5028 = vshrl.u32 %v5027, 7
        %v5029 = vsub.s32 %v5026, %v5028
        %v5030 = vrot.slane %v5021, %v5029
        %v5032 = vunpack.c.l.s4 1966171168
        %v5033 = vunpack.c.0.s8 %v5032
        %v5034 = vlaneseq
        %v5035 = vshrl.u32 %v5034, 7
        %v5036 = vsub.s32 %v5033, %v5035
        %v5037 = vrot.slane %v5023, %v5036
        %v5038 = vcombine.high %v5030, %v5030
        %v5039 = vcombine.high %v5037, %v5037
        %v5041 = vunpack.c.l.s4 1966171168
        %v5042 = vunpack.c.0.s8 %v5041
        %v5043 = vlaneseq
        %v5044 = vshrl.u32 %v5043, 7
        %v5045 = vsub.s32 %v5042, %v5044
        %v5046 = vrot.slane %v5030, %v5045
        %v5048 = vunpack.c.l.s4 1966171168
        %v5049 = vunpack.c.0.s8 %v5048
        %v5050 = vlaneseq
        %v5051 = vshrl.u32 %v5050, 7
        %v5052 = vsub.s32 %v5049, %v5051
        %v5053 = vrot.slane %v5037, %v5052
        %v5055 = vunpack.c.l.s4 1966171168
        %v5056 = vunpack.c.0.s8 %v5055
        %v5057 = vlaneseq
        %v5058 = vshrl.u32 %v5057, 7
        %v5059 = vsub.s32 %v5056, %v5058
        %v5060 = vrot.slane %v5038, %v5059
        %v5062 = vunpack.c.l.s4 1966171168
        %v5063 = vunpack.c.0.s8 %v5062
        %v5064 = vlaneseq
        %v5065 = vshrl.u32 %v5064, 7
        %v5066 = vsub.s32 %v5063, %v5065
        %v5067 = vrot.slane %v5039, %v5066
        %v5068 = vcombine.high %v5046, %v5046
        %v5069 = vcombine.high %v5053, %v5053
        %v5070 = vcombine.high %v5060, %v5060
        %v5071 = vcombine.high %v5067, %v5067
        %5080 = vst.msk [vmem:[%s262 + $0x4] sm:$0x1] %vm1125, %v5046
        %5081 = vst.msk [vmem:[%s262 + $0xc] sm:$0x1] %vm1125, %v5060
        %5082 = vst.msk [vmem:[%s262 + $0x14] sm:$0x1] %vm1125, %v5068
        %5083 = vst.msk [vmem:[%s262 + $0x1c] sm:$0x1] %vm1125, %v5070
        %5084 = vst.msk [vmem:[%s262 + $0x24] sm:$0x1] %vm1125, %v5053
        %5085 = vst.msk [vmem:[%s262 + $0x2c] sm:$0x1] %vm1125, %v5067
        %5086 = vst.msk [vmem:[%s262 + $0x34] sm:$0x1] %vm1125, %v5069
        %5087 = vst.msk [vmem:[%s262 + $0x3c] sm:$0x1] %vm1125, %v5071
        %v5088 = vld [vmem:[%s267 + $0x5] sm:$0x1]
        %v5089 = vld [vmem:[%s267 + $0x15] sm:$0x1]
        %v5090 = vld [vmem:[%s267 + $0x25] sm:$0x1]
        %v5091 = vld [vmem:[%s267 + $0x35] sm:$0x1]
        %v5092 = vld [vmem:[%s291 + $0x5] sm:$0x1]
        %v5093 = vld [vmem:[%s291 + $0x15] sm:$0x1]
        %v5094 = vld [vmem:[%s291 + $0x25] sm:$0x1]
        %v5095 = vld [vmem:[%s291 + $0x35] sm:$0x1]
        %v5100 = vrot.slane %v5093, 7
        %v5101 = vsel %vm301, %v5100, %v5092
        %v5102 = vrot.slane %v5094, 6
        %v5103 = vsel %vm304, %v5102, %v5101
        %v5104 = vrot.slane %v5095, 5
        %v5105 = vsel %vm307, %v5104, %v5103
        %v5106 = vsel %vm313, %v5105, 0
        %5108 = vmatprep.subr.mxu0 0.0
        %5109 = vmatpush1.msra.mxu0 %v5106
        %5110 = vmatprep.subr.mxu0 0.0
        %5111 = vmatpush1.msra.mxu0 0.0
        %5112 = vmatprep.subr.mxu0 0.0
        %5113 = vmatpush1.msra.mxu0 0.0
        %5114 = vmatprep.subr.mxu0 0.0
        %5115 = vmatpush1.msra.mxu0 0.0
        %5116 = vmatprep.subr.mxu0 0.0
        %5117 = vmatpush1.msra.mxu0 0.0
        %5118 = vmatprep.subr.mxu0 0.0
        %5119 = vmatpush1.msra.mxu0 0.0
        %5120 = vmatprep.subr.mxu0 0.0
        %5121 = vmatpush1.msra.mxu0 0.0
        %5122 = vmatprep.subr.mxu0 0.0
        %5123 = vmatpush1.msra.mxu0 0.0
        %5124 = vmatprep.subr.mxu0 0.0
        %5125 = vmatpush1.msra.mxu0 0.0
        %5126 = vmatprep.subr.mxu0 0.0
        %5127 = vmatpush1.msra.mxu0 0.0
        %5128 = vmatprep.subr.mxu0 0.0
        %5129 = vmatpush1.msra.mxu0 0.0
        %5130 = vmatprep.subr.mxu0 0.0
        %5131 = vmatpush1.msra.mxu0 0.0
        %5132 = vmatprep.subr.mxu0 0.0
        %5133 = vmatpush1.msra.mxu0 0.0
        %5134 = vmatprep.subr.mxu0 0.0
        %5135 = vmatpush1.msra.mxu0 0.0
        %5136 = vmatprep.subr.mxu0 0.0
        %5137 = vmatpush1.msra.mxu0 0.0
        %5138 = vmatprep.subr.mxu0 0.0
        %5139 = vmatpush1.msra.mxu0 0.0
        %5140 = vmatprep.subr.mxu0 0.0
        %5141 = vmatpush1.msra.mxu0 0.0
        %5142 = vmatprep.subr.mxu0 0.0
        %5143 = vmatpush1.msra.mxu0 0.0
        %5144 = vmatprep.subr.mxu0 0.0
        %5145 = vmatpush1.msra.mxu0 0.0
        %5146 = vmatprep.subr.mxu0 0.0
        %5147 = vmatpush1.msra.mxu0 0.0
        %5148 = vmatprep.subr.mxu0 0.0
        %5149 = vmatpush1.msra.mxu0 0.0
        %5150 = vmatprep.subr.mxu0 0.0
        %5151 = vmatpush1.msra.mxu0 0.0
        %5152 = vmatprep.subr.mxu0 0.0
        %5153 = vmatpush1.msra.mxu0 0.0
        %5154 = vmatprep.subr.mxu0 0.0
        %5155 = vmatpush1.msra.mxu0 0.0
        %5156 = vmatprep.subr.mxu0 0.0
        %5157 = vmatpush1.msra.mxu0 0.0
        %5158 = vmatprep.subr.mxu0 0.0
        %5159 = vmatpush1.msra.mxu0 0.0
        %5160 = vmatprep.subr.mxu0 0.0
        %5161 = vmatpush1.msra.mxu0 0.0
        %5162 = vmatprep.subr.mxu0 0.0
        %5163 = vmatpush1.msra.mxu0 0.0
        %5164 = vmatprep.subr.mxu0 0.0
        %5165 = vmatpush1.msra.mxu0 0.0
        %5166 = vmatprep.subr.mxu0 0.0
        %5167 = vmatpush1.msra.mxu0 0.0
        %5168 = vmatprep.subr.mxu0 0.0
        %5169 = vmatpush1.msra.mxu0 0.0
        %5170 = vmatprep.subr.mxu0 0.0
        %5171 = vmatpush1.msra.mxu0 0.0
        %5172 = vmatprep.mubr.f32.mxu0 0.0
        %5173 = vmatmul.mubr.f32.gmra.mrb[0].mxu0 %v311
        %v5174 = vpop.f32.mrb[0].mxu0
        %v5175 = vadd.f32 0.0, %v5174
        %v5176 = vpop.f32.mrb[0].mxu0
        %5177 = vdwg.mxu0
        %v5182 = vrot.slane %v5089, 7
        %v5183 = vsel %vm301, %v5182, %v5088
        %v5184 = vrot.slane %v5090, 6
        %v5185 = vsel %vm304, %v5184, %v5183
        %v5186 = vrot.slane %v5091, 5
        %v5187 = vsel %vm307, %v5186, %v5185
        %v5188 = vsel %vm313, %v5187, 0
        %5190 = vmatprep.subr.mxu0 0.0
        %5191 = vmatpush1.msra.mxu0 %v5188
        %5192 = vmatprep.subr.mxu0 0.0
        %5193 = vmatpush1.msra.mxu0 0.0
        %5194 = vmatprep.subr.mxu0 0.0
        %5195 = vmatpush1.msra.mxu0 0.0
        %5196 = vmatprep.subr.mxu0 0.0
        %5197 = vmatpush1.msra.mxu0 0.0
        %5198 = vmatprep.subr.mxu0 0.0
        %5199 = vmatpush1.msra.mxu0 0.0
        %5200 = vmatprep.subr.mxu0 0.0
        %5201 = vmatpush1.msra.mxu0 0.0
        %5202 = vmatprep.subr.mxu0 0.0
        %5203 = vmatpush1.msra.mxu0 0.0
        %5204 = vmatprep.subr.mxu0 0.0
        %5205 = vmatpush1.msra.mxu0 0.0
        %5206 = vmatprep.subr.mxu0 0.0
        %5207 = vmatpush1.msra.mxu0 0.0
        %5208 = vmatprep.subr.mxu0 0.0
        %5209 = vmatpush1.msra.mxu0 0.0
        %5210 = vmatprep.subr.mxu0 0.0
        %5211 = vmatpush1.msra.mxu0 0.0
        %5212 = vmatprep.subr.mxu0 0.0
        %5213 = vmatpush1.msra.mxu0 0.0
        %5214 = vmatprep.subr.mxu0 0.0
        %5215 = vmatpush1.msra.mxu0 0.0
        %5216 = vmatprep.subr.mxu0 0.0
        %5217 = vmatpush1.msra.mxu0 0.0
        %5218 = vmatprep.subr.mxu0 0.0
        %5219 = vmatpush1.msra.mxu0 0.0
        %5220 = vmatprep.subr.mxu0 0.0
        %5221 = vmatpush1.msra.mxu0 0.0
        %5222 = vmatprep.subr.mxu0 0.0
        %5223 = vmatpush1.msra.mxu0 0.0
        %5224 = vmatprep.subr.mxu0 0.0
        %5225 = vmatpush1.msra.mxu0 0.0
        %5226 = vmatprep.subr.mxu0 0.0
        %5227 = vmatpush1.msra.mxu0 0.0
        %5228 = vmatprep.subr.mxu0 0.0
        %5229 = vmatpush1.msra.mxu0 0.0
        %5230 = vmatprep.subr.mxu0 0.0
        %5231 = vmatpush1.msra.mxu0 0.0
        %5232 = vmatprep.subr.mxu0 0.0
        %5233 = vmatpush1.msra.mxu0 0.0
        %5234 = vmatprep.subr.mxu0 0.0
        %5235 = vmatpush1.msra.mxu0 0.0
        %5236 = vmatprep.subr.mxu0 0.0
        %5237 = vmatpush1.msra.mxu0 0.0
        %5238 = vmatprep.subr.mxu0 0.0
        %5239 = vmatpush1.msra.mxu0 0.0
        %5240 = vmatprep.subr.mxu0 0.0
        %5241 = vmatpush1.msra.mxu0 0.0
        %5242 = vmatprep.subr.mxu0 0.0
        %5243 = vmatpush1.msra.mxu0 0.0
        %5244 = vmatprep.subr.mxu0 0.0
        %5245 = vmatpush1.msra.mxu0 0.0
        %5246 = vmatprep.subr.mxu0 0.0
        %5247 = vmatpush1.msra.mxu0 0.0
        %5248 = vmatprep.subr.mxu0 0.0
        %5249 = vmatpush1.msra.mxu0 0.0
        %5250 = vmatprep.subr.mxu0 0.0
        %5251 = vmatpush1.msra.mxu0 0.0
        %5252 = vmatprep.subr.mxu0 0.0
        %5253 = vmatpush1.msra.mxu0 0.0
        %5254 = vmatprep.mubr.f32.mxu0 0.0
        %5255 = vmatmul.mubr.f32.gmra.mrb[0].mxu0 %v397
        %v5256 = vpop.f32.mrb[0].mxu0
        %v5257 = vadd.f32 %v5175, %v5256
        %v5258 = vpop.f32.mrb[0].mxu0
        %5259 = vdwg.mxu0
        %5260 = vrot.lane.b32.xlu0 %v5187, 127
        %v5261 = vpop.permute.xlu0 %5260
        %v5262 = vsel %vm313, %v5261, 0
        %5264 = vmatprep.subr.mxu0 0.0
        %5265 = vmatpush1.msra.mxu0 %v5262
        %5266 = vmatprep.subr.mxu0 0.0
        %5267 = vmatpush1.msra.mxu0 0.0
        %5268 = vmatprep.subr.mxu0 0.0
        %5269 = vmatpush1.msra.mxu0 0.0
        %5270 = vmatprep.subr.mxu0 0.0
        %5271 = vmatpush1.msra.mxu0 0.0
        %5272 = vmatprep.subr.mxu0 0.0
        %5273 = vmatpush1.msra.mxu0 0.0
        %5274 = vmatprep.subr.mxu0 0.0
        %5275 = vmatpush1.msra.mxu0 0.0
        %5276 = vmatprep.subr.mxu0 0.0
        %5277 = vmatpush1.msra.mxu0 0.0
        %5278 = vmatprep.subr.mxu0 0.0
        %5279 = vmatpush1.msra.mxu0 0.0
        %5280 = vmatprep.subr.mxu0 0.0
        %5281 = vmatpush1.msra.mxu0 0.0
        %5282 = vmatprep.subr.mxu0 0.0
        %5283 = vmatpush1.msra.mxu0 0.0
        %5284 = vmatprep.subr.mxu0 0.0
        %5285 = vmatpush1.msra.mxu0 0.0
        %5286 = vmatprep.subr.mxu0 0.0
        %5287 = vmatpush1.msra.mxu0 0.0
        %5288 = vmatprep.subr.mxu0 0.0
        %5289 = vmatpush1.msra.mxu0 0.0
        %5290 = vmatprep.subr.mxu0 0.0
        %5291 = vmatpush1.msra.mxu0 0.0
        %5292 = vmatprep.subr.mxu0 0.0
        %5293 = vmatpush1.msra.mxu0 0.0
        %5294 = vmatprep.subr.mxu0 0.0
        %5295 = vmatpush1.msra.mxu0 0.0
        %5296 = vmatprep.subr.mxu0 0.0
        %5297 = vmatpush1.msra.mxu0 0.0
        %5298 = vmatprep.subr.mxu0 0.0
        %5299 = vmatpush1.msra.mxu0 0.0
        %5300 = vmatprep.subr.mxu0 0.0
        %5301 = vmatpush1.msra.mxu0 0.0
        %5302 = vmatprep.subr.mxu0 0.0
        %5303 = vmatpush1.msra.mxu0 0.0
        %5304 = vmatprep.subr.mxu0 0.0
        %5305 = vmatpush1.msra.mxu0 0.0
        %5306 = vmatprep.subr.mxu0 0.0
        %5307 = vmatpush1.msra.mxu0 0.0
        %5308 = vmatprep.subr.mxu0 0.0
        %5309 = vmatpush1.msra.mxu0 0.0
        %5310 = vmatprep.subr.mxu0 0.0
        %5311 = vmatpush1.msra.mxu0 0.0
        %5312 = vmatprep.subr.mxu0 0.0
        %5313 = vmatpush1.msra.mxu0 0.0
        %5314 = vmatprep.subr.mxu0 0.0
        %5315 = vmatpush1.msra.mxu0 0.0
        %5316 = vmatprep.subr.mxu0 0.0
        %5317 = vmatpush1.msra.mxu0 0.0
        %5318 = vmatprep.subr.mxu0 0.0
        %5319 = vmatpush1.msra.mxu0 0.0
        %5320 = vmatprep.subr.mxu0 0.0
        %5321 = vmatpush1.msra.mxu0 0.0
        %5322 = vmatprep.subr.mxu0 0.0
        %5323 = vmatpush1.msra.mxu0 0.0
        %5324 = vmatprep.subr.mxu0 0.0
        %5325 = vmatpush1.msra.mxu0 0.0
        %5326 = vmatprep.subr.mxu0 0.0
        %5327 = vmatpush1.msra.mxu0 0.0
        %5328 = vmatprep.mubr.f32.mxu0 0.0
        %5329 = vmatmul.mubr.f32.gmra.mrb[0].mxu0 %v474
        %v5330 = vpop.f32.mrb[0].mxu0
        %v5331 = vadd.f32 0.0, %v5330
        %v5332 = vpop.f32.mrb[0].mxu0
        %5333 = vdwg.mxu0
        %v5334 = vadd.f32 %v5257, %v5331
        %v5335 = vld [vmem:[%s549 + $0x5] sm:$0x1]
        %v5336 = vld [vmem:[%s549 + $0x15] sm:$0x1]
        %v5337 = vld [vmem:[%s549 + $0x25] sm:$0x1]
        %v5338 = vld [vmem:[%s549 + $0x35] sm:$0x1]
        %v5343 = vrot.slane %v5336, 7
        %v5344 = vsel %vm301, %v5343, %v5335
        %v5345 = vrot.slane %v5337, 6
        %v5346 = vsel %vm304, %v5345, %v5344
        %v5347 = vrot.slane %v5338, 5
        %v5348 = vsel %vm307, %v5347, %v5346
        %v5349 = vsel %vm313, %v5348, 0
        %5351 = vmatprep.subr.mxu0 0.0
        %5352 = vmatpush1.msra.mxu0 %v5349
        %5353 = vmatprep.subr.mxu0 0.0
        %5354 = vmatpush1.msra.mxu0 0.0
        %5355 = vmatprep.subr.mxu0 0.0
        %5356 = vmatpush1.msra.mxu0 0.0
        %5357 = vmatprep.subr.mxu0 0.0
        %5358 = vmatpush1.msra.mxu0 0.0
        %5359 = vmatprep.subr.mxu0 0.0
        %5360 = vmatpush1.msra.mxu0 0.0
        %5361 = vmatprep.subr.mxu0 0.0
        %5362 = vmatpush1.msra.mxu0 0.0
        %5363 = vmatprep.subr.mxu0 0.0
        %5364 = vmatpush1.msra.mxu0 0.0
        %5365 = vmatprep.subr.mxu0 0.0
        %5366 = vmatpush1.msra.mxu0 0.0
        %5367 = vmatprep.subr.mxu0 0.0
        %5368 = vmatpush1.msra.mxu0 0.0
        %5369 = vmatprep.subr.mxu0 0.0
        %5370 = vmatpush1.msra.mxu0 0.0
        %5371 = vmatprep.subr.mxu0 0.0
        %5372 = vmatpush1.msra.mxu0 0.0
        %5373 = vmatprep.subr.mxu0 0.0
        %5374 = vmatpush1.msra.mxu0 0.0
        %5375 = vmatprep.subr.mxu0 0.0
        %5376 = vmatpush1.msra.mxu0 0.0
        %5377 = vmatprep.subr.mxu0 0.0
        %5378 = vmatpush1.msra.mxu0 0.0
        %5379 = vmatprep.subr.mxu0 0.0
        %5380 = vmatpush1.msra.mxu0 0.0
        %5381 = vmatprep.subr.mxu0 0.0
        %5382 = vmatpush1.msra.mxu0 0.0
        %5383 = vmatprep.subr.mxu0 0.0
        %5384 = vmatpush1.msra.mxu0 0.0
        %5385 = vmatprep.subr.mxu0 0.0
        %5386 = vmatpush1.msra.mxu0 0.0
        %5387 = vmatprep.subr.mxu0 0.0
        %5388 = vmatpush1.msra.mxu0 0.0
        %5389 = vmatprep.subr.mxu0 0.0
        %5390 = vmatpush1.msra.mxu0 0.0
        %5391 = vmatprep.subr.mxu0 0.0
        %5392 = vmatpush1.msra.mxu0 0.0
        %5393 = vmatprep.subr.mxu0 0.0
        %5394 = vmatpush1.msra.mxu0 0.0
        %5395 = vmatprep.subr.mxu0 0.0
        %5396 = vmatpush1.msra.mxu0 0.0
        %5397 = vmatprep.subr.mxu0 0.0
        %5398 = vmatpush1.msra.mxu0 0.0
        %5399 = vmatprep.subr.mxu0 0.0
        %5400 = vmatpush1.msra.mxu0 0.0
        %5401 = vmatprep.subr.mxu0 0.0
        %5402 = vmatpush1.msra.mxu0 0.0
        %5403 = vmatprep.subr.mxu0 0.0
        %5404 = vmatpush1.msra.mxu0 0.0
        %5405 = vmatprep.subr.mxu0 0.0
        %5406 = vmatpush1.msra.mxu0 0.0
        %5407 = vmatprep.subr.mxu0 0.0
        %5408 = vmatpush1.msra.mxu0 0.0
        %5409 = vmatprep.subr.mxu0 0.0
        %5410 = vmatpush1.msra.mxu0 0.0
        %5411 = vmatprep.subr.mxu0 0.0
        %5412 = vmatpush1.msra.mxu0 0.0
        %5413 = vmatprep.subr.mxu0 0.0
        %5414 = vmatpush1.msra.mxu0 0.0
        %5415 = vmatprep.mubr.f32.mxu0 0.0
        %5416 = vmatmul.mubr.f32.gmra.mrb[0].mxu0 %v565
        %v5417 = vpop.f32.mrb[0].mxu0
        %v5418 = vadd.f32 0.0, %v5417
        %v5419 = vpop.f32.mrb[0].mxu0
        %5420 = vdwg.mxu0
        %v5421 = vadd.f32 %v5334, %v5418
        %v5422 = vld [vmem:[%s640 + $0x5] sm:$0x1]
        %v5423 = vld [vmem:[%s640 + $0x15] sm:$0x1]
        %v5424 = vld [vmem:[%s640 + $0x25] sm:$0x1]
        %v5425 = vld [vmem:[%s640 + $0x35] sm:$0x1]
        %v5430 = vrot.slane %v5423, 7
        %v5431 = vsel %vm301, %v5430, %v5422
        %v5432 = vrot.slane %v5424, 6
        %v5433 = vsel %vm304, %v5432, %v5431
        %v5434 = vrot.slane %v5425, 5
        %v5435 = vsel %vm307, %v5434, %v5433
        %v5436 = vsel %vm313, %v5435, 0
        %5438 = vmatprep.subr.mxu0 0.0
        %5439 = vmatpush1.msra.mxu0 %v5436
        %5440 = vmatprep.subr.mxu0 0.0
        %5441 = vmatpush1.msra.mxu0 0.0
        %5442 = vmatprep.subr.mxu0 0.0
        %5443 = vmatpush1.msra.mxu0 0.0
        %5444 = vmatprep.subr.mxu0 0.0
        %5445 = vmatpush1.msra.mxu0 0.0
        %5446 = vmatprep.subr.mxu0 0.0
        %5447 = vmatpush1.msra.mxu0 0.0
        %5448 = vmatprep.subr.mxu0 0.0
        %5449 = vmatpush1.msra.mxu0 0.0
        %5450 = vmatprep.subr.mxu0 0.0
        %5451 = vmatpush1.msra.mxu0 0.0
        %5452 = vmatprep.subr.mxu0 0.0
        %5453 = vmatpush1.msra.mxu0 0.0
        %5454 = vmatprep.subr.mxu0 0.0
        %5455 = vmatpush1.msra.mxu0 0.0
        %5456 = vmatprep.subr.mxu0 0.0
        %5457 = vmatpush1.msra.mxu0 0.0
        %5458 = vmatprep.subr.mxu0 0.0
        %5459 = vmatpush1.msra.mxu0 0.0
        %5460 = vmatprep.subr.mxu0 0.0
        %5461 = vmatpush1.msra.mxu0 0.0
        %5462 = vmatprep.subr.mxu0 0.0
        %5463 = vmatpush1.msra.mxu0 0.0
        %5464 = vmatprep.subr.mxu0 0.0
        %5465 = vmatpush1.msra.mxu0 0.0
        %5466 = vmatprep.subr.mxu0 0.0
        %5467 = vmatpush1.msra.mxu0 0.0
        %5468 = vmatprep.subr.mxu0 0.0
        %5469 = vmatpush1.msra.mxu0 0.0
        %5470 = vmatprep.subr.mxu0 0.0
        %5471 = vmatpush1.msra.mxu0 0.0
        %5472 = vmatprep.subr.mxu0 0.0
        %5473 = vmatpush1.msra.mxu0 0.0
        %5474 = vmatprep.subr.mxu0 0.0
        %5475 = vmatpush1.msra.mxu0 0.0
        %5476 = vmatprep.subr.mxu0 0.0
        %5477 = vmatpush1.msra.mxu0 0.0
        %5478 = vmatprep.subr.mxu0 0.0
        %5479 = vmatpush1.msra.mxu0 0.0
        %5480 = vmatprep.subr.mxu0 0.0
        %5481 = vmatpush1.msra.mxu0 0.0
        %5482 = vmatprep.subr.mxu0 0.0
        %5483 = vmatpush1.msra.mxu0 0.0
        %5484 = vmatprep.subr.mxu0 0.0
        %5485 = vmatpush1.msra.mxu0 0.0
        %5486 = vmatprep.subr.mxu0 0.0
        %5487 = vmatpush1.msra.mxu0 0.0
        %5488 = vmatprep.subr.mxu0 0.0
        %5489 = vmatpush1.msra.mxu0 0.0
        %5490 = vmatprep.subr.mxu0 0.0
        %5491 = vmatpush1.msra.mxu0 0.0
        %5492 = vmatprep.subr.mxu0 0.0
        %5493 = vmatpush1.msra.mxu0 0.0
        %5494 = vmatprep.subr.mxu0 0.0
        %5495 = vmatpush1.msra.mxu0 0.0
        %5496 = vmatprep.subr.mxu0 0.0
        %5497 = vmatpush1.msra.mxu0 0.0
        %5498 = vmatprep.subr.mxu0 0.0
        %5499 = vmatpush1.msra.mxu0 0.0
        %5500 = vmatprep.subr.mxu0 0.0
        %5501 = vmatpush1.msra.mxu0 0.0
        %5502 = vmatprep.mubr.f32.mxu0 0.0
        %5503 = vmatmul.mubr.f32.gmra.mrb[0].mxu0 %v656
        %v5504 = vpop.f32.mrb[0].mxu0
        %v5505 = vadd.f32 0.0, %v5504
        %v5506 = vpop.f32.mrb[0].mxu0
        %5507 = vdwg.mxu0
        %v5508 = vadd.f32 %v5421, %v5505
        %5509 = vrot.lane.b32.xlu0 %v5348, 127
        %v5510 = vpop.permute.xlu0 %5509
        %v5511 = vsel %vm313, %v5510, 0
        %5513 = vmatprep.subr.mxu0 0.0
        %5514 = vmatpush1.msra.mxu0 %v5511
        %5515 = vmatprep.subr.mxu0 0.0
        %5516 = vmatpush1.msra.mxu0 0.0
        %5517 = vmatprep.subr.mxu0 0.0
        %5518 = vmatpush1.msra.mxu0 0.0
        %5519 = vmatprep.subr.mxu0 0.0
        %5520 = vmatpush1.msra.mxu0 0.0
        %5521 = vmatprep.subr.mxu0 0.0
        %5522 = vmatpush1.msra.mxu0 0.0
        %5523 = vmatprep.subr.mxu0 0.0
        %5524 = vmatpush1.msra.mxu0 0.0
        %5525 = vmatprep.subr.mxu0 0.0
        %5526 = vmatpush1.msra.mxu0 0.0
        %5527 = vmatprep.subr.mxu0 0.0
        %5528 = vmatpush1.msra.mxu0 0.0
        %5529 = vmatprep.subr.mxu0 0.0
        %5530 = vmatpush1.msra.mxu0 0.0
        %5531 = vmatprep.subr.mxu0 0.0
        %5532 = vmatpush1.msra.mxu0 0.0
        %5533 = vmatprep.subr.mxu0 0.0
        %5534 = vmatpush1.msra.mxu0 0.0
        %5535 = vmatprep.subr.mxu0 0.0
        %5536 = vmatpush1.msra.mxu0 0.0
        %5537 = vmatprep.subr.mxu0 0.0
        %5538 = vmatpush1.msra.mxu0 0.0
        %5539 = vmatprep.subr.mxu0 0.0
        %5540 = vmatpush1.msra.mxu0 0.0
        %5541 = vmatprep.subr.mxu0 0.0
        %5542 = vmatpush1.msra.mxu0 0.0
        %5543 = vmatprep.subr.mxu0 0.0
        %5544 = vmatpush1.msra.mxu0 0.0
        %5545 = vmatprep.subr.mxu0 0.0
        %5546 = vmatpush1.msra.mxu0 0.0
        %5547 = vmatprep.subr.mxu0 0.0
        %5548 = vmatpush1.msra.mxu0 0.0
        %5549 = vmatprep.subr.mxu0 0.0
        %5550 = vmatpush1.msra.mxu0 0.0
        %5551 = vmatprep.subr.mxu0 0.0
        %5552 = vmatpush1.msra.mxu0 0.0
        %5553 = vmatprep.subr.mxu0 0.0
        %5554 = vmatpush1.msra.mxu0 0.0
        %5555 = vmatprep.subr.mxu0 0.0
        %5556 = vmatpush1.msra.mxu0 0.0
        %5557 = vmatprep.subr.mxu0 0.0
        %5558 = vmatpush1.msra.mxu0 0.0
        %5559 = vmatprep.subr.mxu0 0.0
        %5560 = vmatpush1.msra.mxu0 0.0
        %5561 = vmatprep.subr.mxu0 0.0
        %5562 = vmatpush1.msra.mxu0 0.0
        %5563 = vmatprep.subr.mxu0 0.0
        %5564 = vmatpush1.msra.mxu0 0.0
        %5565 = vmatprep.subr.mxu0 0.0
        %5566 = vmatpush1.msra.mxu0 0.0
        %5567 = vmatprep.subr.mxu0 0.0
        %5568 = vmatpush1.msra.mxu0 0.0
        %5569 = vmatprep.subr.mxu0 0.0
        %5570 = vmatpush1.msra.mxu0 0.0
        %5571 = vmatprep.subr.mxu0 0.0
        %5572 = vmatpush1.msra.mxu0 0.0
        %5573 = vmatprep.subr.mxu0 0.0
        %5574 = vmatpush1.msra.mxu0 0.0
        %5575 = vmatprep.subr.mxu0 0.0
        %5576 = vmatpush1.msra.mxu0 0.0
        %5577 = vmatprep.mubr.f32.mxu0 0.0
        %5578 = vmatmul.mubr.f32.gmra.mrb[0].mxu0 %v734
        %v5579 = vpop.f32.mrb[0].mxu0
        %v5580 = vadd.f32 0.0, %v5579
        %v5581 = vpop.f32.mrb[0].mxu0
        %5582 = vdwg.mxu0
        %v5583 = vadd.f32 %v5508, %v5580
        %v5584 = vld [vmem:[%s267 + $0x6] sm:$0x1]
        %v5585 = vld [vmem:[%s267 + $0x16] sm:$0x1]
        %v5586 = vld [vmem:[%s267 + $0x26] sm:$0x1]
        %v5587 = vld [vmem:[%s267 + $0x36] sm:$0x1]
        %v5592 = vrot.slane %v5585, 7
        %v5593 = vsel %vm301, %v5592, %v5584
        %v5594 = vrot.slane %v5586, 6
        %v5595 = vsel %vm304, %v5594, %v5593
        %v5596 = vrot.slane %v5587, 5
        %v5597 = vsel %vm307, %v5596, %v5595
        %v5598 = vsel %vm313, %v5597, 0
        %5600 = vmatprep.subr.mxu0 0.0
        %5601 = vmatpush1.msra.mxu0 %v5598
        %5602 = vmatprep.subr.mxu0 0.0
        %5603 = vmatpush1.msra.mxu0 0.0
        %5604 = vmatprep.subr.mxu0 0.0
        %5605 = vmatpush1.msra.mxu0 0.0
        %5606 = vmatprep.subr.mxu0 0.0
        %5607 = vmatpush1.msra.mxu0 0.0
        %5608 = vmatprep.subr.mxu0 0.0
        %5609 = vmatpush1.msra.mxu0 0.0
        %5610 = vmatprep.subr.mxu0 0.0
        %5611 = vmatpush1.msra.mxu0 0.0
        %5612 = vmatprep.subr.mxu0 0.0
        %5613 = vmatpush1.msra.mxu0 0.0
        %5614 = vmatprep.subr.mxu0 0.0
        %5615 = vmatpush1.msra.mxu0 0.0
        %5616 = vmatprep.subr.mxu0 0.0
        %5617 = vmatpush1.msra.mxu0 0.0
        %5618 = vmatprep.subr.mxu0 0.0
        %5619 = vmatpush1.msra.mxu0 0.0
        %5620 = vmatprep.subr.mxu0 0.0
        %5621 = vmatpush1.msra.mxu0 0.0
        %5622 = vmatprep.subr.mxu0 0.0
        %5623 = vmatpush1.msra.mxu0 0.0
        %5624 = vmatprep.subr.mxu0 0.0
        %5625 = vmatpush1.msra.mxu0 0.0
        %5626 = vmatprep.subr.mxu0 0.0
        %5627 = vmatpush1.msra.mxu0 0.0
        %5628 = vmatprep.subr.mxu0 0.0
        %5629 = vmatpush1.msra.mxu0 0.0
        %5630 = vmatprep.subr.mxu0 0.0
        %5631 = vmatpush1.msra.mxu0 0.0
        %5632 = vmatprep.subr.mxu0 0.0
        %5633 = vmatpush1.msra.mxu0 0.0
        %5634 = vmatprep.subr.mxu0 0.0
        %5635 = vmatpush1.msra.mxu0 0.0
        %5636 = vmatprep.subr.mxu0 0.0
        %5637 = vmatpush1.msra.mxu0 0.0
        %5638 = vmatprep.subr.mxu0 0.0
        %5639 = vmatpush1.msra.mxu0 0.0
        %5640 = vmatprep.subr.mxu0 0.0
        %5641 = vmatpush1.msra.mxu0 0.0
        %5642 = vmatprep.subr.mxu0 0.0
        %5643 = vmatpush1.msra.mxu0 0.0
        %5644 = vmatprep.subr.mxu0 0.0
        %5645 = vmatpush1.msra.mxu0 0.0
        %5646 = vmatprep.subr.mxu0 0.0
        %5647 = vmatpush1.msra.mxu0 0.0
        %5648 = vmatprep.subr.mxu0 0.0
        %5649 = vmatpush1.msra.mxu0 0.0
        %5650 = vmatprep.subr.mxu0 0.0
        %5651 = vmatpush1.msra.mxu0 0.0
        %5652 = vmatprep.subr.mxu0 0.0
        %5653 = vmatpush1.msra.mxu0 0.0
        %5654 = vmatprep.subr.mxu0 0.0
        %5655 = vmatpush1.msra.mxu0 0.0
        %5656 = vmatprep.subr.mxu0 0.0
        %5657 = vmatpush1.msra.mxu0 0.0
        %5658 = vmatprep.subr.mxu0 0.0
        %5659 = vmatpush1.msra.mxu0 0.0
        %5660 = vmatprep.subr.mxu0 0.0
        %5661 = vmatpush1.msra.mxu0 0.0
        %5662 = vmatprep.subr.mxu0 0.0
        %5663 = vmatpush1.msra.mxu0 0.0
        %5664 = vmatprep.mubr.f32.mxu0 0.0
        %5665 = vmatmul.mubr.f32.gmra.mrb[0].mxu0 %v824
        %v5666 = vpop.f32.mrb[0].mxu0
        %v5667 = vadd.f32 0.0, %v5666
        %v5668 = vpop.f32.mrb[0].mxu0
        %5669 = vdwg.mxu0
        %v5670 = vadd.f32 %v5583, %v5667
        %v5671 = vld [vmem:[%s291 + $0x6] sm:$0x1]
        %v5672 = vld [vmem:[%s291 + $0x16] sm:$0x1]
        %v5673 = vld [vmem:[%s291 + $0x26] sm:$0x1]
        %v5674 = vld [vmem:[%s291 + $0x36] sm:$0x1]
        %v5679 = vrot.slane %v5672, 7
        %v5680 = vsel %vm301, %v5679, %v5671
        %v5681 = vrot.slane %v5673, 6
        %v5682 = vsel %vm304, %v5681, %v5680
        %v5683 = vrot.slane %v5674, 5
        %v5684 = vsel %vm307, %v5683, %v5682
        %v5685 = vsel %vm313, %v5684, 0
        %5687 = vmatprep.subr.mxu0 0.0
        %5688 = vmatpush1.msra.mxu0 %v5685
        %5689 = vmatprep.subr.mxu0 0.0
        %5690 = vmatpush1.msra.mxu0 0.0
        %5691 = vmatprep.subr.mxu0 0.0
        %5692 = vmatpush1.msra.mxu0 0.0
        %5693 = vmatprep.subr.mxu0 0.0
        %5694 = vmatpush1.msra.mxu0 0.0
        %5695 = vmatprep.subr.mxu0 0.0
        %5696 = vmatpush1.msra.mxu0 0.0
        %5697 = vmatprep.subr.mxu0 0.0
        %5698 = vmatpush1.msra.mxu0 0.0
        %5699 = vmatprep.subr.mxu0 0.0
        %5700 = vmatpush1.msra.mxu0 0.0
        %5701 = vmatprep.subr.mxu0 0.0
        %5702 = vmatpush1.msra.mxu0 0.0
        %5703 = vmatprep.subr.mxu0 0.0
        %5704 = vmatpush1.msra.mxu0 0.0
        %5705 = vmatprep.subr.mxu0 0.0
        %5706 = vmatpush1.msra.mxu0 0.0
        %5707 = vmatprep.subr.mxu0 0.0
        %5708 = vmatpush1.msra.mxu0 0.0
        %5709 = vmatprep.subr.mxu0 0.0
        %5710 = vmatpush1.msra.mxu0 0.0
        %5711 = vmatprep.subr.mxu0 0.0
        %5712 = vmatpush1.msra.mxu0 0.0
        %5713 = vmatprep.subr.mxu0 0.0
        %5714 = vmatpush1.msra.mxu0 0.0
        %5715 = vmatprep.subr.mxu0 0.0
        %5716 = vmatpush1.msra.mxu0 0.0
        %5717 = vmatprep.subr.mxu0 0.0
        %5718 = vmatpush1.msra.mxu0 0.0
        %5719 = vmatprep.subr.mxu0 0.0
        %5720 = vmatpush1.msra.mxu0 0.0
        %5721 = vmatprep.subr.mxu0 0.0
        %5722 = vmatpush1.msra.mxu0 0.0
        %5723 = vmatprep.subr.mxu0 0.0
        %5724 = vmatpush1.msra.mxu0 0.0
        %5725 = vmatprep.subr.mxu0 0.0
        %5726 = vmatpush1.msra.mxu0 0.0
        %5727 = vmatprep.subr.mxu0 0.0
        %5728 = vmatpush1.msra.mxu0 0.0
        %5729 = vmatprep.subr.mxu0 0.0
        %5730 = vmatpush1.msra.mxu0 0.0
        %5731 = vmatprep.subr.mxu0 0.0
        %5732 = vmatpush1.msra.mxu0 0.0
        %5733 = vmatprep.subr.mxu0 0.0
        %5734 = vmatpush1.msra.mxu0 0.0
        %5735 = vmatprep.subr.mxu0 0.0
        %5736 = vmatpush1.msra.mxu0 0.0
        %5737 = vmatprep.subr.mxu0 0.0
        %5738 = vmatpush1.msra.mxu0 0.0
        %5739 = vmatprep.subr.mxu0 0.0
        %5740 = vmatpush1.msra.mxu0 0.0
        %5741 = vmatprep.subr.mxu0 0.0
        %5742 = vmatpush1.msra.mxu0 0.0
        %5743 = vmatprep.subr.mxu0 0.0
        %5744 = vmatpush1.msra.mxu0 0.0
        %5745 = vmatprep.subr.mxu0 0.0
        %5746 = vmatpush1.msra.mxu0 0.0
        %5747 = vmatprep.subr.mxu0 0.0
        %5748 = vmatpush1.msra.mxu0 0.0
        %5749 = vmatprep.subr.mxu0 0.0
        %5750 = vmatpush1.msra.mxu0 0.0
        %5751 = vmatprep.mubr.f32.mxu0 0.0
        %5752 = vmatmul.mubr.f32.gmra.mrb[0].mxu0 %v914
        %v5753 = vpop.f32.mrb[0].mxu0
        %v5754 = vadd.f32 0.0, %v5753
        %v5755 = vpop.f32.mrb[0].mxu0
        %5756 = vdwg.mxu0
        %v5757 = vadd.f32 %v5670, %v5754
        %5758 = vrot.lane.b32.xlu0 %v5597, 127
        %v5759 = vpop.permute.xlu0 %5758
        %v5760 = vsel %vm313, %v5759, 0
        %5762 = vmatprep.subr.mxu0 0.0
        %5763 = vmatpush1.msra.mxu0 %v5760
        %5764 = vmatprep.subr.mxu0 0.0
        %5765 = vmatpush1.msra.mxu0 0.0
        %5766 = vmatprep.subr.mxu0 0.0
        %5767 = vmatpush1.msra.mxu0 0.0
        %5768 = vmatprep.subr.mxu0 0.0
        %5769 = vmatpush1.msra.mxu0 0.0
        %5770 = vmatprep.subr.mxu0 0.0
        %5771 = vmatpush1.msra.mxu0 0.0
        %5772 = vmatprep.subr.mxu0 0.0
        %5773 = vmatpush1.msra.mxu0 0.0
        %5774 = vmatprep.subr.mxu0 0.0
        %5775 = vmatpush1.msra.mxu0 0.0
        %5776 = vmatprep.subr.mxu0 0.0
        %5777 = vmatpush1.msra.mxu0 0.0
        %5778 = vmatprep.subr.mxu0 0.0
        %5779 = vmatpush1.msra.mxu0 0.0
        %5780 = vmatprep.subr.mxu0 0.0
        %5781 = vmatpush1.msra.mxu0 0.0
        %5782 = vmatprep.subr.mxu0 0.0
        %5783 = vmatpush1.msra.mxu0 0.0
        %5784 = vmatprep.subr.mxu0 0.0
        %5785 = vmatpush1.msra.mxu0 0.0
        %5786 = vmatprep.subr.mxu0 0.0
        %5787 = vmatpush1.msra.mxu0 0.0
        %5788 = vmatprep.subr.mxu0 0.0
        %5789 = vmatpush1.msra.mxu0 0.0
        %5790 = vmatprep.subr.mxu0 0.0
        %5791 = vmatpush1.msra.mxu0 0.0
        %5792 = vmatprep.subr.mxu0 0.0
        %5793 = vmatpush1.msra.mxu0 0.0
        %5794 = vmatprep.subr.mxu0 0.0
        %5795 = vmatpush1.msra.mxu0 0.0
        %5796 = vmatprep.subr.mxu0 0.0
        %5797 = vmatpush1.msra.mxu0 0.0
        %5798 = vmatprep.subr.mxu0 0.0
        %5799 = vmatpush1.msra.mxu0 0.0
        %5800 = vmatprep.subr.mxu0 0.0
        %5801 = vmatpush1.msra.mxu0 0.0
        %5802 = vmatprep.subr.mxu0 0.0
        %5803 = vmatpush1.msra.mxu0 0.0
        %5804 = vmatprep.subr.mxu0 0.0
        %5805 = vmatpush1.msra.mxu0 0.0
        %5806 = vmatprep.subr.mxu0 0.0
        %5807 = vmatpush1.msra.mxu0 0.0
        %5808 = vmatprep.subr.mxu0 0.0
        %5809 = vmatpush1.msra.mxu0 0.0
        %5810 = vmatprep.subr.mxu0 0.0
        %5811 = vmatpush1.msra.mxu0 0.0
        %5812 = vmatprep.subr.mxu0 0.0
        %5813 = vmatpush1.msra.mxu0 0.0
        %5814 = vmatprep.subr.mxu0 0.0
        %5815 = vmatpush1.msra.mxu0 0.0
        %5816 = vmatprep.subr.mxu0 0.0
        %5817 = vmatpush1.msra.mxu0 0.0
        %5818 = vmatprep.subr.mxu0 0.0
        %5819 = vmatpush1.msra.mxu0 0.0
        %5820 = vmatprep.subr.mxu0 0.0
        %5821 = vmatpush1.msra.mxu0 0.0
        %5822 = vmatprep.subr.mxu0 0.0
        %5823 = vmatpush1.msra.mxu0 0.0
        %5824 = vmatprep.subr.mxu0 0.0
        %5825 = vmatpush1.msra.mxu0 0.0
        %5826 = vmatprep.mubr.f32.mxu0 0.0
        %5827 = vmatmul.mubr.f32.gmra.mrb[0].mxu0 %v992
        %v5828 = vpop.f32.mrb[0].mxu0
        %v5829 = vadd.f32 0.0, %v5828
        %v5830 = vpop.f32.mrb[0].mxu0
        %5831 = vdwg.mxu0
        %v5832 = vadd.f32 %v5757, %v5829
        %v5834 = vcombine.high %v5832, %v5832
        %v5836 = vunpack.c.l.s4 1966171168
        %v5837 = vunpack.c.0.s8 %v5836
        %v5838 = vlaneseq
        %v5839 = vshrl.u32 %v5838, 7
        %v5840 = vsub.s32 %v5837, %v5839
        %v5841 = vrot.slane %v5832, %v5840
        %v5843 = vunpack.c.l.s4 1966171168
        %v5844 = vunpack.c.0.s8 %v5843
        %v5845 = vlaneseq
        %v5846 = vshrl.u32 %v5845, 7
        %v5847 = vsub.s32 %v5844, %v5846
        %v5848 = vrot.slane %v5834, %v5847
        %v5849 = vcombine.high %v5841, %v5841
        %v5850 = vcombine.high %v5848, %v5848
        %v5852 = vunpack.c.l.s4 1966171168
        %v5853 = vunpack.c.0.s8 %v5852
        %v5854 = vlaneseq
        %v5855 = vshrl.u32 %v5854, 7
        %v5856 = vsub.s32 %v5853, %v5855
        %v5857 = vrot.slane %v5841, %v5856
        %v5859 = vunpack.c.l.s4 1966171168
        %v5860 = vunpack.c.0.s8 %v5859
        %v5861 = vlaneseq
        %v5862 = vshrl.u32 %v5861, 7
        %v5863 = vsub.s32 %v5860, %v5862
        %v5864 = vrot.slane %v5848, %v5863
        %v5866 = vunpack.c.l.s4 1966171168
        %v5867 = vunpack.c.0.s8 %v5866
        %v5868 = vlaneseq
        %v5869 = vshrl.u32 %v5868, 7
        %v5870 = vsub.s32 %v5867, %v5869
        %v5871 = vrot.slane %v5849, %v5870
        %v5873 = vunpack.c.l.s4 1966171168
        %v5874 = vunpack.c.0.s8 %v5873
        %v5875 = vlaneseq
        %v5876 = vshrl.u32 %v5875, 7
        %v5877 = vsub.s32 %v5874, %v5876
        %v5878 = vrot.slane %v5850, %v5877
        %v5879 = vcombine.high %v5857, %v5857
        %v5880 = vcombine.high %v5864, %v5864
        %v5881 = vcombine.high %v5871, %v5871
        %v5882 = vcombine.high %v5878, %v5878
        %5891 = vst.msk [vmem:[%s248 + $0x5] sm:$0x1] %vm1125, %v5857
        %5892 = vst.msk [vmem:[%s248 + $0xd] sm:$0x1] %vm1125, %v5871
        %5893 = vst.msk [vmem:[%s248 + $0x15] sm:$0x1] %vm1125, %v5879
        %5894 = vst.msk [vmem:[%s248 + $0x1d] sm:$0x1] %vm1125, %v5881
        %5895 = vst.msk [vmem:[%s248 + $0x25] sm:$0x1] %vm1125, %v5864
        %5896 = vst.msk [vmem:[%s248 + $0x2d] sm:$0x1] %vm1125, %v5878
        %5897 = vst.msk [vmem:[%s248 + $0x35] sm:$0x1] %vm1125, %v5880
        %5898 = vst.msk [vmem:[%s248 + $0x3d] sm:$0x1] %vm1125, %v5882
        %v5899 = vmul.f32 %v5832, %v1137
        %v5900 = vadd.f32 %v5899, %v1143
        %v5902 = vcombine.high %v5900, %v5900
        %v5904 = vunpack.c.l.s4 1966171168
        %v5905 = vunpack.c.0.s8 %v5904
        %v5906 = vlaneseq
        %v5907 = vshrl.u32 %v5906, 7
        %v5908 = vsub.s32 %v5905, %v5907
        %v5909 = vrot.slane %v5900, %v5908
        %v5911 = vunpack.c.l.s4 1966171168
        %v5912 = vunpack.c.0.s8 %v5911
        %v5913 = vlaneseq
        %v5914 = vshrl.u32 %v5913, 7
        %v5915 = vsub.s32 %v5912, %v5914
        %v5916 = vrot.slane %v5902, %v5915
        %v5917 = vcombine.high %v5909, %v5909
        %v5918 = vcombine.high %v5916, %v5916
        %v5920 = vunpack.c.l.s4 1966171168
        %v5921 = vunpack.c.0.s8 %v5920
        %v5922 = vlaneseq
        %v5923 = vshrl.u32 %v5922, 7
        %v5924 = vsub.s32 %v5921, %v5923
        %v5925 = vrot.slane %v5909, %v5924
        %v5927 = vunpack.c.l.s4 1966171168
        %v5928 = vunpack.c.0.s8 %v5927
        %v5929 = vlaneseq
        %v5930 = vshrl.u32 %v5929, 7
        %v5931 = vsub.s32 %v5928, %v5930
        %v5932 = vrot.slane %v5916, %v5931
        %v5934 = vunpack.c.l.s4 1966171168
        %v5935 = vunpack.c.0.s8 %v5934
        %v5936 = vlaneseq
        %v5937 = vshrl.u32 %v5936, 7
        %v5938 = vsub.s32 %v5935, %v5937
        %v5939 = vrot.slane %v5917, %v5938
        %v5941 = vunpack.c.l.s4 1966171168
        %v5942 = vunpack.c.0.s8 %v5941
        %v5943 = vlaneseq
        %v5944 = vshrl.u32 %v5943, 7
        %v5945 = vsub.s32 %v5942, %v5944
        %v5946 = vrot.slane %v5918, %v5945
        %v5947 = vcombine.high %v5925, %v5925
        %v5948 = vcombine.high %v5932, %v5932
        %v5949 = vcombine.high %v5939, %v5939
        %v5950 = vcombine.high %v5946, %v5946
        %5959 = vst.msk [vmem:[%s255 + $0x5] sm:$0x1] %vm1125, %v5925
        %5960 = vst.msk [vmem:[%s255 + $0xd] sm:$0x1] %vm1125, %v5939
        %5961 = vst.msk [vmem:[%s255 + $0x15] sm:$0x1] %vm1125, %v5947
        %5962 = vst.msk [vmem:[%s255 + $0x1d] sm:$0x1] %vm1125, %v5949
        %5963 = vst.msk [vmem:[%s255 + $0x25] sm:$0x1] %vm1125, %v5932
        %5964 = vst.msk [vmem:[%s255 + $0x2d] sm:$0x1] %vm1125, %v5946
        %5965 = vst.msk [vmem:[%s255 + $0x35] sm:$0x1] %vm1125, %v5948
        %5966 = vst.msk [vmem:[%s255 + $0x3d] sm:$0x1] %vm1125, %v5950
        %v5967 = vsub.f32 0.0, %v5900
        %v5968 = vmul.f32 %v5967, 1.442695
        %v5969 = vpow.pop %v5968
        %v5970 = vadd.f32 %v5969, 1.0
        %v5971 = vrcp.pop %v5970
        %v5972 = vmul.f32 %v5900, %v5971
        %v5974 = vcombine.high %v5972, %v5972
        %v5976 = vunpack.c.l.s4 1966171168
        %v5977 = vunpack.c.0.s8 %v5976
        %v5978 = vlaneseq
        %v5979 = vshrl.u32 %v5978, 7
        %v5980 = vsub.s32 %v5977, %v5979
        %v5981 = vrot.slane %v5972, %v5980
        %v5983 = vunpack.c.l.s4 1966171168
        %v5984 = vunpack.c.0.s8 %v5983
        %v5985 = vlaneseq
        %v5986 = vshrl.u32 %v5985, 7
        %v5987 = vsub.s32 %v5984, %v5986
        %v5988 = vrot.slane %v5974, %v5987
        %v5989 = vcombine.high %v5981, %v5981
        %v5990 = vcombine.high %v5988, %v5988
        %v5992 = vunpack.c.l.s4 1966171168
        %v5993 = vunpack.c.0.s8 %v5992
        %v5994 = vlaneseq
        %v5995 = vshrl.u32 %v5994, 7
        %v5996 = vsub.s32 %v5993, %v5995
        %v5997 = vrot.slane %v5981, %v5996
        %v5999 = vunpack.c.l.s4 1966171168
        %v6000 = vunpack.c.0.s8 %v5999
        %v6001 = vlaneseq
        %v6002 = vshrl.u32 %v6001, 7
        %v6003 = vsub.s32 %v6000, %v6002
        %v6004 = vrot.slane %v5988, %v6003
        %v6006 = vunpack.c.l.s4 1966171168
        %v6007 = vunpack.c.0.s8 %v6006
        %v6008 = vlaneseq
        %v6009 = vshrl.u32 %v6008, 7
        %v6010 = vsub.s32 %v6007, %v6009
        %v6011 = vrot.slane %v5989, %v6010
        %v6013 = vunpack.c.l.s4 1966171168
        %v6014 = vunpack.c.0.s8 %v6013
        %v6015 = vlaneseq
        %v6016 = vshrl.u32 %v6015, 7
        %v6017 = vsub.s32 %v6014, %v6016
        %v6018 = vrot.slane %v5990, %v6017
        %v6019 = vcombine.high %v5997, %v5997
        %v6020 = vcombine.high %v6004, %v6004
        %v6021 = vcombine.high %v6011, %v6011
        %v6022 = vcombine.high %v6018, %v6018
        %6031 = vst.msk [vmem:[%s262 + $0x5] sm:$0x1] %vm1125, %v5997
        %6032 = vst.msk [vmem:[%s262 + $0xd] sm:$0x1] %vm1125, %v6011
        %6033 = vst.msk [vmem:[%s262 + $0x15] sm:$0x1] %vm1125, %v6019
        %6034 = vst.msk [vmem:[%s262 + $0x1d] sm:$0x1] %vm1125, %v6021
        %6035 = vst.msk [vmem:[%s262 + $0x25] sm:$0x1] %vm1125, %v6004
        %6036 = vst.msk [vmem:[%s262 + $0x2d] sm:$0x1] %vm1125, %v6018
        %6037 = vst.msk [vmem:[%s262 + $0x35] sm:$0x1] %vm1125, %v6020
        %6038 = vst.msk [vmem:[%s262 + $0x3d] sm:$0x1] %vm1125, %v6022
        %v6039 = vld [vmem:[%s267 + $0x6] sm:$0x1]
        %v6040 = vld [vmem:[%s267 + $0x16] sm:$0x1]
        %v6041 = vld [vmem:[%s267 + $0x26] sm:$0x1]
        %v6042 = vld [vmem:[%s267 + $0x36] sm:$0x1]
        %v6043 = vld [vmem:[%s291 + $0x6] sm:$0x1]
        %v6044 = vld [vmem:[%s291 + $0x16] sm:$0x1]
        %v6045 = vld [vmem:[%s291 + $0x26] sm:$0x1]
        %v6046 = vld [vmem:[%s291 + $0x36] sm:$0x1]
        %v6051 = vrot.slane %v6044, 7
        %v6052 = vsel %vm301, %v6051, %v6043
        %v6053 = vrot.slane %v6045, 6
        %v6054 = vsel %vm304, %v6053, %v6052
        %v6055 = vrot.slane %v6046, 5
        %v6056 = vsel %vm307, %v6055, %v6054
        %v6057 = vsel %vm313, %v6056, 0
        %6059 = vmatprep.subr.mxu0 0.0
        %6060 = vmatpush1.msra.mxu0 %v6057
        %6061 = vmatprep.subr.mxu0 0.0
        %6062 = vmatpush1.msra.mxu0 0.0
        %6063 = vmatprep.subr.mxu0 0.0
        %6064 = vmatpush1.msra.mxu0 0.0
        %6065 = vmatprep.subr.mxu0 0.0
        %6066 = vmatpush1.msra.mxu0 0.0
        %6067 = vmatprep.subr.mxu0 0.0
        %6068 = vmatpush1.msra.mxu0 0.0
        %6069 = vmatprep.subr.mxu0 0.0
        %6070 = vmatpush1.msra.mxu0 0.0
        %6071 = vmatprep.subr.mxu0 0.0
        %6072 = vmatpush1.msra.mxu0 0.0
        %6073 = vmatprep.subr.mxu0 0.0
        %6074 = vmatpush1.msra.mxu0 0.0
        %6075 = vmatprep.subr.mxu0 0.0
        %6076 = vmatpush1.msra.mxu0 0.0
        %6077 = vmatprep.subr.mxu0 0.0
        %6078 = vmatpush1.msra.mxu0 0.0
        %6079 = vmatprep.subr.mxu0 0.0
        %6080 = vmatpush1.msra.mxu0 0.0
        %6081 = vmatprep.subr.mxu0 0.0
        %6082 = vmatpush1.msra.mxu0 0.0
        %6083 = vmatprep.subr.mxu0 0.0
        %6084 = vmatpush1.msra.mxu0 0.0
        %6085 = vmatprep.subr.mxu0 0.0
        %6086 = vmatpush1.msra.mxu0 0.0
        %6087 = vmatprep.subr.mxu0 0.0
        %6088 = vmatpush1.msra.mxu0 0.0
        %6089 = vmatprep.subr.mxu0 0.0
        %6090 = vmatpush1.msra.mxu0 0.0
        %6091 = vmatprep.subr.mxu0 0.0
        %6092 = vmatpush1.msra.mxu0 0.0
        %6093 = vmatprep.subr.mxu0 0.0
        %6094 = vmatpush1.msra.mxu0 0.0
        %6095 = vmatprep.subr.mxu0 0.0
        %6096 = vmatpush1.msra.mxu0 0.0
        %6097 = vmatprep.subr.mxu0 0.0
        %6098 = vmatpush1.msra.mxu0 0.0
        %6099 = vmatprep.subr.mxu0 0.0
        %6100 = vmatpush1.msra.mxu0 0.0
        %6101 = vmatprep.subr.mxu0 0.0
        %6102 = vmatpush1.msra.mxu0 0.0
        %6103 = vmatprep.subr.mxu0 0.0
        %6104 = vmatpush1.msra.mxu0 0.0
        %6105 = vmatprep.subr.mxu0 0.0
        %6106 = vmatpush1.msra.mxu0 0.0
        %6107 = vmatprep.subr.mxu0 0.0
        %6108 = vmatpush1.msra.mxu0 0.0
        %6109 = vmatprep.subr.mxu0 0.0
        %6110 = vmatpush1.msra.mxu0 0.0
        %6111 = vmatprep.subr.mxu0 0.0
        %6112 = vmatpush1.msra.mxu0 0.0
        %6113 = vmatprep.subr.mxu0 0.0
        %6114 = vmatpush1.msra.mxu0 0.0
        %6115 = vmatprep.subr.mxu0 0.0
        %6116 = vmatpush1.msra.mxu0 0.0
        %6117 = vmatprep.subr.mxu0 0.0
        %6118 = vmatpush1.msra.mxu0 0.0
        %6119 = vmatprep.subr.mxu0 0.0
        %6120 = vmatpush1.msra.mxu0 0.0
        %6121 = vmatprep.subr.mxu0 0.0
        %6122 = vmatpush1.msra.mxu0 0.0
        %6123 = vmatprep.mubr.f32.mxu0 0.0
        %6124 = vmatmul.mubr.f32.gmra.mrb[0].mxu0 %v311
        %v6125 = vpop.f32.mrb[0].mxu0
        %v6126 = vadd.f32 0.0, %v6125
        %v6127 = vpop.f32.mrb[0].mxu0
        %6128 = vdwg.mxu0
        %v6133 = vrot.slane %v6040, 7
        %v6134 = vsel %vm301, %v6133, %v6039
        %v6135 = vrot.slane %v6041, 6
        %v6136 = vsel %vm304, %v6135, %v6134
        %v6137 = vrot.slane %v6042, 5
        %v6138 = vsel %vm307, %v6137, %v6136
        %v6139 = vsel %vm313, %v6138, 0
        %6141 = vmatprep.subr.mxu0 0.0
        %6142 = vmatpush1.msra.mxu0 %v6139
        %6143 = vmatprep.subr.mxu0 0.0
        %6144 = vmatpush1.msra.mxu0 0.0
        %6145 = vmatprep.subr.mxu0 0.0
        %6146 = vmatpush1.msra.mxu0 0.0
        %6147 = vmatprep.subr.mxu0 0.0
        %6148 = vmatpush1.msra.mxu0 0.0
        %6149 = vmatprep.subr.mxu0 0.0
        %6150 = vmatpush1.msra.mxu0 0.0
        %6151 = vmatprep.subr.mxu0 0.0
        %6152 = vmatpush1.msra.mxu0 0.0
        %6153 = vmatprep.subr.mxu0 0.0
        %6154 = vmatpush1.msra.mxu0 0.0
        %6155 = vmatprep.subr.mxu0 0.0
        %6156 = vmatpush1.msra.mxu0 0.0
        %6157 = vmatprep.subr.mxu0 0.0
        %6158 = vmatpush1.msra.mxu0 0.0
        %6159 = vmatprep.subr.mxu0 0.0
        %6160 = vmatpush1.msra.mxu0 0.0
        %6161 = vmatprep.subr.mxu0 0.0
        %6162 = vmatpush1.msra.mxu0 0.0
        %6163 = vmatprep.subr.mxu0 0.0
        %6164 = vmatpush1.msra.mxu0 0.0
        %6165 = vmatprep.subr.mxu0 0.0
        %6166 = vmatpush1.msra.mxu0 0.0
        %6167 = vmatprep.subr.mxu0 0.0
        %6168 = vmatpush1.msra.mxu0 0.0
        %6169 = vmatprep.subr.mxu0 0.0
        %6170 = vmatpush1.msra.mxu0 0.0
        %6171 = vmatprep.subr.mxu0 0.0
        %6172 = vmatpush1.msra.mxu0 0.0
        %6173 = vmatprep.subr.mxu0 0.0
        %6174 = vmatpush1.msra.mxu0 0.0
        %6175 = vmatprep.subr.mxu0 0.0
        %6176 = vmatpush1.msra.mxu0 0.0
        %6177 = vmatprep.subr.mxu0 0.0
        %6178 = vmatpush1.msra.mxu0 0.0
        %6179 = vmatprep.subr.mxu0 0.0
        %6180 = vmatpush1.msra.mxu0 0.0
        %6181 = vmatprep.subr.mxu0 0.0
        %6182 = vmatpush1.msra.mxu0 0.0
        %6183 = vmatprep.subr.mxu0 0.0
        %6184 = vmatpush1.msra.mxu0 0.0
        %6185 = vmatprep.subr.mxu0 0.0
        %6186 = vmatpush1.msra.mxu0 0.0
        %6187 = vmatprep.subr.mxu0 0.0
        %6188 = vmatpush1.msra.mxu0 0.0
        %6189 = vmatprep.subr.mxu0 0.0
        %6190 = vmatpush1.msra.mxu0 0.0
        %6191 = vmatprep.subr.mxu0 0.0
        %6192 = vmatpush1.msra.mxu0 0.0
        %6193 = vmatprep.subr.mxu0 0.0
        %6194 = vmatpush1.msra.mxu0 0.0
        %6195 = vmatprep.subr.mxu0 0.0
        %6196 = vmatpush1.msra.mxu0 0.0
        %6197 = vmatprep.subr.mxu0 0.0
        %6198 = vmatpush1.msra.mxu0 0.0
        %6199 = vmatprep.subr.mxu0 0.0
        %6200 = vmatpush1.msra.mxu0 0.0
        %6201 = vmatprep.subr.mxu0 0.0
        %6202 = vmatpush1.msra.mxu0 0.0
        %6203 = vmatprep.subr.mxu0 0.0
        %6204 = vmatpush1.msra.mxu0 0.0
        %6205 = vmatprep.mubr.f32.mxu0 0.0
        %6206 = vmatmul.mubr.f32.gmra.mrb[0].mxu0 %v397
        %v6207 = vpop.f32.mrb[0].mxu0
        %v6208 = vadd.f32 %v6126, %v6207
        %v6209 = vpop.f32.mrb[0].mxu0
        %6210 = vdwg.mxu0
        %6211 = vrot.lane.b32.xlu0 %v6138, 127
        %v6212 = vpop.permute.xlu0 %6211
        %v6213 = vsel %vm313, %v6212, 0
        %6215 = vmatprep.subr.mxu0 0.0
        %6216 = vmatpush1.msra.mxu0 %v6213
        %6217 = vmatprep.subr.mxu0 0.0
        %6218 = vmatpush1.msra.mxu0 0.0
        %6219 = vmatprep.subr.mxu0 0.0
        %6220 = vmatpush1.msra.mxu0 0.0
        %6221 = vmatprep.subr.mxu0 0.0
        %6222 = vmatpush1.msra.mxu0 0.0
        %6223 = vmatprep.subr.mxu0 0.0
        %6224 = vmatpush1.msra.mxu0 0.0
        %6225 = vmatprep.subr.mxu0 0.0
        %6226 = vmatpush1.msra.mxu0 0.0
        %6227 = vmatprep.subr.mxu0 0.0
        %6228 = vmatpush1.msra.mxu0 0.0
        %6229 = vmatprep.subr.mxu0 0.0
        %6230 = vmatpush1.msra.mxu0 0.0
        %6231 = vmatprep.subr.mxu0 0.0
        %6232 = vmatpush1.msra.mxu0 0.0
        %6233 = vmatprep.subr.mxu0 0.0
        %6234 = vmatpush1.msra.mxu0 0.0
        %6235 = vmatprep.subr.mxu0 0.0
        %6236 = vmatpush1.msra.mxu0 0.0
        %6237 = vmatprep.subr.mxu0 0.0
        %6238 = vmatpush1.msra.mxu0 0.0
        %6239 = vmatprep.subr.mxu0 0.0
        %6240 = vmatpush1.msra.mxu0 0.0
        %6241 = vmatprep.subr.mxu0 0.0
        %6242 = vmatpush1.msra.mxu0 0.0
        %6243 = vmatprep.subr.mxu0 0.0
        %6244 = vmatpush1.msra.mxu0 0.0
        %6245 = vmatprep.subr.mxu0 0.0
        %6246 = vmatpush1.msra.mxu0 0.0
        %6247 = vmatprep.subr.mxu0 0.0
        %6248 = vmatpush1.msra.mxu0 0.0
        %6249 = vmatprep.subr.mxu0 0.0
        %6250 = vmatpush1.msra.mxu0 0.0
        %6251 = vmatprep.subr.mxu0 0.0
        %6252 = vmatpush1.msra.mxu0 0.0
        %6253 = vmatprep.subr.mxu0 0.0
        %6254 = vmatpush1.msra.mxu0 0.0
        %6255 = vmatprep.subr.mxu0 0.0
        %6256 = vmatpush1.msra.mxu0 0.0
        %6257 = vmatprep.subr.mxu0 0.0
        %6258 = vmatpush1.msra.mxu0 0.0
        %6259 = vmatprep.subr.mxu0 0.0
        %6260 = vmatpush1.msra.mxu0 0.0
        %6261 = vmatprep.subr.mxu0 0.0
        %6262 = vmatpush1.msra.mxu0 0.0
        %6263 = vmatprep.subr.mxu0 0.0
        %6264 = vmatpush1.msra.mxu0 0.0
        %6265 = vmatprep.subr.mxu0 0.0
        %6266 = vmatpush1.msra.mxu0 0.0
        %6267 = vmatprep.subr.mxu0 0.0
        %6268 = vmatpush1.msra.mxu0 0.0
        %6269 = vmatprep.subr.mxu0 0.0
        %6270 = vmatpush1.msra.mxu0 0.0
        %6271 = vmatprep.subr.mxu0 0.0
        %6272 = vmatpush1.msra.mxu0 0.0
        %6273 = vmatprep.subr.mxu0 0.0
        %6274 = vmatpush1.msra.mxu0 0.0
        %6275 = vmatprep.subr.mxu0 0.0
        %6276 = vmatpush1.msra.mxu0 0.0
        %6277 = vmatprep.subr.mxu0 0.0
        %6278 = vmatpush1.msra.mxu0 0.0
        %6279 = vmatprep.mubr.f32.mxu0 0.0
        %6280 = vmatmul.mubr.f32.gmra.mrb[0].mxu0 %v474
        %v6281 = vpop.f32.mrb[0].mxu0
        %v6282 = vadd.f32 0.0, %v6281
        %v6283 = vpop.f32.mrb[0].mxu0
        %6284 = vdwg.mxu0
        %v6285 = vadd.f32 %v6208, %v6282
        %v6286 = vld [vmem:[%s549 + $0x6] sm:$0x1]
        %v6287 = vld [vmem:[%s549 + $0x16] sm:$0x1]
        %v6288 = vld [vmem:[%s549 + $0x26] sm:$0x1]
        %v6289 = vld [vmem:[%s549 + $0x36] sm:$0x1]
        %v6294 = vrot.slane %v6287, 7
        %v6295 = vsel %vm301, %v6294, %v6286
        %v6296 = vrot.slane %v6288, 6
        %v6297 = vsel %vm304, %v6296, %v6295
        %v6298 = vrot.slane %v6289, 5
        %v6299 = vsel %vm307, %v6298, %v6297
        %v6300 = vsel %vm313, %v6299, 0
        %6302 = vmatprep.subr.mxu0 0.0
        %6303 = vmatpush1.msra.mxu0 %v6300
        %6304 = vmatprep.subr.mxu0 0.0
        %6305 = vmatpush1.msra.mxu0 0.0
        %6306 = vmatprep.subr.mxu0 0.0
        %6307 = vmatpush1.msra.mxu0 0.0
        %6308 = vmatprep.subr.mxu0 0.0
        %6309 = vmatpush1.msra.mxu0 0.0
        %6310 = vmatprep.subr.mxu0 0.0
        %6311 = vmatpush1.msra.mxu0 0.0
        %6312 = vmatprep.subr.mxu0 0.0
        %6313 = vmatpush1.msra.mxu0 0.0
        %6314 = vmatprep.subr.mxu0 0.0
        %6315 = vmatpush1.msra.mxu0 0.0
        %6316 = vmatprep.subr.mxu0 0.0
        %6317 = vmatpush1.msra.mxu0 0.0
        %6318 = vmatprep.subr.mxu0 0.0
        %6319 = vmatpush1.msra.mxu0 0.0
        %6320 = vmatprep.subr.mxu0 0.0
        %6321 = vmatpush1.msra.mxu0 0.0
        %6322 = vmatprep.subr.mxu0 0.0
        %6323 = vmatpush1.msra.mxu0 0.0
        %6324 = vmatprep.subr.mxu0 0.0
        %6325 = vmatpush1.msra.mxu0 0.0
        %6326 = vmatprep.subr.mxu0 0.0
        %6327 = vmatpush1.msra.mxu0 0.0
        %6328 = vmatprep.subr.mxu0 0.0
        %6329 = vmatpush1.msra.mxu0 0.0
        %6330 = vmatprep.subr.mxu0 0.0
        %6331 = vmatpush1.msra.mxu0 0.0
        %6332 = vmatprep.subr.mxu0 0.0
        %6333 = vmatpush1.msra.mxu0 0.0
        %6334 = vmatprep.subr.mxu0 0.0
        %6335 = vmatpush1.msra.mxu0 0.0
        %6336 = vmatprep.subr.mxu0 0.0
        %6337 = vmatpush1.msra.mxu0 0.0
        %6338 = vmatprep.subr.mxu0 0.0
        %6339 = vmatpush1.msra.mxu0 0.0
        %6340 = vmatprep.subr.mxu0 0.0
        %6341 = vmatpush1.msra.mxu0 0.0
        %6342 = vmatprep.subr.mxu0 0.0
        %6343 = vmatpush1.msra.mxu0 0.0
        %6344 = vmatprep.subr.mxu0 0.0
        %6345 = vmatpush1.msra.mxu0 0.0
        %6346 = vmatprep.subr.mxu0 0.0
        %6347 = vmatpush1.msra.mxu0 0.0
        %6348 = vmatprep.subr.mxu0 0.0
        %6349 = vmatpush1.msra.mxu0 0.0
        %6350 = vmatprep.subr.mxu0 0.0
        %6351 = vmatpush1.msra.mxu0 0.0
        %6352 = vmatprep.subr.mxu0 0.0
        %6353 = vmatpush1.msra.mxu0 0.0
        %6354 = vmatprep.subr.mxu0 0.0
        %6355 = vmatpush1.msra.mxu0 0.0
        %6356 = vmatprep.subr.mxu0 0.0
        %6357 = vmatpush1.msra.mxu0 0.0
        %6358 = vmatprep.subr.mxu0 0.0
        %6359 = vmatpush1.msra.mxu0 0.0
        %6360 = vmatprep.subr.mxu0 0.0
        %6361 = vmatpush1.msra.mxu0 0.0
        %6362 = vmatprep.subr.mxu0 0.0
        %6363 = vmatpush1.msra.mxu0 0.0
        %6364 = vmatprep.subr.mxu0 0.0
        %6365 = vmatpush1.msra.mxu0 0.0
        %6366 = vmatprep.mubr.f32.mxu0 0.0
        %6367 = vmatmul.mubr.f32.gmra.mrb[0].mxu0 %v565
        %v6368 = vpop.f32.mrb[0].mxu0
        %v6369 = vadd.f32 0.0, %v6368
        %v6370 = vpop.f32.mrb[0].mxu0
        %6371 = vdwg.mxu0
        %v6372 = vadd.f32 %v6285, %v6369
        %v6373 = vld [vmem:[%s640 + $0x6] sm:$0x1]
        %v6374 = vld [vmem:[%s640 + $0x16] sm:$0x1]
        %v6375 = vld [vmem:[%s640 + $0x26] sm:$0x1]
        %v6376 = vld [vmem:[%s640 + $0x36] sm:$0x1]
        %v6381 = vrot.slane %v6374, 7
        %v6382 = vsel %vm301, %v6381, %v6373
        %v6383 = vrot.slane %v6375, 6
        %v6384 = vsel %vm304, %v6383, %v6382
        %v6385 = vrot.slane %v6376, 5
        %v6386 = vsel %vm307, %v6385, %v6384
        %v6387 = vsel %vm313, %v6386, 0
        %6389 = vmatprep.subr.mxu0 0.0
        %6390 = vmatpush1.msra.mxu0 %v6387
        %6391 = vmatprep.subr.mxu0 0.0
        %6392 = vmatpush1.msra.mxu0 0.0
        %6393 = vmatprep.subr.mxu0 0.0
        %6394 = vmatpush1.msra.mxu0 0.0
        %6395 = vmatprep.subr.mxu0 0.0
        %6396 = vmatpush1.msra.mxu0 0.0
        %6397 = vmatprep.subr.mxu0 0.0
        %6398 = vmatpush1.msra.mxu0 0.0
        %6399 = vmatprep.subr.mxu0 0.0
        %6400 = vmatpush1.msra.mxu0 0.0
        %6401 = vmatprep.subr.mxu0 0.0
        %6402 = vmatpush1.msra.mxu0 0.0
        %6403 = vmatprep.subr.mxu0 0.0
        %6404 = vmatpush1.msra.mxu0 0.0
        %6405 = vmatprep.subr.mxu0 0.0
        %6406 = vmatpush1.msra.mxu0 0.0
        %6407 = vmatprep.subr.mxu0 0.0
        %6408 = vmatpush1.msra.mxu0 0.0
        %6409 = vmatprep.subr.mxu0 0.0
        %6410 = vmatpush1.msra.mxu0 0.0
        %6411 = vmatprep.subr.mxu0 0.0
        %6412 = vmatpush1.msra.mxu0 0.0
        %6413 = vmatprep.subr.mxu0 0.0
        %6414 = vmatpush1.msra.mxu0 0.0
        %6415 = vmatprep.subr.mxu0 0.0
        %6416 = vmatpush1.msra.mxu0 0.0
        %6417 = vmatprep.subr.mxu0 0.0
        %6418 = vmatpush1.msra.mxu0 0.0
        %6419 = vmatprep.subr.mxu0 0.0
        %6420 = vmatpush1.msra.mxu0 0.0
        %6421 = vmatprep.subr.mxu0 0.0
        %6422 = vmatpush1.msra.mxu0 0.0
        %6423 = vmatprep.subr.mxu0 0.0
        %6424 = vmatpush1.msra.mxu0 0.0
        %6425 = vmatprep.subr.mxu0 0.0
        %6426 = vmatpush1.msra.mxu0 0.0
        %6427 = vmatprep.subr.mxu0 0.0
        %6428 = vmatpush1.msra.mxu0 0.0
        %6429 = vmatprep.subr.mxu0 0.0
        %6430 = vmatpush1.msra.mxu0 0.0
        %6431 = vmatprep.subr.mxu0 0.0
        %6432 = vmatpush1.msra.mxu0 0.0
        %6433 = vmatprep.subr.mxu0 0.0
        %6434 = vmatpush1.msra.mxu0 0.0
        %6435 = vmatprep.subr.mxu0 0.0
        %6436 = vmatpush1.msra.mxu0 0.0
        %6437 = vmatprep.subr.mxu0 0.0
        %6438 = vmatpush1.msra.mxu0 0.0
        %6439 = vmatprep.subr.mxu0 0.0
        %6440 = vmatpush1.msra.mxu0 0.0
        %6441 = vmatprep.subr.mxu0 0.0
        %6442 = vmatpush1.msra.mxu0 0.0
        %6443 = vmatprep.subr.mxu0 0.0
        %6444 = vmatpush1.msra.mxu0 0.0
        %6445 = vmatprep.subr.mxu0 0.0
        %6446 = vmatpush1.msra.mxu0 0.0
        %6447 = vmatprep.subr.mxu0 0.0
        %6448 = vmatpush1.msra.mxu0 0.0
        %6449 = vmatprep.subr.mxu0 0.0
        %6450 = vmatpush1.msra.mxu0 0.0
        %6451 = vmatprep.subr.mxu0 0.0
        %6452 = vmatpush1.msra.mxu0 0.0
        %6453 = vmatprep.mubr.f32.mxu0 0.0
        %6454 = vmatmul.mubr.f32.gmra.mrb[0].mxu0 %v656
        %v6455 = vpop.f32.mrb[0].mxu0
        %v6456 = vadd.f32 0.0, %v6455
        %v6457 = vpop.f32.mrb[0].mxu0
        %6458 = vdwg.mxu0
        %v6459 = vadd.f32 %v6372, %v6456
        %6460 = vrot.lane.b32.xlu0 %v6299, 127
        %v6461 = vpop.permute.xlu0 %6460
        %v6462 = vsel %vm313, %v6461, 0
        %6464 = vmatprep.subr.mxu0 0.0
        %6465 = vmatpush1.msra.mxu0 %v6462
        %6466 = vmatprep.subr.mxu0 0.0
        %6467 = vmatpush1.msra.mxu0 0.0
        %6468 = vmatprep.subr.mxu0 0.0
        %6469 = vmatpush1.msra.mxu0 0.0
        %6470 = vmatprep.subr.mxu0 0.0
        %6471 = vmatpush1.msra.mxu0 0.0
        %6472 = vmatprep.subr.mxu0 0.0
        %6473 = vmatpush1.msra.mxu0 0.0
        %6474 = vmatprep.subr.mxu0 0.0
        %6475 = vmatpush1.msra.mxu0 0.0
        %6476 = vmatprep.subr.mxu0 0.0
        %6477 = vmatpush1.msra.mxu0 0.0
        %6478 = vmatprep.subr.mxu0 0.0
        %6479 = vmatpush1.msra.mxu0 0.0
        %6480 = vmatprep.subr.mxu0 0.0
        %6481 = vmatpush1.msra.mxu0 0.0
        %6482 = vmatprep.subr.mxu0 0.0
        %6483 = vmatpush1.msra.mxu0 0.0
        %6484 = vmatprep.subr.mxu0 0.0
        %6485 = vmatpush1.msra.mxu0 0.0
        %6486 = vmatprep.subr.mxu0 0.0
        %6487 = vmatpush1.msra.mxu0 0.0
        %6488 = vmatprep.subr.mxu0 0.0
        %6489 = vmatpush1.msra.mxu0 0.0
        %6490 = vmatprep.subr.mxu0 0.0
        %6491 = vmatpush1.msra.mxu0 0.0
        %6492 = vmatprep.subr.mxu0 0.0
        %6493 = vmatpush1.msra.mxu0 0.0
        %6494 = vmatprep.subr.mxu0 0.0
        %6495 = vmatpush1.msra.mxu0 0.0
        %6496 = vmatprep.subr.mxu0 0.0
        %6497 = vmatpush1.msra.mxu0 0.0
        %6498 = vmatprep.subr.mxu0 0.0
        %6499 = vmatpush1.msra.mxu0 0.0
        %6500 = vmatprep.subr.mxu0 0.0
        %6501 = vmatpush1.msra.mxu0 0.0
        %6502 = vmatprep.subr.mxu0 0.0
        %6503 = vmatpush1.msra.mxu0 0.0
        %6504 = vmatprep.subr.mxu0 0.0
        %6505 = vmatpush1.msra.mxu0 0.0
        %6506 = vmatprep.subr.mxu0 0.0
        %6507 = vmatpush1.msra.mxu0 0.0
        %6508 = vmatprep.subr.mxu0 0.0
        %6509 = vmatpush1.msra.mxu0 0.0
        %6510 = vmatprep.subr.mxu0 0.0
        %6511 = vmatpush1.msra.mxu0 0.0
        %6512 = vmatprep.subr.mxu0 0.0
        %6513 = vmatpush1.msra.mxu0 0.0
        %6514 = vmatprep.subr.mxu0 0.0
        %6515 = vmatpush1.msra.mxu0 0.0
        %6516 = vmatprep.subr.mxu0 0.0
        %6517 = vmatpush1.msra.mxu0 0.0
        %6518 = vmatprep.subr.mxu0 0.0
        %6519 = vmatpush1.msra.mxu0 0.0
        %6520 = vmatprep.subr.mxu0 0.0
        %6521 = vmatpush1.msra.mxu0 0.0
        %6522 = vmatprep.subr.mxu0 0.0
        %6523 = vmatpush1.msra.mxu0 0.0
        %6524 = vmatprep.subr.mxu0 0.0
        %6525 = vmatpush1.msra.mxu0 0.0
        %6526 = vmatprep.subr.mxu0 0.0
        %6527 = vmatpush1.msra.mxu0 0.0
        %6528 = vmatprep.mubr.f32.mxu0 0.0
        %6529 = vmatmul.mubr.f32.gmra.mrb[0].mxu0 %v734
        %v6530 = vpop.f32.mrb[0].mxu0
        %v6531 = vadd.f32 0.0, %v6530
        %v6532 = vpop.f32.mrb[0].mxu0
        %6533 = vdwg.mxu0
        %v6534 = vadd.f32 %v6459, %v6531
        %v6535 = vld [vmem:[%s267 + $0x7] sm:$0x1]
        %v6536 = vld [vmem:[%s267 + $0x17] sm:$0x1]
        %v6537 = vld [vmem:[%s267 + $0x27] sm:$0x1]
        %v6538 = vld [vmem:[%s267 + $0x37] sm:$0x1]
        %v6543 = vrot.slane %v6536, 7
        %v6544 = vsel %vm301, %v6543, %v6535
        %v6545 = vrot.slane %v6537, 6
        %v6546 = vsel %vm304, %v6545, %v6544
        %v6547 = vrot.slane %v6538, 5
        %v6548 = vsel %vm307, %v6547, %v6546
        %v6549 = vsel %vm313, %v6548, 0
        %6551 = vmatprep.subr.mxu0 0.0
        %6552 = vmatpush1.msra.mxu0 %v6549
        %6553 = vmatprep.subr.mxu0 0.0
        %6554 = vmatpush1.msra.mxu0 0.0
        %6555 = vmatprep.subr.mxu0 0.0
        %6556 = vmatpush1.msra.mxu0 0.0
        %6557 = vmatprep.subr.mxu0 0.0
        %6558 = vmatpush1.msra.mxu0 0.0
        %6559 = vmatprep.subr.mxu0 0.0
        %6560 = vmatpush1.msra.mxu0 0.0
        %6561 = vmatprep.subr.mxu0 0.0
        %6562 = vmatpush1.msra.mxu0 0.0
        %6563 = vmatprep.subr.mxu0 0.0
        %6564 = vmatpush1.msra.mxu0 0.0
        %6565 = vmatprep.subr.mxu0 0.0
        %6566 = vmatpush1.msra.mxu0 0.0
        %6567 = vmatprep.subr.mxu0 0.0
        %6568 = vmatpush1.msra.mxu0 0.0
        %6569 = vmatprep.subr.mxu0 0.0
        %6570 = vmatpush1.msra.mxu0 0.0
        %6571 = vmatprep.subr.mxu0 0.0
        %6572 = vmatpush1.msra.mxu0 0.0
        %6573 = vmatprep.subr.mxu0 0.0
        %6574 = vmatpush1.msra.mxu0 0.0
        %6575 = vmatprep.subr.mxu0 0.0
        %6576 = vmatpush1.msra.mxu0 0.0
        %6577 = vmatprep.subr.mxu0 0.0
        %6578 = vmatpush1.msra.mxu0 0.0
        %6579 = vmatprep.subr.mxu0 0.0
        %6580 = vmatpush1.msra.mxu0 0.0
        %6581 = vmatprep.subr.mxu0 0.0
        %6582 = vmatpush1.msra.mxu0 0.0
        %6583 = vmatprep.subr.mxu0 0.0
        %6584 = vmatpush1.msra.mxu0 0.0
        %6585 = vmatprep.subr.mxu0 0.0
        %6586 = vmatpush1.msra.mxu0 0.0
        %6587 = vmatprep.subr.mxu0 0.0
        %6588 = vmatpush1.msra.mxu0 0.0
        %6589 = vmatprep.subr.mxu0 0.0
        %6590 = vmatpush1.msra.mxu0 0.0
        %6591 = vmatprep.subr.mxu0 0.0
        %6592 = vmatpush1.msra.mxu0 0.0
        %6593 = vmatprep.subr.mxu0 0.0
        %6594 = vmatpush1.msra.mxu0 0.0
        %6595 = vmatprep.subr.mxu0 0.0
        %6596 = vmatpush1.msra.mxu0 0.0
        %6597 = vmatprep.subr.mxu0 0.0
        %6598 = vmatpush1.msra.mxu0 0.0
        %6599 = vmatprep.subr.mxu0 0.0
        %6600 = vmatpush1.msra.mxu0 0.0
        %6601 = vmatprep.subr.mxu0 0.0
        %6602 = vmatpush1.msra.mxu0 0.0
        %6603 = vmatprep.subr.mxu0 0.0
        %6604 = vmatpush1.msra.mxu0 0.0
        %6605 = vmatprep.subr.mxu0 0.0
        %6606 = vmatpush1.msra.mxu0 0.0
        %6607 = vmatprep.subr.mxu0 0.0
        %6608 = vmatpush1.msra.mxu0 0.0
        %6609 = vmatprep.subr.mxu0 0.0
        %6610 = vmatpush1.msra.mxu0 0.0
        %6611 = vmatprep.subr.mxu0 0.0
        %6612 = vmatpush1.msra.mxu0 0.0
        %6613 = vmatprep.subr.mxu0 0.0
        %6614 = vmatpush1.msra.mxu0 0.0
        %6615 = vmatprep.mubr.f32.mxu0 0.0
        %6616 = vmatmul.mubr.f32.gmra.mrb[0].mxu0 %v824
        %v6617 = vpop.f32.mrb[0].mxu0
        %v6618 = vadd.f32 0.0, %v6617
        %v6619 = vpop.f32.mrb[0].mxu0
        %6620 = vdwg.mxu0
        %v6621 = vadd.f32 %v6534, %v6618
        %v6622 = vld [vmem:[%s291 + $0x7] sm:$0x1]
        %v6623 = vld [vmem:[%s291 + $0x17] sm:$0x1]
        %v6624 = vld [vmem:[%s291 + $0x27] sm:$0x1]
        %v6625 = vld [vmem:[%s291 + $0x37] sm:$0x1]
        %v6630 = vrot.slane %v6623, 7
        %v6631 = vsel %vm301, %v6630, %v6622
        %v6632 = vrot.slane %v6624, 6
        %v6633 = vsel %vm304, %v6632, %v6631
        %v6634 = vrot.slane %v6625, 5
        %v6635 = vsel %vm307, %v6634, %v6633
        %v6636 = vsel %vm313, %v6635, 0
        %6638 = vmatprep.subr.mxu0 0.0
        %6639 = vmatpush1.msra.mxu0 %v6636
        %6640 = vmatprep.subr.mxu0 0.0
        %6641 = vmatpush1.msra.mxu0 0.0
        %6642 = vmatprep.subr.mxu0 0.0
        %6643 = vmatpush1.msra.mxu0 0.0
        %6644 = vmatprep.subr.mxu0 0.0
        %6645 = vmatpush1.msra.mxu0 0.0
        %6646 = vmatprep.subr.mxu0 0.0
        %6647 = vmatpush1.msra.mxu0 0.0
        %6648 = vmatprep.subr.mxu0 0.0
        %6649 = vmatpush1.msra.mxu0 0.0
        %6650 = vmatprep.subr.mxu0 0.0
        %6651 = vmatpush1.msra.mxu0 0.0
        %6652 = vmatprep.subr.mxu0 0.0
        %6653 = vmatpush1.msra.mxu0 0.0
        %6654 = vmatprep.subr.mxu0 0.0
        %6655 = vmatpush1.msra.mxu0 0.0
        %6656 = vmatprep.subr.mxu0 0.0
        %6657 = vmatpush1.msra.mxu0 0.0
        %6658 = vmatprep.subr.mxu0 0.0
        %6659 = vmatpush1.msra.mxu0 0.0
        %6660 = vmatprep.subr.mxu0 0.0
        %6661 = vmatpush1.msra.mxu0 0.0
        %6662 = vmatprep.subr.mxu0 0.0
        %6663 = vmatpush1.msra.mxu0 0.0
        %6664 = vmatprep.subr.mxu0 0.0
        %6665 = vmatpush1.msra.mxu0 0.0
        %6666 = vmatprep.subr.mxu0 0.0
        %6667 = vmatpush1.msra.mxu0 0.0
        %6668 = vmatprep.subr.mxu0 0.0
        %6669 = vmatpush1.msra.mxu0 0.0
        %6670 = vmatprep.subr.mxu0 0.0
        %6671 = vmatpush1.msra.mxu0 0.0
        %6672 = vmatprep.subr.mxu0 0.0
        %6673 = vmatpush1.msra.mxu0 0.0
        %6674 = vmatprep.subr.mxu0 0.0
        %6675 = vmatpush1.msra.mxu0 0.0
        %6676 = vmatprep.subr.mxu0 0.0
        %6677 = vmatpush1.msra.mxu0 0.0
        %6678 = vmatprep.subr.mxu0 0.0
        %6679 = vmatpush1.msra.mxu0 0.0
        %6680 = vmatprep.subr.mxu0 0.0
        %6681 = vmatpush1.msra.mxu0 0.0
        %6682 = vmatprep.subr.mxu0 0.0
        %6683 = vmatpush1.msra.mxu0 0.0
        %6684 = vmatprep.subr.mxu0 0.0
        %6685 = vmatpush1.msra.mxu0 0.0
        %6686 = vmatprep.subr.mxu0 0.0
        %6687 = vmatpush1.msra.mxu0 0.0
        %6688 = vmatprep.subr.mxu0 0.0
        %6689 = vmatpush1.msra.mxu0 0.0
        %6690 = vmatprep.subr.mxu0 0.0
        %6691 = vmatpush1.msra.mxu0 0.0
        %6692 = vmatprep.subr.mxu0 0.0
        %6693 = vmatpush1.msra.mxu0 0.0
        %6694 = vmatprep.subr.mxu0 0.0
        %6695 = vmatpush1.msra.mxu0 0.0
        %6696 = vmatprep.subr.mxu0 0.0
        %6697 = vmatpush1.msra.mxu0 0.0
        %6698 = vmatprep.subr.mxu0 0.0
        %6699 = vmatpush1.msra.mxu0 0.0
        %6700 = vmatprep.subr.mxu0 0.0
        %6701 = vmatpush1.msra.mxu0 0.0
        %6702 = vmatprep.mubr.f32.mxu0 0.0
        %6703 = vmatmul.mubr.f32.gmra.mrb[0].mxu0 %v914
        %v6704 = vpop.f32.mrb[0].mxu0
        %v6705 = vadd.f32 0.0, %v6704
        %v6706 = vpop.f32.mrb[0].mxu0
        %6707 = vdwg.mxu0
        %v6708 = vadd.f32 %v6621, %v6705
        %6709 = vrot.lane.b32.xlu0 %v6548, 127
        %v6710 = vpop.permute.xlu0 %6709
        %v6711 = vsel %vm313, %v6710, 0
        %6713 = vmatprep.subr.mxu0 0.0
        %6714 = vmatpush1.msra.mxu0 %v6711
        %6715 = vmatprep.subr.mxu0 0.0
        %6716 = vmatpush1.msra.mxu0 0.0
        %6717 = vmatprep.subr.mxu0 0.0
        %6718 = vmatpush1.msra.mxu0 0.0
        %6719 = vmatprep.subr.mxu0 0.0
        %6720 = vmatpush1.msra.mxu0 0.0
        %6721 = vmatprep.subr.mxu0 0.0
        %6722 = vmatpush1.msra.mxu0 0.0
        %6723 = vmatprep.subr.mxu0 0.0
        %6724 = vmatpush1.msra.mxu0 0.0
        %6725 = vmatprep.subr.mxu0 0.0
        %6726 = vmatpush1.msra.mxu0 0.0
        %6727 = vmatprep.subr.mxu0 0.0
        %6728 = vmatpush1.msra.mxu0 0.0
        %6729 = vmatprep.subr.mxu0 0.0
        %6730 = vmatpush1.msra.mxu0 0.0
        %6731 = vmatprep.subr.mxu0 0.0
        %6732 = vmatpush1.msra.mxu0 0.0
        %6733 = vmatprep.subr.mxu0 0.0
        %6734 = vmatpush1.msra.mxu0 0.0
        %6735 = vmatprep.subr.mxu0 0.0
        %6736 = vmatpush1.msra.mxu0 0.0
        %6737 = vmatprep.subr.mxu0 0.0
        %6738 = vmatpush1.msra.mxu0 0.0
        %6739 = vmatprep.subr.mxu0 0.0
        %6740 = vmatpush1.msra.mxu0 0.0
        %6741 = vmatprep.subr.mxu0 0.0
        %6742 = vmatpush1.msra.mxu0 0.0
        %6743 = vmatprep.subr.mxu0 0.0
        %6744 = vmatpush1.msra.mxu0 0.0
        %6745 = vmatprep.subr.mxu0 0.0
        %6746 = vmatpush1.msra.mxu0 0.0
        %6747 = vmatprep.subr.mxu0 0.0
        %6748 = vmatpush1.msra.mxu0 0.0
        %6749 = vmatprep.subr.mxu0 0.0
        %6750 = vmatpush1.msra.mxu0 0.0
        %6751 = vmatprep.subr.mxu0 0.0
        %6752 = vmatpush1.msra.mxu0 0.0
        %6753 = vmatprep.subr.mxu0 0.0
        %6754 = vmatpush1.msra.mxu0 0.0
        %6755 = vmatprep.subr.mxu0 0.0
        %6756 = vmatpush1.msra.mxu0 0.0
        %6757 = vmatprep.subr.mxu0 0.0
        %6758 = vmatpush1.msra.mxu0 0.0
        %6759 = vmatprep.subr.mxu0 0.0
        %6760 = vmatpush1.msra.mxu0 0.0
        %6761 = vmatprep.subr.mxu0 0.0
        %6762 = vmatpush1.msra.mxu0 0.0
        %6763 = vmatprep.subr.mxu0 0.0
        %6764 = vmatpush1.msra.mxu0 0.0
        %6765 = vmatprep.subr.mxu0 0.0
        %6766 = vmatpush1.msra.mxu0 0.0
        %6767 = vmatprep.subr.mxu0 0.0
        %6768 = vmatpush1.msra.mxu0 0.0
        %6769 = vmatprep.subr.mxu0 0.0
        %6770 = vmatpush1.msra.mxu0 0.0
        %6771 = vmatprep.subr.mxu0 0.0
        %6772 = vmatpush1.msra.mxu0 0.0
        %6773 = vmatprep.subr.mxu0 0.0
        %6774 = vmatpush1.msra.mxu0 0.0
        %6775 = vmatprep.subr.mxu0 0.0
        %6776 = vmatpush1.msra.mxu0 0.0
        %6777 = vmatprep.mubr.f32.mxu0 0.0
        %6778 = vmatmul.mubr.f32.gmra.mrb[0].mxu0 %v992
        %v6779 = vpop.f32.mrb[0].mxu0
        %v6780 = vadd.f32 0.0, %v6779
        %v6781 = vpop.f32.mrb[0].mxu0
        %6782 = vdwg.mxu0
        %v6783 = vadd.f32 %v6708, %v6780
        %v6785 = vcombine.high %v6783, %v6783
        %v6787 = vunpack.c.l.s4 1966171168
        %v6788 = vunpack.c.0.s8 %v6787
        %v6789 = vlaneseq
        %v6790 = vshrl.u32 %v6789, 7
        %v6791 = vsub.s32 %v6788, %v6790
        %v6792 = vrot.slane %v6783, %v6791
        %v6794 = vunpack.c.l.s4 1966171168
        %v6795 = vunpack.c.0.s8 %v6794
        %v6796 = vlaneseq
        %v6797 = vshrl.u32 %v6796, 7
        %v6798 = vsub.s32 %v6795, %v6797
        %v6799 = vrot.slane %v6785, %v6798
        %v6800 = vcombine.high %v6792, %v6792
        %v6801 = vcombine.high %v6799, %v6799
        %v6803 = vunpack.c.l.s4 1966171168
        %v6804 = vunpack.c.0.s8 %v6803
        %v6805 = vlaneseq
        %v6806 = vshrl.u32 %v6805, 7
        %v6807 = vsub.s32 %v6804, %v6806
        %v6808 = vrot.slane %v6792, %v6807
        %v6810 = vunpack.c.l.s4 1966171168
        %v6811 = vunpack.c.0.s8 %v6810
        %v6812 = vlaneseq
        %v6813 = vshrl.u32 %v6812, 7
        %v6814 = vsub.s32 %v6811, %v6813
        %v6815 = vrot.slane %v6799, %v6814
        %v6817 = vunpack.c.l.s4 1966171168
        %v6818 = vunpack.c.0.s8 %v6817
        %v6819 = vlaneseq
        %v6820 = vshrl.u32 %v6819, 7
        %v6821 = vsub.s32 %v6818, %v6820
        %v6822 = vrot.slane %v6800, %v6821
        %v6824 = vunpack.c.l.s4 1966171168
        %v6825 = vunpack.c.0.s8 %v6824
        %v6826 = vlaneseq
        %v6827 = vshrl.u32 %v6826, 7
        %v6828 = vsub.s32 %v6825, %v6827
        %v6829 = vrot.slane %v6801, %v6828
        %v6830 = vcombine.high %v6808, %v6808
        %v6831 = vcombine.high %v6815, %v6815
        %v6832 = vcombine.high %v6822, %v6822
        %v6833 = vcombine.high %v6829, %v6829
        %6842 = vst.msk [vmem:[%s248 + $0x6] sm:$0x1] %vm1125, %v6808
        %6843 = vst.msk [vmem:[%s248 + $0xe] sm:$0x1] %vm1125, %v6822
        %6844 = vst.msk [vmem:[%s248 + $0x16] sm:$0x1] %vm1125, %v6830
        %6845 = vst.msk [vmem:[%s248 + $0x1e] sm:$0x1] %vm1125, %v6832
        %6846 = vst.msk [vmem:[%s248 + $0x26] sm:$0x1] %vm1125, %v6815
        %6847 = vst.msk [vmem:[%s248 + $0x2e] sm:$0x1] %vm1125, %v6829
        %6848 = vst.msk [vmem:[%s248 + $0x36] sm:$0x1] %vm1125, %v6831
        %6849 = vst.msk [vmem:[%s248 + $0x3e] sm:$0x1] %vm1125, %v6833
        %v6850 = vmul.f32 %v6783, %v1137
        %v6851 = vadd.f32 %v6850, %v1143
        %v6853 = vcombine.high %v6851, %v6851
        %v6855 = vunpack.c.l.s4 1966171168
        %v6856 = vunpack.c.0.s8 %v6855
        %v6857 = vlaneseq
        %v6858 = vshrl.u32 %v6857, 7
        %v6859 = vsub.s32 %v6856, %v6858
        %v6860 = vrot.slane %v6851, %v6859
        %v6862 = vunpack.c.l.s4 1966171168
        %v6863 = vunpack.c.0.s8 %v6862
        %v6864 = vlaneseq
        %v6865 = vshrl.u32 %v6864, 7
        %v6866 = vsub.s32 %v6863, %v6865
        %v6867 = vrot.slane %v6853, %v6866
        %v6868 = vcombine.high %v6860, %v6860
        %v6869 = vcombine.high %v6867, %v6867
        %v6871 = vunpack.c.l.s4 1966171168
        %v6872 = vunpack.c.0.s8 %v6871
        %v6873 = vlaneseq
        %v6874 = vshrl.u32 %v6873, 7
        %v6875 = vsub.s32 %v6872, %v6874
        %v6876 = vrot.slane %v6860, %v6875
        %v6878 = vunpack.c.l.s4 1966171168
        %v6879 = vunpack.c.0.s8 %v6878
        %v6880 = vlaneseq
        %v6881 = vshrl.u32 %v6880, 7
        %v6882 = vsub.s32 %v6879, %v6881
        %v6883 = vrot.slane %v6867, %v6882
        %v6885 = vunpack.c.l.s4 1966171168
        %v6886 = vunpack.c.0.s8 %v6885
        %v6887 = vlaneseq
        %v6888 = vshrl.u32 %v6887, 7
        %v6889 = vsub.s32 %v6886, %v6888
        %v6890 = vrot.slane %v6868, %v6889
        %v6892 = vunpack.c.l.s4 1966171168
        %v6893 = vunpack.c.0.s8 %v6892
        %v6894 = vlaneseq
        %v6895 = vshrl.u32 %v6894, 7
        %v6896 = vsub.s32 %v6893, %v6895
        %v6897 = vrot.slane %v6869, %v6896
        %v6898 = vcombine.high %v6876, %v6876
        %v6899 = vcombine.high %v6883, %v6883
        %v6900 = vcombine.high %v6890, %v6890
        %v6901 = vcombine.high %v6897, %v6897
        %6910 = vst.msk [vmem:[%s255 + $0x6] sm:$0x1] %vm1125, %v6876
        %6911 = vst.msk [vmem:[%s255 + $0xe] sm:$0x1] %vm1125, %v6890
        %6912 = vst.msk [vmem:[%s255 + $0x16] sm:$0x1] %vm1125, %v6898
        %6913 = vst.msk [vmem:[%s255 + $0x1e] sm:$0x1] %vm1125, %v6900
        %6914 = vst.msk [vmem:[%s255 + $0x26] sm:$0x1] %vm1125, %v6883
        %6915 = vst.msk [vmem:[%s255 + $0x2e] sm:$0x1] %vm1125, %v6897
        %6916 = vst.msk [vmem:[%s255 + $0x36] sm:$0x1] %vm1125, %v6899
        %6917 = vst.msk [vmem:[%s255 + $0x3e] sm:$0x1] %vm1125, %v6901
        %v6918 = vsub.f32 0.0, %v6851
        %v6919 = vmul.f32 %v6918, 1.442695
        %v6920 = vpow.pop %v6919
        %v6921 = vadd.f32 %v6920, 1.0
        %v6922 = vrcp.pop %v6921
        %v6923 = vmul.f32 %v6851, %v6922
        %v6925 = vcombine.high %v6923, %v6923
        %v6927 = vunpack.c.l.s4 1966171168
        %v6928 = vunpack.c.0.s8 %v6927
        %v6929 = vlaneseq
        %v6930 = vshrl.u32 %v6929, 7
        %v6931 = vsub.s32 %v6928, %v6930
        %v6932 = vrot.slane %v6923, %v6931
        %v6934 = vunpack.c.l.s4 1966171168
        %v6935 = vunpack.c.0.s8 %v6934
        %v6936 = vlaneseq
        %v6937 = vshrl.u32 %v6936, 7
        %v6938 = vsub.s32 %v6935, %v6937
        %v6939 = vrot.slane %v6925, %v6938
        %v6940 = vcombine.high %v6932, %v6932
        %v6941 = vcombine.high %v6939, %v6939
        %v6943 = vunpack.c.l.s4 1966171168
        %v6944 = vunpack.c.0.s8 %v6943
        %v6945 = vlaneseq
        %v6946 = vshrl.u32 %v6945, 7
        %v6947 = vsub.s32 %v6944, %v6946
        %v6948 = vrot.slane %v6932, %v6947
        %v6950 = vunpack.c.l.s4 1966171168
        %v6951 = vunpack.c.0.s8 %v6950
        %v6952 = vlaneseq
        %v6953 = vshrl.u32 %v6952, 7
        %v6954 = vsub.s32 %v6951, %v6953
        %v6955 = vrot.slane %v6939, %v6954
        %v6957 = vunpack.c.l.s4 1966171168
        %v6958 = vunpack.c.0.s8 %v6957
        %v6959 = vlaneseq
        %v6960 = vshrl.u32 %v6959, 7
        %v6961 = vsub.s32 %v6958, %v6960
        %v6962 = vrot.slane %v6940, %v6961
        %v6964 = vunpack.c.l.s4 1966171168
        %v6965 = vunpack.c.0.s8 %v6964
        %v6966 = vlaneseq
        %v6967 = vshrl.u32 %v6966, 7
        %v6968 = vsub.s32 %v6965, %v6967
        %v6969 = vrot.slane %v6941, %v6968
        %v6970 = vcombine.high %v6948, %v6948
        %v6971 = vcombine.high %v6955, %v6955
        %v6972 = vcombine.high %v6962, %v6962
        %v6973 = vcombine.high %v6969, %v6969
        %6982 = vst.msk [vmem:[%s262 + $0x6] sm:$0x1] %vm1125, %v6948
        %6983 = vst.msk [vmem:[%s262 + $0xe] sm:$0x1] %vm1125, %v6962
        %6984 = vst.msk [vmem:[%s262 + $0x16] sm:$0x1] %vm1125, %v6970
        %6985 = vst.msk [vmem:[%s262 + $0x1e] sm:$0x1] %vm1125, %v6972
        %6986 = vst.msk [vmem:[%s262 + $0x26] sm:$0x1] %vm1125, %v6955
        %6987 = vst.msk [vmem:[%s262 + $0x2e] sm:$0x1] %vm1125, %v6969
        %6988 = vst.msk [vmem:[%s262 + $0x36] sm:$0x1] %vm1125, %v6971
        %6989 = vst.msk [vmem:[%s262 + $0x3e] sm:$0x1] %vm1125, %v6973
        %v6990 = vld [vmem:[%s267 + $0x7] sm:$0x1]
        %v6991 = vld [vmem:[%s267 + $0x17] sm:$0x1]
        %v6992 = vld [vmem:[%s267 + $0x27] sm:$0x1]
        %v6993 = vld [vmem:[%s267 + $0x37] sm:$0x1]
        %v6994 = vld [vmem:[%s291 + $0x7] sm:$0x1]
        %v6995 = vld [vmem:[%s291 + $0x17] sm:$0x1]
        %v6996 = vld [vmem:[%s291 + $0x27] sm:$0x1]
        %v6997 = vld [vmem:[%s291 + $0x37] sm:$0x1]
        %v7002 = vrot.slane %v6995, 7
        %v7003 = vsel %vm301, %v7002, %v6994
        %v7004 = vrot.slane %v6996, 6
        %v7005 = vsel %vm304, %v7004, %v7003
        %v7006 = vrot.slane %v6997, 5
        %v7007 = vsel %vm307, %v7006, %v7005
        %v7008 = vsel %vm313, %v7007, 0
        %7010 = vmatprep.subr.mxu0 0.0
        %7011 = vmatpush1.msra.mxu0 %v7008
        %7012 = vmatprep.subr.mxu0 0.0
        %7013 = vmatpush1.msra.mxu0 0.0
        %7014 = vmatprep.subr.mxu0 0.0
        %7015 = vmatpush1.msra.mxu0 0.0
        %7016 = vmatprep.subr.mxu0 0.0
        %7017 = vmatpush1.msra.mxu0 0.0
        %7018 = vmatprep.subr.mxu0 0.0
        %7019 = vmatpush1.msra.mxu0 0.0
        %7020 = vmatprep.subr.mxu0 0.0
        %7021 = vmatpush1.msra.mxu0 0.0
        %7022 = vmatprep.subr.mxu0 0.0
        %7023 = vmatpush1.msra.mxu0 0.0
        %7024 = vmatprep.subr.mxu0 0.0
        %7025 = vmatpush1.msra.mxu0 0.0
        %7026 = vmatprep.subr.mxu0 0.0
        %7027 = vmatpush1.msra.mxu0 0.0
        %7028 = vmatprep.subr.mxu0 0.0
        %7029 = vmatpush1.msra.mxu0 0.0
        %7030 = vmatprep.subr.mxu0 0.0
        %7031 = vmatpush1.msra.mxu0 0.0
        %7032 = vmatprep.subr.mxu0 0.0
        %7033 = vmatpush1.msra.mxu0 0.0
        %7034 = vmatprep.subr.mxu0 0.0
        %7035 = vmatpush1.msra.mxu0 0.0
        %7036 = vmatprep.subr.mxu0 0.0
        %7037 = vmatpush1.msra.mxu0 0.0
        %7038 = vmatprep.subr.mxu0 0.0
        %7039 = vmatpush1.msra.mxu0 0.0
        %7040 = vmatprep.subr.mxu0 0.0
        %7041 = vmatpush1.msra.mxu0 0.0
        %7042 = vmatprep.subr.mxu0 0.0
        %7043 = vmatpush1.msra.mxu0 0.0
        %7044 = vmatprep.subr.mxu0 0.0
        %7045 = vmatpush1.msra.mxu0 0.0
        %7046 = vmatprep.subr.mxu0 0.0
        %7047 = vmatpush1.msra.mxu0 0.0
        %7048 = vmatprep.subr.mxu0 0.0
        %7049 = vmatpush1.msra.mxu0 0.0
        %7050 = vmatprep.subr.mxu0 0.0
        %7051 = vmatpush1.msra.mxu0 0.0
        %7052 = vmatprep.subr.mxu0 0.0
        %7053 = vmatpush1.msra.mxu0 0.0
        %7054 = vmatprep.subr.mxu0 0.0
        %7055 = vmatpush1.msra.mxu0 0.0
        %7056 = vmatprep.subr.mxu0 0.0
        %7057 = vmatpush1.msra.mxu0 0.0
        %7058 = vmatprep.subr.mxu0 0.0
        %7059 = vmatpush1.msra.mxu0 0.0
        %7060 = vmatprep.subr.mxu0 0.0
        %7061 = vmatpush1.msra.mxu0 0.0
        %7062 = vmatprep.subr.mxu0 0.0
        %7063 = vmatpush1.msra.mxu0 0.0
        %7064 = vmatprep.subr.mxu0 0.0
        %7065 = vmatpush1.msra.mxu0 0.0
        %7066 = vmatprep.subr.mxu0 0.0
        %7067 = vmatpush1.msra.mxu0 0.0
        %7068 = vmatprep.subr.mxu0 0.0
        %7069 = vmatpush1.msra.mxu0 0.0
        %7070 = vmatprep.subr.mxu0 0.0
        %7071 = vmatpush1.msra.mxu0 0.0
        %7072 = vmatprep.subr.mxu0 0.0
        %7073 = vmatpush1.msra.mxu0 0.0
        %7074 = vmatprep.mubr.f32.mxu0 0.0
        %7075 = vmatmul.mubr.f32.gmra.mrb[0].mxu0 %v311
        %v7076 = vpop.f32.mrb[0].mxu0
        %v7077 = vadd.f32 0.0, %v7076
        %v7078 = vpop.f32.mrb[0].mxu0
        %7079 = vdwg.mxu0
        %v7084 = vrot.slane %v6991, 7
        %v7085 = vsel %vm301, %v7084, %v6990
        %v7086 = vrot.slane %v6992, 6
        %v7087 = vsel %vm304, %v7086, %v7085
        %v7088 = vrot.slane %v6993, 5
        %v7089 = vsel %vm307, %v7088, %v7087
        %v7090 = vsel %vm313, %v7089, 0
        %7092 = vmatprep.subr.mxu0 0.0
        %7093 = vmatpush1.msra.mxu0 %v7090
        %7094 = vmatprep.subr.mxu0 0.0
        %7095 = vmatpush1.msra.mxu0 0.0
        %7096 = vmatprep.subr.mxu0 0.0
        %7097 = vmatpush1.msra.mxu0 0.0
        %7098 = vmatprep.subr.mxu0 0.0
        %7099 = vmatpush1.msra.mxu0 0.0
        %7100 = vmatprep.subr.mxu0 0.0
        %7101 = vmatpush1.msra.mxu0 0.0
        %7102 = vmatprep.subr.mxu0 0.0
        %7103 = vmatpush1.msra.mxu0 0.0
        %7104 = vmatprep.subr.mxu0 0.0
        %7105 = vmatpush1.msra.mxu0 0.0
        %7106 = vmatprep.subr.mxu0 0.0
        %7107 = vmatpush1.msra.mxu0 0.0
        %7108 = vmatprep.subr.mxu0 0.0
        %7109 = vmatpush1.msra.mxu0 0.0
        %7110 = vmatprep.subr.mxu0 0.0
        %7111 = vmatpush1.msra.mxu0 0.0
        %7112 = vmatprep.subr.mxu0 0.0
        %7113 = vmatpush1.msra.mxu0 0.0
        %7114 = vmatprep.subr.mxu0 0.0
        %7115 = vmatpush1.msra.mxu0 0.0
        %7116 = vmatprep.subr.mxu0 0.0
        %7117 = vmatpush1.msra.mxu0 0.0
        %7118 = vmatprep.subr.mxu0 0.0
        %7119 = vmatpush1.msra.mxu0 0.0
        %7120 = vmatprep.subr.mxu0 0.0
        %7121 = vmatpush1.msra.mxu0 0.0
        %7122 = vmatprep.subr.mxu0 0.0
        %7123 = vmatpush1.msra.mxu0 0.0
        %7124 = vmatprep.subr.mxu0 0.0
        %7125 = vmatpush1.msra.mxu0 0.0
        %7126 = vmatprep.subr.mxu0 0.0
        %7127 = vmatpush1.msra.mxu0 0.0
        %7128 = vmatprep.subr.mxu0 0.0
        %7129 = vmatpush1.msra.mxu0 0.0
        %7130 = vmatprep.subr.mxu0 0.0
        %7131 = vmatpush1.msra.mxu0 0.0
        %7132 = vmatprep.subr.mxu0 0.0
        %7133 = vmatpush1.msra.mxu0 0.0
        %7134 = vmatprep.subr.mxu0 0.0
        %7135 = vmatpush1.msra.mxu0 0.0
        %7136 = vmatprep.subr.mxu0 0.0
        %7137 = vmatpush1.msra.mxu0 0.0
        %7138 = vmatprep.subr.mxu0 0.0
        %7139 = vmatpush1.msra.mxu0 0.0
        %7140 = vmatprep.subr.mxu0 0.0
        %7141 = vmatpush1.msra.mxu0 0.0
        %7142 = vmatprep.subr.mxu0 0.0
        %7143 = vmatpush1.msra.mxu0 0.0
        %7144 = vmatprep.subr.mxu0 0.0
        %7145 = vmatpush1.msra.mxu0 0.0
        %7146 = vmatprep.subr.mxu0 0.0
        %7147 = vmatpush1.msra.mxu0 0.0
        %7148 = vmatprep.subr.mxu0 0.0
        %7149 = vmatpush1.msra.mxu0 0.0
        %7150 = vmatprep.subr.mxu0 0.0
        %7151 = vmatpush1.msra.mxu0 0.0
        %7152 = vmatprep.subr.mxu0 0.0
        %7153 = vmatpush1.msra.mxu0 0.0
        %7154 = vmatprep.subr.mxu0 0.0
        %7155 = vmatpush1.msra.mxu0 0.0
        %7156 = vmatprep.mubr.f32.mxu0 0.0
        %7157 = vmatmul.mubr.f32.gmra.mrb[0].mxu0 %v397
        %v7158 = vpop.f32.mrb[0].mxu0
        %v7159 = vadd.f32 %v7077, %v7158
        %v7160 = vpop.f32.mrb[0].mxu0
        %7161 = vdwg.mxu0
        %7162 = vrot.lane.b32.xlu0 %v7089, 127
        %v7163 = vpop.permute.xlu0 %7162
        %v7164 = vsel %vm313, %v7163, 0
        %7166 = vmatprep.subr.mxu0 0.0
        %7167 = vmatpush1.msra.mxu0 %v7164
        %7168 = vmatprep.subr.mxu0 0.0
        %7169 = vmatpush1.msra.mxu0 0.0
        %7170 = vmatprep.subr.mxu0 0.0
        %7171 = vmatpush1.msra.mxu0 0.0
        %7172 = vmatprep.subr.mxu0 0.0
        %7173 = vmatpush1.msra.mxu0 0.0
        %7174 = vmatprep.subr.mxu0 0.0
        %7175 = vmatpush1.msra.mxu0 0.0
        %7176 = vmatprep.subr.mxu0 0.0
        %7177 = vmatpush1.msra.mxu0 0.0
        %7178 = vmatprep.subr.mxu0 0.0
        %7179 = vmatpush1.msra.mxu0 0.0
        %7180 = vmatprep.subr.mxu0 0.0
        %7181 = vmatpush1.msra.mxu0 0.0
        %7182 = vmatprep.subr.mxu0 0.0
        %7183 = vmatpush1.msra.mxu0 0.0
        %7184 = vmatprep.subr.mxu0 0.0
        %7185 = vmatpush1.msra.mxu0 0.0
        %7186 = vmatprep.subr.mxu0 0.0
        %7187 = vmatpush1.msra.mxu0 0.0
        %7188 = vmatprep.subr.mxu0 0.0
        %7189 = vmatpush1.msra.mxu0 0.0
        %7190 = vmatprep.subr.mxu0 0.0
        %7191 = vmatpush1.msra.mxu0 0.0
        %7192 = vmatprep.subr.mxu0 0.0
        %7193 = vmatpush1.msra.mxu0 0.0
        %7194 = vmatprep.subr.mxu0 0.0
        %7195 = vmatpush1.msra.mxu0 0.0
        %7196 = vmatprep.subr.mxu0 0.0
        %7197 = vmatpush1.msra.mxu0 0.0
        %7198 = vmatprep.subr.mxu0 0.0
        %7199 = vmatpush1.msra.mxu0 0.0
        %7200 = vmatprep.subr.mxu0 0.0
        %7201 = vmatpush1.msra.mxu0 0.0
        %7202 = vmatprep.subr.mxu0 0.0
        %7203 = vmatpush1.msra.mxu0 0.0
        %7204 = vmatprep.subr.mxu0 0.0
        %7205 = vmatpush1.msra.mxu0 0.0
        %7206 = vmatprep.subr.mxu0 0.0
        %7207 = vmatpush1.msra.mxu0 0.0
        %7208 = vmatprep.subr.mxu0 0.0
        %7209 = vmatpush1.msra.mxu0 0.0
        %7210 = vmatprep.subr.mxu0 0.0
        %7211 = vmatpush1.msra.mxu0 0.0
        %7212 = vmatprep.subr.mxu0 0.0
        %7213 = vmatpush1.msra.mxu0 0.0
        %7214 = vmatprep.subr.mxu0 0.0
        %7215 = vmatpush1.msra.mxu0 0.0
        %7216 = vmatprep.subr.mxu0 0.0
        %7217 = vmatpush1.msra.mxu0 0.0
        %7218 = vmatprep.subr.mxu0 0.0
        %7219 = vmatpush1.msra.mxu0 0.0
        %7220 = vmatprep.subr.mxu0 0.0
        %7221 = vmatpush1.msra.mxu0 0.0
        %7222 = vmatprep.subr.mxu0 0.0
        %7223 = vmatpush1.msra.mxu0 0.0
        %7224 = vmatprep.subr.mxu0 0.0
        %7225 = vmatpush1.msra.mxu0 0.0
        %7226 = vmatprep.subr.mxu0 0.0
        %7227 = vmatpush1.msra.mxu0 0.0
        %7228 = vmatprep.subr.mxu0 0.0
        %7229 = vmatpush1.msra.mxu0 0.0
        %7230 = vmatprep.mubr.f32.mxu0 0.0
        %7231 = vmatmul.mubr.f32.gmra.mrb[0].mxu0 %v474
        %v7232 = vpop.f32.mrb[0].mxu0
        %v7233 = vadd.f32 0.0, %v7232
        %v7234 = vpop.f32.mrb[0].mxu0
        %7235 = vdwg.mxu0
        %v7236 = vadd.f32 %v7159, %v7233
        %v7237 = vld [vmem:[%s549 + $0x7] sm:$0x1]
        %v7238 = vld [vmem:[%s549 + $0x17] sm:$0x1]
        %v7239 = vld [vmem:[%s549 + $0x27] sm:$0x1]
        %v7240 = vld [vmem:[%s549 + $0x37] sm:$0x1]
        %v7245 = vrot.slane %v7238, 7
        %v7246 = vsel %vm301, %v7245, %v7237
        %v7247 = vrot.slane %v7239, 6
        %v7248 = vsel %vm304, %v7247, %v7246
        %v7249 = vrot.slane %v7240, 5
        %v7250 = vsel %vm307, %v7249, %v7248
        %v7251 = vsel %vm313, %v7250, 0
        %7253 = vmatprep.subr.mxu0 0.0
        %7254 = vmatpush1.msra.mxu0 %v7251
        %7255 = vmatprep.subr.mxu0 0.0
        %7256 = vmatpush1.msra.mxu0 0.0
        %7257 = vmatprep.subr.mxu0 0.0
        %7258 = vmatpush1.msra.mxu0 0.0
        %7259 = vmatprep.subr.mxu0 0.0
        %7260 = vmatpush1.msra.mxu0 0.0
        %7261 = vmatprep.subr.mxu0 0.0
        %7262 = vmatpush1.msra.mxu0 0.0
        %7263 = vmatprep.subr.mxu0 0.0
        %7264 = vmatpush1.msra.mxu0 0.0
        %7265 = vmatprep.subr.mxu0 0.0
        %7266 = vmatpush1.msra.mxu0 0.0
        %7267 = vmatprep.subr.mxu0 0.0
        %7268 = vmatpush1.msra.mxu0 0.0
        %7269 = vmatprep.subr.mxu0 0.0
        %7270 = vmatpush1.msra.mxu0 0.0
        %7271 = vmatprep.subr.mxu0 0.0
        %7272 = vmatpush1.msra.mxu0 0.0
        %7273 = vmatprep.subr.mxu0 0.0
        %7274 = vmatpush1.msra.mxu0 0.0
        %7275 = vmatprep.subr.mxu0 0.0
        %7276 = vmatpush1.msra.mxu0 0.0
        %7277 = vmatprep.subr.mxu0 0.0
        %7278 = vmatpush1.msra.mxu0 0.0
        %7279 = vmatprep.subr.mxu0 0.0
        %7280 = vmatpush1.msra.mxu0 0.0
        %7281 = vmatprep.subr.mxu0 0.0
        %7282 = vmatpush1.msra.mxu0 0.0
        %7283 = vmatprep.subr.mxu0 0.0
        %7284 = vmatpush1.msra.mxu0 0.0
        %7285 = vmatprep.subr.mxu0 0.0
        %7286 = vmatpush1.msra.mxu0 0.0
        %7287 = vmatprep.subr.mxu0 0.0
        %7288 = vmatpush1.msra.mxu0 0.0
        %7289 = vmatprep.subr.mxu0 0.0
        %7290 = vmatpush1.msra.mxu0 0.0
        %7291 = vmatprep.subr.mxu0 0.0
        %7292 = vmatpush1.msra.mxu0 0.0
        %7293 = vmatprep.subr.mxu0 0.0
        %7294 = vmatpush1.msra.mxu0 0.0
        %7295 = vmatprep.subr.mxu0 0.0
        %7296 = vmatpush1.msra.mxu0 0.0
        %7297 = vmatprep.subr.mxu0 0.0
        %7298 = vmatpush1.msra.mxu0 0.0
        %7299 = vmatprep.subr.mxu0 0.0
        %7300 = vmatpush1.msra.mxu0 0.0
        %7301 = vmatprep.subr.mxu0 0.0
        %7302 = vmatpush1.msra.mxu0 0.0
        %7303 = vmatprep.subr.mxu0 0.0
        %7304 = vmatpush1.msra.mxu0 0.0
        %7305 = vmatprep.subr.mxu0 0.0
        %7306 = vmatpush1.msra.mxu0 0.0
        %7307 = vmatprep.subr.mxu0 0.0
        %7308 = vmatpush1.msra.mxu0 0.0
        %7309 = vmatprep.subr.mxu0 0.0
        %7310 = vmatpush1.msra.mxu0 0.0
        %7311 = vmatprep.subr.mxu0 0.0
        %7312 = vmatpush1.msra.mxu0 0.0
        %7313 = vmatprep.subr.mxu0 0.0
        %7314 = vmatpush1.msra.mxu0 0.0
        %7315 = vmatprep.subr.mxu0 0.0
        %7316 = vmatpush1.msra.mxu0 0.0
        %7317 = vmatprep.mubr.f32.mxu0 0.0
        %7318 = vmatmul.mubr.f32.gmra.mrb[0].mxu0 %v565
        %v7319 = vpop.f32.mrb[0].mxu0
        %v7320 = vadd.f32 0.0, %v7319
        %v7321 = vpop.f32.mrb[0].mxu0
        %7322 = vdwg.mxu0
        %v7323 = vadd.f32 %v7236, %v7320
        %v7324 = vld [vmem:[%s640 + $0x7] sm:$0x1]
        %v7325 = vld [vmem:[%s640 + $0x17] sm:$0x1]
        %v7326 = vld [vmem:[%s640 + $0x27] sm:$0x1]
        %v7327 = vld [vmem:[%s640 + $0x37] sm:$0x1]
        %v7332 = vrot.slane %v7325, 7
        %v7333 = vsel %vm301, %v7332, %v7324
        %v7334 = vrot.slane %v7326, 6
        %v7335 = vsel %vm304, %v7334, %v7333
        %v7336 = vrot.slane %v7327, 5
        %v7337 = vsel %vm307, %v7336, %v7335
        %v7338 = vsel %vm313, %v7337, 0
        %7340 = vmatprep.subr.mxu0 0.0
        %7341 = vmatpush1.msra.mxu0 %v7338
        %7342 = vmatprep.subr.mxu0 0.0
        %7343 = vmatpush1.msra.mxu0 0.0
        %7344 = vmatprep.subr.mxu0 0.0
        %7345 = vmatpush1.msra.mxu0 0.0
        %7346 = vmatprep.subr.mxu0 0.0
        %7347 = vmatpush1.msra.mxu0 0.0
        %7348 = vmatprep.subr.mxu0 0.0
        %7349 = vmatpush1.msra.mxu0 0.0
        %7350 = vmatprep.subr.mxu0 0.0
        %7351 = vmatpush1.msra.mxu0 0.0
        %7352 = vmatprep.subr.mxu0 0.0
        %7353 = vmatpush1.msra.mxu0 0.0
        %7354 = vmatprep.subr.mxu0 0.0
        %7355 = vmatpush1.msra.mxu0 0.0
        %7356 = vmatprep.subr.mxu0 0.0
        %7357 = vmatpush1.msra.mxu0 0.0
        %7358 = vmatprep.subr.mxu0 0.0
        %7359 = vmatpush1.msra.mxu0 0.0
        %7360 = vmatprep.subr.mxu0 0.0
        %7361 = vmatpush1.msra.mxu0 0.0
        %7362 = vmatprep.subr.mxu0 0.0
        %7363 = vmatpush1.msra.mxu0 0.0
        %7364 = vmatprep.subr.mxu0 0.0
        %7365 = vmatpush1.msra.mxu0 0.0
        %7366 = vmatprep.subr.mxu0 0.0
        %7367 = vmatpush1.msra.mxu0 0.0
        %7368 = vmatprep.subr.mxu0 0.0
        %7369 = vmatpush1.msra.mxu0 0.0
        %7370 = vmatprep.subr.mxu0 0.0
        %7371 = vmatpush1.msra.mxu0 0.0
        %7372 = vmatprep.subr.mxu0 0.0
        %7373 = vmatpush1.msra.mxu0 0.0
        %7374 = vmatprep.subr.mxu0 0.0
        %7375 = vmatpush1.msra.mxu0 0.0
        %7376 = vmatprep.subr.mxu0 0.0
        %7377 = vmatpush1.msra.mxu0 0.0
        %7378 = vmatprep.subr.mxu0 0.0
        %7379 = vmatpush1.msra.mxu0 0.0
        %7380 = vmatprep.subr.mxu0 0.0
        %7381 = vmatpush1.msra.mxu0 0.0
        %7382 = vmatprep.subr.mxu0 0.0
        %7383 = vmatpush1.msra.mxu0 0.0
        %7384 = vmatprep.subr.mxu0 0.0
        %7385 = vmatpush1.msra.mxu0 0.0
        %7386 = vmatprep.subr.mxu0 0.0
        %7387 = vmatpush1.msra.mxu0 0.0
        %7388 = vmatprep.subr.mxu0 0.0
        %7389 = vmatpush1.msra.mxu0 0.0
        %7390 = vmatprep.subr.mxu0 0.0
        %7391 = vmatpush1.msra.mxu0 0.0
        %7392 = vmatprep.subr.mxu0 0.0
        %7393 = vmatpush1.msra.mxu0 0.0
        %7394 = vmatprep.subr.mxu0 0.0
        %7395 = vmatpush1.msra.mxu0 0.0
        %7396 = vmatprep.subr.mxu0 0.0
        %7397 = vmatpush1.msra.mxu0 0.0
        %7398 = vmatprep.subr.mxu0 0.0
        %7399 = vmatpush1.msra.mxu0 0.0
        %7400 = vmatprep.subr.mxu0 0.0
        %7401 = vmatpush1.msra.mxu0 0.0
        %7402 = vmatprep.subr.mxu0 0.0
        %7403 = vmatpush1.msra.mxu0 0.0
        %7404 = vmatprep.mubr.f32.mxu0 0.0
        %7405 = vmatmul.mubr.f32.gmra.mrb[0].mxu0 %v656
        %v7406 = vpop.f32.mrb[0].mxu0
        %v7407 = vadd.f32 0.0, %v7406
        %v7408 = vpop.f32.mrb[0].mxu0
        %7409 = vdwg.mxu0
        %v7410 = vadd.f32 %v7323, %v7407
        %7411 = vrot.lane.b32.xlu0 %v7250, 127
        %v7412 = vpop.permute.xlu0 %7411
        %v7413 = vsel %vm313, %v7412, 0
        %7415 = vmatprep.subr.mxu0 0.0
        %7416 = vmatpush1.msra.mxu0 %v7413
        %7417 = vmatprep.subr.mxu0 0.0
        %7418 = vmatpush1.msra.mxu0 0.0
        %7419 = vmatprep.subr.mxu0 0.0
        %7420 = vmatpush1.msra.mxu0 0.0
        %7421 = vmatprep.subr.mxu0 0.0
        %7422 = vmatpush1.msra.mxu0 0.0
        %7423 = vmatprep.subr.mxu0 0.0
        %7424 = vmatpush1.msra.mxu0 0.0
        %7425 = vmatprep.subr.mxu0 0.0
        %7426 = vmatpush1.msra.mxu0 0.0
        %7427 = vmatprep.subr.mxu0 0.0
        %7428 = vmatpush1.msra.mxu0 0.0
        %7429 = vmatprep.subr.mxu0 0.0
        %7430 = vmatpush1.msra.mxu0 0.0
        %7431 = vmatprep.subr.mxu0 0.0
        %7432 = vmatpush1.msra.mxu0 0.0
        %7433 = vmatprep.subr.mxu0 0.0
        %7434 = vmatpush1.msra.mxu0 0.0
        %7435 = vmatprep.subr.mxu0 0.0
        %7436 = vmatpush1.msra.mxu0 0.0
        %7437 = vmatprep.subr.mxu0 0.0
        %7438 = vmatpush1.msra.mxu0 0.0
        %7439 = vmatprep.subr.mxu0 0.0
        %7440 = vmatpush1.msra.mxu0 0.0
        %7441 = vmatprep.subr.mxu0 0.0
        %7442 = vmatpush1.msra.mxu0 0.0
        %7443 = vmatprep.subr.mxu0 0.0
        %7444 = vmatpush1.msra.mxu0 0.0
        %7445 = vmatprep.subr.mxu0 0.0
        %7446 = vmatpush1.msra.mxu0 0.0
        %7447 = vmatprep.subr.mxu0 0.0
        %7448 = vmatpush1.msra.mxu0 0.0
        %7449 = vmatprep.subr.mxu0 0.0
        %7450 = vmatpush1.msra.mxu0 0.0
        %7451 = vmatprep.subr.mxu0 0.0
        %7452 = vmatpush1.msra.mxu0 0.0
        %7453 = vmatprep.subr.mxu0 0.0
        %7454 = vmatpush1.msra.mxu0 0.0
        %7455 = vmatprep.subr.mxu0 0.0
        %7456 = vmatpush1.msra.mxu0 0.0
        %7457 = vmatprep.subr.mxu0 0.0
        %7458 = vmatpush1.msra.mxu0 0.0
        %7459 = vmatprep.subr.mxu0 0.0
        %7460 = vmatpush1.msra.mxu0 0.0
        %7461 = vmatprep.subr.mxu0 0.0
        %7462 = vmatpush1.msra.mxu0 0.0
        %7463 = vmatprep.subr.mxu0 0.0
        %7464 = vmatpush1.msra.mxu0 0.0
        %7465 = vmatprep.subr.mxu0 0.0
        %7466 = vmatpush1.msra.mxu0 0.0
        %7467 = vmatprep.subr.mxu0 0.0
        %7468 = vmatpush1.msra.mxu0 0.0
        %7469 = vmatprep.subr.mxu0 0.0
        %7470 = vmatpush1.msra.mxu0 0.0
        %7471 = vmatprep.subr.mxu0 0.0
        %7472 = vmatpush1.msra.mxu0 0.0
        %7473 = vmatprep.subr.mxu0 0.0
        %7474 = vmatpush1.msra.mxu0 0.0
        %7475 = vmatprep.subr.mxu0 0.0
        %7476 = vmatpush1.msra.mxu0 0.0
        %7477 = vmatprep.subr.mxu0 0.0
        %7478 = vmatpush1.msra.mxu0 0.0
        %7479 = vmatprep.mubr.f32.mxu0 0.0
        %7480 = vmatmul.mubr.f32.gmra.mrb[0].mxu0 %v734
        %v7481 = vpop.f32.mrb[0].mxu0
        %v7482 = vadd.f32 0.0, %v7481
        %v7483 = vpop.f32.mrb[0].mxu0
        %7484 = vdwg.mxu0
        %v7485 = vadd.f32 %v7410, %v7482
        %v7486 = vld [vmem:[%s267 + $0x8] sm:$0x1]
        %v7487 = vld [vmem:[%s267 + $0x18] sm:$0x1]
        %v7488 = vld [vmem:[%s267 + $0x28] sm:$0x1]
        %v7489 = vld [vmem:[%s267 + $0x38] sm:$0x1]
        %v7494 = vrot.slane %v7487, 7
        %v7495 = vsel %vm301, %v7494, %v7486
        %v7496 = vrot.slane %v7488, 6
        %v7497 = vsel %vm304, %v7496, %v7495
        %v7498 = vrot.slane %v7489, 5
        %v7499 = vsel %vm307, %v7498, %v7497
        %v7500 = vsel %vm313, %v7499, 0
        %7502 = vmatprep.subr.mxu0 0.0
        %7503 = vmatpush1.msra.mxu0 %v7500
        %7504 = vmatprep.subr.mxu0 0.0
        %7505 = vmatpush1.msra.mxu0 0.0
        %7506 = vmatprep.subr.mxu0 0.0
        %7507 = vmatpush1.msra.mxu0 0.0
        %7508 = vmatprep.subr.mxu0 0.0
        %7509 = vmatpush1.msra.mxu0 0.0
        %7510 = vmatprep.subr.mxu0 0.0
        %7511 = vmatpush1.msra.mxu0 0.0
        %7512 = vmatprep.subr.mxu0 0.0
        %7513 = vmatpush1.msra.mxu0 0.0
        %7514 = vmatprep.subr.mxu0 0.0
        %7515 = vmatpush1.msra.mxu0 0.0
        %7516 = vmatprep.subr.mxu0 0.0
        %7517 = vmatpush1.msra.mxu0 0.0
        %7518 = vmatprep.subr.mxu0 0.0
        %7519 = vmatpush1.msra.mxu0 0.0
        %7520 = vmatprep.subr.mxu0 0.0
        %7521 = vmatpush1.msra.mxu0 0.0
        %7522 = vmatprep.subr.mxu0 0.0
        %7523 = vmatpush1.msra.mxu0 0.0
        %7524 = vmatprep.subr.mxu0 0.0
        %7525 = vmatpush1.msra.mxu0 0.0
        %7526 = vmatprep.subr.mxu0 0.0
        %7527 = vmatpush1.msra.mxu0 0.0
        %7528 = vmatprep.subr.mxu0 0.0
        %7529 = vmatpush1.msra.mxu0 0.0
        %7530 = vmatprep.subr.mxu0 0.0
        %7531 = vmatpush1.msra.mxu0 0.0
        %7532 = vmatprep.subr.mxu0 0.0
        %7533 = vmatpush1.msra.mxu0 0.0
        %7534 = vmatprep.subr.mxu0 0.0
        %7535 = vmatpush1.msra.mxu0 0.0
        %7536 = vmatprep.subr.mxu0 0.0
        %7537 = vmatpush1.msra.mxu0 0.0
        %7538 = vmatprep.subr.mxu0 0.0
        %7539 = vmatpush1.msra.mxu0 0.0
        %7540 = vmatprep.subr.mxu0 0.0
        %7541 = vmatpush1.msra.mxu0 0.0
        %7542 = vmatprep.subr.mxu0 0.0
        %7543 = vmatpush1.msra.mxu0 0.0
        %7544 = vmatprep.subr.mxu0 0.0
        %7545 = vmatpush1.msra.mxu0 0.0
        %7546 = vmatprep.subr.mxu0 0.0
        %7547 = vmatpush1.msra.mxu0 0.0
        %7548 = vmatprep.subr.mxu0 0.0
        %7549 = vmatpush1.msra.mxu0 0.0
        %7550 = vmatprep.subr.mxu0 0.0
        %7551 = vmatpush1.msra.mxu0 0.0
        %7552 = vmatprep.subr.mxu0 0.0
        %7553 = vmatpush1.msra.mxu0 0.0
        %7554 = vmatprep.subr.mxu0 0.0
        %7555 = vmatpush1.msra.mxu0 0.0
        %7556 = vmatprep.subr.mxu0 0.0
        %7557 = vmatpush1.msra.mxu0 0.0
        %7558 = vmatprep.subr.mxu0 0.0
        %7559 = vmatpush1.msra.mxu0 0.0
        %7560 = vmatprep.subr.mxu0 0.0
        %7561 = vmatpush1.msra.mxu0 0.0
        %7562 = vmatprep.subr.mxu0 0.0
        %7563 = vmatpush1.msra.mxu0 0.0
        %7564 = vmatprep.subr.mxu0 0.0
        %7565 = vmatpush1.msra.mxu0 0.0
        %7566 = vmatprep.mubr.f32.mxu0 0.0
        %7567 = vmatmul.mubr.f32.gmra.mrb[0].mxu0 %v824
        %v7568 = vpop.f32.mrb[0].mxu0
        %v7569 = vadd.f32 0.0, %v7568
        %v7570 = vpop.f32.mrb[0].mxu0
        %7571 = vdwg.mxu0
        %v7572 = vadd.f32 %v7485, %v7569
        %v7573 = vld [vmem:[%s291 + $0x8] sm:$0x1]
        %v7574 = vld [vmem:[%s291 + $0x18] sm:$0x1]
        %v7575 = vld [vmem:[%s291 + $0x28] sm:$0x1]
        %v7576 = vld [vmem:[%s291 + $0x38] sm:$0x1]
        %v7581 = vrot.slane %v7574, 7
        %v7582 = vsel %vm301, %v7581, %v7573
        %v7583 = vrot.slane %v7575, 6
        %v7584 = vsel %vm304, %v7583, %v7582
        %v7585 = vrot.slane %v7576, 5
        %v7586 = vsel %vm307, %v7585, %v7584
        %v7587 = vsel %vm313, %v7586, 0
        %7589 = vmatprep.subr.mxu0 0.0
        %7590 = vmatpush1.msra.mxu0 %v7587
        %7591 = vmatprep.subr.mxu0 0.0
        %7592 = vmatpush1.msra.mxu0 0.0
        %7593 = vmatprep.subr.mxu0 0.0
        %7594 = vmatpush1.msra.mxu0 0.0
        %7595 = vmatprep.subr.mxu0 0.0
        %7596 = vmatpush1.msra.mxu0 0.0
        %7597 = vmatprep.subr.mxu0 0.0
        %7598 = vmatpush1.msra.mxu0 0.0
        %7599 = vmatprep.subr.mxu0 0.0
        %7600 = vmatpush1.msra.mxu0 0.0
        %7601 = vmatprep.subr.mxu0 0.0
        %7602 = vmatpush1.msra.mxu0 0.0
        %7603 = vmatprep.subr.mxu0 0.0
        %7604 = vmatpush1.msra.mxu0 0.0
        %7605 = vmatprep.subr.mxu0 0.0
        %7606 = vmatpush1.msra.mxu0 0.0
        %7607 = vmatprep.subr.mxu0 0.0
        %7608 = vmatpush1.msra.mxu0 0.0
        %7609 = vmatprep.subr.mxu0 0.0
        %7610 = vmatpush1.msra.mxu0 0.0
        %7611 = vmatprep.subr.mxu0 0.0
        %7612 = vmatpush1.msra.mxu0 0.0
        %7613 = vmatprep.subr.mxu0 0.0
        %7614 = vmatpush1.msra.mxu0 0.0
        %7615 = vmatprep.subr.mxu0 0.0
        %7616 = vmatpush1.msra.mxu0 0.0
        %7617 = vmatprep.subr.mxu0 0.0
        %7618 = vmatpush1.msra.mxu0 0.0
        %7619 = vmatprep.subr.mxu0 0.0
        %7620 = vmatpush1.msra.mxu0 0.0
        %7621 = vmatprep.subr.mxu0 0.0
        %7622 = vmatpush1.msra.mxu0 0.0
        %7623 = vmatprep.subr.mxu0 0.0
        %7624 = vmatpush1.msra.mxu0 0.0
        %7625 = vmatprep.subr.mxu0 0.0
        %7626 = vmatpush1.msra.mxu0 0.0
        %7627 = vmatprep.subr.mxu0 0.0
        %7628 = vmatpush1.msra.mxu0 0.0
        %7629 = vmatprep.subr.mxu0 0.0
        %7630 = vmatpush1.msra.mxu0 0.0
        %7631 = vmatprep.subr.mxu0 0.0
        %7632 = vmatpush1.msra.mxu0 0.0
        %7633 = vmatprep.subr.mxu0 0.0
        %7634 = vmatpush1.msra.mxu0 0.0
        %7635 = vmatprep.subr.mxu0 0.0
        %7636 = vmatpush1.msra.mxu0 0.0
        %7637 = vmatprep.subr.mxu0 0.0
        %7638 = vmatpush1.msra.mxu0 0.0
        %7639 = vmatprep.subr.mxu0 0.0
        %7640 = vmatpush1.msra.mxu0 0.0
        %7641 = vmatprep.subr.mxu0 0.0
        %7642 = vmatpush1.msra.mxu0 0.0
        %7643 = vmatprep.subr.mxu0 0.0
        %7644 = vmatpush1.msra.mxu0 0.0
        %7645 = vmatprep.subr.mxu0 0.0
        %7646 = vmatpush1.msra.mxu0 0.0
        %7647 = vmatprep.subr.mxu0 0.0
        %7648 = vmatpush1.msra.mxu0 0.0
        %7649 = vmatprep.subr.mxu0 0.0
        %7650 = vmatpush1.msra.mxu0 0.0
        %7651 = vmatprep.subr.mxu0 0.0
        %7652 = vmatpush1.msra.mxu0 0.0
        %7653 = vmatprep.mubr.f32.mxu0 0.0
        %7654 = vmatmul.mubr.f32.gmra.mrb[0].mxu0 %v914
        %v7655 = vpop.f32.mrb[0].mxu0
        %v7656 = vadd.f32 0.0, %v7655
        %v7657 = vpop.f32.mrb[0].mxu0
        %7658 = vdwg.mxu0
        %v7659 = vadd.f32 %v7572, %v7656
        %7660 = vrot.lane.b32.xlu0 %v7499, 127
        %v7661 = vpop.permute.xlu0 %7660
        %v7662 = vsel %vm313, %v7661, 0
        %7664 = vmatprep.subr.mxu0 0.0
        %7665 = vmatpush1.msra.mxu0 %v7662
        %7666 = vmatprep.subr.mxu0 0.0
        %7667 = vmatpush1.msra.mxu0 0.0
        %7668 = vmatprep.subr.mxu0 0.0
        %7669 = vmatpush1.msra.mxu0 0.0
        %7670 = vmatprep.subr.mxu0 0.0
        %7671 = vmatpush1.msra.mxu0 0.0
        %7672 = vmatprep.subr.mxu0 0.0
        %7673 = vmatpush1.msra.mxu0 0.0
        %7674 = vmatprep.subr.mxu0 0.0
        %7675 = vmatpush1.msra.mxu0 0.0
        %7676 = vmatprep.subr.mxu0 0.0
        %7677 = vmatpush1.msra.mxu0 0.0
        %7678 = vmatprep.subr.mxu0 0.0
        %7679 = vmatpush1.msra.mxu0 0.0
        %7680 = vmatprep.subr.mxu0 0.0
        %7681 = vmatpush1.msra.mxu0 0.0
        %7682 = vmatprep.subr.mxu0 0.0
        %7683 = vmatpush1.msra.mxu0 0.0
        %7684 = vmatprep.subr.mxu0 0.0
        %7685 = vmatpush1.msra.mxu0 0.0
        %7686 = vmatprep.subr.mxu0 0.0
        %7687 = vmatpush1.msra.mxu0 0.0
        %7688 = vmatprep.subr.mxu0 0.0
        %7689 = vmatpush1.msra.mxu0 0.0
        %7690 = vmatprep.subr.mxu0 0.0
        %7691 = vmatpush1.msra.mxu0 0.0
        %7692 = vmatprep.subr.mxu0 0.0
        %7693 = vmatpush1.msra.mxu0 0.0
        %7694 = vmatprep.subr.mxu0 0.0
        %7695 = vmatpush1.msra.mxu0 0.0
        %7696 = vmatprep.subr.mxu0 0.0
        %7697 = vmatpush1.msra.mxu0 0.0
        %7698 = vmatprep.subr.mxu0 0.0
        %7699 = vmatpush1.msra.mxu0 0.0
        %7700 = vmatprep.subr.mxu0 0.0
        %7701 = vmatpush1.msra.mxu0 0.0
        %7702 = vmatprep.subr.mxu0 0.0
        %7703 = vmatpush1.msra.mxu0 0.0
        %7704 = vmatprep.subr.mxu0 0.0
        %7705 = vmatpush1.msra.mxu0 0.0
        %7706 = vmatprep.subr.mxu0 0.0
        %7707 = vmatpush1.msra.mxu0 0.0
        %7708 = vmatprep.subr.mxu0 0.0
        %7709 = vmatpush1.msra.mxu0 0.0
        %7710 = vmatprep.subr.mxu0 0.0
        %7711 = vmatpush1.msra.mxu0 0.0
        %7712 = vmatprep.subr.mxu0 0.0
        %7713 = vmatpush1.msra.mxu0 0.0
        %7714 = vmatprep.subr.mxu0 0.0
        %7715 = vmatpush1.msra.mxu0 0.0
        %7716 = vmatprep.subr.mxu0 0.0
        %7717 = vmatpush1.msra.mxu0 0.0
        %7718 = vmatprep.subr.mxu0 0.0
        %7719 = vmatpush1.msra.mxu0 0.0
        %7720 = vmatprep.subr.mxu0 0.0
        %7721 = vmatpush1.msra.mxu0 0.0
        %7722 = vmatprep.subr.mxu0 0.0
        %7723 = vmatpush1.msra.mxu0 0.0
        %7724 = vmatprep.subr.mxu0 0.0
        %7725 = vmatpush1.msra.mxu0 0.0
        %7726 = vmatprep.subr.mxu0 0.0
        %7727 = vmatpush1.msra.mxu0 0.0
        %7728 = vmatprep.mubr.f32.mxu0 0.0
        %7729 = vmatmul.mubr.f32.gmra.mrb[0].mxu0 %v992
        %v7730 = vpop.f32.mrb[0].mxu0
        %v7731 = vadd.f32 0.0, %v7730
        %v7732 = vpop.f32.mrb[0].mxu0
        %7733 = vdwg.mxu0
        %v7734 = vadd.f32 %v7659, %v7731
        %v7736 = vcombine.high %v7734, %v7734
        %v7738 = vunpack.c.l.s4 1966171168
        %v7739 = vunpack.c.0.s8 %v7738
        %v7740 = vlaneseq
        %v7741 = vshrl.u32 %v7740, 7
        %v7742 = vsub.s32 %v7739, %v7741
        %v7743 = vrot.slane %v7734, %v7742
        %v7745 = vunpack.c.l.s4 1966171168
        %v7746 = vunpack.c.0.s8 %v7745
        %v7747 = vlaneseq
        %v7748 = vshrl.u32 %v7747, 7
        %v7749 = vsub.s32 %v7746, %v7748
        %v7750 = vrot.slane %v7736, %v7749
        %v7751 = vcombine.high %v7743, %v7743
        %v7752 = vcombine.high %v7750, %v7750
        %v7754 = vunpack.c.l.s4 1966171168
        %v7755 = vunpack.c.0.s8 %v7754
        %v7756 = vlaneseq
        %v7757 = vshrl.u32 %v7756, 7
        %v7758 = vsub.s32 %v7755, %v7757
        %v7759 = vrot.slane %v7743, %v7758
        %v7761 = vunpack.c.l.s4 1966171168
        %v7762 = vunpack.c.0.s8 %v7761
        %v7763 = vlaneseq
        %v7764 = vshrl.u32 %v7763, 7
        %v7765 = vsub.s32 %v7762, %v7764
        %v7766 = vrot.slane %v7750, %v7765
        %v7768 = vunpack.c.l.s4 1966171168
        %v7769 = vunpack.c.0.s8 %v7768
        %v7770 = vlaneseq
        %v7771 = vshrl.u32 %v7770, 7
        %v7772 = vsub.s32 %v7769, %v7771
        %v7773 = vrot.slane %v7751, %v7772
        %v7775 = vunpack.c.l.s4 1966171168
        %v7776 = vunpack.c.0.s8 %v7775
        %v7777 = vlaneseq
        %v7778 = vshrl.u32 %v7777, 7
        %v7779 = vsub.s32 %v7776, %v7778
        %v7780 = vrot.slane %v7752, %v7779
        %v7781 = vcombine.high %v7759, %v7759
        %v7782 = vcombine.high %v7766, %v7766
        %v7783 = vcombine.high %v7773, %v7773
        %v7784 = vcombine.high %v7780, %v7780
        %7793 = vst.msk [vmem:[%s248 + $0x7] sm:$0x1] %vm1125, %v7759
        %7794 = vst.msk [vmem:[%s248 + $0xf] sm:$0x1] %vm1125, %v7773
        %7795 = vst.msk [vmem:[%s248 + $0x17] sm:$0x1] %vm1125, %v7781
        %7796 = vst.msk [vmem:[%s248 + $0x1f] sm:$0x1] %vm1125, %v7783
        %7797 = vst.msk [vmem:[%s248 + $0x27] sm:$0x1] %vm1125, %v7766
        %7798 = vst.msk [vmem:[%s248 + $0x2f] sm:$0x1] %vm1125, %v7780
        %7799 = vst.msk [vmem:[%s248 + $0x37] sm:$0x1] %vm1125, %v7782
        %7800 = vst.msk [vmem:[%s248 + $0x3f] sm:$0x1] %vm1125, %v7784
        %v7801 = vmul.f32 %v7734, %v1137
        %v7802 = vadd.f32 %v7801, %v1143
        %v7804 = vcombine.high %v7802, %v7802
        %v7806 = vunpack.c.l.s4 1966171168
        %v7807 = vunpack.c.0.s8 %v7806
        %v7808 = vlaneseq
        %v7809 = vshrl.u32 %v7808, 7
        %v7810 = vsub.s32 %v7807, %v7809
        %v7811 = vrot.slane %v7802, %v7810
        %v7813 = vunpack.c.l.s4 1966171168
        %v7814 = vunpack.c.0.s8 %v7813
        %v7815 = vlaneseq
        %v7816 = vshrl.u32 %v7815, 7
        %v7817 = vsub.s32 %v7814, %v7816
        %v7818 = vrot.slane %v7804, %v7817
        %v7819 = vcombine.high %v7811, %v7811
        %v7820 = vcombine.high %v7818, %v7818
        %v7822 = vunpack.c.l.s4 1966171168
        %v7823 = vunpack.c.0.s8 %v7822
        %v7824 = vlaneseq
        %v7825 = vshrl.u32 %v7824, 7
        %v7826 = vsub.s32 %v7823, %v7825
        %v7827 = vrot.slane %v7811, %v7826
        %v7829 = vunpack.c.l.s4 1966171168
        %v7830 = vunpack.c.0.s8 %v7829
        %v7831 = vlaneseq
        %v7832 = vshrl.u32 %v7831, 7
        %v7833 = vsub.s32 %v7830, %v7832
        %v7834 = vrot.slane %v7818, %v7833
        %v7836 = vunpack.c.l.s4 1966171168
        %v7837 = vunpack.c.0.s8 %v7836
        %v7838 = vlaneseq
        %v7839 = vshrl.u32 %v7838, 7
        %v7840 = vsub.s32 %v7837, %v7839
        %v7841 = vrot.slane %v7819, %v7840
        %v7843 = vunpack.c.l.s4 1966171168
        %v7844 = vunpack.c.0.s8 %v7843
        %v7845 = vlaneseq
        %v7846 = vshrl.u32 %v7845, 7
        %v7847 = vsub.s32 %v7844, %v7846
        %v7848 = vrot.slane %v7820, %v7847
        %v7849 = vcombine.high %v7827, %v7827
        %v7850 = vcombine.high %v7834, %v7834
        %v7851 = vcombine.high %v7841, %v7841
        %v7852 = vcombine.high %v7848, %v7848
        %7861 = vst.msk [vmem:[%s255 + $0x7] sm:$0x1] %vm1125, %v7827
        %7862 = vst.msk [vmem:[%s255 + $0xf] sm:$0x1] %vm1125, %v7841
        %7863 = vst.msk [vmem:[%s255 + $0x17] sm:$0x1] %vm1125, %v7849
        %7864 = vst.msk [vmem:[%s255 + $0x1f] sm:$0x1] %vm1125, %v7851
        %7865 = vst.msk [vmem:[%s255 + $0x27] sm:$0x1] %vm1125, %v7834
        %7866 = vst.msk [vmem:[%s255 + $0x2f] sm:$0x1] %vm1125, %v7848
        %7867 = vst.msk [vmem:[%s255 + $0x37] sm:$0x1] %vm1125, %v7850
        %7868 = vst.msk [vmem:[%s255 + $0x3f] sm:$0x1] %vm1125, %v7852
        %v7869 = vsub.f32 0.0, %v7802
        %v7870 = vmul.f32 %v7869, 1.442695
        %v7871 = vpow.pop %v7870
        %v7872 = vadd.f32 %v7871, 1.0
        %v7873 = vrcp.pop %v7872
        %v7874 = vmul.f32 %v7802, %v7873
        %v7876 = vcombine.high %v7874, %v7874
        %v7878 = vunpack.c.l.s4 1966171168
        %v7879 = vunpack.c.0.s8 %v7878
        %v7880 = vlaneseq
        %v7881 = vshrl.u32 %v7880, 7
        %v7882 = vsub.s32 %v7879, %v7881
        %v7883 = vrot.slane %v7874, %v7882
        %v7885 = vunpack.c.l.s4 1966171168
        %v7886 = vunpack.c.0.s8 %v7885
        %v7887 = vlaneseq
        %v7888 = vshrl.u32 %v7887, 7
        %v7889 = vsub.s32 %v7886, %v7888
        %v7890 = vrot.slane %v7876, %v7889
        %v7891 = vcombine.high %v7883, %v7883
        %v7892 = vcombine.high %v7890, %v7890
        %v7894 = vunpack.c.l.s4 1966171168
        %v7895 = vunpack.c.0.s8 %v7894
        %v7896 = vlaneseq
        %v7897 = vshrl.u32 %v7896, 7
        %v7898 = vsub.s32 %v7895, %v7897
        %v7899 = vrot.slane %v7883, %v7898
        %v7901 = vunpack.c.l.s4 1966171168
        %v7902 = vunpack.c.0.s8 %v7901
        %v7903 = vlaneseq
        %v7904 = vshrl.u32 %v7903, 7
        %v7905 = vsub.s32 %v7902, %v7904
        %v7906 = vrot.slane %v7890, %v7905
        %v7908 = vunpack.c.l.s4 1966171168
        %v7909 = vunpack.c.0.s8 %v7908
        %v7910 = vlaneseq
        %v7911 = vshrl.u32 %v7910, 7
        %v7912 = vsub.s32 %v7909, %v7911
        %v7913 = vrot.slane %v7891, %v7912
        %v7915 = vunpack.c.l.s4 1966171168
        %v7916 = vunpack.c.0.s8 %v7915
        %v7917 = vlaneseq
        %v7918 = vshrl.u32 %v7917, 7
        %v7919 = vsub.s32 %v7916, %v7918
        %v7920 = vrot.slane %v7892, %v7919
        %v7921 = vcombine.high %v7899, %v7899
        %v7922 = vcombine.high %v7906, %v7906
        %v7923 = vcombine.high %v7913, %v7913
        %v7924 = vcombine.high %v7920, %v7920
        %7933 = vst.msk [vmem:[%s262 + $0x7] sm:$0x1] %vm1125, %v7899
        %7934 = vst.msk [vmem:[%s262 + $0xf] sm:$0x1] %vm1125, %v7913
        %7935 = vst.msk [vmem:[%s262 + $0x17] sm:$0x1] %vm1125, %v7921
        %7936 = vst.msk [vmem:[%s262 + $0x1f] sm:$0x1] %vm1125, %v7923
        %7937 = vst.msk [vmem:[%s262 + $0x27] sm:$0x1] %vm1125, %v7906
        %7938 = vst.msk [vmem:[%s262 + $0x2f] sm:$0x1] %vm1125, %v7920
        %7939 = vst.msk [vmem:[%s262 + $0x37] sm:$0x1] %vm1125, %v7922
        %7940 = vst.msk [vmem:[%s262 + $0x3f] sm:$0x1] %vm1125, %v7924
        %s7941 = sand.u32 %s121, 1
        %s7942 = scalar_lea.sflag [#allocation3], %s7941
        %s7943 = sand.u32 %s121, 1
        %s7944 = smul.addr %s7943, 64
        %s7945 = scalar_lea.vmem [#allocation2], %s7944
        %s7946 = sand.u32 %s24, 1
        %s7947 = scalar_lea.sflag [#allocation5], %s7946
        %s7948 = sand.u32 %s147, 1
        %s7949 = smul.addr %s7948, 64
        %s7950 = scalar_lea.vmem [#allocation4], %s7949
        %s7951 = sand.u32 %s24, 1
        %s7952 = scalar_lea.sflag [#allocation5], %s7951
        %s7953 = sand.u32 %s173, 1
        %s7954 = smul.addr %s7953, 64
        %s7955 = scalar_lea.vmem [#allocation6], %s7954
        // Predicated region
        $region37: #{tpu_custom_call.1} parent=35 // pred_check
          %p7956 = pneg %p131
        $region38: #{tpu_custom_call.1} parent=35 // pred_check_branch
          %7958 = sbr.rel (%p7956) target = $region40
        $region39: #{tpu_custom_call.1} parent=35 // pred_region
          %s7960 = ssub.s32 1024, 1024
          %7961 = vsyncadd %s7942, %s7960
          %s7962 = smul.addr %s24, 8
          %s7963 = smul.addr %s7962, 128
          %s7964 = scalar_lea.hbm %s4, %s7963
          %s7965 = sshll.u32 %s7945, 4
          %s7966 = int_to_ptr.vmem [resolvable:$true] %s7965
          %7971 = dma.vmem_to_hbm [thread:$0]  %s7966, 1024, %s7964, %s7942, 128, 128, 8
        $region40: #{tpu_custom_call.1} parent=35 // pred_fallthru
          _
        // Predicated region
        $region41: #{tpu_custom_call.1} parent=35 // pred_check
          %p7972 = pneg %p157
        $region42: #{tpu_custom_call.1} parent=35 // pred_check_branch
          %7974 = sbr.rel (%p7972) target = $region44
        $region43: #{tpu_custom_call.1} parent=35 // pred_region
          %s7976 = ssub.s32 1024, 1024
          %7977 = vsyncadd %s7947, %s7976
          %s7978 = smul.addr %s24, 8
          %s7979 = smul.addr %s7978, 128
          %s7980 = scalar_lea.hbm %s5, %s7979
          %s7981 = sshll.u32 %s7950, 4
          %s7982 = int_to_ptr.vmem [resolvable:$true] %s7981
          %7987 = dma.vmem_to_hbm [thread:$0]  %s7982, 1024, %s7980, %s7947, 128, 128, 8
        $region44: #{tpu_custom_call.1} parent=35 // pred_fallthru
          _
        // Predicated region
        $region45: #{tpu_custom_call.1} parent=35 // pred_check
          %p7988 = pneg %p183
        $region46: #{tpu_custom_call.1} parent=35 // pred_check_branch
          %7990 = sbr.rel (%p7988) target = $region48
        $region47: #{tpu_custom_call.1} parent=35 // pred_region
          %s7992 = ssub.s32 1024, 1024
          %7993 = vsyncadd %s7952, %s7992
          %s7994 = smul.addr %s24, 8
          %s7995 = smul.addr %s7994, 128
          %s7996 = scalar_lea.hbm %s6, %s7995
          %s7997 = sshll.u32 %s7955, 4
          %s7998 = int_to_ptr.vmem [resolvable:$true] %s7997
          %8003 = dma.vmem_to_hbm [thread:$0]  %s7998, 1024, %s7996, %s7952, 128, 128, 8
        $region48: #{tpu_custom_call.1} parent=35 // pred_fallthru
          _
      $region36: #{tpu_custom_call.1} parent=5 // pred_fallthru
        _
      %p8004 = scmp.le.s32.totalorder 2, %s19
      // Predicated region
      $region49: #{tpu_custom_call.1} parent=5 // pred_check
        %p8005 = pneg %p8004
      $region50: #{tpu_custom_call.1} parent=5 // pred_check_branch
        %8007 = sbr.rel (%p8005) target = $region52
      $region51: #{tpu_custom_call.1} parent=5 // pred_region
        %s8008 = ssub.s32 %s19, 2
        // Predicated region
        $region53: #{tpu_custom_call.1} parent=51 // pred_check
          %p8009 = pneg %p137
        $region54: #{tpu_custom_call.1} parent=51 // pred_check_branch
          %8011 = sbr.rel (%p8009) target = $region56
        $region55: #{tpu_custom_call.1} parent=51 // pred_region
          %s8012 = sand.u32 %s122, 1
          %s8013 = scalar_lea.sflag [#allocation3], %s8012
          %s8014 = sand.u32 %s122, 1
          %s8015 = smul.addr %s8014, 64
          %s8016 = scalar_lea.vmem [#allocation2], %s8015
          %8017 = dma.done %s8013, 1024
        $region56: #{tpu_custom_call.1} parent=51 // pred_fallthru
          _
        // Predicated region
        $region57: #{tpu_custom_call.1} parent=51 // pred_check
          %p8018 = pneg %p163
        $region58: #{tpu_custom_call.1} parent=51 // pred_check_branch
          %8020 = sbr.rel (%p8018) target = $region60
        $region59: #{tpu_custom_call.1} parent=51 // pred_region
          %s8021 = sand.u32 %s25, 1
          %s8022 = scalar_lea.sflag [#allocation5], %s8021
          %s8023 = sand.u32 %s148, 1
          %s8024 = smul.addr %s8023, 64
          %s8025 = scalar_lea.vmem [#allocation4], %s8024
          %8026 = dma.done %s8022, 1024
        $region60: #{tpu_custom_call.1} parent=51 // pred_fallthru
          _
        // Predicated region
        $region61: #{tpu_custom_call.1} parent=51 // pred_check
          %p8027 = pneg %p189
        $region62: #{tpu_custom_call.1} parent=51 // pred_check_branch
          %8029 = sbr.rel (%p8027) target = $region64
        $region63: #{tpu_custom_call.1} parent=51 // pred_region
          %s8030 = sand.u32 %s25, 1
          %s8031 = scalar_lea.sflag [#allocation5], %s8030
          %s8032 = sand.u32 %s174, 1
          %s8033 = smul.addr %s8032, 64
          %s8034 = scalar_lea.vmem [#allocation6], %s8033
          %8035 = dma.done %s8031, 1024
        $region64: #{tpu_custom_call.1} parent=51 // pred_fallthru
          _
      $region52: #{tpu_custom_call.1} parent=5 // pred_fallthru
        _
    $region6: #{tpu_custom_call.1} parent=1 // loop_footer
      %s23 = sadd.s32 1, %s19
    $region7: #{tpu_custom_call.1} parent=1 // loop_footer_branch
      %18 = sbr.rel target = $region3
    $region8: #{tpu_custom_call.1} parent=1 // loop_exit
      _
    %8036 = vsyncpa [#allocation3], 1
    %s8037 = scalar_lea.sflag [#allocation3], 1
    %8038 = vsyncpa %s8037, 1
    %8039 = vsyncpa [#allocation5], 1
    %s8040 = scalar_lea.sflag [#allocation5], 1
    %8041 = vsyncpa %s8040, 1

</llo_original>
